<compile_context>
chip_gen: v6e
topology: v6e:2x2x1
jax: 0.10.0
libtpu: 0.0.40
codegen_flags: <defaults>
</compile_context>

<pallas_src>
import jax
import jax.numpy as jnp
import numpy as np
from jax.experimental import pallas as pl
from jax.experimental.pallas import tpu as pltpu

NPAD = 8          # padded batch (sublane alignment)
H = 90            # input height == conv2 kernel height
W = 90            # input width  == conv1 kernel width
CIN = 3
C1 = 64
C2 = 128          # flattened feature dim
HC = 96           # classifier hidden
HD = 64           # discriminator hidden
OUTW = 128        # lane-dense output width
NACC = 6          # independent conv2 accumulator chains


def dann_kernel(scal_ref, x1_ref, w1_ref, b1_ref, w2t_ref, b2_ref,
                wh1_ref, bh1_ref, wout_ref, bout_ref, out_ref, h1_s):
    # ---- conv1 (kernel (1,90)) as one bf16 MXU matmul over (ci, w), + ReLU ----
    h1_s[...] = jnp.maximum(
        jnp.dot(x1_ref[...], w1_ref[...], preferred_element_type=jnp.float32)
        + b1_ref[...], 0.0)                                      # (H*NPAD, C1) f32

    # ---- conv2 (kernel (90,1)): 90 taps, fully unrolled, NACC accumulator
    #      chains (keeps the MXU fed; avoids push->pop->add serialization). ----
    accs = [jnp.zeros((NPAD, C2), jnp.float32) for _ in range(NACC)]
    for kh in range(H):
        blk = h1_s[pl.ds(kh * NPAD, NPAD), :].astype(jnp.bfloat16)   # (8, 64)
        accs[kh % NACC] = accs[kh % NACC] + jnp.dot(
            blk, w2t_ref[kh], preferred_element_type=jnp.float32)
    acc = accs[0]
    for a in accs[1:]:
        acc = acc + a
    feat = jnp.maximum(acc + b2_ref[...], 0.0)                   # (NPAD, 128) f32
    # torch.flatten(feature, start_dim=1) is a no-op: spatial output is 1x1.

    # ---- fused class + domain heads ----
    # hidden: Linear(128,96) || Linear(128,64) as one (128,160) matmul + ReLU
    # (Dropout is identity in eval; ReverseLayerF is identity in forward).
    hcd = jnp.maximum(
        jnp.dot(feat.astype(jnp.bfloat16), wh1_ref[...],
                preferred_element_type=jnp.float32) + bh1_ref[...], 0.0)
    # output: block-structured (160, 128) weight -> col 0 = class logit,
    # col 1 = domain logit (lane-dense result, single MXU drain).
    z = jnp.dot(hcd.astype(jnp.bfloat16), wout_ref[...],
                preferred_element_type=jnp.float32) + bout_ref[...]
    probs = 1.0 / (1.0 + jnp.exp(-z))                            # (NPAD, 128)

    cls = probs[:, 0:1]                                          # class sigmoid
    pd = probs[:, 1:2]                                           # domain sigmoid

    # BCELoss(domain_pred, label), label = 1 (source) / 0 (target); mean over the
    # real batch; log clamped at -100 like PyTorch.
    logp = jnp.maximum(jnp.log(pd), -100.0)
    log1mp = jnp.maximum(jnp.log(1.0 - pd), -100.0)
    src = scal_ref[1]                                            # 1 = source
    bce = jnp.where(src == 1, -logp, -log1mp)                    # (NPAD, 1)
    n_valid = scal_ref[0]
    rows = jax.lax.broadcasted_iota(jnp.int32, (NPAD, 1), 0)
    mask = (rows < n_valid).astype(jnp.float32)
    loss = jnp.sum(bce * mask) / n_valid.astype(jnp.float32)

    # single lane-dense output: col 0 = class probs, col 1 = loss.
    cols = jax.lax.broadcasted_iota(jnp.int32, (NPAD, OUTW), 1)
    out_ref[...] = jnp.where(cols == 0, cls, jnp.where(cols == 1, loss, 0.0))


def dann_forward(params, x, alpha=1.0, source=True):
    """Returns (class_output (N,1), domain_loss scalar).  alpha only scales the
    reversed gradient (backward pass) -> unused in forward."""
    n, cin, h, w = x.shape
    assert (cin, h, w) == (CIN, H, W) and 1 <= n <= NPAD

    # im2col for conv1: rows ordered (h, n), cols ordered (ci, w); pad batch to 8.
    x1 = jnp.transpose(x, (2, 0, 1, 3))                          # (H, N, CIN, W)
    x1 = jnp.pad(x1, ((0, 0), (0, NPAD - n), (0, 0), (0, 0)))
    x1 = x1.reshape(H * NPAD, CIN * W).astype(jnp.bfloat16)

    w1 = params["conv1_w"].reshape(C1, CIN * W).T.astype(jnp.bfloat16)   # (270,64)
    b1 = params["conv1_b"].reshape(1, C1).astype(jnp.float32)
    w2t = jnp.transpose(params["conv2_w"][..., 0], (2, 1, 0)).astype(jnp.bfloat16)  # (90,64,128)
    b2 = params["conv2_b"].reshape(1, C2).astype(jnp.float32)

    # fused heads: hidden (128, 96+64), block-structured output (160, 128).
    wh1 = jnp.concatenate([params["c_fc1_w"].T, params["d_fc1_w"].T],
                          axis=1).astype(jnp.bfloat16)           # (128, 160)
    bh1 = jnp.concatenate([params["c_fc1_b"], params["d_fc1_b"]]
                          ).reshape(1, HC + HD).astype(jnp.float32)
    wout = jnp.zeros((HC + HD, OUTW), jnp.float32)
    wout = wout.at[:HC, 0].set(params["c_fc2_w"][0])
    wout = wout.at[HC:, 1].set(params["d_fc2_w"][0])
    wout = wout.astype(jnp.bfloat16)
    bout = jnp.zeros((1, OUTW), jnp.float32)
    bout = bout.at[0, 0].set(params["c_fc2_b"][0])
    bout = bout.at[0, 1].set(params["d_fc2_b"][0])

    # runtime scalars in SMEM: (n_valid, source_flag) -> no per-variant recompile.
    src = jnp.asarray(source, dtype=jnp.int32).reshape(1)
    scal = jnp.concatenate([jnp.full((1,), n, jnp.int32), src])

    out = pl.pallas_call(
        dann_kernel,
        out_shape=jax.ShapeDtypeStruct((NPAD, OUTW), jnp.float32),
        in_specs=[pl.BlockSpec(memory_space=pltpu.MemorySpace.SMEM)]
                 + [pl.BlockSpec(memory_space=pltpu.MemorySpace.VMEM)] * 9,
        out_specs=pl.BlockSpec(memory_space=pltpu.MemorySpace.VMEM),
        scratch_shapes=[pltpu.VMEM((H * NPAD, C1), jnp.float32)],
    )(scal, x1, w1, b1, w2t, b2, wh1, bh1, wout, bout)
    return out[:n, 0:1], out[0, 1]


def init_params(key):
    """Deterministic PyTorch-default-style init: U(-1/sqrt(fan_in), +1/sqrt(fan_in))."""
    def u(k, shape, fan_in):
        b = 1.0 / float(np.sqrt(fan_in))
        return jax.random.uniform(k, shape, jnp.float32, -b, b)

    ks = jax.random.split(key, 12)
    return {
        "conv1_w": u(ks[0], (C1, CIN, 1, W), CIN * 1 * W),
        "conv1_b": u(ks[1], (C1,), CIN * 1 * W),
        "conv2_w": u(ks[2], (C2, C1, H, 1), C1 * H * 1),
        "conv2_b": u(ks[3], (C2,), C1 * H * 1),
        "c_fc1_w": u(ks[4], (HC, C2), C2),
        "c_fc1_b": u(ks[5], (HC,), C2),
        "c_fc2_w": u(ks[6], (1, HC), HC),
        "c_fc2_b": u(ks[7], (1,), HC),
        "d_fc1_w": u(ks[8], (HD, C2), C2),
        "d_fc1_b": u(ks[9], (HD,), C2),
        "d_fc2_w": u(ks[10], (1, HD), HD),
        "d_fc2_b": u(ks[11], (1,), HD),
    }


def reference_forward(p, x, source=True):
    """Pure-JAX f32 reference mirroring the PyTorch forward (eval mode)."""
    P = jax.lax.Precision.HIGHEST
    y = jax.lax.conv_general_dilated(
        x, p["conv1_w"], (1, 1), "VALID",
        dimension_numbers=("NCHW", "OIHW", "NCHW"), precision=P)
    y = jnp.maximum(y + p["conv1_b"][None, :, None, None], 0.0)
    y = jax.lax.conv_general_dilated(
        y, p["conv2_w"], (1, 1), "VALID",
        dimension_numbers=("NCHW", "OIHW", "NCHW"), precision=P)
    y = jnp.maximum(y + p["conv2_b"][None, :, None, None], 0.0)
    feat = y.reshape(y.shape[0], -1)                             # (N, 128)
    hc = jnp.maximum(jnp.dot(feat, p["c_fc1_w"].T, precision=P) + p["c_fc1_b"], 0.0)
    cls = jax.nn.sigmoid(jnp.dot(hc, p["c_fc2_w"].T, precision=P) + p["c_fc2_b"])
    hd = jnp.maximum(jnp.dot(feat, p["d_fc1_w"].T, precision=P) + p["d_fc1_b"], 0.0)
    pd = jax.nn.sigmoid(jnp.dot(hd, p["d_fc2_w"].T, precision=P) + p["d_fc2_b"])[:, 0]
    yl = 1.0 if source else 0.0
    bce = -(yl * jnp.log(pd) + (1.0 - yl) * jnp.log(1.0 - pd))
    return cls, jnp.mean(bce)


if __name__ == "__main__":
    key = jax.random.PRNGKey(0)
    pkey, xkey = jax.random.split(key)
    params = init_params(pkey)

    # Module geometry forces (N, 3, 90, 90); keep the batch small.
    x = jax.random.normal(xkey, (2, CIN, H, W), dtype=jnp.float32)

    # source batch
    class_out, domain_loss = dann_forward(params, x, alpha=1.0, source=True)
    class_out = jax.block_until_ready(class_out)
    domain_loss = jax.block_until_ready(domain_loss)
    ref_cls, ref_loss = reference_forward(params, x, source=True)
    np.testing.assert_allclose(np.asarray(class_out), np.asarray(ref_cls),
                               rtol=2e-2, atol=2e-3)
    np.testing.assert_allclose(float(domain_loss), float(ref_loss),
                               rtol=2e-2, atol=2e-3)

    # target batch (same kernel, source flag is a runtime SMEM scalar)
    _, domain_loss_t = dann_forward(params, x, alpha=1.0, source=False)
    domain_loss_t = jax.block_until_ready(domain_loss_t)
    _, ref_loss_t = reference_forward(params, x, source=False)
    np.testing.assert_allclose(float(domain_loss_t), float(ref_loss_t),
                               rtol=2e-2, atol=2e-3)

    # TODO(synk): Dropout / ReverseLayerF gradient reversal are training/backward
    # behaviors with no forward-pass compute; forward implements eval semantics.
    print("KERNEL_OK")
</pallas_src>

<mosaic_0001>
module attributes {stable_mosaic.version = 11 : i64} {
  func.func @dann_kernel(%arg0: memref<2xi32, #tpu.memory_space<smem>>, %arg1: memref<720x270xbf16, #tpu.memory_space<vmem>>, %arg2: memref<270x64xbf16, #tpu.memory_space<vmem>>, %arg3: memref<1x64xf32, #tpu.memory_space<vmem>>, %arg4: memref<90x64x128xbf16, #tpu.memory_space<vmem>>, %arg5: memref<1x128xf32, #tpu.memory_space<vmem>>, %arg6: memref<128x160xbf16, #tpu.memory_space<vmem>>, %arg7: memref<1x160xf32, #tpu.memory_space<vmem>>, %arg8: memref<160x128xbf16, #tpu.memory_space<vmem>>, %arg9: memref<1x128xf32, #tpu.memory_space<vmem>>, %arg10: memref<8x128xf32, #tpu.memory_space<vmem>>, %arg11: memref<720x64xf32, #tpu.memory_space<vmem>>) attributes {dimension_semantics = [], scalar_prefetch = 0 : i64, scratch_operands = 1 : i64, tpu.core_type = #tpu.core_type<tc>} {
    %c0 = arith.constant 0 : index
    %c0_0 = arith.constant 0 : index
    %0 = vector.load %arg1[%c0, %c0_0] : memref<720x270xbf16, #tpu.memory_space<vmem>>, vector<720x270xbf16>
    %c0_1 = arith.constant 0 : index
    %c0_2 = arith.constant 0 : index
    %1 = vector.load %arg2[%c0_1, %c0_2] : memref<270x64xbf16, #tpu.memory_space<vmem>>, vector<270x64xbf16>
    %cst = arith.constant dense<0.000000e+00> : vector<720x64xf32>
    %2 = tpu.matmul %0, %1, %cst {dimension_numbers = #tpu.dot_dimension_numbers<[1], [0], [0], [1], [0, 0, 1, 1], [], []>} : vector<720x270xbf16>, vector<270x64xbf16>, vector<720x64xf32> -> vector<720x64xf32>
    %c0_3 = arith.constant 0 : index
    %c0_4 = arith.constant 0 : index
    %3 = vector.load %arg3[%c0_3, %c0_4] : memref<1x64xf32, #tpu.memory_space<vmem>>, vector<1x64xf32>
    %4 = vector.broadcast %3 : vector<1x64xf32> to vector<720x64xf32>
    %5 = arith.addf %2, %4 : vector<720x64xf32>
    %cst_5 = arith.constant 0.000000e+00 : f32
    %6 = vector.broadcast %cst_5 : f32 to vector<720x64xf32>
    %7 = arith.maximumf %5, %6 : vector<720x64xf32>
    %c0_6 = arith.constant 0 : index
    %c0_7 = arith.constant 0 : index
    %8 = vector.load %arg11[%c0_6, %c0_7] : memref<720x64xf32, #tpu.memory_space<vmem>>, vector<720x64xf32>
    tpu.vector_store %arg11[%c0_6, %c0_7], %7 {strides = array<i32>} : memref<720x64xf32, #tpu.memory_space<vmem>>, vector<720x64xf32>,
    %cst_8 = arith.constant 0.000000e+00 : f32
    %9 = vector.broadcast %cst_8 : f32 to vector<8x128xf32>
    %cst_9 = arith.constant 0.000000e+00 : f32
    %10 = vector.broadcast %cst_9 : f32 to vector<8x128xf32>
    %cst_10 = arith.constant 0.000000e+00 : f32
    %11 = vector.broadcast %cst_10 : f32 to vector<8x128xf32>
    %cst_11 = arith.constant 0.000000e+00 : f32
    %12 = vector.broadcast %cst_11 : f32 to vector<8x128xf32>
    %cst_12 = arith.constant 0.000000e+00 : f32
    %13 = vector.broadcast %cst_12 : f32 to vector<8x128xf32>
    %cst_13 = arith.constant 0.000000e+00 : f32
    %14 = vector.broadcast %cst_13 : f32 to vector<8x128xf32>
    %c0_14 = arith.constant 0 : index
    %c0_15 = arith.constant 0 : index
    %15 = vector.load %arg11[%c0_14, %c0_15] : memref<720x64xf32, #tpu.memory_space<vmem>>, vector<8x64xf32>
    %16 = arith.truncf %15 : vector<8x64xf32> to vector<8x64xbf16>
    %c0_16 = arith.constant 0 : index
    %c0_17 = arith.constant 0 : index
    %c0_18 = arith.constant 0 : index
    %17 = vector.load %arg4[%c0_16, %c0_17, %c0_18] : memref<90x64x128xbf16, #tpu.memory_space<vmem>>, vector<1x64x128xbf16>
    %18 = vector.shape_cast %17 : vector<1x64x128xbf16> to vector<64x128xbf16>
    %cst_19 = arith.constant dense<0.000000e+00> : vector<8x128xf32>
    %19 = tpu.matmul %16, %18, %cst_19 {dimension_numbers = #tpu.dot_dimension_numbers<[1], [0], [0], [1], [0, 0, 1, 1], [], []>} : vector<8x64xbf16>, vector<64x128xbf16>, vector<8x128xf32> -> vector<8x128xf32>
    %20 = arith.addf %9, %19 : vector<8x128xf32>
    %c8 = arith.constant 8 : index
    %c0_20 = arith.constant 0 : index
    %21 = vector.load %arg11[%c8, %c0_20] : memref<720x64xf32, #tpu.memory_space<vmem>>, vector<8x64xf32>
    %22 = arith.truncf %21 : vector<8x64xf32> to vector<8x64xbf16>
    %c1 = arith.constant 1 : index
    %c0_21 = arith.constant 0 : index
    %c0_22 = arith.constant 0 : index
    %23 = vector.load %arg4[%c1, %c0_21, %c0_22] : memref<90x64x128xbf16, #tpu.memory_space<vmem>>, vector<1x64x128xbf16>
    %24 = vector.shape_cast %23 : vector<1x64x128xbf16> to vector<64x128xbf16>
    %cst_23 = arith.constant dense<0.000000e+00> : vector<8x128xf32>
    %25 = tpu.matmul %22, %24, %cst_23 {dimension_numbers = #tpu.dot_dimension_numbers<[1], [0], [0], [1], [0, 0, 1, 1], [], []>} : vector<8x64xbf16>, vector<64x128xbf16>, vector<8x128xf32> -> vector<8x128xf32>
    %26 = arith.addf %10, %25 : vector<8x128xf32>
    %c16 = arith.constant 16 : index
    %c0_24 = arith.constant 0 : index
    %27 = vector.load %arg11[%c16, %c0_24] : memref<720x64xf32, #tpu.memory_space<vmem>>, vector<8x64xf32>
    %28 = arith.truncf %27 : vector<8x64xf32> to vector<8x64xbf16>
    %c2 = arith.constant 2 : index
    %c0_25 = arith.constant 0 : index
    %c0_26 = arith.constant 0 : index
    %29 = vector.load %arg4[%c2, %c0_25, %c0_26] : memref<90x64x128xbf16, #tpu.memory_space<vmem>>, vector<1x64x128xbf16>
    %30 = vector.shape_cast %29 : vector<1x64x128xbf16> to vector<64x128xbf16>
    %cst_27 = arith.constant dense<0.000000e+00> : vector<8x128xf32>
    %31 = tpu.matmul %28, %30, %cst_27 {dimension_numbers = #tpu.dot_dimension_numbers<[1], [0], [0], [1], [0, 0, 1, 1], [], []>} : vector<8x64xbf16>, vector<64x128xbf16>, vector<8x128xf32> -> vector<8x128xf32>
    %32 = arith.addf %11, %31 : vector<8x128xf32>
    %c24 = arith.constant 24 : index
    %c0_28 = arith.constant 0 : index
    %33 = vector.load %arg11[%c24, %c0_28] : memref<720x64xf32, #tpu.memory_space<vmem>>, vector<8x64xf32>
    %34 = arith.truncf %33 : vector<8x64xf32> to vector<8x64xbf16>
    %c3 = arith.constant 3 : index
    %c0_29 = arith.constant 0 : index
    %c0_30 = arith.constant 0 : index
    %35 = vector.load %arg4[%c3, %c0_29, %c0_30] : memref<90x64x128xbf16, #tpu.memory_space<vmem>>, vector<1x64x128xbf16>
    %36 = vector.shape_cast %35 : vector<1x64x128xbf16> to vector<64x128xbf16>
    %cst_31 = arith.constant dense<0.000000e+00> : vector<8x128xf32>
    %37 = tpu.matmul %34, %36, %cst_31 {dimension_numbers = #tpu.dot_dimension_numbers<[1], [0], [0], [1], [0, 0, 1, 1], [], []>} : vector<8x64xbf16>, vector<64x128xbf16>, vector<8x128xf32> -> vector<8x128xf32>
    %38 = arith.addf %12, %37 : vector<8x128xf32>
    %c32 = arith.constant 32 : index
    %c0_32 = arith.constant 0 : index
    %39 = vector.load %arg11[%c32, %c0_32] : memref<720x64xf32, #tpu.memory_space<vmem>>, vector<8x64xf32>
    %40 = arith.truncf %39 : vector<8x64xf32> to vector<8x64xbf16>
    %c4 = arith.constant 4 : index
    %c0_33 = arith.constant 0 : index
    %c0_34 = arith.constant 0 : index
    %41 = vector.load %arg4[%c4, %c0_33, %c0_34] : memref<90x64x128xbf16, #tpu.memory_space<vmem>>, vector<1x64x128xbf16>
    %42 = vector.shape_cast %41 : vector<1x64x128xbf16> to vector<64x128xbf16>
    %cst_35 = arith.constant dense<0.000000e+00> : vector<8x128xf32>
    %43 = tpu.matmul %40, %42, %cst_35 {dimension_numbers = #tpu.dot_dimension_numbers<[1], [0], [0], [1], [0, 0, 1, 1], [], []>} : vector<8x64xbf16>, vector<64x128xbf16>, vector<8x128xf32> -> vector<8x128xf32>
    %44 = arith.addf %13, %43 : vector<8x128xf32>
    %c40 = arith.constant 40 : index
    %c0_36 = arith.constant 0 : index
    %45 = vector.load %arg11[%c40, %c0_36] : memref<720x64xf32, #tpu.memory_space<vmem>>, vector<8x64xf32>
    %46 = arith.truncf %45 : vector<8x64xf32> to vector<8x64xbf16>
    %c5 = arith.constant 5 : index
    %c0_37 = arith.constant 0 : index
    %c0_38 = arith.constant 0 : index
    %47 = vector.load %arg4[%c5, %c0_37, %c0_38] : memref<90x64x128xbf16, #tpu.memory_space<vmem>>, vector<1x64x128xbf16>
    %48 = vector.shape_cast %47 : vector<1x64x128xbf16> to vector<64x128xbf16>
    %cst_39 = arith.constant dense<0.000000e+00> : vector<8x128xf32>
    %49 = tpu.matmul %46, %48, %cst_39 {dimension_numbers = #tpu.dot_dimension_numbers<[1], [0], [0], [1], [0, 0, 1, 1], [], []>} : vector<8x64xbf16>, vector<64x128xbf16>, vector<8x128xf32> -> vector<8x128xf32>
    %50 = arith.addf %14, %49 : vector<8x128xf32>
    %c48 = arith.constant 48 : index
    %c0_40 = arith.constant 0 : index
    %51 = vector.load %arg11[%c48, %c0_40] : memref<720x64xf32, #tpu.memory_space<vmem>>, vector<8x64xf32>
    %52 = arith.truncf %51 : vector<8x64xf32> to vector<8x64xbf16>
    %c6 = arith.constant 6 : index
    %c0_41 = arith.constant 0 : index
    %c0_42 = arith.constant 0 : index
    %53 = vector.load %arg4[%c6, %c0_41, %c0_42] : memref<90x64x128xbf16, #tpu.memory_space<vmem>>, vector<1x64x128xbf16>
    %54 = vector.shape_cast %53 : vector<1x64x128xbf16> to vector<64x128xbf16>
    %cst_43 = arith.constant dense<0.000000e+00> : vector<8x128xf32>
    %55 = tpu.matmul %52, %54, %cst_43 {dimension_numbers = #tpu.dot_dimension_numbers<[1], [0], [0], [1], [0, 0, 1, 1], [], []>} : vector<8x64xbf16>, vector<64x128xbf16>, vector<8x128xf32> -> vector<8x128xf32>
    %56 = arith.addf %20, %55 : vector<8x128xf32>
    %c56 = arith.constant 56 : index
    %c0_44 = arith.constant 0 : index
    %57 = vector.load %arg11[%c56, %c0_44] : memref<720x64xf32, #tpu.memory_space<vmem>>, vector<8x64xf32>
    %58 = arith.truncf %57 : vector<8x64xf32> to vector<8x64xbf16>
    %c7 = arith.constant 7 : index
    %c0_45 = arith.constant 0 : index
    %c0_46 = arith.constant 0 : index
    %59 = vector.load %arg4[%c7, %c0_45, %c0_46] : memref<90x64x128xbf16, #tpu.memory_space<vmem>>, vector<1x64x128xbf16>
    %60 = vector.shape_cast %59 : vector<1x64x128xbf16> to vector<64x128xbf16>
    %cst_47 = arith.constant dense<0.000000e+00> : vector<8x128xf32>
    %61 = tpu.matmul %58, %60, %cst_47 {dimension_numbers = #tpu.dot_dimension_numbers<[1], [0], [0], [1], [0, 0, 1, 1], [], []>} : vector<8x64xbf16>, vector<64x128xbf16>, vector<8x128xf32> -> vector<8x128xf32>
    %62 = arith.addf %26, %61 : vector<8x128xf32>
    %c64 = arith.constant 64 : index
    %c0_48 = arith.constant 0 : index
    %63 = vector.load %arg11[%c64, %c0_48] : memref<720x64xf32, #tpu.memory_space<vmem>>, vector<8x64xf32>
    %64 = arith.truncf %63 : vector<8x64xf32> to vector<8x64xbf16>
    %c8_49 = arith.constant 8 : index
    %c0_50 = arith.constant 0 : index
    %c0_51 = arith.constant 0 : index
    %65 = vector.load %arg4[%c8_49, %c0_50, %c0_51] : memref<90x64x128xbf16, #tpu.memory_space<vmem>>, vector<1x64x128xbf16>
    %66 = vector.shape_cast %65 : vector<1x64x128xbf16> to vector<64x128xbf16>
    %cst_52 = arith.constant dense<0.000000e+00> : vector<8x128xf32>
    %67 = tpu.matmul %64, %66, %cst_52 {dimension_numbers = #tpu.dot_dimension_numbers<[1], [0], [0], [1], [0, 0, 1, 1], [], []>} : vector<8x64xbf16>, vector<64x128xbf16>, vector<8x128xf32> -> vector<8x128xf32>
    %68 = arith.addf %32, %67 : vector<8x128xf32>
    %c72 = arith.constant 72 : index
    %c0_53 = arith.constant 0 : index
    %69 = vector.load %arg11[%c72, %c0_53] : memref<720x64xf32, #tpu.memory_space<vmem>>, vector<8x64xf32>
    %70 = arith.truncf %69 : vector<8x64xf32> to vector<8x64xbf16>
    %c9 = arith.constant 9 : index
    %c0_54 = arith.constant 0 : index
    %c0_55 = arith.constant 0 : index
    %71 = vector.load %arg4[%c9, %c0_54, %c0_55] : memref<90x64x128xbf16, #tpu.memory_space<vmem>>, vector<1x64x128xbf16>
    %72 = vector.shape_cast %71 : vector<1x64x128xbf16> to vector<64x128xbf16>
    %cst_56 = arith.constant dense<0.000000e+00> : vector<8x128xf32>
    %73 = tpu.matmul %70, %72, %cst_56 {dimension_numbers = #tpu.dot_dimension_numbers<[1], [0], [0], [1], [0, 0, 1, 1], [], []>} : vector<8x64xbf16>, vector<64x128xbf16>, vector<8x128xf32> -> vector<8x128xf32>
    %74 = arith.addf %38, %73 : vector<8x128xf32>
    %c80 = arith.constant 80 : index
    %c0_57 = arith.constant 0 : index
    %75 = vector.load %arg11[%c80, %c0_57] : memref<720x64xf32, #tpu.memory_space<vmem>>, vector<8x64xf32>
    %76 = arith.truncf %75 : vector<8x64xf32> to vector<8x64xbf16>
    %c10 = arith.constant 10 : index
    %c0_58 = arith.constant 0 : index
    %c0_59 = arith.constant 0 : index
    %77 = vector.load %arg4[%c10, %c0_58, %c0_59] : memref<90x64x128xbf16, #tpu.memory_space<vmem>>, vector<1x64x128xbf16>
    %78 = vector.shape_cast %77 : vector<1x64x128xbf16> to vector<64x128xbf16>
    %cst_60 = arith.constant dense<0.000000e+00> : vector<8x128xf32>
    %79 = tpu.matmul %76, %78, %cst_60 {dimension_numbers = #tpu.dot_dimension_numbers<[1], [0], [0], [1], [0, 0, 1, 1], [], []>} : vector<8x64xbf16>, vector<64x128xbf16>, vector<8x128xf32> -> vector<8x128xf32>
    %80 = arith.addf %44, %79 : vector<8x128xf32>
    %c88 = arith.constant 88 : index
    %c0_61 = arith.constant 0 : index
    %81 = vector.load %arg11[%c88, %c0_61] : memref<720x64xf32, #tpu.memory_space<vmem>>, vector<8x64xf32>
    %82 = arith.truncf %81 : vector<8x64xf32> to vector<8x64xbf16>
    %c11 = arith.constant 11 : index
    %c0_62 = arith.constant 0 : index
    %c0_63 = arith.constant 0 : index
    %83 = vector.load %arg4[%c11, %c0_62, %c0_63] : memref<90x64x128xbf16, #tpu.memory_space<vmem>>, vector<1x64x128xbf16>
    %84 = vector.shape_cast %83 : vector<1x64x128xbf16> to vector<64x128xbf16>
    %cst_64 = arith.constant dense<0.000000e+00> : vector<8x128xf32>
    %85 = tpu.matmul %82, %84, %cst_64 {dimension_numbers = #tpu.dot_dimension_numbers<[1], [0], [0], [1], [0, 0, 1, 1], [], []>} : vector<8x64xbf16>, vector<64x128xbf16>, vector<8x128xf32> -> vector<8x128xf32>
    %86 = arith.addf %50, %85 : vector<8x128xf32>
    %c96 = arith.constant 96 : index
    %c0_65 = arith.constant 0 : index
    %87 = vector.load %arg11[%c96, %c0_65] : memref<720x64xf32, #tpu.memory_space<vmem>>, vector<8x64xf32>
    %88 = arith.truncf %87 : vector<8x64xf32> to vector<8x64xbf16>
    %c12 = arith.constant 12 : index
    %c0_66 = arith.constant 0 : index
    %c0_67 = arith.constant 0 : index
    %89 = vector.load %arg4[%c12, %c0_66, %c0_67] : memref<90x64x128xbf16, #tpu.memory_space<vmem>>, vector<1x64x128xbf16>
    %90 = vector.shape_cast %89 : vector<1x64x128xbf16> to vector<64x128xbf16>
    %cst_68 = arith.constant dense<0.000000e+00> : vector<8x128xf32>
    %91 = tpu.matmul %88, %90, %cst_68 {dimension_numbers = #tpu.dot_dimension_numbers<[1], [0], [0], [1], [0, 0, 1, 1], [], []>} : vector<8x64xbf16>, vector<64x128xbf16>, vector<8x128xf32> -> vector<8x128xf32>
    %92 = arith.addf %56, %91 : vector<8x128xf32>
    %c104 = arith.constant 104 : index
    %c0_69 = arith.constant 0 : index
    %93 = vector.load %arg11[%c104, %c0_69] : memref<720x64xf32, #tpu.memory_space<vmem>>, vector<8x64xf32>
    %94 = arith.truncf %93 : vector<8x64xf32> to vector<8x64xbf16>
    %c13 = arith.constant 13 : index
    %c0_70 = arith.constant 0 : index
    %c0_71 = arith.constant 0 : index
    %95 = vector.load %arg4[%c13, %c0_70, %c0_71] : memref<90x64x128xbf16, #tpu.memory_space<vmem>>, vector<1x64x128xbf16>
    %96 = vector.shape_cast %95 : vector<1x64x128xbf16> to vector<64x128xbf16>
    %cst_72 = arith.constant dense<0.000000e+00> : vector<8x128xf32>
    %97 = tpu.matmul %94, %96, %cst_72 {dimension_numbers = #tpu.dot_dimension_numbers<[1], [0], [0], [1], [0, 0, 1, 1], [], []>} : vector<8x64xbf16>, vector<64x128xbf16>, vector<8x128xf32> -> vector<8x128xf32>
    %98 = arith.addf %62, %97 : vector<8x128xf32>
    %c112 = arith.constant 112 : index
    %c0_73 = arith.constant 0 : index
    %99 = vector.load %arg11[%c112, %c0_73] : memref<720x64xf32, #tpu.memory_space<vmem>>, vector<8x64xf32>
    %100 = arith.truncf %99 : vector<8x64xf32> to vector<8x64xbf16>
    %c14 = arith.constant 14 : index
    %c0_74 = arith.constant 0 : index
    %c0_75 = arith.constant 0 : index
    %101 = vector.load %arg4[%c14, %c0_74, %c0_75] : memref<90x64x128xbf16, #tpu.memory_space<vmem>>, vector<1x64x128xbf16>
    %102 = vector.shape_cast %101 : vector<1x64x128xbf16> to vector<64x128xbf16>
    %cst_76 = arith.constant dense<0.000000e+00> : vector<8x128xf32>
    %103 = tpu.matmul %100, %102, %cst_76 {dimension_numbers = #tpu.dot_dimension_numbers<[1], [0], [0], [1], [0, 0, 1, 1], [], []>} : vector<8x64xbf16>, vector<64x128xbf16>, vector<8x128xf32> -> vector<8x128xf32>
    %104 = arith.addf %68, %103 : vector<8x128xf32>
    %c120 = arith.constant 120 : index
    %c0_77 = arith.constant 0 : index
    %105 = vector.load %arg11[%c120, %c0_77] : memref<720x64xf32, #tpu.memory_space<vmem>>, vector<8x64xf32>
    %106 = arith.truncf %105 : vector<8x64xf32> to vector<8x64xbf16>
    %c15 = arith.constant 15 : index
    %c0_78 = arith.constant 0 : index
    %c0_79 = arith.constant 0 : index
    %107 = vector.load %arg4[%c15, %c0_78, %c0_79] : memref<90x64x128xbf16, #tpu.memory_space<vmem>>, vector<1x64x128xbf16>
    %108 = vector.shape_cast %107 : vector<1x64x128xbf16> to vector<64x128xbf16>
    %cst_80 = arith.constant dense<0.000000e+00> : vector<8x128xf32>
    %109 = tpu.matmul %106, %108, %cst_80 {dimension_numbers = #tpu.dot_dimension_numbers<[1], [0], [0], [1], [0, 0, 1, 1], [], []>} : vector<8x64xbf16>, vector<64x128xbf16>, vector<8x128xf32> -> vector<8x128xf32>
    %110 = arith.addf %74, %109 : vector<8x128xf32>
    %c128 = arith.constant 128 : index
    %c0_81 = arith.constant 0 : index
    %111 = vector.load %arg11[%c128, %c0_81] : memref<720x64xf32, #tpu.memory_space<vmem>>, vector<8x64xf32>
    %112 = arith.truncf %111 : vector<8x64xf32> to vector<8x64xbf16>
    %c16_82 = arith.constant 16 : index
    %c0_83 = arith.constant 0 : index
    %c0_84 = arith.constant 0 : index
    %113 = vector.load %arg4[%c16_82, %c0_83, %c0_84] : memref<90x64x128xbf16, #tpu.memory_space<vmem>>, vector<1x64x128xbf16>
    %114 = vector.shape_cast %113 : vector<1x64x128xbf16> to vector<64x128xbf16>
    %cst_85 = arith.constant dense<0.000000e+00> : vector<8x128xf32>
    %115 = tpu.matmul %112, %114, %cst_85 {dimension_numbers = #tpu.dot_dimension_numbers<[1], [0], [0], [1], [0, 0, 1, 1], [], []>} : vector<8x64xbf16>, vector<64x128xbf16>, vector<8x128xf32> -> vector<8x128xf32>
    %116 = arith.addf %80, %115 : vector<8x128xf32>
    %c136 = arith.constant 136 : index
    %c0_86 = arith.constant 0 : index
    %117 = vector.load %arg11[%c136, %c0_86] : memref<720x64xf32, #tpu.memory_space<vmem>>, vector<8x64xf32>
    %118 = arith.truncf %117 : vector<8x64xf32> to vector<8x64xbf16>
    %c17 = arith.constant 17 : index
    %c0_87 = arith.constant 0 : index
    %c0_88 = arith.constant 0 : index
    %119 = vector.load %arg4[%c17, %c0_87, %c0_88] : memref<90x64x128xbf16, #tpu.memory_space<vmem>>, vector<1x64x128xbf16>
    %120 = vector.shape_cast %119 : vector<1x64x128xbf16> to vector<64x128xbf16>
    %cst_89 = arith.constant dense<0.000000e+00> : vector<8x128xf32>
    %121 = tpu.matmul %118, %120, %cst_89 {dimension_numbers = #tpu.dot_dimension_numbers<[1], [0], [0], [1], [0, 0, 1, 1], [], []>} : vector<8x64xbf16>, vector<64x128xbf16>, vector<8x128xf32> -> vector<8x128xf32>
    %122 = arith.addf %86, %121 : vector<8x128xf32>
    %c144 = arith.constant 144 : index
    %c0_90 = arith.constant 0 : index
    %123 = vector.load %arg11[%c144, %c0_90] : memref<720x64xf32, #tpu.memory_space<vmem>>, vector<8x64xf32>
    %124 = arith.truncf %123 : vector<8x64xf32> to vector<8x64xbf16>
    %c18 = arith.constant 18 : index
    %c0_91 = arith.constant 0 : index
    %c0_92 = arith.constant 0 : index
    %125 = vector.load %arg4[%c18, %c0_91, %c0_92] : memref<90x64x128xbf16, #tpu.memory_space<vmem>>, vector<1x64x128xbf16>
    %126 = vector.shape_cast %125 : vector<1x64x128xbf16> to vector<64x128xbf16>
    %cst_93 = arith.constant dense<0.000000e+00> : vector<8x128xf32>
    %127 = tpu.matmul %124, %126, %cst_93 {dimension_numbers = #tpu.dot_dimension_numbers<[1], [0], [0], [1], [0, 0, 1, 1], [], []>} : vector<8x64xbf16>, vector<64x128xbf16>, vector<8x128xf32> -> vector<8x128xf32>
    %128 = arith.addf %92, %127 : vector<8x128xf32>
    %c152 = arith.constant 152 : index
    %c0_94 = arith.constant 0 : index
    %129 = vector.load %arg11[%c152, %c0_94] : memref<720x64xf32, #tpu.memory_space<vmem>>, vector<8x64xf32>
    %130 = arith.truncf %129 : vector<8x64xf32> to vector<8x64xbf16>
    %c19 = arith.constant 19 : index
    %c0_95 = arith.constant 0 : index
    %c0_96 = arith.constant 0 : index
    %131 = vector.load %arg4[%c19, %c0_95, %c0_96] : memref<90x64x128xbf16, #tpu.memory_space<vmem>>, vector<1x64x128xbf16>
    %132 = vector.shape_cast %131 : vector<1x64x128xbf16> to vector<64x128xbf16>
    %cst_97 = arith.constant dense<0.000000e+00> : vector<8x128xf32>
    %133 = tpu.matmul %130, %132, %cst_97 {dimension_numbers = #tpu.dot_dimension_numbers<[1], [0], [0], [1], [0, 0, 1, 1], [], []>} : vector<8x64xbf16>, vector<64x128xbf16>, vector<8x128xf32> -> vector<8x128xf32>
    %134 = arith.addf %98, %133 : vector<8x128xf32>
    %c160 = arith.constant 160 : index
    %c0_98 = arith.constant 0 : index
    %135 = vector.load %arg11[%c160, %c0_98] : memref<720x64xf32, #tpu.memory_space<vmem>>, vector<8x64xf32>
    %136 = arith.truncf %135 : vector<8x64xf32> to vector<8x64xbf16>
    %c20 = arith.constant 20 : index
    %c0_99 = arith.constant 0 : index
    %c0_100 = arith.constant 0 : index
    %137 = vector.load %arg4[%c20, %c0_99, %c0_100] : memref<90x64x128xbf16, #tpu.memory_space<vmem>>, vector<1x64x128xbf16>
    %138 = vector.shape_cast %137 : vector<1x64x128xbf16> to vector<64x128xbf16>
    %cst_101 = arith.constant dense<0.000000e+00> : vector<8x128xf32>
    %139 = tpu.matmul %136, %138, %cst_101 {dimension_numbers = #tpu.dot_dimension_numbers<[1], [0], [0], [1], [0, 0, 1, 1], [], []>} : vector<8x64xbf16>, vector<64x128xbf16>, vector<8x128xf32> -> vector<8x128xf32>
    %140 = arith.addf %104, %139 : vector<8x128xf32>
    %c168 = arith.constant 168 : index
    %c0_102 = arith.constant 0 : index
    %141 = vector.load %arg11[%c168, %c0_102] : memref<720x64xf32, #tpu.memory_space<vmem>>, vector<8x64xf32>
    %142 = arith.truncf %141 : vector<8x64xf32> to vector<8x64xbf16>
    %c21 = arith.constant 21 : index
    %c0_103 = arith.constant 0 : index
    %c0_104 = arith.constant 0 : index
    %143 = vector.load %arg4[%c21, %c0_103, %c0_104] : memref<90x64x128xbf16, #tpu.memory_space<vmem>>, vector<1x64x128xbf16>
    %144 = vector.shape_cast %143 : vector<1x64x128xbf16> to vector<64x128xbf16>
    %cst_105 = arith.constant dense<0.000000e+00> : vector<8x128xf32>
    %145 = tpu.matmul %142, %144, %cst_105 {dimension_numbers = #tpu.dot_dimension_numbers<[1], [0], [0], [1], [0, 0, 1, 1], [], []>} : vector<8x64xbf16>, vector<64x128xbf16>, vector<8x128xf32> -> vector<8x128xf32>
    %146 = arith.addf %110, %145 : vector<8x128xf32>
    %c176 = arith.constant 176 : index
    %c0_106 = arith.constant 0 : index
    %147 = vector.load %arg11[%c176, %c0_106] : memref<720x64xf32, #tpu.memory_space<vmem>>, vector<8x64xf32>
    %148 = arith.truncf %147 : vector<8x64xf32> to vector<8x64xbf16>
    %c22 = arith.constant 22 : index
    %c0_107 = arith.constant 0 : index
    %c0_108 = arith.constant 0 : index
    %149 = vector.load %arg4[%c22, %c0_107, %c0_108] : memref<90x64x128xbf16, #tpu.memory_space<vmem>>, vector<1x64x128xbf16>
    %150 = vector.shape_cast %149 : vector<1x64x128xbf16> to vector<64x128xbf16>
    %cst_109 = arith.constant dense<0.000000e+00> : vector<8x128xf32>
    %151 = tpu.matmul %148, %150, %cst_109 {dimension_numbers = #tpu.dot_dimension_numbers<[1], [0], [0], [1], [0, 0, 1, 1], [], []>} : vector<8x64xbf16>, vector<64x128xbf16>, vector<8x128xf32> -> vector<8x128xf32>
    %152 = arith.addf %116, %151 : vector<8x128xf32>
    %c184 = arith.constant 184 : index
    %c0_110 = arith.constant 0 : index
    %153 = vector.load %arg11[%c184, %c0_110] : memref<720x64xf32, #tpu.memory_space<vmem>>, vector<8x64xf32>
    %154 = arith.truncf %153 : vector<8x64xf32> to vector<8x64xbf16>
    %c23 = arith.constant 23 : index
    %c0_111 = arith.constant 0 : index
    %c0_112 = arith.constant 0 : index
    %155 = vector.load %arg4[%c23, %c0_111, %c0_112] : memref<90x64x128xbf16, #tpu.memory_space<vmem>>, vector<1x64x128xbf16>
    %156 = vector.shape_cast %155 : vector<1x64x128xbf16> to vector<64x128xbf16>
    %cst_113 = arith.constant dense<0.000000e+00> : vector<8x128xf32>
    %157 = tpu.matmul %154, %156, %cst_113 {dimension_numbers = #tpu.dot_dimension_numbers<[1], [0], [0], [1], [0, 0, 1, 1], [], []>} : vector<8x64xbf16>, vector<64x128xbf16>, vector<8x128xf32> -> vector<8x128xf32>
    %158 = arith.addf %122, %157 : vector<8x128xf32>
    %c192 = arith.constant 192 : index
    %c0_114 = arith.constant 0 : index
    %159 = vector.load %arg11[%c192, %c0_114] : memref<720x64xf32, #tpu.memory_space<vmem>>, vector<8x64xf32>
    %160 = arith.truncf %159 : vector<8x64xf32> to vector<8x64xbf16>
    %c24_115 = arith.constant 24 : index
    %c0_116 = arith.constant 0 : index
    %c0_117 = arith.constant 0 : index
    %161 = vector.load %arg4[%c24_115, %c0_116, %c0_117] : memref<90x64x128xbf16, #tpu.memory_space<vmem>>, vector<1x64x128xbf16>
    %162 = vector.shape_cast %161 : vector<1x64x128xbf16> to vector<64x128xbf16>
    %cst_118 = arith.constant dense<0.000000e+00> : vector<8x128xf32>
    %163 = tpu.matmul %160, %162, %cst_118 {dimension_numbers = #tpu.dot_dimension_numbers<[1], [0], [0], [1], [0, 0, 1, 1], [], []>} : vector<8x64xbf16>, vector<64x128xbf16>, vector<8x128xf32> -> vector<8x128xf32>
    %164 = arith.addf %128, %163 : vector<8x128xf32>
    %c200 = arith.constant 200 : index
    %c0_119 = arith.constant 0 : index
    %165 = vector.load %arg11[%c200, %c0_119] : memref<720x64xf32, #tpu.memory_space<vmem>>, vector<8x64xf32>
    %166 = arith.truncf %165 : vector<8x64xf32> to vector<8x64xbf16>
    %c25 = arith.constant 25 : index
    %c0_120 = arith.constant 0 : index
    %c0_121 = arith.constant 0 : index
    %167 = vector.load %arg4[%c25, %c0_120, %c0_121] : memref<90x64x128xbf16, #tpu.memory_space<vmem>>, vector<1x64x128xbf16>
    %168 = vector.shape_cast %167 : vector<1x64x128xbf16> to vector<64x128xbf16>
    %cst_122 = arith.constant dense<0.000000e+00> : vector<8x128xf32>
    %169 = tpu.matmul %166, %168, %cst_122 {dimension_numbers = #tpu.dot_dimension_numbers<[1], [0], [0], [1], [0, 0, 1, 1], [], []>} : vector<8x64xbf16>, vector<64x128xbf16>, vector<8x128xf32> -> vector<8x128xf32>
    %170 = arith.addf %134, %169 : vector<8x128xf32>
    %c208 = arith.constant 208 : index
    %c0_123 = arith.constant 0 : index
    %171 = vector.load %arg11[%c208, %c0_123] : memref<720x64xf32, #tpu.memory_space<vmem>>, vector<8x64xf32>
    %172 = arith.truncf %171 : vector<8x64xf32> to vector<8x64xbf16>
    %c26 = arith.constant 26 : index
    %c0_124 = arith.constant 0 : index
    %c0_125 = arith.constant 0 : index
    %173 = vector.load %arg4[%c26, %c0_124, %c0_125] : memref<90x64x128xbf16, #tpu.memory_space<vmem>>, vector<1x64x128xbf16>
    %174 = vector.shape_cast %173 : vector<1x64x128xbf16> to vector<64x128xbf16>
    %cst_126 = arith.constant dense<0.000000e+00> : vector<8x128xf32>
    %175 = tpu.matmul %172, %174, %cst_126 {dimension_numbers = #tpu.dot_dimension_numbers<[1], [0], [0], [1], [0, 0, 1, 1], [], []>} : vector<8x64xbf16>, vector<64x128xbf16>, vector<8x128xf32> -> vector<8x128xf32>
    %176 = arith.addf %140, %175 : vector<8x128xf32>
    %c216 = arith.constant 216 : index
    %c0_127 = arith.constant 0 : index
    %177 = vector.load %arg11[%c216, %c0_127] : memref<720x64xf32, #tpu.memory_space<vmem>>, vector<8x64xf32>
    %178 = arith.truncf %177 : vector<8x64xf32> to vector<8x64xbf16>
    %c27 = arith.constant 27 : index
    %c0_128 = arith.constant 0 : index
    %c0_129 = arith.constant 0 : index
    %179 = vector.load %arg4[%c27, %c0_128, %c0_129] : memref<90x64x128xbf16, #tpu.memory_space<vmem>>, vector<1x64x128xbf16>
    %180 = vector.shape_cast %179 : vector<1x64x128xbf16> to vector<64x128xbf16>
    %cst_130 = arith.constant dense<0.000000e+00> : vector<8x128xf32>
    %181 = tpu.matmul %178, %180, %cst_130 {dimension_numbers = #tpu.dot_dimension_numbers<[1], [0], [0], [1], [0, 0, 1, 1], [], []>} : vector<8x64xbf16>, vector<64x128xbf16>, vector<8x128xf32> -> vector<8x128xf32>
    %182 = arith.addf %146, %181 : vector<8x128xf32>
    %c224 = arith.constant 224 : index
    %c0_131 = arith.constant 0 : index
    %183 = vector.load %arg11[%c224, %c0_131] : memref<720x64xf32, #tpu.memory_space<vmem>>, vector<8x64xf32>
    %184 = arith.truncf %183 : vector<8x64xf32> to vector<8x64xbf16>
    %c28 = arith.constant 28 : index
    %c0_132 = arith.constant 0 : index
    %c0_133 = arith.constant 0 : index
    %185 = vector.load %arg4[%c28, %c0_132, %c0_133] : memref<90x64x128xbf16, #tpu.memory_space<vmem>>, vector<1x64x128xbf16>
    %186 = vector.shape_cast %185 : vector<1x64x128xbf16> to vector<64x128xbf16>
    %cst_134 = arith.constant dense<0.000000e+00> : vector<8x128xf32>
    %187 = tpu.matmul %184, %186, %cst_134 {dimension_numbers = #tpu.dot_dimension_numbers<[1], [0], [0], [1], [0, 0, 1, 1], [], []>} : vector<8x64xbf16>, vector<64x128xbf16>, vector<8x128xf32> -> vector<8x128xf32>
    %188 = arith.addf %152, %187 : vector<8x128xf32>
    %c232 = arith.constant 232 : index
    %c0_135 = arith.constant 0 : index
    %189 = vector.load %arg11[%c232, %c0_135] : memref<720x64xf32, #tpu.memory_space<vmem>>, vector<8x64xf32>
    %190 = arith.truncf %189 : vector<8x64xf32> to vector<8x64xbf16>
    %c29 = arith.constant 29 : index
    %c0_136 = arith.constant 0 : index
    %c0_137 = arith.constant 0 : index
    %191 = vector.load %arg4[%c29, %c0_136, %c0_137] : memref<90x64x128xbf16, #tpu.memory_space<vmem>>, vector<1x64x128xbf16>
    %192 = vector.shape_cast %191 : vector<1x64x128xbf16> to vector<64x128xbf16>
    %cst_138 = arith.constant dense<0.000000e+00> : vector<8x128xf32>
    %193 = tpu.matmul %190, %192, %cst_138 {dimension_numbers = #tpu.dot_dimension_numbers<[1], [0], [0], [1], [0, 0, 1, 1], [], []>} : vector<8x64xbf16>, vector<64x128xbf16>, vector<8x128xf32> -> vector<8x128xf32>
    %194 = arith.addf %158, %193 : vector<8x128xf32>
    %c240 = arith.constant 240 : index
    %c0_139 = arith.constant 0 : index
    %195 = vector.load %arg11[%c240, %c0_139] : memref<720x64xf32, #tpu.memory_space<vmem>>, vector<8x64xf32>
    %196 = arith.truncf %195 : vector<8x64xf32> to vector<8x64xbf16>
    %c30 = arith.constant 30 : index
    %c0_140 = arith.constant 0 : index
    %c0_141 = arith.constant 0 : index
    %197 = vector.load %arg4[%c30, %c0_140, %c0_141] : memref<90x64x128xbf16, #tpu.memory_space<vmem>>, vector<1x64x128xbf16>
    %198 = vector.shape_cast %197 : vector<1x64x128xbf16> to vector<64x128xbf16>
    %cst_142 = arith.constant dense<0.000000e+00> : vector<8x128xf32>
    %199 = tpu.matmul %196, %198, %cst_142 {dimension_numbers = #tpu.dot_dimension_numbers<[1], [0], [0], [1], [0, 0, 1, 1], [], []>} : vector<8x64xbf16>, vector<64x128xbf16>, vector<8x128xf32> -> vector<8x128xf32>
    %200 = arith.addf %164, %199 : vector<8x128xf32>
    %c248 = arith.constant 248 : index
    %c0_143 = arith.constant 0 : index
    %201 = vector.load %arg11[%c248, %c0_143] : memref<720x64xf32, #tpu.memory_space<vmem>>, vector<8x64xf32>
    %202 = arith.truncf %201 : vector<8x64xf32> to vector<8x64xbf16>
    %c31 = arith.constant 31 : index
    %c0_144 = arith.constant 0 : index
    %c0_145 = arith.constant 0 : index
    %203 = vector.load %arg4[%c31, %c0_144, %c0_145] : memref<90x64x128xbf16, #tpu.memory_space<vmem>>, vector<1x64x128xbf16>
    %204 = vector.shape_cast %203 : vector<1x64x128xbf16> to vector<64x128xbf16>
    %cst_146 = arith.constant dense<0.000000e+00> : vector<8x128xf32>
    %205 = tpu.matmul %202, %204, %cst_146 {dimension_numbers = #tpu.dot_dimension_numbers<[1], [0], [0], [1], [0, 0, 1, 1], [], []>} : vector<8x64xbf16>, vector<64x128xbf16>, vector<8x128xf32> -> vector<8x128xf32>
    %206 = arith.addf %170, %205 : vector<8x128xf32>
    %c256 = arith.constant 256 : index
    %c0_147 = arith.constant 0 : index
    %207 = vector.load %arg11[%c256, %c0_147] : memref<720x64xf32, #tpu.memory_space<vmem>>, vector<8x64xf32>
    %208 = arith.truncf %207 : vector<8x64xf32> to vector<8x64xbf16>
    %c32_148 = arith.constant 32 : index
    %c0_149 = arith.constant 0 : index
    %c0_150 = arith.constant 0 : index
    %209 = vector.load %arg4[%c32_148, %c0_149, %c0_150] : memref<90x64x128xbf16, #tpu.memory_space<vmem>>, vector<1x64x128xbf16>
    %210 = vector.shape_cast %209 : vector<1x64x128xbf16> to vector<64x128xbf16>
    %cst_151 = arith.constant dense<0.000000e+00> : vector<8x128xf32>
    %211 = tpu.matmul %208, %210, %cst_151 {dimension_numbers = #tpu.dot_dimension_numbers<[1], [0], [0], [1], [0, 0, 1, 1], [], []>} : vector<8x64xbf16>, vector<64x128xbf16>, vector<8x128xf32> -> vector<8x128xf32>
    %212 = arith.addf %176, %211 : vector<8x128xf32>
    %c264 = arith.constant 264 : index
    %c0_152 = arith.constant 0 : index
    %213 = vector.load %arg11[%c264, %c0_152] : memref<720x64xf32, #tpu.memory_space<vmem>>, vector<8x64xf32>
    %214 = arith.truncf %213 : vector<8x64xf32> to vector<8x64xbf16>
    %c33 = arith.constant 33 : index
    %c0_153 = arith.constant 0 : index
    %c0_154 = arith.constant 0 : index
    %215 = vector.load %arg4[%c33, %c0_153, %c0_154] : memref<90x64x128xbf16, #tpu.memory_space<vmem>>, vector<1x64x128xbf16>
    %216 = vector.shape_cast %215 : vector<1x64x128xbf16> to vector<64x128xbf16>
    %cst_155 = arith.constant dense<0.000000e+00> : vector<8x128xf32>
    %217 = tpu.matmul %214, %216, %cst_155 {dimension_numbers = #tpu.dot_dimension_numbers<[1], [0], [0], [1], [0, 0, 1, 1], [], []>} : vector<8x64xbf16>, vector<64x128xbf16>, vector<8x128xf32> -> vector<8x128xf32>
    %218 = arith.addf %182, %217 : vector<8x128xf32>
    %c272 = arith.constant 272 : index
    %c0_156 = arith.constant 0 : index
    %219 = vector.load %arg11[%c272, %c0_156] : memref<720x64xf32, #tpu.memory_space<vmem>>, vector<8x64xf32>
    %220 = arith.truncf %219 : vector<8x64xf32> to vector<8x64xbf16>
    %c34 = arith.constant 34 : index
    %c0_157 = arith.constant 0 : index
    %c0_158 = arith.constant 0 : index
    %221 = vector.load %arg4[%c34, %c0_157, %c0_158] : memref<90x64x128xbf16, #tpu.memory_space<vmem>>, vector<1x64x128xbf16>
    %222 = vector.shape_cast %221 : vector<1x64x128xbf16> to vector<64x128xbf16>
    %cst_159 = arith.constant dense<0.000000e+00> : vector<8x128xf32>
    %223 = tpu.matmul %220, %222, %cst_159 {dimension_numbers = #tpu.dot_dimension_numbers<[1], [0], [0], [1], [0, 0, 1, 1], [], []>} : vector<8x64xbf16>, vector<64x128xbf16>, vector<8x128xf32> -> vector<8x128xf32>
    %224 = arith.addf %188, %223 : vector<8x128xf32>
    %c280 = arith.constant 280 : index
    %c0_160 = arith.constant 0 : index
    %225 = vector.load %arg11[%c280, %c0_160] : memref<720x64xf32, #tpu.memory_space<vmem>>, vector<8x64xf32>
    %226 = arith.truncf %225 : vector<8x64xf32> to vector<8x64xbf16>
    %c35 = arith.constant 35 : index
    %c0_161 = arith.constant 0 : index
    %c0_162 = arith.constant 0 : index
    %227 = vector.load %arg4[%c35, %c0_161, %c0_162] : memref<90x64x128xbf16, #tpu.memory_space<vmem>>, vector<1x64x128xbf16>
    %228 = vector.shape_cast %227 : vector<1x64x128xbf16> to vector<64x128xbf16>
    %cst_163 = arith.constant dense<0.000000e+00> : vector<8x128xf32>
    %229 = tpu.matmul %226, %228, %cst_163 {dimension_numbers = #tpu.dot_dimension_numbers<[1], [0], [0], [1], [0, 0, 1, 1], [], []>} : vector<8x64xbf16>, vector<64x128xbf16>, vector<8x128xf32> -> vector<8x128xf32>
    %230 = arith.addf %194, %229 : vector<8x128xf32>
    %c288 = arith.constant 288 : index
    %c0_164 = arith.constant 0 : index
    %231 = vector.load %arg11[%c288, %c0_164] : memref<720x64xf32, #tpu.memory_space<vmem>>, vector<8x64xf32>
    %232 = arith.truncf %231 : vector<8x64xf32> to vector<8x64xbf16>
    %c36 = arith.constant 36 : index
    %c0_165 = arith.constant 0 : index
    %c0_166 = arith.constant 0 : index
    %233 = vector.load %arg4[%c36, %c0_165, %c0_166] : memref<90x64x128xbf16, #tpu.memory_space<vmem>>, vector<1x64x128xbf16>
    %234 = vector.shape_cast %233 : vector<1x64x128xbf16> to vector<64x128xbf16>
    %cst_167 = arith.constant dense<0.000000e+00> : vector<8x128xf32>
    %235 = tpu.matmul %232, %234, %cst_167 {dimension_numbers = #tpu.dot_dimension_numbers<[1], [0], [0], [1], [0, 0, 1, 1], [], []>} : vector<8x64xbf16>, vector<64x128xbf16>, vector<8x128xf32> -> vector<8x128xf32>
    %236 = arith.addf %200, %235 : vector<8x128xf32>
    %c296 = arith.constant 296 : index
    %c0_168 = arith.constant 0 : index
    %237 = vector.load %arg11[%c296, %c0_168] : memref<720x64xf32, #tpu.memory_space<vmem>>, vector<8x64xf32>
    %238 = arith.truncf %237 : vector<8x64xf32> to vector<8x64xbf16>
    %c37 = arith.constant 37 : index
    %c0_169 = arith.constant 0 : index
    %c0_170 = arith.constant 0 : index
    %239 = vector.load %arg4[%c37, %c0_169, %c0_170] : memref<90x64x128xbf16, #tpu.memory_space<vmem>>, vector<1x64x128xbf16>
    %240 = vector.shape_cast %239 : vector<1x64x128xbf16> to vector<64x128xbf16>
    %cst_171 = arith.constant dense<0.000000e+00> : vector<8x128xf32>
    %241 = tpu.matmul %238, %240, %cst_171 {dimension_numbers = #tpu.dot_dimension_numbers<[1], [0], [0], [1], [0, 0, 1, 1], [], []>} : vector<8x64xbf16>, vector<64x128xbf16>, vector<8x128xf32> -> vector<8x128xf32>
    %242 = arith.addf %206, %241 : vector<8x128xf32>
    %c304 = arith.constant 304 : index
    %c0_172 = arith.constant 0 : index
    %243 = vector.load %arg11[%c304, %c0_172] : memref<720x64xf32, #tpu.memory_space<vmem>>, vector<8x64xf32>
    %244 = arith.truncf %243 : vector<8x64xf32> to vector<8x64xbf16>
    %c38 = arith.constant 38 : index
    %c0_173 = arith.constant 0 : index
    %c0_174 = arith.constant 0 : index
    %245 = vector.load %arg4[%c38, %c0_173, %c0_174] : memref<90x64x128xbf16, #tpu.memory_space<vmem>>, vector<1x64x128xbf16>
    %246 = vector.shape_cast %245 : vector<1x64x128xbf16> to vector<64x128xbf16>
    %cst_175 = arith.constant dense<0.000000e+00> : vector<8x128xf32>
    %247 = tpu.matmul %244, %246, %cst_175 {dimension_numbers = #tpu.dot_dimension_numbers<[1], [0], [0], [1], [0, 0, 1, 1], [], []>} : vector<8x64xbf16>, vector<64x128xbf16>, vector<8x128xf32> -> vector<8x128xf32>
    %248 = arith.addf %212, %247 : vector<8x128xf32>
    %c312 = arith.constant 312 : index
    %c0_176 = arith.constant 0 : index
    %249 = vector.load %arg11[%c312, %c0_176] : memref<720x64xf32, #tpu.memory_space<vmem>>, vector<8x64xf32>
    %250 = arith.truncf %249 : vector<8x64xf32> to vector<8x64xbf16>
    %c39 = arith.constant 39 : index
    %c0_177 = arith.constant 0 : index
    %c0_178 = arith.constant 0 : index
    %251 = vector.load %arg4[%c39, %c0_177, %c0_178] : memref<90x64x128xbf16, #tpu.memory_space<vmem>>, vector<1x64x128xbf16>
    %252 = vector.shape_cast %251 : vector<1x64x128xbf16> to vector<64x128xbf16>
    %cst_179 = arith.constant dense<0.000000e+00> : vector<8x128xf32>
    %253 = tpu.matmul %250, %252, %cst_179 {dimension_numbers = #tpu.dot_dimension_numbers<[1], [0], [0], [1], [0, 0, 1, 1], [], []>} : vector<8x64xbf16>, vector<64x128xbf16>, vector<8x128xf32> -> vector<8x128xf32>
    %254 = arith.addf %218, %253 : vector<8x128xf32>
    %c320 = arith.constant 320 : index
    %c0_180 = arith.constant 0 : index
    %255 = vector.load %arg11[%c320, %c0_180] : memref<720x64xf32, #tpu.memory_space<vmem>>, vector<8x64xf32>
    %256 = arith.truncf %255 : vector<8x64xf32> to vector<8x64xbf16>
    %c40_181 = arith.constant 40 : index
    %c0_182 = arith.constant 0 : index
    %c0_183 = arith.constant 0 : index
    %257 = vector.load %arg4[%c40_181, %c0_182, %c0_183] : memref<90x64x128xbf16, #tpu.memory_space<vmem>>, vector<1x64x128xbf16>
    %258 = vector.shape_cast %257 : vector<1x64x128xbf16> to vector<64x128xbf16>
    %cst_184 = arith.constant dense<0.000000e+00> : vector<8x128xf32>
    %259 = tpu.matmul %256, %258, %cst_184 {dimension_numbers = #tpu.dot_dimension_numbers<[1], [0], [0], [1], [0, 0, 1, 1], [], []>} : vector<8x64xbf16>, vector<64x128xbf16>, vector<8x128xf32> -> vector<8x128xf32>
    %260 = arith.addf %224, %259 : vector<8x128xf32>
    %c328 = arith.constant 328 : index
    %c0_185 = arith.constant 0 : index
    %261 = vector.load %arg11[%c328, %c0_185] : memref<720x64xf32, #tpu.memory_space<vmem>>, vector<8x64xf32>
    %262 = arith.truncf %261 : vector<8x64xf32> to vector<8x64xbf16>
    %c41 = arith.constant 41 : index
    %c0_186 = arith.constant 0 : index
    %c0_187 = arith.constant 0 : index
    %263 = vector.load %arg4[%c41, %c0_186, %c0_187] : memref<90x64x128xbf16, #tpu.memory_space<vmem>>, vector<1x64x128xbf16>
    %264 = vector.shape_cast %263 : vector<1x64x128xbf16> to vector<64x128xbf16>
    %cst_188 = arith.constant dense<0.000000e+00> : vector<8x128xf32>
    %265 = tpu.matmul %262, %264, %cst_188 {dimension_numbers = #tpu.dot_dimension_numbers<[1], [0], [0], [1], [0, 0, 1, 1], [], []>} : vector<8x64xbf16>, vector<64x128xbf16>, vector<8x128xf32> -> vector<8x128xf32>
    %266 = arith.addf %230, %265 : vector<8x128xf32>
    %c336 = arith.constant 336 : index
    %c0_189 = arith.constant 0 : index
    %267 = vector.load %arg11[%c336, %c0_189] : memref<720x64xf32, #tpu.memory_space<vmem>>, vector<8x64xf32>
    %268 = arith.truncf %267 : vector<8x64xf32> to vector<8x64xbf16>
    %c42 = arith.constant 42 : index
    %c0_190 = arith.constant 0 : index
    %c0_191 = arith.constant 0 : index
    %269 = vector.load %arg4[%c42, %c0_190, %c0_191] : memref<90x64x128xbf16, #tpu.memory_space<vmem>>, vector<1x64x128xbf16>
    %270 = vector.shape_cast %269 : vector<1x64x128xbf16> to vector<64x128xbf16>
    %cst_192 = arith.constant dense<0.000000e+00> : vector<8x128xf32>
    %271 = tpu.matmul %268, %270, %cst_192 {dimension_numbers = #tpu.dot_dimension_numbers<[1], [0], [0], [1], [0, 0, 1, 1], [], []>} : vector<8x64xbf16>, vector<64x128xbf16>, vector<8x128xf32> -> vector<8x128xf32>
    %272 = arith.addf %236, %271 : vector<8x128xf32>
    %c344 = arith.constant 344 : index
    %c0_193 = arith.constant 0 : index
    %273 = vector.load %arg11[%c344, %c0_193] : memref<720x64xf32, #tpu.memory_space<vmem>>, vector<8x64xf32>
    %274 = arith.truncf %273 : vector<8x64xf32> to vector<8x64xbf16>
    %c43 = arith.constant 43 : index
    %c0_194 = arith.constant 0 : index
    %c0_195 = arith.constant 0 : index
    %275 = vector.load %arg4[%c43, %c0_194, %c0_195] : memref<90x64x128xbf16, #tpu.memory_space<vmem>>, vector<1x64x128xbf16>
    %276 = vector.shape_cast %275 : vector<1x64x128xbf16> to vector<64x128xbf16>
    %cst_196 = arith.constant dense<0.000000e+00> : vector<8x128xf32>
    %277 = tpu.matmul %274, %276, %cst_196 {dimension_numbers = #tpu.dot_dimension_numbers<[1], [0], [0], [1], [0, 0, 1, 1], [], []>} : vector<8x64xbf16>, vector<64x128xbf16>, vector<8x128xf32> -> vector<8x128xf32>
    %278 = arith.addf %242, %277 : vector<8x128xf32>
    %c352 = arith.constant 352 : index
    %c0_197 = arith.constant 0 : index
    %279 = vector.load %arg11[%c352, %c0_197] : memref<720x64xf32, #tpu.memory_space<vmem>>, vector<8x64xf32>
    %280 = arith.truncf %279 : vector<8x64xf32> to vector<8x64xbf16>
    %c44 = arith.constant 44 : index
    %c0_198 = arith.constant 0 : index
    %c0_199 = arith.constant 0 : index
    %281 = vector.load %arg4[%c44, %c0_198, %c0_199] : memref<90x64x128xbf16, #tpu.memory_space<vmem>>, vector<1x64x128xbf16>
    %282 = vector.shape_cast %281 : vector<1x64x128xbf16> to vector<64x128xbf16>
    %cst_200 = arith.constant dense<0.000000e+00> : vector<8x128xf32>
    %283 = tpu.matmul %280, %282, %cst_200 {dimension_numbers = #tpu.dot_dimension_numbers<[1], [0], [0], [1], [0, 0, 1, 1], [], []>} : vector<8x64xbf16>, vector<64x128xbf16>, vector<8x128xf32> -> vector<8x128xf32>
    %284 = arith.addf %248, %283 : vector<8x128xf32>
    %c360 = arith.constant 360 : index
    %c0_201 = arith.constant 0 : index
    %285 = vector.load %arg11[%c360, %c0_201] : memref<720x64xf32, #tpu.memory_space<vmem>>, vector<8x64xf32>
    %286 = arith.truncf %285 : vector<8x64xf32> to vector<8x64xbf16>
    %c45 = arith.constant 45 : index
    %c0_202 = arith.constant 0 : index
    %c0_203 = arith.constant 0 : index
    %287 = vector.load %arg4[%c45, %c0_202, %c0_203] : memref<90x64x128xbf16, #tpu.memory_space<vmem>>, vector<1x64x128xbf16>
    %288 = vector.shape_cast %287 : vector<1x64x128xbf16> to vector<64x128xbf16>
    %cst_204 = arith.constant dense<0.000000e+00> : vector<8x128xf32>
    %289 = tpu.matmul %286, %288, %cst_204 {dimension_numbers = #tpu.dot_dimension_numbers<[1], [0], [0], [1], [0, 0, 1, 1], [], []>} : vector<8x64xbf16>, vector<64x128xbf16>, vector<8x128xf32> -> vector<8x128xf32>
    %290 = arith.addf %254, %289 : vector<8x128xf32>
    %c368 = arith.constant 368 : index
    %c0_205 = arith.constant 0 : index
    %291 = vector.load %arg11[%c368, %c0_205] : memref<720x64xf32, #tpu.memory_space<vmem>>, vector<8x64xf32>
    %292 = arith.truncf %291 : vector<8x64xf32> to vector<8x64xbf16>
    %c46 = arith.constant 46 : index
    %c0_206 = arith.constant 0 : index
    %c0_207 = arith.constant 0 : index
    %293 = vector.load %arg4[%c46, %c0_206, %c0_207] : memref<90x64x128xbf16, #tpu.memory_space<vmem>>, vector<1x64x128xbf16>
    %294 = vector.shape_cast %293 : vector<1x64x128xbf16> to vector<64x128xbf16>
    %cst_208 = arith.constant dense<0.000000e+00> : vector<8x128xf32>
    %295 = tpu.matmul %292, %294, %cst_208 {dimension_numbers = #tpu.dot_dimension_numbers<[1], [0], [0], [1], [0, 0, 1, 1], [], []>} : vector<8x64xbf16>, vector<64x128xbf16>, vector<8x128xf32> -> vector<8x128xf32>
    %296 = arith.addf %260, %295 : vector<8x128xf32>
    %c376 = arith.constant 376 : index
    %c0_209 = arith.constant 0 : index
    %297 = vector.load %arg11[%c376, %c0_209] : memref<720x64xf32, #tpu.memory_space<vmem>>, vector<8x64xf32>
    %298 = arith.truncf %297 : vector<8x64xf32> to vector<8x64xbf16>
    %c47 = arith.constant 47 : index
    %c0_210 = arith.constant 0 : index
    %c0_211 = arith.constant 0 : index
    %299 = vector.load %arg4[%c47, %c0_210, %c0_211] : memref<90x64x128xbf16, #tpu.memory_space<vmem>>, vector<1x64x128xbf16>
    %300 = vector.shape_cast %299 : vector<1x64x128xbf16> to vector<64x128xbf16>
    %cst_212 = arith.constant dense<0.000000e+00> : vector<8x128xf32>
    %301 = tpu.matmul %298, %300, %cst_212 {dimension_numbers = #tpu.dot_dimension_numbers<[1], [0], [0], [1], [0, 0, 1, 1], [], []>} : vector<8x64xbf16>, vector<64x128xbf16>, vector<8x128xf32> -> vector<8x128xf32>
    %302 = arith.addf %266, %301 : vector<8x128xf32>
    %c384 = arith.constant 384 : index
    %c0_213 = arith.constant 0 : index
    %303 = vector.load %arg11[%c384, %c0_213] : memref<720x64xf32, #tpu.memory_space<vmem>>, vector<8x64xf32>
    %304 = arith.truncf %303 : vector<8x64xf32> to vector<8x64xbf16>
    %c48_214 = arith.constant 48 : index
    %c0_215 = arith.constant 0 : index
    %c0_216 = arith.constant 0 : index
    %305 = vector.load %arg4[%c48_214, %c0_215, %c0_216] : memref<90x64x128xbf16, #tpu.memory_space<vmem>>, vector<1x64x128xbf16>
    %306 = vector.shape_cast %305 : vector<1x64x128xbf16> to vector<64x128xbf16>
    %cst_217 = arith.constant dense<0.000000e+00> : vector<8x128xf32>
    %307 = tpu.matmul %304, %306, %cst_217 {dimension_numbers = #tpu.dot_dimension_numbers<[1], [0], [0], [1], [0, 0, 1, 1], [], []>} : vector<8x64xbf16>, vector<64x128xbf16>, vector<8x128xf32> -> vector<8x128xf32>
    %308 = arith.addf %272, %307 : vector<8x128xf32>
    %c392 = arith.constant 392 : index
    %c0_218 = arith.constant 0 : index
    %309 = vector.load %arg11[%c392, %c0_218] : memref<720x64xf32, #tpu.memory_space<vmem>>, vector<8x64xf32>
    %310 = arith.truncf %309 : vector<8x64xf32> to vector<8x64xbf16>
    %c49 = arith.constant 49 : index
    %c0_219 = arith.constant 0 : index
    %c0_220 = arith.constant 0 : index
    %311 = vector.load %arg4[%c49, %c0_219, %c0_220] : memref<90x64x128xbf16, #tpu.memory_space<vmem>>, vector<1x64x128xbf16>
    %312 = vector.shape_cast %311 : vector<1x64x128xbf16> to vector<64x128xbf16>
    %cst_221 = arith.constant dense<0.000000e+00> : vector<8x128xf32>
    %313 = tpu.matmul %310, %312, %cst_221 {dimension_numbers = #tpu.dot_dimension_numbers<[1], [0], [0], [1], [0, 0, 1, 1], [], []>} : vector<8x64xbf16>, vector<64x128xbf16>, vector<8x128xf32> -> vector<8x128xf32>
    %314 = arith.addf %278, %313 : vector<8x128xf32>
    %c400 = arith.constant 400 : index
    %c0_222 = arith.constant 0 : index
    %315 = vector.load %arg11[%c400, %c0_222] : memref<720x64xf32, #tpu.memory_space<vmem>>, vector<8x64xf32>
    %316 = arith.truncf %315 : vector<8x64xf32> to vector<8x64xbf16>
    %c50 = arith.constant 50 : index
    %c0_223 = arith.constant 0 : index
    %c0_224 = arith.constant 0 : index
    %317 = vector.load %arg4[%c50, %c0_223, %c0_224] : memref<90x64x128xbf16, #tpu.memory_space<vmem>>, vector<1x64x128xbf16>
    %318 = vector.shape_cast %317 : vector<1x64x128xbf16> to vector<64x128xbf16>
    %cst_225 = arith.constant dense<0.000000e+00> : vector<8x128xf32>
    %319 = tpu.matmul %316, %318, %cst_225 {dimension_numbers = #tpu.dot_dimension_numbers<[1], [0], [0], [1], [0, 0, 1, 1], [], []>} : vector<8x64xbf16>, vector<64x128xbf16>, vector<8x128xf32> -> vector<8x128xf32>
    %320 = arith.addf %284, %319 : vector<8x128xf32>
    %c408 = arith.constant 408 : index
    %c0_226 = arith.constant 0 : index
    %321 = vector.load %arg11[%c408, %c0_226] : memref<720x64xf32, #tpu.memory_space<vmem>>, vector<8x64xf32>
    %322 = arith.truncf %321 : vector<8x64xf32> to vector<8x64xbf16>
    %c51 = arith.constant 51 : index
    %c0_227 = arith.constant 0 : index
    %c0_228 = arith.constant 0 : index
    %323 = vector.load %arg4[%c51, %c0_227, %c0_228] : memref<90x64x128xbf16, #tpu.memory_space<vmem>>, vector<1x64x128xbf16>
    %324 = vector.shape_cast %323 : vector<1x64x128xbf16> to vector<64x128xbf16>
    %cst_229 = arith.constant dense<0.000000e+00> : vector<8x128xf32>
    %325 = tpu.matmul %322, %324, %cst_229 {dimension_numbers = #tpu.dot_dimension_numbers<[1], [0], [0], [1], [0, 0, 1, 1], [], []>} : vector<8x64xbf16>, vector<64x128xbf16>, vector<8x128xf32> -> vector<8x128xf32>
    %326 = arith.addf %290, %325 : vector<8x128xf32>
    %c416 = arith.constant 416 : index
    %c0_230 = arith.constant 0 : index
    %327 = vector.load %arg11[%c416, %c0_230] : memref<720x64xf32, #tpu.memory_space<vmem>>, vector<8x64xf32>
    %328 = arith.truncf %327 : vector<8x64xf32> to vector<8x64xbf16>
    %c52 = arith.constant 52 : index
    %c0_231 = arith.constant 0 : index
    %c0_232 = arith.constant 0 : index
    %329 = vector.load %arg4[%c52, %c0_231, %c0_232] : memref<90x64x128xbf16, #tpu.memory_space<vmem>>, vector<1x64x128xbf16>
    %330 = vector.shape_cast %329 : vector<1x64x128xbf16> to vector<64x128xbf16>
    %cst_233 = arith.constant dense<0.000000e+00> : vector<8x128xf32>
    %331 = tpu.matmul %328, %330, %cst_233 {dimension_numbers = #tpu.dot_dimension_numbers<[1], [0], [0], [1], [0, 0, 1, 1], [], []>} : vector<8x64xbf16>, vector<64x128xbf16>, vector<8x128xf32> -> vector<8x128xf32>
    %332 = arith.addf %296, %331 : vector<8x128xf32>
    %c424 = arith.constant 424 : index
    %c0_234 = arith.constant 0 : index
    %333 = vector.load %arg11[%c424, %c0_234] : memref<720x64xf32, #tpu.memory_space<vmem>>, vector<8x64xf32>
    %334 = arith.truncf %333 : vector<8x64xf32> to vector<8x64xbf16>
    %c53 = arith.constant 53 : index
    %c0_235 = arith.constant 0 : index
    %c0_236 = arith.constant 0 : index
    %335 = vector.load %arg4[%c53, %c0_235, %c0_236] : memref<90x64x128xbf16, #tpu.memory_space<vmem>>, vector<1x64x128xbf16>
    %336 = vector.shape_cast %335 : vector<1x64x128xbf16> to vector<64x128xbf16>
    %cst_237 = arith.constant dense<0.000000e+00> : vector<8x128xf32>
    %337 = tpu.matmul %334, %336, %cst_237 {dimension_numbers = #tpu.dot_dimension_numbers<[1], [0], [0], [1], [0, 0, 1, 1], [], []>} : vector<8x64xbf16>, vector<64x128xbf16>, vector<8x128xf32> -> vector<8x128xf32>
    %338 = arith.addf %302, %337 : vector<8x128xf32>
    %c432 = arith.constant 432 : index
    %c0_238 = arith.constant 0 : index
    %339 = vector.load %arg11[%c432, %c0_238] : memref<720x64xf32, #tpu.memory_space<vmem>>, vector<8x64xf32>
    %340 = arith.truncf %339 : vector<8x64xf32> to vector<8x64xbf16>
    %c54 = arith.constant 54 : index
    %c0_239 = arith.constant 0 : index
    %c0_240 = arith.constant 0 : index
    %341 = vector.load %arg4[%c54, %c0_239, %c0_240] : memref<90x64x128xbf16, #tpu.memory_space<vmem>>, vector<1x64x128xbf16>
    %342 = vector.shape_cast %341 : vector<1x64x128xbf16> to vector<64x128xbf16>
    %cst_241 = arith.constant dense<0.000000e+00> : vector<8x128xf32>
    %343 = tpu.matmul %340, %342, %cst_241 {dimension_numbers = #tpu.dot_dimension_numbers<[1], [0], [0], [1], [0, 0, 1, 1], [], []>} : vector<8x64xbf16>, vector<64x128xbf16>, vector<8x128xf32> -> vector<8x128xf32>
    %344 = arith.addf %308, %343 : vector<8x128xf32>
    %c440 = arith.constant 440 : index
    %c0_242 = arith.constant 0 : index
    %345 = vector.load %arg11[%c440, %c0_242] : memref<720x64xf32, #tpu.memory_space<vmem>>, vector<8x64xf32>
    %346 = arith.truncf %345 : vector<8x64xf32> to vector<8x64xbf16>
    %c55 = arith.constant 55 : index
    %c0_243 = arith.constant 0 : index
    %c0_244 = arith.constant 0 : index
    %347 = vector.load %arg4[%c55, %c0_243, %c0_244] : memref<90x64x128xbf16, #tpu.memory_space<vmem>>, vector<1x64x128xbf16>
    %348 = vector.shape_cast %347 : vector<1x64x128xbf16> to vector<64x128xbf16>
    %cst_245 = arith.constant dense<0.000000e+00> : vector<8x128xf32>
    %349 = tpu.matmul %346, %348, %cst_245 {dimension_numbers = #tpu.dot_dimension_numbers<[1], [0], [0], [1], [0, 0, 1, 1], [], []>} : vector<8x64xbf16>, vector<64x128xbf16>, vector<8x128xf32> -> vector<8x128xf32>
    %350 = arith.addf %314, %349 : vector<8x128xf32>
    %c448 = arith.constant 448 : index
    %c0_246 = arith.constant 0 : index
    %351 = vector.load %arg11[%c448, %c0_246] : memref<720x64xf32, #tpu.memory_space<vmem>>, vector<8x64xf32>
    %352 = arith.truncf %351 : vector<8x64xf32> to vector<8x64xbf16>
    %c56_247 = arith.constant 56 : index
    %c0_248 = arith.constant 0 : index
    %c0_249 = arith.constant 0 : index
    %353 = vector.load %arg4[%c56_247, %c0_248, %c0_249] : memref<90x64x128xbf16, #tpu.memory_space<vmem>>, vector<1x64x128xbf16>
    %354 = vector.shape_cast %353 : vector<1x64x128xbf16> to vector<64x128xbf16>
    %cst_250 = arith.constant dense<0.000000e+00> : vector<8x128xf32>
    %355 = tpu.matmul %352, %354, %cst_250 {dimension_numbers = #tpu.dot_dimension_numbers<[1], [0], [0], [1], [0, 0, 1, 1], [], []>} : vector<8x64xbf16>, vector<64x128xbf16>, vector<8x128xf32> -> vector<8x128xf32>
    %356 = arith.addf %320, %355 : vector<8x128xf32>
    %c456 = arith.constant 456 : index
    %c0_251 = arith.constant 0 : index
    %357 = vector.load %arg11[%c456, %c0_251] : memref<720x64xf32, #tpu.memory_space<vmem>>, vector<8x64xf32>
    %358 = arith.truncf %357 : vector<8x64xf32> to vector<8x64xbf16>
    %c57 = arith.constant 57 : index
    %c0_252 = arith.constant 0 : index
    %c0_253 = arith.constant 0 : index
    %359 = vector.load %arg4[%c57, %c0_252, %c0_253] : memref<90x64x128xbf16, #tpu.memory_space<vmem>>, vector<1x64x128xbf16>
    %360 = vector.shape_cast %359 : vector<1x64x128xbf16> to vector<64x128xbf16>
    %cst_254 = arith.constant dense<0.000000e+00> : vector<8x128xf32>
    %361 = tpu.matmul %358, %360, %cst_254 {dimension_numbers = #tpu.dot_dimension_numbers<[1], [0], [0], [1], [0, 0, 1, 1], [], []>} : vector<8x64xbf16>, vector<64x128xbf16>, vector<8x128xf32> -> vector<8x128xf32>
    %362 = arith.addf %326, %361 : vector<8x128xf32>
    %c464 = arith.constant 464 : index
    %c0_255 = arith.constant 0 : index
    %363 = vector.load %arg11[%c464, %c0_255] : memref<720x64xf32, #tpu.memory_space<vmem>>, vector<8x64xf32>
    %364 = arith.truncf %363 : vector<8x64xf32> to vector<8x64xbf16>
    %c58 = arith.constant 58 : index
    %c0_256 = arith.constant 0 : index
    %c0_257 = arith.constant 0 : index
    %365 = vector.load %arg4[%c58, %c0_256, %c0_257] : memref<90x64x128xbf16, #tpu.memory_space<vmem>>, vector<1x64x128xbf16>
    %366 = vector.shape_cast %365 : vector<1x64x128xbf16> to vector<64x128xbf16>
    %cst_258 = arith.constant dense<0.000000e+00> : vector<8x128xf32>
    %367 = tpu.matmul %364, %366, %cst_258 {dimension_numbers = #tpu.dot_dimension_numbers<[1], [0], [0], [1], [0, 0, 1, 1], [], []>} : vector<8x64xbf16>, vector<64x128xbf16>, vector<8x128xf32> -> vector<8x128xf32>
    %368 = arith.addf %332, %367 : vector<8x128xf32>
    %c472 = arith.constant 472 : index
    %c0_259 = arith.constant 0 : index
    %369 = vector.load %arg11[%c472, %c0_259] : memref<720x64xf32, #tpu.memory_space<vmem>>, vector<8x64xf32>
    %370 = arith.truncf %369 : vector<8x64xf32> to vector<8x64xbf16>
    %c59 = arith.constant 59 : index
    %c0_260 = arith.constant 0 : index
    %c0_261 = arith.constant 0 : index
    %371 = vector.load %arg4[%c59, %c0_260, %c0_261] : memref<90x64x128xbf16, #tpu.memory_space<vmem>>, vector<1x64x128xbf16>
    %372 = vector.shape_cast %371 : vector<1x64x128xbf16> to vector<64x128xbf16>
    %cst_262 = arith.constant dense<0.000000e+00> : vector<8x128xf32>
    %373 = tpu.matmul %370, %372, %cst_262 {dimension_numbers = #tpu.dot_dimension_numbers<[1], [0], [0], [1], [0, 0, 1, 1], [], []>} : vector<8x64xbf16>, vector<64x128xbf16>, vector<8x128xf32> -> vector<8x128xf32>
    %374 = arith.addf %338, %373 : vector<8x128xf32>
    %c480 = arith.constant 480 : index
    %c0_263 = arith.constant 0 : index
    %375 = vector.load %arg11[%c480, %c0_263] : memref<720x64xf32, #tpu.memory_space<vmem>>, vector<8x64xf32>
    %376 = arith.truncf %375 : vector<8x64xf32> to vector<8x64xbf16>
    %c60 = arith.constant 60 : index
    %c0_264 = arith.constant 0 : index
    %c0_265 = arith.constant 0 : index
    %377 = vector.load %arg4[%c60, %c0_264, %c0_265] : memref<90x64x128xbf16, #tpu.memory_space<vmem>>, vector<1x64x128xbf16>
    %378 = vector.shape_cast %377 : vector<1x64x128xbf16> to vector<64x128xbf16>
    %cst_266 = arith.constant dense<0.000000e+00> : vector<8x128xf32>
    %379 = tpu.matmul %376, %378, %cst_266 {dimension_numbers = #tpu.dot_dimension_numbers<[1], [0], [0], [1], [0, 0, 1, 1], [], []>} : vector<8x64xbf16>, vector<64x128xbf16>, vector<8x128xf32> -> vector<8x128xf32>
    %380 = arith.addf %344, %379 : vector<8x128xf32>
    %c488 = arith.constant 488 : index
    %c0_267 = arith.constant 0 : index
    %381 = vector.load %arg11[%c488, %c0_267] : memref<720x64xf32, #tpu.memory_space<vmem>>, vector<8x64xf32>
    %382 = arith.truncf %381 : vector<8x64xf32> to vector<8x64xbf16>
    %c61 = arith.constant 61 : index
    %c0_268 = arith.constant 0 : index
    %c0_269 = arith.constant 0 : index
    %383 = vector.load %arg4[%c61, %c0_268, %c0_269] : memref<90x64x128xbf16, #tpu.memory_space<vmem>>, vector<1x64x128xbf16>
    %384 = vector.shape_cast %383 : vector<1x64x128xbf16> to vector<64x128xbf16>
    %cst_270 = arith.constant dense<0.000000e+00> : vector<8x128xf32>
    %385 = tpu.matmul %382, %384, %cst_270 {dimension_numbers = #tpu.dot_dimension_numbers<[1], [0], [0], [1], [0, 0, 1, 1], [], []>} : vector<8x64xbf16>, vector<64x128xbf16>, vector<8x128xf32> -> vector<8x128xf32>
    %386 = arith.addf %350, %385 : vector<8x128xf32>
    %c496 = arith.constant 496 : index
    %c0_271 = arith.constant 0 : index
    %387 = vector.load %arg11[%c496, %c0_271] : memref<720x64xf32, #tpu.memory_space<vmem>>, vector<8x64xf32>
    %388 = arith.truncf %387 : vector<8x64xf32> to vector<8x64xbf16>
    %c62 = arith.constant 62 : index
    %c0_272 = arith.constant 0 : index
    %c0_273 = arith.constant 0 : index
    %389 = vector.load %arg4[%c62, %c0_272, %c0_273] : memref<90x64x128xbf16, #tpu.memory_space<vmem>>, vector<1x64x128xbf16>
    %390 = vector.shape_cast %389 : vector<1x64x128xbf16> to vector<64x128xbf16>
    %cst_274 = arith.constant dense<0.000000e+00> : vector<8x128xf32>
    %391 = tpu.matmul %388, %390, %cst_274 {dimension_numbers = #tpu.dot_dimension_numbers<[1], [0], [0], [1], [0, 0, 1, 1], [], []>} : vector<8x64xbf16>, vector<64x128xbf16>, vector<8x128xf32> -> vector<8x128xf32>
    %392 = arith.addf %356, %391 : vector<8x128xf32>
    %c504 = arith.constant 504 : index
    %c0_275 = arith.constant 0 : index
    %393 = vector.load %arg11[%c504, %c0_275] : memref<720x64xf32, #tpu.memory_space<vmem>>, vector<8x64xf32>
    %394 = arith.truncf %393 : vector<8x64xf32> to vector<8x64xbf16>
    %c63 = arith.constant 63 : index
    %c0_276 = arith.constant 0 : index
    %c0_277 = arith.constant 0 : index
    %395 = vector.load %arg4[%c63, %c0_276, %c0_277] : memref<90x64x128xbf16, #tpu.memory_space<vmem>>, vector<1x64x128xbf16>
    %396 = vector.shape_cast %395 : vector<1x64x128xbf16> to vector<64x128xbf16>
    %cst_278 = arith.constant dense<0.000000e+00> : vector<8x128xf32>
    %397 = tpu.matmul %394, %396, %cst_278 {dimension_numbers = #tpu.dot_dimension_numbers<[1], [0], [0], [1], [0, 0, 1, 1], [], []>} : vector<8x64xbf16>, vector<64x128xbf16>, vector<8x128xf32> -> vector<8x128xf32>
    %398 = arith.addf %362, %397 : vector<8x128xf32>
    %c512 = arith.constant 512 : index
    %c0_279 = arith.constant 0 : index
    %399 = vector.load %arg11[%c512, %c0_279] : memref<720x64xf32, #tpu.memory_space<vmem>>, vector<8x64xf32>
    %400 = arith.truncf %399 : vector<8x64xf32> to vector<8x64xbf16>
    %c64_280 = arith.constant 64 : index
    %c0_281 = arith.constant 0 : index
    %c0_282 = arith.constant 0 : index
    %401 = vector.load %arg4[%c64_280, %c0_281, %c0_282] : memref<90x64x128xbf16, #tpu.memory_space<vmem>>, vector<1x64x128xbf16>
    %402 = vector.shape_cast %401 : vector<1x64x128xbf16> to vector<64x128xbf16>
    %cst_283 = arith.constant dense<0.000000e+00> : vector<8x128xf32>
    %403 = tpu.matmul %400, %402, %cst_283 {dimension_numbers = #tpu.dot_dimension_numbers<[1], [0], [0], [1], [0, 0, 1, 1], [], []>} : vector<8x64xbf16>, vector<64x128xbf16>, vector<8x128xf32> -> vector<8x128xf32>
    %404 = arith.addf %368, %403 : vector<8x128xf32>
    %c520 = arith.constant 520 : index
    %c0_284 = arith.constant 0 : index
    %405 = vector.load %arg11[%c520, %c0_284] : memref<720x64xf32, #tpu.memory_space<vmem>>, vector<8x64xf32>
    %406 = arith.truncf %405 : vector<8x64xf32> to vector<8x64xbf16>
    %c65 = arith.constant 65 : index
    %c0_285 = arith.constant 0 : index
    %c0_286 = arith.constant 0 : index
    %407 = vector.load %arg4[%c65, %c0_285, %c0_286] : memref<90x64x128xbf16, #tpu.memory_space<vmem>>, vector<1x64x128xbf16>
    %408 = vector.shape_cast %407 : vector<1x64x128xbf16> to vector<64x128xbf16>
    %cst_287 = arith.constant dense<0.000000e+00> : vector<8x128xf32>
    %409 = tpu.matmul %406, %408, %cst_287 {dimension_numbers = #tpu.dot_dimension_numbers<[1], [0], [0], [1], [0, 0, 1, 1], [], []>} : vector<8x64xbf16>, vector<64x128xbf16>, vector<8x128xf32> -> vector<8x128xf32>
    %410 = arith.addf %374, %409 : vector<8x128xf32>
    %c528 = arith.constant 528 : index
    %c0_288 = arith.constant 0 : index
    %411 = vector.load %arg11[%c528, %c0_288] : memref<720x64xf32, #tpu.memory_space<vmem>>, vector<8x64xf32>
    %412 = arith.truncf %411 : vector<8x64xf32> to vector<8x64xbf16>
    %c66 = arith.constant 66 : index
    %c0_289 = arith.constant 0 : index
    %c0_290 = arith.constant 0 : index
    %413 = vector.load %arg4[%c66, %c0_289, %c0_290] : memref<90x64x128xbf16, #tpu.memory_space<vmem>>, vector<1x64x128xbf16>
    %414 = vector.shape_cast %413 : vector<1x64x128xbf16> to vector<64x128xbf16>
    %cst_291 = arith.constant dense<0.000000e+00> : vector<8x128xf32>
    %415 = tpu.matmul %412, %414, %cst_291 {dimension_numbers = #tpu.dot_dimension_numbers<[1], [0], [0], [1], [0, 0, 1, 1], [], []>} : vector<8x64xbf16>, vector<64x128xbf16>, vector<8x128xf32> -> vector<8x128xf32>
    %416 = arith.addf %380, %415 : vector<8x128xf32>
    %c536 = arith.constant 536 : index
    %c0_292 = arith.constant 0 : index
    %417 = vector.load %arg11[%c536, %c0_292] : memref<720x64xf32, #tpu.memory_space<vmem>>, vector<8x64xf32>
    %418 = arith.truncf %417 : vector<8x64xf32> to vector<8x64xbf16>
    %c67 = arith.constant 67 : index
    %c0_293 = arith.constant 0 : index
    %c0_294 = arith.constant 0 : index
    %419 = vector.load %arg4[%c67, %c0_293, %c0_294] : memref<90x64x128xbf16, #tpu.memory_space<vmem>>, vector<1x64x128xbf16>
    %420 = vector.shape_cast %419 : vector<1x64x128xbf16> to vector<64x128xbf16>
    %cst_295 = arith.constant dense<0.000000e+00> : vector<8x128xf32>
    %421 = tpu.matmul %418, %420, %cst_295 {dimension_numbers = #tpu.dot_dimension_numbers<[1], [0], [0], [1], [0, 0, 1, 1], [], []>} : vector<8x64xbf16>, vector<64x128xbf16>, vector<8x128xf32> -> vector<8x128xf32>
    %422 = arith.addf %386, %421 : vector<8x128xf32>
    %c544 = arith.constant 544 : index
    %c0_296 = arith.constant 0 : index
    %423 = vector.load %arg11[%c544, %c0_296] : memref<720x64xf32, #tpu.memory_space<vmem>>, vector<8x64xf32>
    %424 = arith.truncf %423 : vector<8x64xf32> to vector<8x64xbf16>
    %c68 = arith.constant 68 : index
    %c0_297 = arith.constant 0 : index
    %c0_298 = arith.constant 0 : index
    %425 = vector.load %arg4[%c68, %c0_297, %c0_298] : memref<90x64x128xbf16, #tpu.memory_space<vmem>>, vector<1x64x128xbf16>
    %426 = vector.shape_cast %425 : vector<1x64x128xbf16> to vector<64x128xbf16>
    %cst_299 = arith.constant dense<0.000000e+00> : vector<8x128xf32>
    %427 = tpu.matmul %424, %426, %cst_299 {dimension_numbers = #tpu.dot_dimension_numbers<[1], [0], [0], [1], [0, 0, 1, 1], [], []>} : vector<8x64xbf16>, vector<64x128xbf16>, vector<8x128xf32> -> vector<8x128xf32>
    %428 = arith.addf %392, %427 : vector<8x128xf32>
    %c552 = arith.constant 552 : index
    %c0_300 = arith.constant 0 : index
    %429 = vector.load %arg11[%c552, %c0_300] : memref<720x64xf32, #tpu.memory_space<vmem>>, vector<8x64xf32>
    %430 = arith.truncf %429 : vector<8x64xf32> to vector<8x64xbf16>
    %c69 = arith.constant 69 : index
    %c0_301 = arith.constant 0 : index
    %c0_302 = arith.constant 0 : index
    %431 = vector.load %arg4[%c69, %c0_301, %c0_302] : memref<90x64x128xbf16, #tpu.memory_space<vmem>>, vector<1x64x128xbf16>
    %432 = vector.shape_cast %431 : vector<1x64x128xbf16> to vector<64x128xbf16>
    %cst_303 = arith.constant dense<0.000000e+00> : vector<8x128xf32>
    %433 = tpu.matmul %430, %432, %cst_303 {dimension_numbers = #tpu.dot_dimension_numbers<[1], [0], [0], [1], [0, 0, 1, 1], [], []>} : vector<8x64xbf16>, vector<64x128xbf16>, vector<8x128xf32> -> vector<8x128xf32>
    %434 = arith.addf %398, %433 : vector<8x128xf32>
    %c560 = arith.constant 560 : index
    %c0_304 = arith.constant 0 : index
    %435 = vector.load %arg11[%c560, %c0_304] : memref<720x64xf32, #tpu.memory_space<vmem>>, vector<8x64xf32>
    %436 = arith.truncf %435 : vector<8x64xf32> to vector<8x64xbf16>
    %c70 = arith.constant 70 : index
    %c0_305 = arith.constant 0 : index
    %c0_306 = arith.constant 0 : index
    %437 = vector.load %arg4[%c70, %c0_305, %c0_306] : memref<90x64x128xbf16, #tpu.memory_space<vmem>>, vector<1x64x128xbf16>
    %438 = vector.shape_cast %437 : vector<1x64x128xbf16> to vector<64x128xbf16>
    %cst_307 = arith.constant dense<0.000000e+00> : vector<8x128xf32>
    %439 = tpu.matmul %436, %438, %cst_307 {dimension_numbers = #tpu.dot_dimension_numbers<[1], [0], [0], [1], [0, 0, 1, 1], [], []>} : vector<8x64xbf16>, vector<64x128xbf16>, vector<8x128xf32> -> vector<8x128xf32>
    %440 = arith.addf %404, %439 : vector<8x128xf32>
    %c568 = arith.constant 568 : index
    %c0_308 = arith.constant 0 : index
    %441 = vector.load %arg11[%c568, %c0_308] : memref<720x64xf32, #tpu.memory_space<vmem>>, vector<8x64xf32>
    %442 = arith.truncf %441 : vector<8x64xf32> to vector<8x64xbf16>
    %c71 = arith.constant 71 : index
    %c0_309 = arith.constant 0 : index
    %c0_310 = arith.constant 0 : index
    %443 = vector.load %arg4[%c71, %c0_309, %c0_310] : memref<90x64x128xbf16, #tpu.memory_space<vmem>>, vector<1x64x128xbf16>
    %444 = vector.shape_cast %443 : vector<1x64x128xbf16> to vector<64x128xbf16>
    %cst_311 = arith.constant dense<0.000000e+00> : vector<8x128xf32>
    %445 = tpu.matmul %442, %444, %cst_311 {dimension_numbers = #tpu.dot_dimension_numbers<[1], [0], [0], [1], [0, 0, 1, 1], [], []>} : vector<8x64xbf16>, vector<64x128xbf16>, vector<8x128xf32> -> vector<8x128xf32>
    %446 = arith.addf %410, %445 : vector<8x128xf32>
    %c576 = arith.constant 576 : index
    %c0_312 = arith.constant 0 : index
    %447 = vector.load %arg11[%c576, %c0_312] : memref<720x64xf32, #tpu.memory_space<vmem>>, vector<8x64xf32>
    %448 = arith.truncf %447 : vector<8x64xf32> to vector<8x64xbf16>
    %c72_313 = arith.constant 72 : index
    %c0_314 = arith.constant 0 : index
    %c0_315 = arith.constant 0 : index
    %449 = vector.load %arg4[%c72_313, %c0_314, %c0_315] : memref<90x64x128xbf16, #tpu.memory_space<vmem>>, vector<1x64x128xbf16>
    %450 = vector.shape_cast %449 : vector<1x64x128xbf16> to vector<64x128xbf16>
    %cst_316 = arith.constant dense<0.000000e+00> : vector<8x128xf32>
    %451 = tpu.matmul %448, %450, %cst_316 {dimension_numbers = #tpu.dot_dimension_numbers<[1], [0], [0], [1], [0, 0, 1, 1], [], []>} : vector<8x64xbf16>, vector<64x128xbf16>, vector<8x128xf32> -> vector<8x128xf32>
    %452 = arith.addf %416, %451 : vector<8x128xf32>
    %c584 = arith.constant 584 : index
    %c0_317 = arith.constant 0 : index
    %453 = vector.load %arg11[%c584, %c0_317] : memref<720x64xf32, #tpu.memory_space<vmem>>, vector<8x64xf32>
    %454 = arith.truncf %453 : vector<8x64xf32> to vector<8x64xbf16>
    %c73 = arith.constant 73 : index
    %c0_318 = arith.constant 0 : index
    %c0_319 = arith.constant 0 : index
    %455 = vector.load %arg4[%c73, %c0_318, %c0_319] : memref<90x64x128xbf16, #tpu.memory_space<vmem>>, vector<1x64x128xbf16>
    %456 = vector.shape_cast %455 : vector<1x64x128xbf16> to vector<64x128xbf16>
    %cst_320 = arith.constant dense<0.000000e+00> : vector<8x128xf32>
    %457 = tpu.matmul %454, %456, %cst_320 {dimension_numbers = #tpu.dot_dimension_numbers<[1], [0], [0], [1], [0, 0, 1, 1], [], []>} : vector<8x64xbf16>, vector<64x128xbf16>, vector<8x128xf32> -> vector<8x128xf32>
    %458 = arith.addf %422, %457 : vector<8x128xf32>
    %c592 = arith.constant 592 : index
    %c0_321 = arith.constant 0 : index
    %459 = vector.load %arg11[%c592, %c0_321] : memref<720x64xf32, #tpu.memory_space<vmem>>, vector<8x64xf32>
    %460 = arith.truncf %459 : vector<8x64xf32> to vector<8x64xbf16>
    %c74 = arith.constant 74 : index
    %c0_322 = arith.constant 0 : index
    %c0_323 = arith.constant 0 : index
    %461 = vector.load %arg4[%c74, %c0_322, %c0_323] : memref<90x64x128xbf16, #tpu.memory_space<vmem>>, vector<1x64x128xbf16>
    %462 = vector.shape_cast %461 : vector<1x64x128xbf16> to vector<64x128xbf16>
    %cst_324 = arith.constant dense<0.000000e+00> : vector<8x128xf32>
    %463 = tpu.matmul %460, %462, %cst_324 {dimension_numbers = #tpu.dot_dimension_numbers<[1], [0], [0], [1], [0, 0, 1, 1], [], []>} : vector<8x64xbf16>, vector<64x128xbf16>, vector<8x128xf32> -> vector<8x128xf32>
    %464 = arith.addf %428, %463 : vector<8x128xf32>
    %c600 = arith.constant 600 : index
    %c0_325 = arith.constant 0 : index
    %465 = vector.load %arg11[%c600, %c0_325] : memref<720x64xf32, #tpu.memory_space<vmem>>, vector<8x64xf32>
    %466 = arith.truncf %465 : vector<8x64xf32> to vector<8x64xbf16>
    %c75 = arith.constant 75 : index
    %c0_326 = arith.constant 0 : index
    %c0_327 = arith.constant 0 : index
    %467 = vector.load %arg4[%c75, %c0_326, %c0_327] : memref<90x64x128xbf16, #tpu.memory_space<vmem>>, vector<1x64x128xbf16>
    %468 = vector.shape_cast %467 : vector<1x64x128xbf16> to vector<64x128xbf16>
    %cst_328 = arith.constant dense<0.000000e+00> : vector<8x128xf32>
    %469 = tpu.matmul %466, %468, %cst_328 {dimension_numbers = #tpu.dot_dimension_numbers<[1], [0], [0], [1], [0, 0, 1, 1], [], []>} : vector<8x64xbf16>, vector<64x128xbf16>, vector<8x128xf32> -> vector<8x128xf32>
    %470 = arith.addf %434, %469 : vector<8x128xf32>
    %c608 = arith.constant 608 : index
    %c0_329 = arith.constant 0 : index
    %471 = vector.load %arg11[%c608, %c0_329] : memref<720x64xf32, #tpu.memory_space<vmem>>, vector<8x64xf32>
    %472 = arith.truncf %471 : vector<8x64xf32> to vector<8x64xbf16>
    %c76 = arith.constant 76 : index
    %c0_330 = arith.constant 0 : index
    %c0_331 = arith.constant 0 : index
    %473 = vector.load %arg4[%c76, %c0_330, %c0_331] : memref<90x64x128xbf16, #tpu.memory_space<vmem>>, vector<1x64x128xbf16>
    %474 = vector.shape_cast %473 : vector<1x64x128xbf16> to vector<64x128xbf16>
    %cst_332 = arith.constant dense<0.000000e+00> : vector<8x128xf32>
    %475 = tpu.matmul %472, %474, %cst_332 {dimension_numbers = #tpu.dot_dimension_numbers<[1], [0], [0], [1], [0, 0, 1, 1], [], []>} : vector<8x64xbf16>, vector<64x128xbf16>, vector<8x128xf32> -> vector<8x128xf32>
    %476 = arith.addf %440, %475 : vector<8x128xf32>
    %c616 = arith.constant 616 : index
    %c0_333 = arith.constant 0 : index
    %477 = vector.load %arg11[%c616, %c0_333] : memref<720x64xf32, #tpu.memory_space<vmem>>, vector<8x64xf32>
    %478 = arith.truncf %477 : vector<8x64xf32> to vector<8x64xbf16>
    %c77 = arith.constant 77 : index
    %c0_334 = arith.constant 0 : index
    %c0_335 = arith.constant 0 : index
    %479 = vector.load %arg4[%c77, %c0_334, %c0_335] : memref<90x64x128xbf16, #tpu.memory_space<vmem>>, vector<1x64x128xbf16>
    %480 = vector.shape_cast %479 : vector<1x64x128xbf16> to vector<64x128xbf16>
    %cst_336 = arith.constant dense<0.000000e+00> : vector<8x128xf32>
    %481 = tpu.matmul %478, %480, %cst_336 {dimension_numbers = #tpu.dot_dimension_numbers<[1], [0], [0], [1], [0, 0, 1, 1], [], []>} : vector<8x64xbf16>, vector<64x128xbf16>, vector<8x128xf32> -> vector<8x128xf32>
    %482 = arith.addf %446, %481 : vector<8x128xf32>
    %c624 = arith.constant 624 : index
    %c0_337 = arith.constant 0 : index
    %483 = vector.load %arg11[%c624, %c0_337] : memref<720x64xf32, #tpu.memory_space<vmem>>, vector<8x64xf32>
    %484 = arith.truncf %483 : vector<8x64xf32> to vector<8x64xbf16>
    %c78 = arith.constant 78 : index
    %c0_338 = arith.constant 0 : index
    %c0_339 = arith.constant 0 : index
    %485 = vector.load %arg4[%c78, %c0_338, %c0_339] : memref<90x64x128xbf16, #tpu.memory_space<vmem>>, vector<1x64x128xbf16>
    %486 = vector.shape_cast %485 : vector<1x64x128xbf16> to vector<64x128xbf16>
    %cst_340 = arith.constant dense<0.000000e+00> : vector<8x128xf32>
    %487 = tpu.matmul %484, %486, %cst_340 {dimension_numbers = #tpu.dot_dimension_numbers<[1], [0], [0], [1], [0, 0, 1, 1], [], []>} : vector<8x64xbf16>, vector<64x128xbf16>, vector<8x128xf32> -> vector<8x128xf32>
    %488 = arith.addf %452, %487 : vector<8x128xf32>
    %c632 = arith.constant 632 : index
    %c0_341 = arith.constant 0 : index
    %489 = vector.load %arg11[%c632, %c0_341] : memref<720x64xf32, #tpu.memory_space<vmem>>, vector<8x64xf32>
    %490 = arith.truncf %489 : vector<8x64xf32> to vector<8x64xbf16>
    %c79 = arith.constant 79 : index
    %c0_342 = arith.constant 0 : index
    %c0_343 = arith.constant 0 : index
    %491 = vector.load %arg4[%c79, %c0_342, %c0_343] : memref<90x64x128xbf16, #tpu.memory_space<vmem>>, vector<1x64x128xbf16>
    %492 = vector.shape_cast %491 : vector<1x64x128xbf16> to vector<64x128xbf16>
    %cst_344 = arith.constant dense<0.000000e+00> : vector<8x128xf32>
    %493 = tpu.matmul %490, %492, %cst_344 {dimension_numbers = #tpu.dot_dimension_numbers<[1], [0], [0], [1], [0, 0, 1, 1], [], []>} : vector<8x64xbf16>, vector<64x128xbf16>, vector<8x128xf32> -> vector<8x128xf32>
    %494 = arith.addf %458, %493 : vector<8x128xf32>
    %c640 = arith.constant 640 : index
    %c0_345 = arith.constant 0 : index
    %495 = vector.load %arg11[%c640, %c0_345] : memref<720x64xf32, #tpu.memory_space<vmem>>, vector<8x64xf32>
    %496 = arith.truncf %495 : vector<8x64xf32> to vector<8x64xbf16>
    %c80_346 = arith.constant 80 : index
    %c0_347 = arith.constant 0 : index
    %c0_348 = arith.constant 0 : index
    %497 = vector.load %arg4[%c80_346, %c0_347, %c0_348] : memref<90x64x128xbf16, #tpu.memory_space<vmem>>, vector<1x64x128xbf16>
    %498 = vector.shape_cast %497 : vector<1x64x128xbf16> to vector<64x128xbf16>
    %cst_349 = arith.constant dense<0.000000e+00> : vector<8x128xf32>
    %499 = tpu.matmul %496, %498, %cst_349 {dimension_numbers = #tpu.dot_dimension_numbers<[1], [0], [0], [1], [0, 0, 1, 1], [], []>} : vector<8x64xbf16>, vector<64x128xbf16>, vector<8x128xf32> -> vector<8x128xf32>
    %500 = arith.addf %464, %499 : vector<8x128xf32>
    %c648 = arith.constant 648 : index
    %c0_350 = arith.constant 0 : index
    %501 = vector.load %arg11[%c648, %c0_350] : memref<720x64xf32, #tpu.memory_space<vmem>>, vector<8x64xf32>
    %502 = arith.truncf %501 : vector<8x64xf32> to vector<8x64xbf16>
    %c81 = arith.constant 81 : index
    %c0_351 = arith.constant 0 : index
    %c0_352 = arith.constant 0 : index
    %503 = vector.load %arg4[%c81, %c0_351, %c0_352] : memref<90x64x128xbf16, #tpu.memory_space<vmem>>, vector<1x64x128xbf16>
    %504 = vector.shape_cast %503 : vector<1x64x128xbf16> to vector<64x128xbf16>
    %cst_353 = arith.constant dense<0.000000e+00> : vector<8x128xf32>
    %505 = tpu.matmul %502, %504, %cst_353 {dimension_numbers = #tpu.dot_dimension_numbers<[1], [0], [0], [1], [0, 0, 1, 1], [], []>} : vector<8x64xbf16>, vector<64x128xbf16>, vector<8x128xf32> -> vector<8x128xf32>
    %506 = arith.addf %470, %505 : vector<8x128xf32>
    %c656 = arith.constant 656 : index
    %c0_354 = arith.constant 0 : index
    %507 = vector.load %arg11[%c656, %c0_354] : memref<720x64xf32, #tpu.memory_space<vmem>>, vector<8x64xf32>
    %508 = arith.truncf %507 : vector<8x64xf32> to vector<8x64xbf16>
    %c82 = arith.constant 82 : index
    %c0_355 = arith.constant 0 : index
    %c0_356 = arith.constant 0 : index
    %509 = vector.load %arg4[%c82, %c0_355, %c0_356] : memref<90x64x128xbf16, #tpu.memory_space<vmem>>, vector<1x64x128xbf16>
    %510 = vector.shape_cast %509 : vector<1x64x128xbf16> to vector<64x128xbf16>
    %cst_357 = arith.constant dense<0.000000e+00> : vector<8x128xf32>
    %511 = tpu.matmul %508, %510, %cst_357 {dimension_numbers = #tpu.dot_dimension_numbers<[1], [0], [0], [1], [0, 0, 1, 1], [], []>} : vector<8x64xbf16>, vector<64x128xbf16>, vector<8x128xf32> -> vector<8x128xf32>
    %512 = arith.addf %476, %511 : vector<8x128xf32>
    %c664 = arith.constant 664 : index
    %c0_358 = arith.constant 0 : index
    %513 = vector.load %arg11[%c664, %c0_358] : memref<720x64xf32, #tpu.memory_space<vmem>>, vector<8x64xf32>
    %514 = arith.truncf %513 : vector<8x64xf32> to vector<8x64xbf16>
    %c83 = arith.constant 83 : index
    %c0_359 = arith.constant 0 : index
    %c0_360 = arith.constant 0 : index
    %515 = vector.load %arg4[%c83, %c0_359, %c0_360] : memref<90x64x128xbf16, #tpu.memory_space<vmem>>, vector<1x64x128xbf16>
    %516 = vector.shape_cast %515 : vector<1x64x128xbf16> to vector<64x128xbf16>
    %cst_361 = arith.constant dense<0.000000e+00> : vector<8x128xf32>
    %517 = tpu.matmul %514, %516, %cst_361 {dimension_numbers = #tpu.dot_dimension_numbers<[1], [0], [0], [1], [0, 0, 1, 1], [], []>} : vector<8x64xbf16>, vector<64x128xbf16>, vector<8x128xf32> -> vector<8x128xf32>
    %518 = arith.addf %482, %517 : vector<8x128xf32>
    %c672 = arith.constant 672 : index
    %c0_362 = arith.constant 0 : index
    %519 = vector.load %arg11[%c672, %c0_362] : memref<720x64xf32, #tpu.memory_space<vmem>>, vector<8x64xf32>
    %520 = arith.truncf %519 : vector<8x64xf32> to vector<8x64xbf16>
    %c84 = arith.constant 84 : index
    %c0_363 = arith.constant 0 : index
    %c0_364 = arith.constant 0 : index
    %521 = vector.load %arg4[%c84, %c0_363, %c0_364] : memref<90x64x128xbf16, #tpu.memory_space<vmem>>, vector<1x64x128xbf16>
    %522 = vector.shape_cast %521 : vector<1x64x128xbf16> to vector<64x128xbf16>
    %cst_365 = arith.constant dense<0.000000e+00> : vector<8x128xf32>
    %523 = tpu.matmul %520, %522, %cst_365 {dimension_numbers = #tpu.dot_dimension_numbers<[1], [0], [0], [1], [0, 0, 1, 1], [], []>} : vector<8x64xbf16>, vector<64x128xbf16>, vector<8x128xf32> -> vector<8x128xf32>
    %524 = arith.addf %488, %523 : vector<8x128xf32>
    %c680 = arith.constant 680 : index
    %c0_366 = arith.constant 0 : index
    %525 = vector.load %arg11[%c680, %c0_366] : memref<720x64xf32, #tpu.memory_space<vmem>>, vector<8x64xf32>
    %526 = arith.truncf %525 : vector<8x64xf32> to vector<8x64xbf16>
    %c85 = arith.constant 85 : index
    %c0_367 = arith.constant 0 : index
    %c0_368 = arith.constant 0 : index
    %527 = vector.load %arg4[%c85, %c0_367, %c0_368] : memref<90x64x128xbf16, #tpu.memory_space<vmem>>, vector<1x64x128xbf16>
    %528 = vector.shape_cast %527 : vector<1x64x128xbf16> to vector<64x128xbf16>
    %cst_369 = arith.constant dense<0.000000e+00> : vector<8x128xf32>
    %529 = tpu.matmul %526, %528, %cst_369 {dimension_numbers = #tpu.dot_dimension_numbers<[1], [0], [0], [1], [0, 0, 1, 1], [], []>} : vector<8x64xbf16>, vector<64x128xbf16>, vector<8x128xf32> -> vector<8x128xf32>
    %530 = arith.addf %494, %529 : vector<8x128xf32>
    %c688 = arith.constant 688 : index
    %c0_370 = arith.constant 0 : index
    %531 = vector.load %arg11[%c688, %c0_370] : memref<720x64xf32, #tpu.memory_space<vmem>>, vector<8x64xf32>
    %532 = arith.truncf %531 : vector<8x64xf32> to vector<8x64xbf16>
    %c86 = arith.constant 86 : index
    %c0_371 = arith.constant 0 : index
    %c0_372 = arith.constant 0 : index
    %533 = vector.load %arg4[%c86, %c0_371, %c0_372] : memref<90x64x128xbf16, #tpu.memory_space<vmem>>, vector<1x64x128xbf16>
    %534 = vector.shape_cast %533 : vector<1x64x128xbf16> to vector<64x128xbf16>
    %cst_373 = arith.constant dense<0.000000e+00> : vector<8x128xf32>
    %535 = tpu.matmul %532, %534, %cst_373 {dimension_numbers = #tpu.dot_dimension_numbers<[1], [0], [0], [1], [0, 0, 1, 1], [], []>} : vector<8x64xbf16>, vector<64x128xbf16>, vector<8x128xf32> -> vector<8x128xf32>
    %536 = arith.addf %500, %535 : vector<8x128xf32>
    %c696 = arith.constant 696 : index
    %c0_374 = arith.constant 0 : index
    %537 = vector.load %arg11[%c696, %c0_374] : memref<720x64xf32, #tpu.memory_space<vmem>>, vector<8x64xf32>
    %538 = arith.truncf %537 : vector<8x64xf32> to vector<8x64xbf16>
    %c87 = arith.constant 87 : index
    %c0_375 = arith.constant 0 : index
    %c0_376 = arith.constant 0 : index
    %539 = vector.load %arg4[%c87, %c0_375, %c0_376] : memref<90x64x128xbf16, #tpu.memory_space<vmem>>, vector<1x64x128xbf16>
    %540 = vector.shape_cast %539 : vector<1x64x128xbf16> to vector<64x128xbf16>
    %cst_377 = arith.constant dense<0.000000e+00> : vector<8x128xf32>
    %541 = tpu.matmul %538, %540, %cst_377 {dimension_numbers = #tpu.dot_dimension_numbers<[1], [0], [0], [1], [0, 0, 1, 1], [], []>} : vector<8x64xbf16>, vector<64x128xbf16>, vector<8x128xf32> -> vector<8x128xf32>
    %542 = arith.addf %506, %541 : vector<8x128xf32>
    %c704 = arith.constant 704 : index
    %c0_378 = arith.constant 0 : index
    %543 = vector.load %arg11[%c704, %c0_378] : memref<720x64xf32, #tpu.memory_space<vmem>>, vector<8x64xf32>
    %544 = arith.truncf %543 : vector<8x64xf32> to vector<8x64xbf16>
    %c88_379 = arith.constant 88 : index
    %c0_380 = arith.constant 0 : index
    %c0_381 = arith.constant 0 : index
    %545 = vector.load %arg4[%c88_379, %c0_380, %c0_381] : memref<90x64x128xbf16, #tpu.memory_space<vmem>>, vector<1x64x128xbf16>
    %546 = vector.shape_cast %545 : vector<1x64x128xbf16> to vector<64x128xbf16>
    %cst_382 = arith.constant dense<0.000000e+00> : vector<8x128xf32>
    %547 = tpu.matmul %544, %546, %cst_382 {dimension_numbers = #tpu.dot_dimension_numbers<[1], [0], [0], [1], [0, 0, 1, 1], [], []>} : vector<8x64xbf16>, vector<64x128xbf16>, vector<8x128xf32> -> vector<8x128xf32>
    %548 = arith.addf %512, %547 : vector<8x128xf32>
    %c712 = arith.constant 712 : index
    %c0_383 = arith.constant 0 : index
    %549 = vector.load %arg11[%c712, %c0_383] : memref<720x64xf32, #tpu.memory_space<vmem>>, vector<8x64xf32>
    %550 = arith.truncf %549 : vector<8x64xf32> to vector<8x64xbf16>
    %c89 = arith.constant 89 : index
    %c0_384 = arith.constant 0 : index
    %c0_385 = arith.constant 0 : index
    %551 = vector.load %arg4[%c89, %c0_384, %c0_385] : memref<90x64x128xbf16, #tpu.memory_space<vmem>>, vector<1x64x128xbf16>
    %552 = vector.shape_cast %551 : vector<1x64x128xbf16> to vector<64x128xbf16>
    %cst_386 = arith.constant dense<0.000000e+00> : vector<8x128xf32>
    %553 = tpu.matmul %550, %552, %cst_386 {dimension_numbers = #tpu.dot_dimension_numbers<[1], [0], [0], [1], [0, 0, 1, 1], [], []>} : vector<8x64xbf16>, vector<64x128xbf16>, vector<8x128xf32> -> vector<8x128xf32>
    %554 = arith.addf %518, %553 : vector<8x128xf32>
    %555 = arith.addf %524, %530 : vector<8x128xf32>
    %556 = arith.addf %555, %536 : vector<8x128xf32>
    %557 = arith.addf %556, %542 : vector<8x128xf32>
    %558 = arith.addf %557, %548 : vector<8x128xf32>
    %559 = arith.addf %558, %554 : vector<8x128xf32>
    %c0_387 = arith.constant 0 : index
    %c0_388 = arith.constant 0 : index
    %560 = vector.load %arg5[%c0_387, %c0_388] : memref<1x128xf32, #tpu.memory_space<vmem>>, vector<1x128xf32>
    %561 = vector.broadcast %560 : vector<1x128xf32> to vector<8x128xf32>
    %562 = arith.addf %559, %561 : vector<8x128xf32>
    %cst_389 = arith.constant 0.000000e+00 : f32
    %563 = vector.broadcast %cst_389 : f32 to vector<8x128xf32>
    %564 = arith.maximumf %562, %563 : vector<8x128xf32>
    %565 = arith.truncf %564 : vector<8x128xf32> to vector<8x128xbf16>
    %c0_390 = arith.constant 0 : index
    %c0_391 = arith.constant 0 : index
    %566 = vector.load %arg6[%c0_390, %c0_391] : memref<128x160xbf16, #tpu.memory_space<vmem>>, vector<128x160xbf16>
    %cst_392 = arith.constant dense<0.000000e+00> : vector<8x160xf32>
    %567 = tpu.matmul %565, %566, %cst_392 {dimension_numbers = #tpu.dot_dimension_numbers<[1], [0], [0], [1], [0, 0, 1, 1], [], []>} : vector<8x128xbf16>, vector<128x160xbf16>, vector<8x160xf32> -> vector<8x160xf32>
    %c0_393 = arith.constant 0 : index
    %c0_394 = arith.constant 0 : index
    %568 = vector.load %arg7[%c0_393, %c0_394] : memref<1x160xf32, #tpu.memory_space<vmem>>, vector<1x160xf32>
    %569 = vector.broadcast %568 : vector<1x160xf32> to vector<8x160xf32>
    %570 = arith.addf %567, %569 : vector<8x160xf32>
    %cst_395 = arith.constant 0.000000e+00 : f32
    %571 = vector.broadcast %cst_395 : f32 to vector<8x160xf32>
    %572 = arith.maximumf %570, %571 : vector<8x160xf32>
    %573 = arith.truncf %572 : vector<8x160xf32> to vector<8x160xbf16>
    %c0_396 = arith.constant 0 : index
    %c0_397 = arith.constant 0 : index
    %574 = vector.load %arg8[%c0_396, %c0_397] : memref<160x128xbf16, #tpu.memory_space<vmem>>, vector<160x128xbf16>
    %cst_398 = arith.constant dense<0.000000e+00> : vector<8x128xf32>
    %575 = tpu.matmul %573, %574, %cst_398 {dimension_numbers = #tpu.dot_dimension_numbers<[1], [0], [0], [1], [0, 0, 1, 1], [], []>} : vector<8x160xbf16>, vector<160x128xbf16>, vector<8x128xf32> -> vector<8x128xf32>
    %c0_399 = arith.constant 0 : index
    %c0_400 = arith.constant 0 : index
    %576 = vector.load %arg9[%c0_399, %c0_400] : memref<1x128xf32, #tpu.memory_space<vmem>>, vector<1x128xf32>
    %577 = vector.broadcast %576 : vector<1x128xf32> to vector<8x128xf32>
    %578 = arith.addf %575, %577 : vector<8x128xf32>
    %cst_401 = arith.constant 0.000000e+00 : f32
    %579 = vector.broadcast %cst_401 : f32 to vector<8x128xf32>
    %580 = arith.subf %579, %578 : vector<8x128xf32>
    %581 = math.exp %580 : vector<8x128xf32>
    %cst_402 = arith.constant 1.000000e+00 : f32
    %582 = vector.broadcast %cst_402 : f32 to vector<8x128xf32>
    %583 = arith.addf %582, %581 : vector<8x128xf32>
    %cst_403 = arith.constant 1.000000e+00 : f32
    %584 = vector.broadcast %cst_403 : f32 to vector<8x128xf32>
    %585 = arith.divf %584, %583 : vector<8x128xf32>
    %586 = vector.extract_strided_slice %585 {offsets = [0, 0], sizes = [8, 1], strides = [1, 1]} : vector<8x128xf32> to vector<8x1xf32>
    %587 = vector.extract_strided_slice %585 {offsets = [0, 1], sizes = [8, 1], strides = [1, 1]} : vector<8x128xf32> to vector<8x1xf32>
    %588 = math.log %587 : vector<8x1xf32>
    %cst_404 = arith.constant -1.000000e+02 : f32
    %589 = vector.broadcast %cst_404 : f32 to vector<8x1xf32>
    %590 = arith.maximumf %588, %589 : vector<8x1xf32>
    %cst_405 = arith.constant 1.000000e+00 : f32
    %591 = vector.broadcast %cst_405 : f32 to vector<8x1xf32>
    %592 = arith.subf %591, %587 : vector<8x1xf32>
    %593 = math.log %592 : vector<8x1xf32>
    %cst_406 = arith.constant -1.000000e+02 : f32
    %594 = vector.broadcast %cst_406 : f32 to vector<8x1xf32>
    %595 = arith.maximumf %593, %594 : vector<8x1xf32>
    %c1_407 = arith.constant 1 : index
    %596 = memref.load %arg0[%c1_407] : memref<2xi32, #tpu.memory_space<smem>>
    %c1_i32 = arith.constant 1 : i32
    %597 = arith.cmpi eq, %596, %c1_i32 : i32
    %cst_408 = arith.constant 0.000000e+00 : f32
    %598 = vector.broadcast %cst_408 : f32 to vector<8x1xf32>
    %599 = arith.subf %598, %590 : vector<8x1xf32>
    %cst_409 = arith.constant 0.000000e+00 : f32
    %600 = vector.broadcast %cst_409 : f32 to vector<8x1xf32>
    %601 = arith.subf %600, %595 : vector<8x1xf32>
    %602 = arith.select %597, %599, %601 : vector<8x1xf32>
    %c0_410 = arith.constant 0 : index
    %603 = memref.load %arg0[%c0_410] : memref<2xi32, #tpu.memory_space<smem>>
    %604 = tpu.iota {dimensions = array<i32: 0>} : vector<8x1xi32>
    %605 = vector.broadcast %603 : i32 to vector<8x1xi32>
    %606 = arith.cmpi slt, %604, %605 : vector<8x1xi32>
    %607 = arith.extui %606 : vector<8x1xi1> to vector<8x1xi32>
    %608 = arith.sitofp %607 : vector<8x1xi32> to vector<8x1xf32>
    %609 = arith.mulf %602, %608 : vector<8x1xf32>
    %610 = vector.shape_cast %609 : vector<8x1xf32> to vector<1x8x1xf32>
    %cst_411 = arith.constant dense<0.000000e+00> : vector<1xf32>
    %611 = vector.multi_reduction <add>, %610, %cst_411 [1, 2] : vector<1x8x1xf32> to vector<1xf32>
    %612 = vector.shape_cast %611 : vector<1xf32> to vector<1x1x1xf32>
    %613 = vector.extract %612[0, 0, 0] : f32 from vector<1x1x1xf32>
    %614 = arith.sitofp %603 : i32 to f32
    %615 = arith.divf %613, %614 : f32
    %616 = tpu.iota {dimensions = array<i32: 1>} : vector<8x128xi32>
    %c0_i32 = arith.constant 0 : i32
    %617 = vector.broadcast %c0_i32 : i32 to vector<8x128xi32>
    %618 = arith.cmpi eq, %616, %617 : vector<8x128xi32>
    %c1_i32_412 = arith.constant 1 : i32
    %619 = vector.broadcast %c1_i32_412 : i32 to vector<8x128xi32>
    %620 = arith.cmpi eq, %616, %619 : vector<8x128xi32>
    %cst_413 = arith.constant 0.000000e+00 : f32
    %621 = vector.broadcast %615 : f32 to vector<8x128xf32>
    %622 = vector.broadcast %cst_413 : f32 to vector<8x128xf32>
    %623 = arith.select %620, %621, %622 : vector<8x128xi1>, vector<8x128xf32>
    %624 = vector.shape_cast %586 : vector<8x1xf32> to vector<8x1xf32>
    %625 = vector.broadcast %624 : vector<8x1xf32> to vector<8x128xf32>
    %626 = arith.select %618, %625, %623 : vector<8x128xi1>, vector<8x128xf32>
    %c0_414 = arith.constant 0 : index
    %c0_415 = arith.constant 0 : index
    %627 = vector.load %arg10[%c0_414, %c0_415] : memref<8x128xf32, #tpu.memory_space<vmem>>, vector<8x128xf32>
    tpu.vector_store %arg10[%c0_414, %c0_415], %626 {strides = array<i32>} : memref<8x128xf32, #tpu.memory_space<vmem>>, vector<8x128xf32>,
    return
  }
}

</mosaic_0001>

<llo_original>
// kernel: tpu_custom_call.1
$region0: #{tpu_custom_call.1}
  #allocation0 [shape = 'u32[]', space=smem, size = 0x4, offset = 0x4, fixed_abs, tag = 'smem constant byte address 0x4 - core index']
  #allocation1 [shape = 'u32[144,128]{1,0:T(1,128)}', space=vmem, size = 0x12000, scoped, tag = 'internal scratch']
  #allocation2 [shape = 'f32[720,64]{1,0:T(8,128)}', space=vmem, size = 0x5a000, scoped, tag = 'scratch operand']
  %s0 = inlined_call_operand.hbm [shape: s32[2], index: 0, kind: input, shape index: {}]
  %s1 = inlined_call_operand.vmem [shape: bf16[720,270], index: 1, kind: input, shape index: {}]
  %s2 = inlined_call_operand.vmem [shape: bf16[270,64], index: 2, kind: input, shape index: {}]
  %s3 = inlined_call_operand.hbm [shape: f32[1,64], index: 3, kind: input, shape index: {}]
  %s4 = inlined_call_operand.hbm [shape: bf16[90,64,128], index: 4, kind: input, shape index: {}]
  %s5 = inlined_call_operand.hbm [shape: f32[1,128], index: 5, kind: input, shape index: {}]
  %s6 = inlined_call_operand.vmem [shape: bf16[128,160], index: 6, kind: input, shape index: {}]
  %s7 = inlined_call_operand.hbm [shape: f32[1,160], index: 7, kind: input, shape index: {}]
  %s8 = inlined_call_operand.hbm [shape: bf16[160,128], index: 8, kind: input, shape index: {}]
  %s9 = inlined_call_operand.hbm [shape: f32[1,128], index: 9, kind: input, shape index: {}]
  %s10 = inlined_call_operand.hbm [shape: f32[8,128], index: 10, kind: output, shape index: {}]
  %s11 = sld [smem:[#allocation0]]
  $region78: #{tpu_custom_call.1} parent=0
    _
  %s13 = ssub.s32 1, %s11
  %s14 = scalar_select 0, %s13, %s11
  $region1: #{tpu_custom_call.1} parent=0
    #allocation3 [shape = 'u8[512]{0}', space=smem, size = 0x200, scoped, tag = 'input window, operand 0, single buffered']
    #allocation4 [shape = 's32[1]{0}', space=sflag, size = 0x4, scoped, tag = 'scoped memory for tpu_custom_call.1']
    #allocation5 [shape = 's32[1]{0}', space=sflag, size = 0x4, scoped, tag = 'scoped memory for tpu_custom_call.1']
    #allocation6 [shape = 's32[1]{0}', space=sflag, size = 0x4, scoped, tag = 'scoped memory for tpu_custom_call.1']
    #allocation7 [shape = 'u8[512]{0}', space=vmem, size = 0x400, scoped, tag = 'input window, operand 3, single buffered']
    #allocation8 [shape = 'u8[1474560]{0}', space=vmem, size = 0x168000, scoped, tag = 'input window, operand 4, single buffered']
    #allocation9 [shape = 's32[1]{0}', space=sflag, size = 0x4, scoped, tag = 'scoped memory for tpu_custom_call.1']
    #allocation10 [shape = 'u8[512]{0}', space=vmem, size = 0x400, scoped, tag = 'input window, operand 5, single buffered']
    #allocation11 [shape = 'u8[1024]{0}', space=vmem, size = 0x400, scoped, tag = 'input window, operand 7, single buffered']
    #allocation12 [shape = 's32[1]{0}', space=sflag, size = 0x4, scoped, tag = 'scoped memory for tpu_custom_call.1']
    #allocation13 [shape = 'u8[40960]{0}', space=vmem, size = 0xa000, scoped, tag = 'input window, operand 8, single buffered']
    #allocation14 [shape = 'u8[512]{0}', space=vmem, size = 0x400, scoped, tag = 'input window, operand 9, single buffered']
    #allocation15 [shape = 's32[1]{0}', space=sflag, size = 0x4, scoped, tag = 'scoped memory for tpu_custom_call.1']
    #allocation16 [shape = 'u8[4096]{0}', space=vmem, size = 0x1000, scoped, tag = 'output window, operand 0, single buffered']
    %15 = vsyncpa [#allocation6], 0
    %16 = vsyncpa [#allocation4], 0
    %17 = vsyncpa [#allocation9], 0
    %18 = vsyncpa [#allocation12], 0
    %19 = vsyncpa [#allocation15], 0
    %20 = vsyncpa [#allocation5], 0
    // Predicated region
    $region2: #{tpu_custom_call.1} parent=1 // pred_check
      _
    $region3: #{tpu_custom_call.1} parent=1 // pred_check_branch
      %22 = sbr.rel (0) target = $region5
    $region4: #{tpu_custom_call.1} parent=1 // pred_region
      %s24 = ssub.s32 16, 16
      %25 = vsyncadd [#allocation6], %s24
      %28 = dma.hbm_to_smem %s0, 16, [#allocation3], [#allocation6]
    $region5: #{tpu_custom_call.1} parent=1 // pred_fallthru
      _
    // Predicated region
    $region6: #{tpu_custom_call.1} parent=1 // pred_check
      _
    $region7: #{tpu_custom_call.1} parent=1 // pred_check_branch
      %30 = sbr.rel (0) target = $region9
    $region8: #{tpu_custom_call.1} parent=1 // pred_region
      _
    $region9: #{tpu_custom_call.1} parent=1 // pred_fallthru
      _
    // Predicated region
    $region10: #{tpu_custom_call.1} parent=1 // pred_check
      _
    $region11: #{tpu_custom_call.1} parent=1 // pred_check_branch
      %32 = sbr.rel (0) target = $region13
    $region12: #{tpu_custom_call.1} parent=1 // pred_region
      _
    $region13: #{tpu_custom_call.1} parent=1 // pred_fallthru
      _
    // Predicated region
    $region14: #{tpu_custom_call.1} parent=1 // pred_check
      _
    $region15: #{tpu_custom_call.1} parent=1 // pred_check_branch
      %34 = sbr.rel (0) target = $region17
    $region16: #{tpu_custom_call.1} parent=1 // pred_region
      %s36 = ssub.s32 16, 16
      %37 = vsyncadd [#allocation4], %s36
      %s39 = sshll.u32 [#allocation7], 4
      %s40 = int_to_ptr.vmem [resolvable:$true] %s39
      %42 = dma.hbm_to_vmem [thread:$0]  %s3, 16, %s40, [#allocation4]
    $region17: #{tpu_custom_call.1} parent=1 // pred_fallthru
      _
    // Predicated region
    $region18: #{tpu_custom_call.1} parent=1 // pred_check
      _
    $region19: #{tpu_custom_call.1} parent=1 // pred_check_branch
      %44 = sbr.rel (0) target = $region21
    $region20: #{tpu_custom_call.1} parent=1 // pred_region
      %s46 = ssub.s32 46080, 46080
      %47 = vsyncadd [#allocation9], %s46
      %s48 = sshll.u32 [#allocation8], 4
      %s49 = int_to_ptr.vmem [resolvable:$true] %s48
      %54 = dma.hbm_to_vmem [thread:$0]  %s4, 46080, %s49, [#allocation9], 64, 64, 4
    $region21: #{tpu_custom_call.1} parent=1 // pred_fallthru
      _
    // Predicated region
    $region22: #{tpu_custom_call.1} parent=1 // pred_check
      _
    $region23: #{tpu_custom_call.1} parent=1 // pred_check_branch
      %56 = sbr.rel (0) target = $region25
    $region24: #{tpu_custom_call.1} parent=1 // pred_region
      %s58 = ssub.s32 16, 16
      %59 = vsyncadd [#allocation9], %s58
      %s61 = sshll.u32 [#allocation10], 4
      %s62 = int_to_ptr.vmem [resolvable:$true] %s61
      %64 = dma.hbm_to_vmem [thread:$0]  %s5, 16, %s62, [#allocation9]
    $region25: #{tpu_custom_call.1} parent=1 // pred_fallthru
      _
    // Predicated region
    $region26: #{tpu_custom_call.1} parent=1 // pred_check
      _
    $region27: #{tpu_custom_call.1} parent=1 // pred_check_branch
      %66 = sbr.rel (0) target = $region29
    $region28: #{tpu_custom_call.1} parent=1 // pred_region
      _
    $region29: #{tpu_custom_call.1} parent=1 // pred_fallthru
      _
    // Predicated region
    $region30: #{tpu_custom_call.1} parent=1 // pred_check
      _
    $region31: #{tpu_custom_call.1} parent=1 // pred_check_branch
      %68 = sbr.rel (0) target = $region33
    $region32: #{tpu_custom_call.1} parent=1 // pred_region
      %s70 = ssub.s32 32, 32
      %71 = vsyncadd [#allocation12], %s70
      %s73 = sshll.u32 [#allocation11], 4
      %s74 = int_to_ptr.vmem [resolvable:$true] %s73
      %76 = dma.hbm_to_vmem [thread:$0]  %s7, 32, %s74, [#allocation12]
    $region33: #{tpu_custom_call.1} parent=1 // pred_fallthru
      _
    // Predicated region
    $region34: #{tpu_custom_call.1} parent=1 // pred_check
      _
    $region35: #{tpu_custom_call.1} parent=1 // pred_check_branch
      %78 = sbr.rel (0) target = $region37
    $region36: #{tpu_custom_call.1} parent=1 // pred_region
      %s80 = ssub.s32 1280, 1280
      %81 = vsyncadd [#allocation12], %s80
      %s82 = sshll.u32 [#allocation13], 4
      %s83 = int_to_ptr.vmem [resolvable:$true] %s82
      %88 = dma.hbm_to_vmem [thread:$0]  %s8, 1280, %s83, [#allocation12], 64, 64, 4
    $region37: #{tpu_custom_call.1} parent=1 // pred_fallthru
      _
    // Predicated region
    $region38: #{tpu_custom_call.1} parent=1 // pred_check
      _
    $region39: #{tpu_custom_call.1} parent=1 // pred_check_branch
      %90 = sbr.rel (0) target = $region41
    $region40: #{tpu_custom_call.1} parent=1 // pred_region
      %s92 = ssub.s32 16, 16
      %93 = vsyncadd [#allocation15], %s92
      %s95 = sshll.u32 [#allocation14], 4
      %s96 = int_to_ptr.vmem [resolvable:$true] %s95
      %98 = dma.hbm_to_vmem [thread:$0]  %s9, 16, %s96, [#allocation15]
    $region41: #{tpu_custom_call.1} parent=1 // pred_fallthru
      _
    // Predicated region
    $region42: #{tpu_custom_call.1} parent=1 // pred_check
      _
    $region43: #{tpu_custom_call.1} parent=1 // pred_check_branch
      %100 = sbr.rel (0) target = $region45
    $region44: #{tpu_custom_call.1} parent=1 // pred_region
      %101 = dma.done [#allocation6], 16
    $region45: #{tpu_custom_call.1} parent=1 // pred_fallthru
      _
    // Predicated region
    $region46: #{tpu_custom_call.1} parent=1 // pred_check
      _
    $region47: #{tpu_custom_call.1} parent=1 // pred_check_branch
      %103 = sbr.rel (0) target = $region49
    $region48: #{tpu_custom_call.1} parent=1 // pred_region
      %104 = dma.done [#allocation4], 16
    $region49: #{tpu_custom_call.1} parent=1 // pred_fallthru
      _
    // Predicated region
    $region50: #{tpu_custom_call.1} parent=1 // pred_check
      _
    $region51: #{tpu_custom_call.1} parent=1 // pred_check_branch
      %106 = sbr.rel (0) target = $region53
    $region52: #{tpu_custom_call.1} parent=1 // pred_region
      %107 = dma.done [#allocation9], 46080
    $region53: #{tpu_custom_call.1} parent=1 // pred_fallthru
      _
    // Predicated region
    $region54: #{tpu_custom_call.1} parent=1 // pred_check
      _
    $region55: #{tpu_custom_call.1} parent=1 // pred_check_branch
      %109 = sbr.rel (0) target = $region57
    $region56: #{tpu_custom_call.1} parent=1 // pred_region
      %110 = dma.done [#allocation9], 16
    $region57: #{tpu_custom_call.1} parent=1 // pred_fallthru
      _
    // Predicated region
    $region58: #{tpu_custom_call.1} parent=1 // pred_check
      _
    $region59: #{tpu_custom_call.1} parent=1 // pred_check_branch
      %112 = sbr.rel (0) target = $region61
    $region60: #{tpu_custom_call.1} parent=1 // pred_region
      %113 = dma.done [#allocation12], 32
    $region61: #{tpu_custom_call.1} parent=1 // pred_fallthru
      _
    // Predicated region
    $region62: #{tpu_custom_call.1} parent=1 // pred_check
      _
    $region63: #{tpu_custom_call.1} parent=1 // pred_check_branch
      %115 = sbr.rel (0) target = $region65
    $region64: #{tpu_custom_call.1} parent=1 // pred_region
      %116 = dma.done [#allocation12], 1280
    $region65: #{tpu_custom_call.1} parent=1 // pred_fallthru
      _
    // Predicated region
    $region66: #{tpu_custom_call.1} parent=1 // pred_check
      _
    $region67: #{tpu_custom_call.1} parent=1 // pred_check_branch
      %118 = sbr.rel (0) target = $region69
    $region68: #{tpu_custom_call.1} parent=1 // pred_region
      %119 = dma.done [#allocation15], 16
    $region69: #{tpu_custom_call.1} parent=1 // pred_fallthru
      _
    %120 = sfence
    %v122 = vld [vmem:[%s1] sm:$0xff]
    %v123 = vld [vmem:[%s1 + $0x8] sm:$0xf]
    %v124 = vld [vmem:[%s1 + $0xc] sm:$0xff]
    %v125 = vld [vmem:[%s1 + $0x14] sm:$0xf]
    %v126 = vld [vmem:[%s1 + $0x18] sm:$0xff]
    %v127 = vld [vmem:[%s1 + $0x20] sm:$0xf]
    %v128 = vld [vmem:[%s1 + $0x24] sm:$0xff]
    %v129 = vld [vmem:[%s1 + $0x2c] sm:$0xf]
    %v130 = vld [vmem:[%s1 + $0x30] sm:$0xff]
    %v131 = vld [vmem:[%s1 + $0x38] sm:$0xf]
    %v132 = vld [vmem:[%s1 + $0x3c] sm:$0xff]
    %v133 = vld [vmem:[%s1 + $0x44] sm:$0xf]
    %v134 = vld [vmem:[%s1 + $0x48] sm:$0xff]
    %v135 = vld [vmem:[%s1 + $0x50] sm:$0xf]
    %v136 = vld [vmem:[%s1 + $0x54] sm:$0xff]
    %v137 = vld [vmem:[%s1 + $0x5c] sm:$0xf]
    %v138 = vld [vmem:[%s1 + $0x60] sm:$0xff]
    %v139 = vld [vmem:[%s1 + $0x68] sm:$0xf]
    %v140 = vld [vmem:[%s1 + $0x6c] sm:$0xff]
    %v141 = vld [vmem:[%s1 + $0x74] sm:$0xf]
    %v142 = vld [vmem:[%s1 + $0x78] sm:$0xff]
    %v143 = vld [vmem:[%s1 + $0x80] sm:$0xf]
    %v144 = vld [vmem:[%s1 + $0x84] sm:$0xff]
    %v145 = vld [vmem:[%s1 + $0x8c] sm:$0xf]
    %v146 = vld [vmem:[%s1 + $0x90] sm:$0xff]
    %v147 = vld [vmem:[%s1 + $0x98] sm:$0xf]
    %v148 = vld [vmem:[%s1 + $0x9c] sm:$0xff]
    %v149 = vld [vmem:[%s1 + $0xa4] sm:$0xf]
    %v150 = vld [vmem:[%s1 + $0xa8] sm:$0xff]
    %v151 = vld [vmem:[%s1 + $0xb0] sm:$0xf]
    %v152 = vld [vmem:[%s1 + $0xb4] sm:$0xff]
    %v153 = vld [vmem:[%s1 + $0xbc] sm:$0xf]
    %v154 = vld [vmem:[%s1 + $0xc0] sm:$0xff]
    %v155 = vld [vmem:[%s1 + $0xc8] sm:$0xf]
    %v156 = vld [vmem:[%s1 + $0xcc] sm:$0xff]
    %v157 = vld [vmem:[%s1 + $0xd4] sm:$0xf]
    %v158 = vld [vmem:[%s1 + $0xd8] sm:$0xff]
    %v159 = vld [vmem:[%s1 + $0xe0] sm:$0xf]
    %v160 = vld [vmem:[%s1 + $0xe4] sm:$0xff]
    %v161 = vld [vmem:[%s1 + $0xec] sm:$0xf]
    %v162 = vld [vmem:[%s1 + $0xf0] sm:$0xff]
    %v163 = vld [vmem:[%s1 + $0xf8] sm:$0xf]
    %v164 = vld [vmem:[%s1 + $0xfc] sm:$0xff]
    %v165 = vld [vmem:[%s1 + $0x104] sm:$0xf]
    %v166 = vld [vmem:[%s1 + $0x108] sm:$0xff]
    %v167 = vld [vmem:[%s1 + $0x110] sm:$0xf]
    %v168 = vld [vmem:[%s1 + $0x114] sm:$0xff]
    %v169 = vld [vmem:[%s1 + $0x11c] sm:$0xf]
    %v170 = vld [vmem:[%s1 + $0x120] sm:$0xff]
    %v171 = vld [vmem:[%s1 + $0x128] sm:$0xf]
    %v172 = vld [vmem:[%s1 + $0x12c] sm:$0xff]
    %v173 = vld [vmem:[%s1 + $0x134] sm:$0xf]
    %v174 = vld [vmem:[%s1 + $0x138] sm:$0xff]
    %v175 = vld [vmem:[%s1 + $0x140] sm:$0xf]
    %v176 = vld [vmem:[%s1 + $0x144] sm:$0xff]
    %v177 = vld [vmem:[%s1 + $0x14c] sm:$0xf]
    %v178 = vld [vmem:[%s1 + $0x150] sm:$0xff]
    %v179 = vld [vmem:[%s1 + $0x158] sm:$0xf]
    %v180 = vld [vmem:[%s1 + $0x15c] sm:$0xff]
    %v181 = vld [vmem:[%s1 + $0x164] sm:$0xf]
    %v182 = vld [vmem:[%s1 + $0x168] sm:$0xff]
    %v183 = vld [vmem:[%s1 + $0x170] sm:$0xf]
    %v184 = vld [vmem:[%s1 + $0x174] sm:$0xff]
    %v185 = vld [vmem:[%s1 + $0x17c] sm:$0xf]
    %v186 = vld [vmem:[%s1 + $0x180] sm:$0xff]
    %v187 = vld [vmem:[%s1 + $0x188] sm:$0xf]
    %v188 = vld [vmem:[%s1 + $0x18c] sm:$0xff]
    %v189 = vld [vmem:[%s1 + $0x194] sm:$0xf]
    %v190 = vld [vmem:[%s1 + $0x198] sm:$0xff]
    %v191 = vld [vmem:[%s1 + $0x1a0] sm:$0xf]
    %v192 = vld [vmem:[%s1 + $0x1a4] sm:$0xff]
    %v193 = vld [vmem:[%s1 + $0x1ac] sm:$0xf]
    %v194 = vld [vmem:[%s1 + $0x1b0] sm:$0xff]
    %v195 = vld [vmem:[%s1 + $0x1b8] sm:$0xf]
    %v196 = vld [vmem:[%s1 + $0x1bc] sm:$0xff]
    %v197 = vld [vmem:[%s1 + $0x1c4] sm:$0xf]
    %v198 = vld [vmem:[%s1 + $0x1c8] sm:$0xff]
    %v199 = vld [vmem:[%s1 + $0x1d0] sm:$0xf]
    %v200 = vld [vmem:[%s1 + $0x1d4] sm:$0xff]
    %v201 = vld [vmem:[%s1 + $0x1dc] sm:$0xf]
    %v202 = vld [vmem:[%s1 + $0x1e0] sm:$0xff]
    %v203 = vld [vmem:[%s1 + $0x1e8] sm:$0xf]
    %v204 = vld [vmem:[%s1 + $0x1ec] sm:$0xff]
    %v205 = vld [vmem:[%s1 + $0x1f4] sm:$0xf]
    %v206 = vld [vmem:[%s1 + $0x1f8] sm:$0xff]
    %v207 = vld [vmem:[%s1 + $0x200] sm:$0xf]
    %v208 = vld [vmem:[%s1 + $0x204] sm:$0xff]
    %v209 = vld [vmem:[%s1 + $0x20c] sm:$0xf]
    %v210 = vld [vmem:[%s1 + $0x210] sm:$0xff]
    %v211 = vld [vmem:[%s1 + $0x218] sm:$0xf]
    %v212 = vld [vmem:[%s1 + $0x21c] sm:$0xff]
    %v213 = vld [vmem:[%s1 + $0x224] sm:$0xf]
    %v214 = vld [vmem:[%s1 + $0x228] sm:$0xff]
    %v215 = vld [vmem:[%s1 + $0x230] sm:$0xf]
    %v216 = vld [vmem:[%s1 + $0x234] sm:$0xff]
    %v217 = vld [vmem:[%s1 + $0x23c] sm:$0xf]
    %v218 = vld [vmem:[%s1 + $0x240] sm:$0xff]
    %v219 = vld [vmem:[%s1 + $0x248] sm:$0xf]
    %v220 = vld [vmem:[%s1 + $0x24c] sm:$0xff]
    %v221 = vld [vmem:[%s1 + $0x254] sm:$0xf]
    %v222 = vld [vmem:[%s1 + $0x258] sm:$0xff]
    %v223 = vld [vmem:[%s1 + $0x260] sm:$0xf]
    %v224 = vld [vmem:[%s1 + $0x264] sm:$0xff]
    %v225 = vld [vmem:[%s1 + $0x26c] sm:$0xf]
    %v226 = vld [vmem:[%s1 + $0x270] sm:$0xff]
    %v227 = vld [vmem:[%s1 + $0x278] sm:$0xf]
    %v228 = vld [vmem:[%s1 + $0x27c] sm:$0xff]
    %v229 = vld [vmem:[%s1 + $0x284] sm:$0xf]
    %v230 = vld [vmem:[%s1 + $0x288] sm:$0xff]
    %v231 = vld [vmem:[%s1 + $0x290] sm:$0xf]
    %v232 = vld [vmem:[%s1 + $0x294] sm:$0xff]
    %v233 = vld [vmem:[%s1 + $0x29c] sm:$0xf]
    %v234 = vld [vmem:[%s1 + $0x2a0] sm:$0xff]
    %v235 = vld [vmem:[%s1 + $0x2a8] sm:$0xf]
    %v236 = vld [vmem:[%s1 + $0x2ac] sm:$0xff]
    %v237 = vld [vmem:[%s1 + $0x2b4] sm:$0xf]
    %v238 = vld [vmem:[%s1 + $0x2b8] sm:$0xff]
    %v239 = vld [vmem:[%s1 + $0x2c0] sm:$0xf]
    %v240 = vld [vmem:[%s1 + $0x2c4] sm:$0xff]
    %v241 = vld [vmem:[%s1 + $0x2cc] sm:$0xf]
    %v242 = vld [vmem:[%s1 + $0x2d0] sm:$0xff]
    %v243 = vld [vmem:[%s1 + $0x2d8] sm:$0xf]
    %v244 = vld [vmem:[%s1 + $0x2dc] sm:$0xff]
    %v245 = vld [vmem:[%s1 + $0x2e4] sm:$0xf]
    %v246 = vld [vmem:[%s1 + $0x2e8] sm:$0xff]
    %v247 = vld [vmem:[%s1 + $0x2f0] sm:$0xf]
    %v248 = vld [vmem:[%s1 + $0x2f4] sm:$0xff]
    %v249 = vld [vmem:[%s1 + $0x2fc] sm:$0xf]
    %v250 = vld [vmem:[%s1 + $0x300] sm:$0xff]
    %v251 = vld [vmem:[%s1 + $0x308] sm:$0xf]
    %v252 = vld [vmem:[%s1 + $0x30c] sm:$0xff]
    %v253 = vld [vmem:[%s1 + $0x314] sm:$0xf]
    %v254 = vld [vmem:[%s1 + $0x318] sm:$0xff]
    %v255 = vld [vmem:[%s1 + $0x320] sm:$0xf]
    %v256 = vld [vmem:[%s1 + $0x324] sm:$0xff]
    %v257 = vld [vmem:[%s1 + $0x32c] sm:$0xf]
    %v258 = vld [vmem:[%s1 + $0x330] sm:$0xff]
    %v259 = vld [vmem:[%s1 + $0x338] sm:$0xf]
    %v260 = vld [vmem:[%s1 + $0x33c] sm:$0xff]
    %v261 = vld [vmem:[%s1 + $0x344] sm:$0xf]
    %v262 = vld [vmem:[%s1 + $0x348] sm:$0xff]
    %v263 = vld [vmem:[%s1 + $0x350] sm:$0xf]
    %v264 = vld [vmem:[%s1 + $0x354] sm:$0xff]
    %v265 = vld [vmem:[%s1 + $0x35c] sm:$0xf]
    %v266 = vld [vmem:[%s1 + $0x360] sm:$0xff]
    %v267 = vld [vmem:[%s1 + $0x368] sm:$0xf]
    %v268 = vld [vmem:[%s1 + $0x36c] sm:$0xff]
    %v269 = vld [vmem:[%s1 + $0x374] sm:$0xf]
    %v270 = vld [vmem:[%s1 + $0x378] sm:$0xff]
    %v271 = vld [vmem:[%s1 + $0x380] sm:$0xf]
    %v272 = vld [vmem:[%s1 + $0x384] sm:$0xff]
    %v273 = vld [vmem:[%s1 + $0x38c] sm:$0xf]
    %v274 = vld [vmem:[%s1 + $0x390] sm:$0xff]
    %v275 = vld [vmem:[%s1 + $0x398] sm:$0xf]
    %v276 = vld [vmem:[%s1 + $0x39c] sm:$0xff]
    %v277 = vld [vmem:[%s1 + $0x3a4] sm:$0xf]
    %v278 = vld [vmem:[%s1 + $0x3a8] sm:$0xff]
    %v279 = vld [vmem:[%s1 + $0x3b0] sm:$0xf]
    %v280 = vld [vmem:[%s1 + $0x3b4] sm:$0xff]
    %v281 = vld [vmem:[%s1 + $0x3bc] sm:$0xf]
    %v282 = vld [vmem:[%s1 + $0x3c0] sm:$0xff]
    %v283 = vld [vmem:[%s1 + $0x3c8] sm:$0xf]
    %v284 = vld [vmem:[%s1 + $0x3cc] sm:$0xff]
    %v285 = vld [vmem:[%s1 + $0x3d4] sm:$0xf]
    %v286 = vld [vmem:[%s1 + $0x3d8] sm:$0xff]
    %v287 = vld [vmem:[%s1 + $0x3e0] sm:$0xf]
    %v288 = vld [vmem:[%s1 + $0x3e4] sm:$0xff]
    %v289 = vld [vmem:[%s1 + $0x3ec] sm:$0xf]
    %v290 = vld [vmem:[%s1 + $0x3f0] sm:$0xff]
    %v291 = vld [vmem:[%s1 + $0x3f8] sm:$0xf]
    %v292 = vld [vmem:[%s1 + $0x3fc] sm:$0xff]
    %v293 = vld [vmem:[%s1 + $0x404] sm:$0xf]
    %v294 = vld [vmem:[%s1 + $0x408] sm:$0xff]
    %v295 = vld [vmem:[%s1 + $0x410] sm:$0xf]
    %v296 = vld [vmem:[%s1 + $0x414] sm:$0xff]
    %v297 = vld [vmem:[%s1 + $0x41c] sm:$0xf]
    %v298 = vld [vmem:[%s1 + $0x420] sm:$0xff]
    %v299 = vld [vmem:[%s1 + $0x428] sm:$0xf]
    %v300 = vld [vmem:[%s1 + $0x42c] sm:$0xff]
    %v301 = vld [vmem:[%s1 + $0x434] sm:$0xf]
    %v302 = vld [vmem:[%s2] sm:$0xf]
    %v303 = vld [vmem:[%s2 + $0x4] sm:$0xf]
    %v304 = vld [vmem:[%s2 + $0x8] sm:$0xf]
    %v305 = vld [vmem:[%s2 + $0xc] sm:$0xf]
    %v306 = vld [vmem:[%s2 + $0x10] sm:$0xf]
    %v307 = vld [vmem:[%s2 + $0x14] sm:$0xf]
    %v308 = vld [vmem:[%s2 + $0x18] sm:$0xf]
    %v309 = vld [vmem:[%s2 + $0x1c] sm:$0xf]
    %v310 = vld [vmem:[%s2 + $0x20] sm:$0xf]
    %v311 = vld [vmem:[%s2 + $0x24] sm:$0xf]
    %v312 = vld [vmem:[%s2 + $0x28] sm:$0xf]
    %v313 = vld [vmem:[%s2 + $0x2c] sm:$0xf]
    %v314 = vld [vmem:[%s2 + $0x30] sm:$0xf]
    %v315 = vld [vmem:[%s2 + $0x34] sm:$0xf]
    %v316 = vld [vmem:[%s2 + $0x38] sm:$0xf]
    %v317 = vld [vmem:[%s2 + $0x3c] sm:$0xf]
    %v318 = vld [vmem:[%s2 + $0x40] sm:$0xf]
    %v319 = vld [vmem:[%s2 + $0x44] sm:$0xf]
    %v320 = vld [vmem:[%s2 + $0x48] sm:$0xf]
    %v321 = vld [vmem:[%s2 + $0x4c] sm:$0xf]
    %v322 = vld [vmem:[%s2 + $0x50] sm:$0xf]
    %v323 = vld [vmem:[%s2 + $0x54] sm:$0xf]
    %v324 = vld [vmem:[%s2 + $0x58] sm:$0xf]
    %v325 = vld [vmem:[%s2 + $0x5c] sm:$0xf]
    %v326 = vld [vmem:[%s2 + $0x60] sm:$0xf]
    %v327 = vld [vmem:[%s2 + $0x64] sm:$0xf]
    %v328 = vld [vmem:[%s2 + $0x68] sm:$0xf]
    %v329 = vld [vmem:[%s2 + $0x6c] sm:$0xf]
    %v330 = vld [vmem:[%s2 + $0x70] sm:$0xf]
    %v331 = vld [vmem:[%s2 + $0x74] sm:$0xf]
    %v332 = vld [vmem:[%s2 + $0x78] sm:$0xf]
    %v333 = vld [vmem:[%s2 + $0x7c] sm:$0xf]
    %v334 = vld [vmem:[%s2 + $0x80] sm:$0xf]
    %v335 = vld [vmem:[%s2 + $0x84] sm:$0x7]
    %v336 = vld [vmem:[#allocation7] sm:$0x1]
    %v338 = vlaneseq
    %v339 = vshrl.u32 %v338, 7
    %v340 = vsub.s32 0, %v339
    %v341 = vrot.slane %v336, %v340
    %v523 = vunpack.c.l.b16 %v122
    %v524 = vunpack.c.h.b16 %v122
    %v525 = vunpack.c.l.b16 %v123
    %v526 = vunpack.c.l.b16 %v124
    %v527 = vunpack.c.h.b16 %v124
    %v528 = vunpack.c.l.b16 %v125
    %v529 = vunpack.c.l.b16 %v126
    %v530 = vunpack.c.h.b16 %v126
    %v531 = vunpack.c.l.b16 %v127
    %v532 = vunpack.c.l.b16 %v128
    %v533 = vunpack.c.h.b16 %v128
    %v534 = vunpack.c.l.b16 %v129
    %v535 = vunpack.c.l.b16 %v130
    %v536 = vunpack.c.h.b16 %v130
    %v537 = vunpack.c.l.b16 %v131
    %v538 = vunpack.c.l.b16 %v132
    %v539 = vunpack.c.h.b16 %v132
    %v540 = vunpack.c.l.b16 %v133
    %v541 = vunpack.c.l.b16 %v134
    %v542 = vunpack.c.h.b16 %v134
    %v543 = vunpack.c.l.b16 %v135
    %v544 = vunpack.c.l.b16 %v136
    %v545 = vunpack.c.h.b16 %v136
    %v546 = vunpack.c.l.b16 %v137
    %v547 = vunpack.c.l.b16 %v138
    %v548 = vunpack.c.h.b16 %v138
    %v549 = vunpack.c.l.b16 %v139
    %v550 = vunpack.c.l.b16 %v140
    %v551 = vunpack.c.h.b16 %v140
    %v552 = vunpack.c.l.b16 %v141
    %v553 = vunpack.c.l.b16 %v142
    %v554 = vunpack.c.h.b16 %v142
    %v555 = vunpack.c.l.b16 %v143
    %v556 = vunpack.c.l.b16 %v144
    %v557 = vunpack.c.h.b16 %v144
    %v558 = vunpack.c.l.b16 %v145
    %v559 = vunpack.c.l.b16 %v146
    %v560 = vunpack.c.h.b16 %v146
    %v561 = vunpack.c.l.b16 %v147
    %v562 = vunpack.c.l.b16 %v148
    %v563 = vunpack.c.h.b16 %v148
    %v564 = vunpack.c.l.b16 %v149
    %v565 = vunpack.c.l.b16 %v150
    %v566 = vunpack.c.h.b16 %v150
    %v567 = vunpack.c.l.b16 %v151
    %v568 = vunpack.c.l.b16 %v152
    %v569 = vunpack.c.h.b16 %v152
    %v570 = vunpack.c.l.b16 %v153
    %v571 = vunpack.c.l.b16 %v154
    %v572 = vunpack.c.h.b16 %v154
    %v573 = vunpack.c.l.b16 %v155
    %v574 = vunpack.c.l.b16 %v156
    %v575 = vunpack.c.h.b16 %v156
    %v576 = vunpack.c.l.b16 %v157
    %v577 = vunpack.c.l.b16 %v158
    %v578 = vunpack.c.h.b16 %v158
    %v579 = vunpack.c.l.b16 %v159
    %v580 = vunpack.c.l.b16 %v160
    %v581 = vunpack.c.h.b16 %v160
    %v582 = vunpack.c.l.b16 %v161
    %v583 = vunpack.c.l.b16 %v162
    %v584 = vunpack.c.h.b16 %v162
    %v585 = vunpack.c.l.b16 %v163
    %v586 = vunpack.c.l.b16 %v164
    %v587 = vunpack.c.h.b16 %v164
    %v588 = vunpack.c.l.b16 %v165
    %v589 = vunpack.c.l.b16 %v166
    %v590 = vunpack.c.h.b16 %v166
    %v591 = vunpack.c.l.b16 %v167
    %v592 = vunpack.c.l.b16 %v168
    %v593 = vunpack.c.h.b16 %v168
    %v594 = vunpack.c.l.b16 %v169
    %v595 = vunpack.c.l.b16 %v170
    %v596 = vunpack.c.h.b16 %v170
    %v597 = vunpack.c.l.b16 %v171
    %v598 = vunpack.c.l.b16 %v172
    %v599 = vunpack.c.h.b16 %v172
    %v600 = vunpack.c.l.b16 %v173
    %v601 = vunpack.c.l.b16 %v174
    %v602 = vunpack.c.h.b16 %v174
    %v603 = vunpack.c.l.b16 %v175
    %v604 = vunpack.c.l.b16 %v176
    %v605 = vunpack.c.h.b16 %v176
    %v606 = vunpack.c.l.b16 %v177
    %v607 = vunpack.c.l.b16 %v178
    %v608 = vunpack.c.h.b16 %v178
    %v609 = vunpack.c.l.b16 %v179
    %v610 = vunpack.c.l.b16 %v180
    %v611 = vunpack.c.h.b16 %v180
    %v612 = vunpack.c.l.b16 %v181
    %v613 = vunpack.c.l.b16 %v182
    %v614 = vunpack.c.h.b16 %v182
    %v615 = vunpack.c.l.b16 %v183
    %v616 = vunpack.c.l.b16 %v184
    %v617 = vunpack.c.h.b16 %v184
    %v618 = vunpack.c.l.b16 %v185
    %v619 = vunpack.c.l.b16 %v186
    %v620 = vunpack.c.h.b16 %v186
    %v621 = vunpack.c.l.b16 %v187
    %v622 = vunpack.c.l.b16 %v188
    %v623 = vunpack.c.h.b16 %v188
    %v624 = vunpack.c.l.b16 %v189
    %v625 = vunpack.c.l.b16 %v190
    %v626 = vunpack.c.h.b16 %v190
    %v627 = vunpack.c.l.b16 %v191
    %v628 = vunpack.c.l.b16 %v192
    %v629 = vunpack.c.h.b16 %v192
    %v630 = vunpack.c.l.b16 %v193
    %v631 = vunpack.c.l.b16 %v194
    %v632 = vunpack.c.h.b16 %v194
    %v633 = vunpack.c.l.b16 %v195
    %v634 = vunpack.c.l.b16 %v196
    %v635 = vunpack.c.h.b16 %v196
    %v636 = vunpack.c.l.b16 %v197
    %v637 = vunpack.c.l.b16 %v198
    %v638 = vunpack.c.h.b16 %v198
    %v639 = vunpack.c.l.b16 %v199
    %v640 = vunpack.c.l.b16 %v200
    %v641 = vunpack.c.h.b16 %v200
    %v642 = vunpack.c.l.b16 %v201
    %v643 = vunpack.c.l.b16 %v202
    %v644 = vunpack.c.h.b16 %v202
    %v645 = vunpack.c.l.b16 %v203
    %v646 = vunpack.c.l.b16 %v204
    %v647 = vunpack.c.h.b16 %v204
    %v648 = vunpack.c.l.b16 %v205
    %v649 = vunpack.c.l.b16 %v206
    %v650 = vunpack.c.h.b16 %v206
    %v651 = vunpack.c.l.b16 %v207
    %v652 = vunpack.c.l.b16 %v208
    %v653 = vunpack.c.h.b16 %v208
    %v654 = vunpack.c.l.b16 %v209
    %v655 = vunpack.c.l.b16 %v210
    %v656 = vunpack.c.h.b16 %v210
    %v657 = vunpack.c.l.b16 %v211
    %v658 = vunpack.c.l.b16 %v212
    %v659 = vunpack.c.h.b16 %v212
    %v660 = vunpack.c.l.b16 %v213
    %v661 = vunpack.c.l.b16 %v214
    %v662 = vunpack.c.h.b16 %v214
    %v663 = vunpack.c.l.b16 %v215
    %v664 = vunpack.c.l.b16 %v216
    %v665 = vunpack.c.h.b16 %v216
    %v666 = vunpack.c.l.b16 %v217
    %v667 = vunpack.c.l.b16 %v218
    %v668 = vunpack.c.h.b16 %v218
    %v669 = vunpack.c.l.b16 %v219
    %v670 = vunpack.c.l.b16 %v220
    %v671 = vunpack.c.h.b16 %v220
    %v672 = vunpack.c.l.b16 %v221
    %v673 = vunpack.c.l.b16 %v222
    %v674 = vunpack.c.h.b16 %v222
    %v675 = vunpack.c.l.b16 %v223
    %v676 = vunpack.c.l.b16 %v224
    %v677 = vunpack.c.h.b16 %v224
    %v678 = vunpack.c.l.b16 %v225
    %v679 = vunpack.c.l.b16 %v226
    %v680 = vunpack.c.h.b16 %v226
    %v681 = vunpack.c.l.b16 %v227
    %v682 = vunpack.c.l.b16 %v228
    %v683 = vunpack.c.h.b16 %v228
    %v684 = vunpack.c.l.b16 %v229
    %v685 = vunpack.c.l.b16 %v230
    %v686 = vunpack.c.h.b16 %v230
    %v687 = vunpack.c.l.b16 %v231
    %v688 = vunpack.c.l.b16 %v232
    %v689 = vunpack.c.h.b16 %v232
    %v690 = vunpack.c.l.b16 %v233
    %v691 = vunpack.c.l.b16 %v234
    %v692 = vunpack.c.h.b16 %v234
    %v693 = vunpack.c.l.b16 %v235
    %v694 = vunpack.c.l.b16 %v236
    %v695 = vunpack.c.h.b16 %v236
    %v696 = vunpack.c.l.b16 %v237
    %v697 = vunpack.c.l.b16 %v238
    %v698 = vunpack.c.h.b16 %v238
    %v699 = vunpack.c.l.b16 %v239
    %v700 = vunpack.c.l.b16 %v240
    %v701 = vunpack.c.h.b16 %v240
    %v702 = vunpack.c.l.b16 %v241
    %v703 = vunpack.c.l.b16 %v242
    %v704 = vunpack.c.h.b16 %v242
    %v705 = vunpack.c.l.b16 %v243
    %v706 = vunpack.c.l.b16 %v244
    %v707 = vunpack.c.h.b16 %v244
    %v708 = vunpack.c.l.b16 %v245
    %v709 = vunpack.c.l.b16 %v246
    %v710 = vunpack.c.h.b16 %v246
    %v711 = vunpack.c.l.b16 %v247
    %v712 = vunpack.c.l.b16 %v248
    %v713 = vunpack.c.h.b16 %v248
    %v714 = vunpack.c.l.b16 %v249
    %v715 = vunpack.c.l.b16 %v250
    %v716 = vunpack.c.h.b16 %v250
    %v717 = vunpack.c.l.b16 %v251
    %v718 = vunpack.c.l.b16 %v252
    %v719 = vunpack.c.h.b16 %v252
    %v720 = vunpack.c.l.b16 %v253
    %v721 = vunpack.c.l.b16 %v254
    %v722 = vunpack.c.h.b16 %v254
    %v723 = vunpack.c.l.b16 %v255
    %v724 = vunpack.c.l.b16 %v256
    %v725 = vunpack.c.h.b16 %v256
    %v726 = vunpack.c.l.b16 %v257
    %v727 = vunpack.c.l.b16 %v258
    %v728 = vunpack.c.h.b16 %v258
    %v729 = vunpack.c.l.b16 %v259
    %v730 = vunpack.c.l.b16 %v260
    %v731 = vunpack.c.h.b16 %v260
    %v732 = vunpack.c.l.b16 %v261
    %v733 = vunpack.c.l.b16 %v262
    %v734 = vunpack.c.h.b16 %v262
    %v735 = vunpack.c.l.b16 %v263
    %v736 = vunpack.c.l.b16 %v264
    %v737 = vunpack.c.h.b16 %v264
    %v738 = vunpack.c.l.b16 %v265
    %v739 = vunpack.c.l.b16 %v266
    %v740 = vunpack.c.h.b16 %v266
    %v741 = vunpack.c.l.b16 %v267
    %v742 = vunpack.c.l.b16 %v268
    %v743 = vunpack.c.h.b16 %v268
    %v744 = vunpack.c.l.b16 %v269
    %v745 = vunpack.c.l.b16 %v270
    %v746 = vunpack.c.h.b16 %v270
    %v747 = vunpack.c.l.b16 %v271
    %v748 = vunpack.c.l.b16 %v272
    %v749 = vunpack.c.h.b16 %v272
    %v750 = vunpack.c.l.b16 %v273
    %v751 = vunpack.c.l.b16 %v274
    %v752 = vunpack.c.h.b16 %v274
    %v753 = vunpack.c.l.b16 %v275
    %v754 = vunpack.c.l.b16 %v276
    %v755 = vunpack.c.h.b16 %v276
    %v756 = vunpack.c.l.b16 %v277
    %v757 = vunpack.c.l.b16 %v278
    %v758 = vunpack.c.h.b16 %v278
    %v759 = vunpack.c.l.b16 %v279
    %v760 = vunpack.c.l.b16 %v280
    %v761 = vunpack.c.h.b16 %v280
    %v762 = vunpack.c.l.b16 %v281
    %v763 = vunpack.c.l.b16 %v282
    %v764 = vunpack.c.h.b16 %v282
    %v765 = vunpack.c.l.b16 %v283
    %v766 = vunpack.c.l.b16 %v284
    %v767 = vunpack.c.h.b16 %v284
    %v768 = vunpack.c.l.b16 %v285
    %v769 = vunpack.c.l.b16 %v286
    %v770 = vunpack.c.h.b16 %v286
    %v771 = vunpack.c.l.b16 %v287
    %v772 = vunpack.c.l.b16 %v288
    %v773 = vunpack.c.h.b16 %v288
    %v774 = vunpack.c.l.b16 %v289
    %v775 = vunpack.c.l.b16 %v290
    %v776 = vunpack.c.h.b16 %v290
    %v777 = vunpack.c.l.b16 %v291
    %v778 = vunpack.c.l.b16 %v292
    %v779 = vunpack.c.h.b16 %v292
    %v780 = vunpack.c.l.b16 %v293
    %v781 = vunpack.c.l.b16 %v294
    %v782 = vunpack.c.h.b16 %v294
    %v783 = vunpack.c.l.b16 %v295
    %v784 = vunpack.c.l.b16 %v296
    %v785 = vunpack.c.h.b16 %v296
    %v786 = vunpack.c.l.b16 %v297
    %v787 = vunpack.c.l.b16 %v298
    %v788 = vunpack.c.h.b16 %v298
    %v789 = vunpack.c.l.b16 %v299
    %v790 = vunpack.c.l.b16 %v300
    %v791 = vunpack.c.h.b16 %v300
    %v792 = vunpack.c.l.b16 %v301
    %v793 = vpack.c.b16 %v526, %v523
    %v794 = vpack.c.b16 %v527, %v524
    %v795 = vpack.c.b16 %v528, %v525
    %v796 = vpack.c.b16 %v532, %v529
    %v797 = vpack.c.b16 %v533, %v530
    %v798 = vpack.c.b16 %v534, %v531
    %v799 = vpack.c.b16 %v538, %v535
    %v800 = vpack.c.b16 %v539, %v536
    %v801 = vpack.c.b16 %v540, %v537
    %v802 = vpack.c.b16 %v544, %v541
    %v803 = vpack.c.b16 %v545, %v542
    %v804 = vpack.c.b16 %v546, %v543
    %v805 = vpack.c.b16 %v550, %v547
    %v806 = vpack.c.b16 %v551, %v548
    %v807 = vpack.c.b16 %v552, %v549
    %v808 = vpack.c.b16 %v556, %v553
    %v809 = vpack.c.b16 %v557, %v554
    %v810 = vpack.c.b16 %v558, %v555
    %v811 = vpack.c.b16 %v562, %v559
    %v812 = vpack.c.b16 %v563, %v560
    %v813 = vpack.c.b16 %v564, %v561
    %v814 = vpack.c.b16 %v568, %v565
    %v815 = vpack.c.b16 %v569, %v566
    %v816 = vpack.c.b16 %v570, %v567
    %v817 = vpack.c.b16 %v574, %v571
    %v818 = vpack.c.b16 %v575, %v572
    %v819 = vpack.c.b16 %v576, %v573
    %v820 = vpack.c.b16 %v580, %v577
    %v821 = vpack.c.b16 %v581, %v578
    %v822 = vpack.c.b16 %v582, %v579
    %v823 = vpack.c.b16 %v586, %v583
    %v824 = vpack.c.b16 %v587, %v584
    %v825 = vpack.c.b16 %v588, %v585
    %v826 = vpack.c.b16 %v592, %v589
    %v827 = vpack.c.b16 %v593, %v590
    %v828 = vpack.c.b16 %v594, %v591
    %v829 = vpack.c.b16 %v598, %v595
    %v830 = vpack.c.b16 %v599, %v596
    %v831 = vpack.c.b16 %v600, %v597
    %v832 = vpack.c.b16 %v604, %v601
    %v833 = vpack.c.b16 %v605, %v602
    %v834 = vpack.c.b16 %v606, %v603
    %v835 = vpack.c.b16 %v610, %v607
    %v836 = vpack.c.b16 %v611, %v608
    %v837 = vpack.c.b16 %v612, %v609
    %v838 = vpack.c.b16 %v616, %v613
    %v839 = vpack.c.b16 %v617, %v614
    %v840 = vpack.c.b16 %v618, %v615
    %v841 = vpack.c.b16 %v622, %v619
    %v842 = vpack.c.b16 %v623, %v620
    %v843 = vpack.c.b16 %v624, %v621
    %v844 = vpack.c.b16 %v628, %v625
    %v845 = vpack.c.b16 %v629, %v626
    %v846 = vpack.c.b16 %v630, %v627
    %v847 = vpack.c.b16 %v634, %v631
    %v848 = vpack.c.b16 %v635, %v632
    %v849 = vpack.c.b16 %v636, %v633
    %v850 = vpack.c.b16 %v640, %v637
    %v851 = vpack.c.b16 %v641, %v638
    %v852 = vpack.c.b16 %v642, %v639
    %v853 = vpack.c.b16 %v646, %v643
    %v854 = vpack.c.b16 %v647, %v644
    %v855 = vpack.c.b16 %v648, %v645
    %v856 = vpack.c.b16 %v652, %v649
    %v857 = vpack.c.b16 %v653, %v650
    %v858 = vpack.c.b16 %v654, %v651
    %v859 = vpack.c.b16 %v658, %v655
    %v860 = vpack.c.b16 %v659, %v656
    %v861 = vpack.c.b16 %v660, %v657
    %v862 = vpack.c.b16 %v664, %v661
    %v863 = vpack.c.b16 %v665, %v662
    %v864 = vpack.c.b16 %v666, %v663
    %v865 = vpack.c.b16 %v670, %v667
    %v866 = vpack.c.b16 %v671, %v668
    %v867 = vpack.c.b16 %v672, %v669
    %v868 = vpack.c.b16 %v676, %v673
    %v869 = vpack.c.b16 %v677, %v674
    %v870 = vpack.c.b16 %v678, %v675
    %v871 = vpack.c.b16 %v682, %v679
    %v872 = vpack.c.b16 %v683, %v680
    %v873 = vpack.c.b16 %v684, %v681
    %v874 = vpack.c.b16 %v688, %v685
    %v875 = vpack.c.b16 %v689, %v686
    %v876 = vpack.c.b16 %v690, %v687
    %v877 = vpack.c.b16 %v694, %v691
    %v878 = vpack.c.b16 %v695, %v692
    %v879 = vpack.c.b16 %v696, %v693
    %v880 = vpack.c.b16 %v700, %v697
    %v881 = vpack.c.b16 %v701, %v698
    %v882 = vpack.c.b16 %v702, %v699
    %v883 = vpack.c.b16 %v706, %v703
    %v884 = vpack.c.b16 %v707, %v704
    %v885 = vpack.c.b16 %v708, %v705
    %v886 = vpack.c.b16 %v712, %v709
    %v887 = vpack.c.b16 %v713, %v710
    %v888 = vpack.c.b16 %v714, %v711
    %v889 = vpack.c.b16 %v718, %v715
    %v890 = vpack.c.b16 %v719, %v716
    %v891 = vpack.c.b16 %v720, %v717
    %v892 = vpack.c.b16 %v724, %v721
    %v893 = vpack.c.b16 %v725, %v722
    %v894 = vpack.c.b16 %v726, %v723
    %v895 = vpack.c.b16 %v730, %v727
    %v896 = vpack.c.b16 %v731, %v728
    %v897 = vpack.c.b16 %v732, %v729
    %v898 = vpack.c.b16 %v736, %v733
    %v899 = vpack.c.b16 %v737, %v734
    %v900 = vpack.c.b16 %v738, %v735
    %v901 = vpack.c.b16 %v742, %v739
    %v902 = vpack.c.b16 %v743, %v740
    %v903 = vpack.c.b16 %v744, %v741
    %v904 = vpack.c.b16 %v748, %v745
    %v905 = vpack.c.b16 %v749, %v746
    %v906 = vpack.c.b16 %v750, %v747
    %v907 = vpack.c.b16 %v754, %v751
    %v908 = vpack.c.b16 %v755, %v752
    %v909 = vpack.c.b16 %v756, %v753
    %v910 = vpack.c.b16 %v760, %v757
    %v911 = vpack.c.b16 %v761, %v758
    %v912 = vpack.c.b16 %v762, %v759
    %v913 = vpack.c.b16 %v766, %v763
    %v914 = vpack.c.b16 %v767, %v764
    %v915 = vpack.c.b16 %v768, %v765
    %v916 = vpack.c.b16 %v772, %v769
    %v917 = vpack.c.b16 %v773, %v770
    %v918 = vpack.c.b16 %v774, %v771
    %v919 = vpack.c.b16 %v778, %v775
    %v920 = vpack.c.b16 %v779, %v776
    %v921 = vpack.c.b16 %v780, %v777
    %v922 = vpack.c.b16 %v784, %v781
    %v923 = vpack.c.b16 %v785, %v782
    %v924 = vpack.c.b16 %v786, %v783
    %v925 = vpack.c.b16 %v790, %v787
    %v926 = vpack.c.b16 %v791, %v788
    %v927 = vpack.c.b16 %v792, %v789
    %v1052 = vunpack.c.l.b16 %v302
    %v1053 = vunpack.c.l.b16 %v303
    %v1054 = vunpack.c.l.b16 %v304
    %v1055 = vunpack.c.l.b16 %v305
    %v1056 = vunpack.c.l.b16 %v306
    %v1057 = vunpack.c.l.b16 %v307
    %v1058 = vunpack.c.l.b16 %v308
    %v1059 = vunpack.c.l.b16 %v309
    %v1060 = vunpack.c.l.b16 %v310
    %v1061 = vunpack.c.l.b16 %v311
    %v1062 = vunpack.c.l.b16 %v312
    %v1063 = vunpack.c.l.b16 %v313
    %v1064 = vunpack.c.l.b16 %v314
    %v1065 = vunpack.c.l.b16 %v315
    %v1066 = vunpack.c.l.b16 %v316
    %v1067 = vunpack.c.l.b16 %v317
    %v1068 = vunpack.c.l.b16 %v318
    %v1069 = vunpack.c.l.b16 %v319
    %v1070 = vunpack.c.l.b16 %v320
    %v1071 = vunpack.c.l.b16 %v321
    %v1072 = vunpack.c.l.b16 %v322
    %v1073 = vunpack.c.l.b16 %v323
    %v1074 = vunpack.c.l.b16 %v324
    %v1075 = vunpack.c.l.b16 %v325
    %v1076 = vunpack.c.l.b16 %v326
    %v1077 = vunpack.c.l.b16 %v327
    %v1078 = vunpack.c.l.b16 %v328
    %v1079 = vunpack.c.l.b16 %v329
    %v1080 = vunpack.c.l.b16 %v330
    %v1081 = vunpack.c.l.b16 %v331
    %v1082 = vunpack.c.l.b16 %v332
    %v1083 = vunpack.c.l.b16 %v333
    %v1084 = vunpack.c.l.b16 %v334
    %v1085 = vunpack.c.l.b16 %v335
    %v1086 = vpack.c.b16 %v1053, %v1052
    %v1087 = vpack.c.b16 %v1055, %v1054
    %v1088 = vpack.c.b16 %v1057, %v1056
    %v1089 = vpack.c.b16 %v1059, %v1058
    %v1090 = vpack.c.b16 %v1061, %v1060
    %v1091 = vpack.c.b16 %v1063, %v1062
    %v1092 = vpack.c.b16 %v1065, %v1064
    %v1093 = vpack.c.b16 %v1067, %v1066
    %v1094 = vpack.c.b16 %v1069, %v1068
    %v1095 = vpack.c.b16 %v1071, %v1070
    %v1096 = vpack.c.b16 %v1073, %v1072
    %v1097 = vpack.c.b16 %v1075, %v1074
    %v1098 = vpack.c.b16 %v1077, %v1076
    %v1099 = vpack.c.b16 %v1079, %v1078
    %v1100 = vpack.c.b16 %v1081, %v1080
    %v1101 = vpack.c.b16 %v1083, %v1082
    %v1102 = vpack.c.b16 %v1085, %v1084
    %vm1119 = vcmask 113664
    %v1121 = vsel %vm1119, %v795, 0
    %v1124 = vsel %vm1119, %v798, 0
    %v1127 = vsel %vm1119, %v801, 0
    %v1130 = vsel %vm1119, %v804, 0
    %v1133 = vsel %vm1119, %v807, 0
    %v1136 = vsel %vm1119, %v810, 0
    %v1139 = vsel %vm1119, %v813, 0
    %v1142 = vsel %vm1119, %v816, 0
    %v1145 = vsel %vm1119, %v819, 0
    %v1148 = vsel %vm1119, %v822, 0
    %v1151 = vsel %vm1119, %v825, 0
    %v1154 = vsel %vm1119, %v828, 0
    %v1157 = vsel %vm1119, %v831, 0
    %v1160 = vsel %vm1119, %v834, 0
    %v1163 = vsel %vm1119, %v837, 0
    %v1166 = vsel %vm1119, %v840, 0
    %v1169 = vsel %vm1119, %v843, 0
    %v1172 = vsel %vm1119, %v846, 0
    %v1175 = vsel %vm1119, %v849, 0
    %v1178 = vsel %vm1119, %v852, 0
    %v1181 = vsel %vm1119, %v855, 0
    %v1184 = vsel %vm1119, %v858, 0
    %v1187 = vsel %vm1119, %v861, 0
    %v1190 = vsel %vm1119, %v864, 0
    %v1193 = vsel %vm1119, %v867, 0
    %v1196 = vsel %vm1119, %v870, 0
    %v1199 = vsel %vm1119, %v873, 0
    %v1202 = vsel %vm1119, %v876, 0
    %v1205 = vsel %vm1119, %v879, 0
    %v1208 = vsel %vm1119, %v882, 0
    %v1211 = vsel %vm1119, %v885, 0
    %v1214 = vsel %vm1119, %v888, 0
    %v1217 = vsel %vm1119, %v891, 0
    %v1220 = vsel %vm1119, %v894, 0
    %v1223 = vsel %vm1119, %v897, 0
    %v1226 = vsel %vm1119, %v900, 0
    %v1229 = vsel %vm1119, %v903, 0
    %v1232 = vsel %vm1119, %v906, 0
    %v1235 = vsel %vm1119, %v909, 0
    %v1238 = vsel %vm1119, %v912, 0
    %v1241 = vsel %vm1119, %v915, 0
    %v1244 = vsel %vm1119, %v918, 0
    %v1247 = vsel %vm1119, %v921, 0
    %v1250 = vsel %vm1119, %v924, 0
    %v1253 = vsel %vm1119, %v927, 0
    %vm1255 = vcmask 1046528
    %v1257 = vsel %vm1255, %v1102, 0
    %1259 = vmatprep.subr.bf16.mxu0 0
    %1260 = vmatpush1.bf16.msra.mxu0 %v1093
    %1261 = vmatprep.subr.bf16.mxu0 0
    %1262 = vmatpush1.bf16.msra.mxu0 %v1092
    %1263 = vmatprep.subr.bf16.mxu0 0
    %1264 = vmatpush1.bf16.msra.mxu0 %v1091
    %1265 = vmatprep.subr.bf16.mxu0 0
    %1266 = vmatpush1.bf16.msra.mxu0 %v1090
    %1267 = vmatprep.subr.bf16.mxu0 0
    %1268 = vmatpush1.bf16.msra.mxu0 %v1089
    %1269 = vmatprep.subr.bf16.mxu0 0
    %1270 = vmatpush1.bf16.msra.mxu0 %v1088
    %1271 = vmatprep.subr.bf16.mxu0 0
    %1272 = vmatpush1.bf16.msra.mxu0 %v1087
    %1273 = vmatprep.subr.bf16.mxu0 0
    %1274 = vmatpush1.bf16.msra.mxu0 %v1086
    %1275 = vmatprep.subr.bf16.mxu0 0
    %1276 = vmatpush2.bf16.msra.mxu0 %v1101
    %1277 = vmatprep.subr.bf16.mxu0 0
    %1278 = vmatpush2.bf16.msra.mxu0 %v1100
    %1279 = vmatprep.subr.bf16.mxu0 0
    %1280 = vmatpush2.bf16.msra.mxu0 %v1099
    %1281 = vmatprep.subr.bf16.mxu0 0
    %1282 = vmatpush2.bf16.msra.mxu0 %v1098
    %1283 = vmatprep.subr.bf16.mxu0 0
    %1284 = vmatpush2.bf16.msra.mxu0 %v1097
    %1285 = vmatprep.subr.bf16.mxu0 0
    %1286 = vmatpush2.bf16.msra.mxu0 %v1096
    %1287 = vmatprep.subr.bf16.mxu0 0
    %1288 = vmatpush2.bf16.msra.mxu0 %v1095
    %1289 = vmatprep.subr.bf16.mxu0 0
    %1290 = vmatpush2.bf16.msra.mxu0 %v1094
    %1291 = vmatprep.mubr.bf16.mxu0 %v794
    %1292 = vmatmul.mubr.bf16.gmra.mxu0 %v793
    %v1293 = vpop.f32.mrf.mxu0
    %v1294 = vadd.f32 %v341, %v1293
    %v1295 = vpop.f32.mrf.mxu0
    %v1296 = vpop.f32.mrf.mxu0
    %v1297 = vadd.f32 %v341, %v1296
    %v1298 = vpop.f32.mrf.mxu0
    %1299 = vmatprep.mubr.bf16.mxu0 %v797
    %1300 = vmatmul.mubr.bf16.gmra.mxu0 %v796
    %v1301 = vpop.f32.mrf.mxu0
    %v1302 = vadd.f32 %v341, %v1301
    %v1303 = vpop.f32.mrf.mxu0
    %v1304 = vpop.f32.mrf.mxu0
    %v1305 = vadd.f32 %v341, %v1304
    %v1306 = vpop.f32.mrf.mxu0
    %1307 = vmatprep.mubr.bf16.mxu0 %v800
    %1308 = vmatmul.mubr.bf16.gmra.mxu0 %v799
    %v1309 = vpop.f32.mrf.mxu0
    %v1310 = vadd.f32 %v341, %v1309
    %v1311 = vpop.f32.mrf.mxu0
    %v1312 = vpop.f32.mrf.mxu0
    %v1313 = vadd.f32 %v341, %v1312
    %v1314 = vpop.f32.mrf.mxu0
    %1315 = vmatprep.mubr.bf16.mxu0 %v803
    %1316 = vmatmul.mubr.bf16.gmra.mxu0 %v802
    %v1317 = vpop.f32.mrf.mxu0
    %v1318 = vadd.f32 %v341, %v1317
    %v1319 = vpop.f32.mrf.mxu0
    %v1320 = vpop.f32.mrf.mxu0
    %v1321 = vadd.f32 %v341, %v1320
    %v1322 = vpop.f32.mrf.mxu0
    %1323 = vmatprep.mubr.bf16.mxu0 %v806
    %1324 = vmatmul.mubr.bf16.gmra.mxu0 %v805
    %v1325 = vpop.f32.mrf.mxu0
    %v1326 = vadd.f32 %v341, %v1325
    %v1327 = vpop.f32.mrf.mxu0
    %v1328 = vpop.f32.mrf.mxu0
    %v1329 = vadd.f32 %v341, %v1328
    %v1330 = vpop.f32.mrf.mxu0
    %1331 = vmatprep.mubr.bf16.mxu0 %v809
    %1332 = vmatmul.mubr.bf16.gmra.mxu0 %v808
    %v1333 = vpop.f32.mrf.mxu0
    %v1334 = vadd.f32 %v341, %v1333
    %v1335 = vpop.f32.mrf.mxu0
    %v1336 = vpop.f32.mrf.mxu0
    %v1337 = vadd.f32 %v341, %v1336
    %v1338 = vpop.f32.mrf.mxu0
    %1339 = vmatprep.mubr.bf16.mxu0 %v812
    %1340 = vmatmul.mubr.bf16.gmra.mxu0 %v811
    %v1341 = vpop.f32.mrf.mxu0
    %v1342 = vadd.f32 %v341, %v1341
    %v1343 = vpop.f32.mrf.mxu0
    %v1344 = vpop.f32.mrf.mxu0
    %v1345 = vadd.f32 %v341, %v1344
    %v1346 = vpop.f32.mrf.mxu0
    %1347 = vmatprep.mubr.bf16.mxu0 %v815
    %1348 = vmatmul.mubr.bf16.gmra.mxu0 %v814
    %v1349 = vpop.f32.mrf.mxu0
    %v1350 = vadd.f32 %v341, %v1349
    %v1351 = vpop.f32.mrf.mxu0
    %v1352 = vpop.f32.mrf.mxu0
    %v1353 = vadd.f32 %v341, %v1352
    %v1354 = vpop.f32.mrf.mxu0
    %1355 = vmatprep.mubr.bf16.mxu0 %v818
    %1356 = vmatmul.mubr.bf16.gmra.mxu0 %v817
    %v1357 = vpop.f32.mrf.mxu0
    %v1358 = vadd.f32 %v341, %v1357
    %v1359 = vpop.f32.mrf.mxu0
    %v1360 = vpop.f32.mrf.mxu0
    %v1361 = vadd.f32 %v341, %v1360
    %v1362 = vpop.f32.mrf.mxu0
    %1363 = vmatprep.mubr.bf16.mxu0 %v821
    %1364 = vmatmul.mubr.bf16.gmra.mxu0 %v820
    %v1365 = vpop.f32.mrf.mxu0
    %v1366 = vadd.f32 %v341, %v1365
    %v1367 = vpop.f32.mrf.mxu0
    %v1368 = vpop.f32.mrf.mxu0
    %v1369 = vadd.f32 %v341, %v1368
    %v1370 = vpop.f32.mrf.mxu0
    %1371 = vmatprep.mubr.bf16.mxu0 %v824
    %1372 = vmatmul.mubr.bf16.gmra.mxu0 %v823
    %v1373 = vpop.f32.mrf.mxu0
    %v1374 = vadd.f32 %v341, %v1373
    %v1375 = vpop.f32.mrf.mxu0
    %v1376 = vpop.f32.mrf.mxu0
    %v1377 = vadd.f32 %v341, %v1376
    %v1378 = vpop.f32.mrf.mxu0
    %1379 = vmatprep.mubr.bf16.mxu0 %v827
    %1380 = vmatmul.mubr.bf16.gmra.mxu0 %v826
    %v1381 = vpop.f32.mrf.mxu0
    %v1382 = vadd.f32 %v341, %v1381
    %v1383 = vpop.f32.mrf.mxu0
    %v1384 = vpop.f32.mrf.mxu0
    %v1385 = vadd.f32 %v341, %v1384
    %v1386 = vpop.f32.mrf.mxu0
    %1387 = vmatprep.mubr.bf16.mxu0 %v830
    %1388 = vmatmul.mubr.bf16.gmra.mxu0 %v829
    %v1389 = vpop.f32.mrf.mxu0
    %v1390 = vadd.f32 %v341, %v1389
    %v1391 = vpop.f32.mrf.mxu0
    %v1392 = vpop.f32.mrf.mxu0
    %v1393 = vadd.f32 %v341, %v1392
    %v1394 = vpop.f32.mrf.mxu0
    %1395 = vmatprep.mubr.bf16.mxu0 %v833
    %1396 = vmatmul.mubr.bf16.gmra.mxu0 %v832
    %v1397 = vpop.f32.mrf.mxu0
    %v1398 = vadd.f32 %v341, %v1397
    %v1399 = vpop.f32.mrf.mxu0
    %v1400 = vpop.f32.mrf.mxu0
    %v1401 = vadd.f32 %v341, %v1400
    %v1402 = vpop.f32.mrf.mxu0
    %1403 = vmatprep.mubr.bf16.mxu0 %v836
    %1404 = vmatmul.mubr.bf16.gmra.mxu0 %v835
    %v1405 = vpop.f32.mrf.mxu0
    %v1406 = vadd.f32 %v341, %v1405
    %v1407 = vpop.f32.mrf.mxu0
    %v1408 = vpop.f32.mrf.mxu0
    %v1409 = vadd.f32 %v341, %v1408
    %v1410 = vpop.f32.mrf.mxu0
    %1411 = vmatprep.mubr.bf16.mxu0 %v839
    %1412 = vmatmul.mubr.bf16.gmra.mxu0 %v838
    %v1413 = vpop.f32.mrf.mxu0
    %v1414 = vadd.f32 %v341, %v1413
    %v1415 = vpop.f32.mrf.mxu0
    %v1416 = vpop.f32.mrf.mxu0
    %v1417 = vadd.f32 %v341, %v1416
    %v1418 = vpop.f32.mrf.mxu0
    %1419 = vmatprep.mubr.bf16.mxu0 %v842
    %1420 = vmatmul.mubr.bf16.gmra.mxu0 %v841
    %v1421 = vpop.f32.mrf.mxu0
    %v1422 = vadd.f32 %v341, %v1421
    %v1423 = vpop.f32.mrf.mxu0
    %v1424 = vpop.f32.mrf.mxu0
    %v1425 = vadd.f32 %v341, %v1424
    %v1426 = vpop.f32.mrf.mxu0
    %1427 = vmatprep.mubr.bf16.mxu0 %v845
    %1428 = vmatmul.mubr.bf16.gmra.mxu0 %v844
    %v1429 = vpop.f32.mrf.mxu0
    %v1430 = vadd.f32 %v341, %v1429
    %v1431 = vpop.f32.mrf.mxu0
    %v1432 = vpop.f32.mrf.mxu0
    %v1433 = vadd.f32 %v341, %v1432
    %v1434 = vpop.f32.mrf.mxu0
    %1435 = vmatprep.mubr.bf16.mxu0 %v848
    %1436 = vmatmul.mubr.bf16.gmra.mxu0 %v847
    %v1437 = vpop.f32.mrf.mxu0
    %v1438 = vadd.f32 %v341, %v1437
    %v1439 = vpop.f32.mrf.mxu0
    %v1440 = vpop.f32.mrf.mxu0
    %v1441 = vadd.f32 %v341, %v1440
    %v1442 = vpop.f32.mrf.mxu0
    %1443 = vmatprep.mubr.bf16.mxu0 %v851
    %1444 = vmatmul.mubr.bf16.gmra.mxu0 %v850
    %v1445 = vpop.f32.mrf.mxu0
    %v1446 = vadd.f32 %v341, %v1445
    %v1447 = vpop.f32.mrf.mxu0
    %v1448 = vpop.f32.mrf.mxu0
    %v1449 = vadd.f32 %v341, %v1448
    %v1450 = vpop.f32.mrf.mxu0
    %1451 = vmatprep.mubr.bf16.mxu0 %v854
    %1452 = vmatmul.mubr.bf16.gmra.mxu0 %v853
    %v1453 = vpop.f32.mrf.mxu0
    %v1454 = vadd.f32 %v341, %v1453
    %v1455 = vpop.f32.mrf.mxu0
    %v1456 = vpop.f32.mrf.mxu0
    %v1457 = vadd.f32 %v341, %v1456
    %v1458 = vpop.f32.mrf.mxu0
    %1459 = vmatprep.mubr.bf16.mxu0 %v857
    %1460 = vmatmul.mubr.bf16.gmra.mxu0 %v856
    %v1461 = vpop.f32.mrf.mxu0
    %v1462 = vadd.f32 %v341, %v1461
    %v1463 = vpop.f32.mrf.mxu0
    %v1464 = vpop.f32.mrf.mxu0
    %v1465 = vadd.f32 %v341, %v1464
    %v1466 = vpop.f32.mrf.mxu0
    %1467 = vmatprep.mubr.bf16.mxu0 %v860
    %1468 = vmatmul.mubr.bf16.gmra.mxu0 %v859
    %v1469 = vpop.f32.mrf.mxu0
    %v1470 = vadd.f32 %v341, %v1469
    %v1471 = vpop.f32.mrf.mxu0
    %v1472 = vpop.f32.mrf.mxu0
    %v1473 = vadd.f32 %v341, %v1472
    %v1474 = vpop.f32.mrf.mxu0
    %1475 = vmatprep.mubr.bf16.mxu0 %v863
    %1476 = vmatmul.mubr.bf16.gmra.mxu0 %v862
    %v1477 = vpop.f32.mrf.mxu0
    %v1478 = vadd.f32 %v341, %v1477
    %v1479 = vpop.f32.mrf.mxu0
    %v1480 = vpop.f32.mrf.mxu0
    %v1481 = vadd.f32 %v341, %v1480
    %v1482 = vpop.f32.mrf.mxu0
    %1483 = vmatprep.mubr.bf16.mxu0 %v866
    %1484 = vmatmul.mubr.bf16.gmra.mxu0 %v865
    %v1485 = vpop.f32.mrf.mxu0
    %v1486 = vadd.f32 %v341, %v1485
    %v1487 = vpop.f32.mrf.mxu0
    %v1488 = vpop.f32.mrf.mxu0
    %v1489 = vadd.f32 %v341, %v1488
    %v1490 = vpop.f32.mrf.mxu0
    %1491 = vmatprep.mubr.bf16.mxu0 %v869
    %1492 = vmatmul.mubr.bf16.gmra.mxu0 %v868
    %v1493 = vpop.f32.mrf.mxu0
    %v1494 = vadd.f32 %v341, %v1493
    %v1495 = vpop.f32.mrf.mxu0
    %v1496 = vpop.f32.mrf.mxu0
    %v1497 = vadd.f32 %v341, %v1496
    %v1498 = vpop.f32.mrf.mxu0
    %1499 = vmatprep.mubr.bf16.mxu0 %v872
    %1500 = vmatmul.mubr.bf16.gmra.mxu0 %v871
    %v1501 = vpop.f32.mrf.mxu0
    %v1502 = vadd.f32 %v341, %v1501
    %v1503 = vpop.f32.mrf.mxu0
    %v1504 = vpop.f32.mrf.mxu0
    %v1505 = vadd.f32 %v341, %v1504
    %v1506 = vpop.f32.mrf.mxu0
    %1507 = vmatprep.mubr.bf16.mxu0 %v875
    %1508 = vmatmul.mubr.bf16.gmra.mxu0 %v874
    %v1509 = vpop.f32.mrf.mxu0
    %v1510 = vadd.f32 %v341, %v1509
    %v1511 = vpop.f32.mrf.mxu0
    %v1512 = vpop.f32.mrf.mxu0
    %v1513 = vadd.f32 %v341, %v1512
    %v1514 = vpop.f32.mrf.mxu0
    %1515 = vmatprep.mubr.bf16.mxu0 %v878
    %1516 = vmatmul.mubr.bf16.gmra.mxu0 %v877
    %v1517 = vpop.f32.mrf.mxu0
    %v1518 = vadd.f32 %v341, %v1517
    %v1519 = vpop.f32.mrf.mxu0
    %v1520 = vpop.f32.mrf.mxu0
    %v1521 = vadd.f32 %v341, %v1520
    %v1522 = vpop.f32.mrf.mxu0
    %1523 = vmatprep.mubr.bf16.mxu0 %v881
    %1524 = vmatmul.mubr.bf16.gmra.mxu0 %v880
    %v1525 = vpop.f32.mrf.mxu0
    %v1526 = vadd.f32 %v341, %v1525
    %v1527 = vpop.f32.mrf.mxu0
    %v1528 = vpop.f32.mrf.mxu0
    %v1529 = vadd.f32 %v341, %v1528
    %v1530 = vpop.f32.mrf.mxu0
    %1531 = vmatprep.mubr.bf16.mxu0 %v884
    %1532 = vmatmul.mubr.bf16.gmra.mxu0 %v883
    %v1533 = vpop.f32.mrf.mxu0
    %v1534 = vadd.f32 %v341, %v1533
    %v1535 = vpop.f32.mrf.mxu0
    %v1536 = vpop.f32.mrf.mxu0
    %v1537 = vadd.f32 %v341, %v1536
    %v1538 = vpop.f32.mrf.mxu0
    %1539 = vmatprep.mubr.bf16.mxu0 %v887
    %1540 = vmatmul.mubr.bf16.gmra.mxu0 %v886
    %v1541 = vpop.f32.mrf.mxu0
    %v1542 = vadd.f32 %v341, %v1541
    %v1543 = vpop.f32.mrf.mxu0
    %v1544 = vpop.f32.mrf.mxu0
    %v1545 = vadd.f32 %v341, %v1544
    %v1546 = vpop.f32.mrf.mxu0
    %1547 = vmatprep.mubr.bf16.mxu0 %v890
    %1548 = vmatmul.mubr.bf16.gmra.mxu0 %v889
    %v1549 = vpop.f32.mrf.mxu0
    %v1550 = vadd.f32 %v341, %v1549
    %v1551 = vpop.f32.mrf.mxu0
    %v1552 = vpop.f32.mrf.mxu0
    %v1553 = vadd.f32 %v341, %v1552
    %v1554 = vpop.f32.mrf.mxu0
    %1555 = vmatprep.mubr.bf16.mxu0 %v893
    %1556 = vmatmul.mubr.bf16.gmra.mxu0 %v892
    %v1557 = vpop.f32.mrf.mxu0
    %v1558 = vadd.f32 %v341, %v1557
    %v1559 = vpop.f32.mrf.mxu0
    %v1560 = vpop.f32.mrf.mxu0
    %v1561 = vadd.f32 %v341, %v1560
    %v1562 = vpop.f32.mrf.mxu0
    %1563 = vmatprep.mubr.bf16.mxu0 %v896
    %1564 = vmatmul.mubr.bf16.gmra.mxu0 %v895
    %v1565 = vpop.f32.mrf.mxu0
    %v1566 = vadd.f32 %v341, %v1565
    %v1567 = vpop.f32.mrf.mxu0
    %v1568 = vpop.f32.mrf.mxu0
    %v1569 = vadd.f32 %v341, %v1568
    %v1570 = vpop.f32.mrf.mxu0
    %1571 = vmatprep.mubr.bf16.mxu0 %v899
    %1572 = vmatmul.mubr.bf16.gmra.mxu0 %v898
    %v1573 = vpop.f32.mrf.mxu0
    %v1574 = vadd.f32 %v341, %v1573
    %v1575 = vpop.f32.mrf.mxu0
    %v1576 = vpop.f32.mrf.mxu0
    %v1577 = vadd.f32 %v341, %v1576
    %v1578 = vpop.f32.mrf.mxu0
    %1579 = vmatprep.mubr.bf16.mxu0 %v902
    %1580 = vmatmul.mubr.bf16.gmra.mxu0 %v901
    %v1581 = vpop.f32.mrf.mxu0
    %v1582 = vadd.f32 %v341, %v1581
    %v1583 = vpop.f32.mrf.mxu0
    %v1584 = vpop.f32.mrf.mxu0
    %v1585 = vadd.f32 %v341, %v1584
    %v1586 = vpop.f32.mrf.mxu0
    %1587 = vmatprep.mubr.bf16.mxu0 %v905
    %1588 = vmatmul.mubr.bf16.gmra.mxu0 %v904
    %v1589 = vpop.f32.mrf.mxu0
    %v1590 = vadd.f32 %v341, %v1589
    %v1591 = vpop.f32.mrf.mxu0
    %v1592 = vpop.f32.mrf.mxu0
    %v1593 = vadd.f32 %v341, %v1592
    %v1594 = vpop.f32.mrf.mxu0
    %1595 = vmatprep.mubr.bf16.mxu0 %v908
    %1596 = vmatmul.mubr.bf16.gmra.mxu0 %v907
    %v1597 = vpop.f32.mrf.mxu0
    %v1598 = vadd.f32 %v341, %v1597
    %v1599 = vpop.f32.mrf.mxu0
    %v1600 = vpop.f32.mrf.mxu0
    %v1601 = vadd.f32 %v341, %v1600
    %v1602 = vpop.f32.mrf.mxu0
    %1603 = vmatprep.mubr.bf16.mxu0 %v911
    %1604 = vmatmul.mubr.bf16.gmra.mxu0 %v910
    %v1605 = vpop.f32.mrf.mxu0
    %v1606 = vadd.f32 %v341, %v1605
    %v1607 = vpop.f32.mrf.mxu0
    %v1608 = vpop.f32.mrf.mxu0
    %v1609 = vadd.f32 %v341, %v1608
    %v1610 = vpop.f32.mrf.mxu0
    %1611 = vmatprep.mubr.bf16.mxu0 %v914
    %1612 = vmatmul.mubr.bf16.gmra.mxu0 %v913
    %v1613 = vpop.f32.mrf.mxu0
    %v1614 = vadd.f32 %v341, %v1613
    %v1615 = vpop.f32.mrf.mxu0
    %v1616 = vpop.f32.mrf.mxu0
    %v1617 = vadd.f32 %v341, %v1616
    %v1618 = vpop.f32.mrf.mxu0
    %1619 = vmatprep.mubr.bf16.mxu0 %v917
    %1620 = vmatmul.mubr.bf16.gmra.mxu0 %v916
    %v1621 = vpop.f32.mrf.mxu0
    %v1622 = vadd.f32 %v341, %v1621
    %v1623 = vpop.f32.mrf.mxu0
    %v1624 = vpop.f32.mrf.mxu0
    %v1625 = vadd.f32 %v341, %v1624
    %v1626 = vpop.f32.mrf.mxu0
    %1627 = vmatprep.mubr.bf16.mxu0 %v920
    %1628 = vmatmul.mubr.bf16.gmra.mxu0 %v919
    %v1629 = vpop.f32.mrf.mxu0
    %v1630 = vadd.f32 %v341, %v1629
    %v1631 = vpop.f32.mrf.mxu0
    %v1632 = vpop.f32.mrf.mxu0
    %v1633 = vadd.f32 %v341, %v1632
    %v1634 = vpop.f32.mrf.mxu0
    %1635 = vmatprep.mubr.bf16.mxu0 %v923
    %1636 = vmatmul.mubr.bf16.gmra.mxu0 %v922
    %v1637 = vpop.f32.mrf.mxu0
    %v1638 = vadd.f32 %v341, %v1637
    %v1639 = vpop.f32.mrf.mxu0
    %v1640 = vpop.f32.mrf.mxu0
    %v1641 = vadd.f32 %v341, %v1640
    %v1642 = vpop.f32.mrf.mxu0
    %1643 = vmatprep.mubr.bf16.mxu0 %v926
    %1644 = vmatmul.mubr.bf16.gmra.mxu0 %v925
    %v1645 = vpop.f32.mrf.mxu0
    %v1646 = vadd.f32 %v341, %v1645
    %v1647 = vpop.f32.mrf.mxu0
    %v1648 = vpop.f32.mrf.mxu0
    %v1649 = vadd.f32 %v341, %v1648
    %v1650 = vpop.f32.mrf.mxu0
    %1651 = vdwg.mxu0
    %1652 = vmatprep.subr.bf16.mxu0 0
    %1653 = vmatpush1.bf16.msra.mxu0 0
    %1654 = vmatprep.subr.bf16.mxu0 0
    %1655 = vmatpush1.bf16.msra.mxu0 0
    %1656 = vmatprep.subr.bf16.mxu0 0
    %1657 = vmatpush1.bf16.msra.mxu0 0
    %1658 = vmatprep.subr.bf16.mxu0 0
    %1659 = vmatpush1.bf16.msra.mxu0 0
    %1660 = vmatprep.subr.bf16.mxu0 0
    %1661 = vmatpush1.bf16.msra.mxu0 0
    %1662 = vmatprep.subr.bf16.mxu0 0
    %1663 = vmatpush1.bf16.msra.mxu0 0
    %1664 = vmatprep.subr.bf16.mxu0 0
    %1665 = vmatpush1.bf16.msra.mxu0 0
    %1666 = vmatprep.subr.bf16.mxu0 0
    %1667 = vmatpush1.bf16.msra.mxu0 %v1257
    %1668 = vmatprep.subr.bf16.mxu0 0
    %1669 = vmatpush2.bf16.msra.mxu0 0
    %1670 = vmatprep.subr.bf16.mxu0 0
    %1671 = vmatpush2.bf16.msra.mxu0 0
    %1672 = vmatprep.subr.bf16.mxu0 0
    %1673 = vmatpush2.bf16.msra.mxu0 0
    %1674 = vmatprep.subr.bf16.mxu0 0
    %1675 = vmatpush2.bf16.msra.mxu0 0
    %1676 = vmatprep.subr.bf16.mxu0 0
    %1677 = vmatpush2.bf16.msra.mxu0 0
    %1678 = vmatprep.subr.bf16.mxu0 0
    %1679 = vmatpush2.bf16.msra.mxu0 0
    %1680 = vmatprep.subr.bf16.mxu0 0
    %1681 = vmatpush2.bf16.msra.mxu0 0
    %1682 = vmatprep.subr.bf16.mxu0 0
    %1683 = vmatpush2.bf16.msra.mxu0 0
    %1684 = vmatprep.mubr.bf16.mxu0 0
    %1685 = vmatmul.mubr.bf16.gmra.mxu0 %v1121
    %v1686 = vpop.f32.mrf.mxu0
    %v1687 = vadd.f32 %v1294, %v1686
    %v1688 = vpop.f32.mrf.mxu0
    %v1689 = vpop.f32.mrf.mxu0
    %v1690 = vadd.f32 %v1297, %v1689
    %v1691 = vpop.f32.mrf.mxu0
    %1692 = vmatprep.mubr.bf16.mxu0 0
    %1693 = vmatmul.mubr.bf16.gmra.mxu0 %v1124
    %v1694 = vpop.f32.mrf.mxu0
    %v1695 = vadd.f32 %v1302, %v1694
    %v1696 = vpop.f32.mrf.mxu0
    %v1697 = vpop.f32.mrf.mxu0
    %v1698 = vadd.f32 %v1305, %v1697
    %v1699 = vpop.f32.mrf.mxu0
    %1700 = vmatprep.mubr.bf16.mxu0 0
    %1701 = vmatmul.mubr.bf16.gmra.mxu0 %v1127
    %v1702 = vpop.f32.mrf.mxu0
    %v1703 = vadd.f32 %v1310, %v1702
    %v1704 = vpop.f32.mrf.mxu0
    %v1705 = vpop.f32.mrf.mxu0
    %v1706 = vadd.f32 %v1313, %v1705
    %v1707 = vpop.f32.mrf.mxu0
    %1708 = vmatprep.mubr.bf16.mxu0 0
    %1709 = vmatmul.mubr.bf16.gmra.mxu0 %v1130
    %v1710 = vpop.f32.mrf.mxu0
    %v1711 = vadd.f32 %v1318, %v1710
    %v1712 = vpop.f32.mrf.mxu0
    %v1713 = vpop.f32.mrf.mxu0
    %v1714 = vadd.f32 %v1321, %v1713
    %v1715 = vpop.f32.mrf.mxu0
    %1716 = vmatprep.mubr.bf16.mxu0 0
    %1717 = vmatmul.mubr.bf16.gmra.mxu0 %v1133
    %v1718 = vpop.f32.mrf.mxu0
    %v1719 = vadd.f32 %v1326, %v1718
    %v1720 = vpop.f32.mrf.mxu0
    %v1721 = vpop.f32.mrf.mxu0
    %v1722 = vadd.f32 %v1329, %v1721
    %v1723 = vpop.f32.mrf.mxu0
    %1724 = vmatprep.mubr.bf16.mxu0 0
    %1725 = vmatmul.mubr.bf16.gmra.mxu0 %v1136
    %v1726 = vpop.f32.mrf.mxu0
    %v1727 = vadd.f32 %v1334, %v1726
    %v1728 = vpop.f32.mrf.mxu0
    %v1729 = vpop.f32.mrf.mxu0
    %v1730 = vadd.f32 %v1337, %v1729
    %v1731 = vpop.f32.mrf.mxu0
    %1732 = vmatprep.mubr.bf16.mxu0 0
    %1733 = vmatmul.mubr.bf16.gmra.mxu0 %v1139
    %v1734 = vpop.f32.mrf.mxu0
    %v1735 = vadd.f32 %v1342, %v1734
    %v1736 = vpop.f32.mrf.mxu0
    %v1737 = vpop.f32.mrf.mxu0
    %v1738 = vadd.f32 %v1345, %v1737
    %v1739 = vpop.f32.mrf.mxu0
    %1740 = vmatprep.mubr.bf16.mxu0 0
    %1741 = vmatmul.mubr.bf16.gmra.mxu0 %v1142
    %v1742 = vpop.f32.mrf.mxu0
    %v1743 = vadd.f32 %v1350, %v1742
    %v1744 = vpop.f32.mrf.mxu0
    %v1745 = vpop.f32.mrf.mxu0
    %v1746 = vadd.f32 %v1353, %v1745
    %v1747 = vpop.f32.mrf.mxu0
    %1748 = vmatprep.mubr.bf16.mxu0 0
    %1749 = vmatmul.mubr.bf16.gmra.mxu0 %v1145
    %v1750 = vpop.f32.mrf.mxu0
    %v1751 = vadd.f32 %v1358, %v1750
    %v1752 = vpop.f32.mrf.mxu0
    %v1753 = vpop.f32.mrf.mxu0
    %v1754 = vadd.f32 %v1361, %v1753
    %v1755 = vpop.f32.mrf.mxu0
    %1756 = vmatprep.mubr.bf16.mxu0 0
    %1757 = vmatmul.mubr.bf16.gmra.mxu0 %v1148
    %v1758 = vpop.f32.mrf.mxu0
    %v1759 = vadd.f32 %v1366, %v1758
    %v1760 = vpop.f32.mrf.mxu0
    %v1761 = vpop.f32.mrf.mxu0
    %v1762 = vadd.f32 %v1369, %v1761
    %v1763 = vpop.f32.mrf.mxu0
    %1764 = vmatprep.mubr.bf16.mxu0 0
    %1765 = vmatmul.mubr.bf16.gmra.mxu0 %v1151
    %v1766 = vpop.f32.mrf.mxu0
    %v1767 = vadd.f32 %v1374, %v1766
    %v1768 = vpop.f32.mrf.mxu0
    %v1769 = vpop.f32.mrf.mxu0
    %v1770 = vadd.f32 %v1377, %v1769
    %v1771 = vpop.f32.mrf.mxu0
    %1772 = vmatprep.mubr.bf16.mxu0 0
    %1773 = vmatmul.mubr.bf16.gmra.mxu0 %v1154
    %v1774 = vpop.f32.mrf.mxu0
    %v1775 = vadd.f32 %v1382, %v1774
    %v1776 = vpop.f32.mrf.mxu0
    %v1777 = vpop.f32.mrf.mxu0
    %v1778 = vadd.f32 %v1385, %v1777
    %v1779 = vpop.f32.mrf.mxu0
    %1780 = vmatprep.mubr.bf16.mxu0 0
    %1781 = vmatmul.mubr.bf16.gmra.mxu0 %v1157
    %v1782 = vpop.f32.mrf.mxu0
    %v1783 = vadd.f32 %v1390, %v1782
    %v1784 = vpop.f32.mrf.mxu0
    %v1785 = vpop.f32.mrf.mxu0
    %v1786 = vadd.f32 %v1393, %v1785
    %v1787 = vpop.f32.mrf.mxu0
    %1788 = vmatprep.mubr.bf16.mxu0 0
    %1789 = vmatmul.mubr.bf16.gmra.mxu0 %v1160
    %v1790 = vpop.f32.mrf.mxu0
    %v1791 = vadd.f32 %v1398, %v1790
    %v1792 = vpop.f32.mrf.mxu0
    %v1793 = vpop.f32.mrf.mxu0
    %v1794 = vadd.f32 %v1401, %v1793
    %v1795 = vpop.f32.mrf.mxu0
    %1796 = vmatprep.mubr.bf16.mxu0 0
    %1797 = vmatmul.mubr.bf16.gmra.mxu0 %v1163
    %v1798 = vpop.f32.mrf.mxu0
    %v1799 = vadd.f32 %v1406, %v1798
    %v1800 = vpop.f32.mrf.mxu0
    %v1801 = vpop.f32.mrf.mxu0
    %v1802 = vadd.f32 %v1409, %v1801
    %v1803 = vpop.f32.mrf.mxu0
    %1804 = vmatprep.mubr.bf16.mxu0 0
    %1805 = vmatmul.mubr.bf16.gmra.mxu0 %v1166
    %v1806 = vpop.f32.mrf.mxu0
    %v1807 = vadd.f32 %v1414, %v1806
    %v1808 = vpop.f32.mrf.mxu0
    %v1809 = vpop.f32.mrf.mxu0
    %v1810 = vadd.f32 %v1417, %v1809
    %v1811 = vpop.f32.mrf.mxu0
    %1812 = vmatprep.mubr.bf16.mxu0 0
    %1813 = vmatmul.mubr.bf16.gmra.mxu0 %v1169
    %v1814 = vpop.f32.mrf.mxu0
    %v1815 = vadd.f32 %v1422, %v1814
    %v1816 = vpop.f32.mrf.mxu0
    %v1817 = vpop.f32.mrf.mxu0
    %v1818 = vadd.f32 %v1425, %v1817
    %v1819 = vpop.f32.mrf.mxu0
    %1820 = vmatprep.mubr.bf16.mxu0 0
    %1821 = vmatmul.mubr.bf16.gmra.mxu0 %v1172
    %v1822 = vpop.f32.mrf.mxu0
    %v1823 = vadd.f32 %v1430, %v1822
    %v1824 = vpop.f32.mrf.mxu0
    %v1825 = vpop.f32.mrf.mxu0
    %v1826 = vadd.f32 %v1433, %v1825
    %v1827 = vpop.f32.mrf.mxu0
    %1828 = vmatprep.mubr.bf16.mxu0 0
    %1829 = vmatmul.mubr.bf16.gmra.mxu0 %v1175
    %v1830 = vpop.f32.mrf.mxu0
    %v1831 = vadd.f32 %v1438, %v1830
    %v1832 = vpop.f32.mrf.mxu0
    %v1833 = vpop.f32.mrf.mxu0
    %v1834 = vadd.f32 %v1441, %v1833
    %v1835 = vpop.f32.mrf.mxu0
    %1836 = vmatprep.mubr.bf16.mxu0 0
    %1837 = vmatmul.mubr.bf16.gmra.mxu0 %v1178
    %v1838 = vpop.f32.mrf.mxu0
    %v1839 = vadd.f32 %v1446, %v1838
    %v1840 = vpop.f32.mrf.mxu0
    %v1841 = vpop.f32.mrf.mxu0
    %v1842 = vadd.f32 %v1449, %v1841
    %v1843 = vpop.f32.mrf.mxu0
    %1844 = vmatprep.mubr.bf16.mxu0 0
    %1845 = vmatmul.mubr.bf16.gmra.mxu0 %v1181
    %v1846 = vpop.f32.mrf.mxu0
    %v1847 = vadd.f32 %v1454, %v1846
    %v1848 = vpop.f32.mrf.mxu0
    %v1849 = vpop.f32.mrf.mxu0
    %v1850 = vadd.f32 %v1457, %v1849
    %v1851 = vpop.f32.mrf.mxu0
    %1852 = vmatprep.mubr.bf16.mxu0 0
    %1853 = vmatmul.mubr.bf16.gmra.mxu0 %v1184
    %v1854 = vpop.f32.mrf.mxu0
    %v1855 = vadd.f32 %v1462, %v1854
    %v1856 = vpop.f32.mrf.mxu0
    %v1857 = vpop.f32.mrf.mxu0
    %v1858 = vadd.f32 %v1465, %v1857
    %v1859 = vpop.f32.mrf.mxu0
    %1860 = vmatprep.mubr.bf16.mxu0 0
    %1861 = vmatmul.mubr.bf16.gmra.mxu0 %v1187
    %v1862 = vpop.f32.mrf.mxu0
    %v1863 = vadd.f32 %v1470, %v1862
    %v1864 = vpop.f32.mrf.mxu0
    %v1865 = vpop.f32.mrf.mxu0
    %v1866 = vadd.f32 %v1473, %v1865
    %v1867 = vpop.f32.mrf.mxu0
    %1868 = vmatprep.mubr.bf16.mxu0 0
    %1869 = vmatmul.mubr.bf16.gmra.mxu0 %v1190
    %v1870 = vpop.f32.mrf.mxu0
    %v1871 = vadd.f32 %v1478, %v1870
    %v1872 = vpop.f32.mrf.mxu0
    %v1873 = vpop.f32.mrf.mxu0
    %v1874 = vadd.f32 %v1481, %v1873
    %v1875 = vpop.f32.mrf.mxu0
    %1876 = vmatprep.mubr.bf16.mxu0 0
    %1877 = vmatmul.mubr.bf16.gmra.mxu0 %v1193
    %v1878 = vpop.f32.mrf.mxu0
    %v1879 = vadd.f32 %v1486, %v1878
    %v1880 = vpop.f32.mrf.mxu0
    %v1881 = vpop.f32.mrf.mxu0
    %v1882 = vadd.f32 %v1489, %v1881
    %v1883 = vpop.f32.mrf.mxu0
    %1884 = vmatprep.mubr.bf16.mxu0 0
    %1885 = vmatmul.mubr.bf16.gmra.mxu0 %v1196
    %v1886 = vpop.f32.mrf.mxu0
    %v1887 = vadd.f32 %v1494, %v1886
    %v1888 = vpop.f32.mrf.mxu0
    %v1889 = vpop.f32.mrf.mxu0
    %v1890 = vadd.f32 %v1497, %v1889
    %v1891 = vpop.f32.mrf.mxu0
    %1892 = vmatprep.mubr.bf16.mxu0 0
    %1893 = vmatmul.mubr.bf16.gmra.mxu0 %v1199
    %v1894 = vpop.f32.mrf.mxu0
    %v1895 = vadd.f32 %v1502, %v1894
    %v1896 = vpop.f32.mrf.mxu0
    %v1897 = vpop.f32.mrf.mxu0
    %v1898 = vadd.f32 %v1505, %v1897
    %v1899 = vpop.f32.mrf.mxu0
    %1900 = vmatprep.mubr.bf16.mxu0 0
    %1901 = vmatmul.mubr.bf16.gmra.mxu0 %v1202
    %v1902 = vpop.f32.mrf.mxu0
    %v1903 = vadd.f32 %v1510, %v1902
    %v1904 = vpop.f32.mrf.mxu0
    %v1905 = vpop.f32.mrf.mxu0
    %v1906 = vadd.f32 %v1513, %v1905
    %v1907 = vpop.f32.mrf.mxu0
    %1908 = vmatprep.mubr.bf16.mxu0 0
    %1909 = vmatmul.mubr.bf16.gmra.mxu0 %v1205
    %v1910 = vpop.f32.mrf.mxu0
    %v1911 = vadd.f32 %v1518, %v1910
    %v1912 = vpop.f32.mrf.mxu0
    %v1913 = vpop.f32.mrf.mxu0
    %v1914 = vadd.f32 %v1521, %v1913
    %v1915 = vpop.f32.mrf.mxu0
    %1916 = vmatprep.mubr.bf16.mxu0 0
    %1917 = vmatmul.mubr.bf16.gmra.mxu0 %v1208
    %v1918 = vpop.f32.mrf.mxu0
    %v1919 = vadd.f32 %v1526, %v1918
    %v1920 = vpop.f32.mrf.mxu0
    %v1921 = vpop.f32.mrf.mxu0
    %v1922 = vadd.f32 %v1529, %v1921
    %v1923 = vpop.f32.mrf.mxu0
    %1924 = vmatprep.mubr.bf16.mxu0 0
    %1925 = vmatmul.mubr.bf16.gmra.mxu0 %v1211
    %v1926 = vpop.f32.mrf.mxu0
    %v1927 = vadd.f32 %v1534, %v1926
    %v1928 = vpop.f32.mrf.mxu0
    %v1929 = vpop.f32.mrf.mxu0
    %v1930 = vadd.f32 %v1537, %v1929
    %v1931 = vpop.f32.mrf.mxu0
    %1932 = vmatprep.mubr.bf16.mxu0 0
    %1933 = vmatmul.mubr.bf16.gmra.mxu0 %v1214
    %v1934 = vpop.f32.mrf.mxu0
    %v1935 = vadd.f32 %v1542, %v1934
    %v1936 = vpop.f32.mrf.mxu0
    %v1937 = vpop.f32.mrf.mxu0
    %v1938 = vadd.f32 %v1545, %v1937
    %v1939 = vpop.f32.mrf.mxu0
    %1940 = vmatprep.mubr.bf16.mxu0 0
    %1941 = vmatmul.mubr.bf16.gmra.mxu0 %v1217
    %v1942 = vpop.f32.mrf.mxu0
    %v1943 = vadd.f32 %v1550, %v1942
    %v1944 = vpop.f32.mrf.mxu0
    %v1945 = vpop.f32.mrf.mxu0
    %v1946 = vadd.f32 %v1553, %v1945
    %v1947 = vpop.f32.mrf.mxu0
    %1948 = vmatprep.mubr.bf16.mxu0 0
    %1949 = vmatmul.mubr.bf16.gmra.mxu0 %v1220
    %v1950 = vpop.f32.mrf.mxu0
    %v1951 = vadd.f32 %v1558, %v1950
    %v1952 = vpop.f32.mrf.mxu0
    %v1953 = vpop.f32.mrf.mxu0
    %v1954 = vadd.f32 %v1561, %v1953
    %v1955 = vpop.f32.mrf.mxu0
    %1956 = vmatprep.mubr.bf16.mxu0 0
    %1957 = vmatmul.mubr.bf16.gmra.mxu0 %v1223
    %v1958 = vpop.f32.mrf.mxu0
    %v1959 = vadd.f32 %v1566, %v1958
    %v1960 = vpop.f32.mrf.mxu0
    %v1961 = vpop.f32.mrf.mxu0
    %v1962 = vadd.f32 %v1569, %v1961
    %v1963 = vpop.f32.mrf.mxu0
    %1964 = vmatprep.mubr.bf16.mxu0 0
    %1965 = vmatmul.mubr.bf16.gmra.mxu0 %v1226
    %v1966 = vpop.f32.mrf.mxu0
    %v1967 = vadd.f32 %v1574, %v1966
    %v1968 = vpop.f32.mrf.mxu0
    %v1969 = vpop.f32.mrf.mxu0
    %v1970 = vadd.f32 %v1577, %v1969
    %v1971 = vpop.f32.mrf.mxu0
    %1972 = vmatprep.mubr.bf16.mxu0 0
    %1973 = vmatmul.mubr.bf16.gmra.mxu0 %v1229
    %v1974 = vpop.f32.mrf.mxu0
    %v1975 = vadd.f32 %v1582, %v1974
    %v1976 = vpop.f32.mrf.mxu0
    %v1977 = vpop.f32.mrf.mxu0
    %v1978 = vadd.f32 %v1585, %v1977
    %v1979 = vpop.f32.mrf.mxu0
    %1980 = vmatprep.mubr.bf16.mxu0 0
    %1981 = vmatmul.mubr.bf16.gmra.mxu0 %v1232
    %v1982 = vpop.f32.mrf.mxu0
    %v1983 = vadd.f32 %v1590, %v1982
    %v1984 = vpop.f32.mrf.mxu0
    %v1985 = vpop.f32.mrf.mxu0
    %v1986 = vadd.f32 %v1593, %v1985
    %v1987 = vpop.f32.mrf.mxu0
    %1988 = vmatprep.mubr.bf16.mxu0 0
    %1989 = vmatmul.mubr.bf16.gmra.mxu0 %v1235
    %v1990 = vpop.f32.mrf.mxu0
    %v1991 = vadd.f32 %v1598, %v1990
    %v1992 = vpop.f32.mrf.mxu0
    %v1993 = vpop.f32.mrf.mxu0
    %v1994 = vadd.f32 %v1601, %v1993
    %v1995 = vpop.f32.mrf.mxu0
    %1996 = vmatprep.mubr.bf16.mxu0 0
    %1997 = vmatmul.mubr.bf16.gmra.mxu0 %v1238
    %v1998 = vpop.f32.mrf.mxu0
    %v1999 = vadd.f32 %v1606, %v1998
    %v2000 = vpop.f32.mrf.mxu0
    %v2001 = vpop.f32.mrf.mxu0
    %v2002 = vadd.f32 %v1609, %v2001
    %v2003 = vpop.f32.mrf.mxu0
    %2004 = vmatprep.mubr.bf16.mxu0 0
    %2005 = vmatmul.mubr.bf16.gmra.mxu0 %v1241
    %v2006 = vpop.f32.mrf.mxu0
    %v2007 = vadd.f32 %v1614, %v2006
    %v2008 = vpop.f32.mrf.mxu0
    %v2009 = vpop.f32.mrf.mxu0
    %v2010 = vadd.f32 %v1617, %v2009
    %v2011 = vpop.f32.mrf.mxu0
    %2012 = vmatprep.mubr.bf16.mxu0 0
    %2013 = vmatmul.mubr.bf16.gmra.mxu0 %v1244
    %v2014 = vpop.f32.mrf.mxu0
    %v2015 = vadd.f32 %v1622, %v2014
    %v2016 = vpop.f32.mrf.mxu0
    %v2017 = vpop.f32.mrf.mxu0
    %v2018 = vadd.f32 %v1625, %v2017
    %v2019 = vpop.f32.mrf.mxu0
    %2020 = vmatprep.mubr.bf16.mxu0 0
    %2021 = vmatmul.mubr.bf16.gmra.mxu0 %v1247
    %v2022 = vpop.f32.mrf.mxu0
    %v2023 = vadd.f32 %v1630, %v2022
    %v2024 = vpop.f32.mrf.mxu0
    %v2025 = vpop.f32.mrf.mxu0
    %v2026 = vadd.f32 %v1633, %v2025
    %v2027 = vpop.f32.mrf.mxu0
    %2028 = vmatprep.mubr.bf16.mxu0 0
    %2029 = vmatmul.mubr.bf16.gmra.mxu0 %v1250
    %v2030 = vpop.f32.mrf.mxu0
    %v2031 = vadd.f32 %v1638, %v2030
    %v2032 = vpop.f32.mrf.mxu0
    %v2033 = vpop.f32.mrf.mxu0
    %v2034 = vadd.f32 %v1641, %v2033
    %v2035 = vpop.f32.mrf.mxu0
    %2036 = vmatprep.mubr.bf16.mxu0 0
    %2037 = vmatmul.mubr.bf16.gmra.mxu0 %v1253
    %v2038 = vpop.f32.mrf.mxu0
    %v2039 = vadd.f32 %v1646, %v2038
    %v2040 = vpop.f32.mrf.mxu0
    %v2041 = vpop.f32.mrf.mxu0
    %v2042 = vadd.f32 %v1649, %v2041
    %v2043 = vpop.f32.mrf.mxu0
    %2044 = vdwg.mxu0
    %v2045 = vmax.f32 %v1687, 0.0
    %v2046 = vmax.f32 %v1690, 0.0
    %v2047 = vmax.f32 %v1695, 0.0
    %v2048 = vmax.f32 %v1698, 0.0
    %v2049 = vmax.f32 %v1703, 0.0
    %v2050 = vmax.f32 %v1706, 0.0
    %v2051 = vmax.f32 %v1711, 0.0
    %v2052 = vmax.f32 %v1714, 0.0
    %v2053 = vmax.f32 %v1719, 0.0
    %v2054 = vmax.f32 %v1722, 0.0
    %v2055 = vmax.f32 %v1727, 0.0
    %v2056 = vmax.f32 %v1730, 0.0
    %v2057 = vmax.f32 %v1735, 0.0
    %v2058 = vmax.f32 %v1738, 0.0
    %v2059 = vmax.f32 %v1743, 0.0
    %v2060 = vmax.f32 %v1746, 0.0
    %v2061 = vmax.f32 %v1751, 0.0
    %v2062 = vmax.f32 %v1754, 0.0
    %v2063 = vmax.f32 %v1759, 0.0
    %v2064 = vmax.f32 %v1762, 0.0
    %v2065 = vmax.f32 %v1767, 0.0
    %v2066 = vmax.f32 %v1770, 0.0
    %v2067 = vmax.f32 %v1775, 0.0
    %v2068 = vmax.f32 %v1778, 0.0
    %v2069 = vmax.f32 %v1783, 0.0
    %v2070 = vmax.f32 %v1786, 0.0
    %v2071 = vmax.f32 %v1791, 0.0
    %v2072 = vmax.f32 %v1794, 0.0
    %v2073 = vmax.f32 %v1799, 0.0
    %v2074 = vmax.f32 %v1802, 0.0
    %v2075 = vmax.f32 %v1807, 0.0
    %v2076 = vmax.f32 %v1810, 0.0
    %v2077 = vmax.f32 %v1815, 0.0
    %v2078 = vmax.f32 %v1818, 0.0
    %v2079 = vmax.f32 %v1823, 0.0
    %v2080 = vmax.f32 %v1826, 0.0
    %v2081 = vmax.f32 %v1831, 0.0
    %v2082 = vmax.f32 %v1834, 0.0
    %v2083 = vmax.f32 %v1839, 0.0
    %v2084 = vmax.f32 %v1842, 0.0
    %v2085 = vmax.f32 %v1847, 0.0
    %v2086 = vmax.f32 %v1850, 0.0
    %v2087 = vmax.f32 %v1855, 0.0
    %v2088 = vmax.f32 %v1858, 0.0
    %v2089 = vmax.f32 %v1863, 0.0
    %v2090 = vmax.f32 %v1866, 0.0
    %v2091 = vmax.f32 %v1871, 0.0
    %v2092 = vmax.f32 %v1874, 0.0
    %v2093 = vmax.f32 %v1879, 0.0
    %v2094 = vmax.f32 %v1882, 0.0
    %v2095 = vmax.f32 %v1887, 0.0
    %v2096 = vmax.f32 %v1890, 0.0
    %v2097 = vmax.f32 %v1895, 0.0
    %v2098 = vmax.f32 %v1898, 0.0
    %v2099 = vmax.f32 %v1903, 0.0
    %v2100 = vmax.f32 %v1906, 0.0
    %v2101 = vmax.f32 %v1911, 0.0
    %v2102 = vmax.f32 %v1914, 0.0
    %v2103 = vmax.f32 %v1919, 0.0
    %v2104 = vmax.f32 %v1922, 0.0
    %v2105 = vmax.f32 %v1927, 0.0
    %v2106 = vmax.f32 %v1930, 0.0
    %v2107 = vmax.f32 %v1935, 0.0
    %v2108 = vmax.f32 %v1938, 0.0
    %v2109 = vmax.f32 %v1943, 0.0
    %v2110 = vmax.f32 %v1946, 0.0
    %v2111 = vmax.f32 %v1951, 0.0
    %v2112 = vmax.f32 %v1954, 0.0
    %v2113 = vmax.f32 %v1959, 0.0
    %v2114 = vmax.f32 %v1962, 0.0
    %v2115 = vmax.f32 %v1967, 0.0
    %v2116 = vmax.f32 %v1970, 0.0
    %v2117 = vmax.f32 %v1975, 0.0
    %v2118 = vmax.f32 %v1978, 0.0
    %v2119 = vmax.f32 %v1983, 0.0
    %v2120 = vmax.f32 %v1986, 0.0
    %v2121 = vmax.f32 %v1991, 0.0
    %v2122 = vmax.f32 %v1994, 0.0
    %v2123 = vmax.f32 %v1999, 0.0
    %v2124 = vmax.f32 %v2002, 0.0
    %v2125 = vmax.f32 %v2007, 0.0
    %v2126 = vmax.f32 %v2010, 0.0
    %v2127 = vmax.f32 %v2015, 0.0
    %v2128 = vmax.f32 %v2018, 0.0
    %v2129 = vmax.f32 %v2023, 0.0
    %v2130 = vmax.f32 %v2026, 0.0
    %v2131 = vmax.f32 %v2031, 0.0
    %v2132 = vmax.f32 %v2034, 0.0
    %v2133 = vmax.f32 %v2039, 0.0
    %v2134 = vmax.f32 %v2042, 0.0
    %vm2135 = vcmask 523264
    %2136 = vst.msk [vmem:[#allocation2] sm:$0xff] %vm2135, %v2045
    %2137 = vst.msk [vmem:[#allocation2 + $0x8] sm:$0xff] %vm2135, %v2046
    %2138 = vst.msk [vmem:[#allocation2 + $0x10] sm:$0xff] %vm2135, %v2047
    %2139 = vst.msk [vmem:[#allocation2 + $0x18] sm:$0xff] %vm2135, %v2048
    %2140 = vst.msk [vmem:[#allocation2 + $0x20] sm:$0xff] %vm2135, %v2049
    %2141 = vst.msk [vmem:[#allocation2 + $0x28] sm:$0xff] %vm2135, %v2050
    %2142 = vst.msk [vmem:[#allocation2 + $0x30] sm:$0xff] %vm2135, %v2051
    %2143 = vst.msk [vmem:[#allocation2 + $0x38] sm:$0xff] %vm2135, %v2052
    %2144 = vst.msk [vmem:[#allocation2 + $0x40] sm:$0xff] %vm2135, %v2053
    %2145 = vst.msk [vmem:[#allocation2 + $0x48] sm:$0xff] %vm2135, %v2054
    %2146 = vst.msk [vmem:[#allocation2 + $0x50] sm:$0xff] %vm2135, %v2055
    %2147 = vst.msk [vmem:[#allocation2 + $0x58] sm:$0xff] %vm2135, %v2056
    %2148 = vst.msk [vmem:[#allocation2 + $0x60] sm:$0xff] %vm2135, %v2057
    %2149 = vst.msk [vmem:[#allocation2 + $0x68] sm:$0xff] %vm2135, %v2058
    %2150 = vst.msk [vmem:[#allocation2 + $0x70] sm:$0xff] %vm2135, %v2059
    %2151 = vst.msk [vmem:[#allocation2 + $0x78] sm:$0xff] %vm2135, %v2060
    %2152 = vst.msk [vmem:[#allocation2 + $0x80] sm:$0xff] %vm2135, %v2061
    %2153 = vst.msk [vmem:[#allocation2 + $0x88] sm:$0xff] %vm2135, %v2062
    %2154 = vst.msk [vmem:[#allocation2 + $0x90] sm:$0xff] %vm2135, %v2063
    %2155 = vst.msk [vmem:[#allocation2 + $0x98] sm:$0xff] %vm2135, %v2064
    %2156 = vst.msk [vmem:[#allocation2 + $0xa0] sm:$0xff] %vm2135, %v2065
    %2157 = vst.msk [vmem:[#allocation2 + $0xa8] sm:$0xff] %vm2135, %v2066
    %2158 = vst.msk [vmem:[#allocation2 + $0xb0] sm:$0xff] %vm2135, %v2067
    %2159 = vst.msk [vmem:[#allocation2 + $0xb8] sm:$0xff] %vm2135, %v2068
    %2160 = vst.msk [vmem:[#allocation2 + $0xc0] sm:$0xff] %vm2135, %v2069
    %2161 = vst.msk [vmem:[#allocation2 + $0xc8] sm:$0xff] %vm2135, %v2070
    %2162 = vst.msk [vmem:[#allocation2 + $0xd0] sm:$0xff] %vm2135, %v2071
    %2163 = vst.msk [vmem:[#allocation2 + $0xd8] sm:$0xff] %vm2135, %v2072
    %2164 = vst.msk [vmem:[#allocation2 + $0xe0] sm:$0xff] %vm2135, %v2073
    %2165 = vst.msk [vmem:[#allocation2 + $0xe8] sm:$0xff] %vm2135, %v2074
    %2166 = vst.msk [vmem:[#allocation2 + $0xf0] sm:$0xff] %vm2135, %v2075
    %2167 = vst.msk [vmem:[#allocation2 + $0xf8] sm:$0xff] %vm2135, %v2076
    %2168 = vst.msk [vmem:[#allocation2 + $0x100] sm:$0xff] %vm2135, %v2077
    %2169 = vst.msk [vmem:[#allocation2 + $0x108] sm:$0xff] %vm2135, %v2078
    %2170 = vst.msk [vmem:[#allocation2 + $0x110] sm:$0xff] %vm2135, %v2079
    %2171 = vst.msk [vmem:[#allocation2 + $0x118] sm:$0xff] %vm2135, %v2080
    %2172 = vst.msk [vmem:[#allocation2 + $0x120] sm:$0xff] %vm2135, %v2081
    %2173 = vst.msk [vmem:[#allocation2 + $0x128] sm:$0xff] %vm2135, %v2082
    %2174 = vst.msk [vmem:[#allocation2 + $0x130] sm:$0xff] %vm2135, %v2083
    %2175 = vst.msk [vmem:[#allocation2 + $0x138] sm:$0xff] %vm2135, %v2084
    %2176 = vst.msk [vmem:[#allocation2 + $0x140] sm:$0xff] %vm2135, %v2085
    %2177 = vst.msk [vmem:[#allocation2 + $0x148] sm:$0xff] %vm2135, %v2086
    %2178 = vst.msk [vmem:[#allocation2 + $0x150] sm:$0xff] %vm2135, %v2087
    %2179 = vst.msk [vmem:[#allocation2 + $0x158] sm:$0xff] %vm2135, %v2088
    %2180 = vst.msk [vmem:[#allocation2 + $0x160] sm:$0xff] %vm2135, %v2089
    %2181 = vst.msk [vmem:[#allocation2 + $0x168] sm:$0xff] %vm2135, %v2090
    %2182 = vst.msk [vmem:[#allocation2 + $0x170] sm:$0xff] %vm2135, %v2091
    %2183 = vst.msk [vmem:[#allocation2 + $0x178] sm:$0xff] %vm2135, %v2092
    %2184 = vst.msk [vmem:[#allocation2 + $0x180] sm:$0xff] %vm2135, %v2093
    %2185 = vst.msk [vmem:[#allocation2 + $0x188] sm:$0xff] %vm2135, %v2094
    %2186 = vst.msk [vmem:[#allocation2 + $0x190] sm:$0xff] %vm2135, %v2095
    %2187 = vst.msk [vmem:[#allocation2 + $0x198] sm:$0xff] %vm2135, %v2096
    %2188 = vst.msk [vmem:[#allocation2 + $0x1a0] sm:$0xff] %vm2135, %v2097
    %2189 = vst.msk [vmem:[#allocation2 + $0x1a8] sm:$0xff] %vm2135, %v2098
    %2190 = vst.msk [vmem:[#allocation2 + $0x1b0] sm:$0xff] %vm2135, %v2099
    %2191 = vst.msk [vmem:[#allocation2 + $0x1b8] sm:$0xff] %vm2135, %v2100
    %2192 = vst.msk [vmem:[#allocation2 + $0x1c0] sm:$0xff] %vm2135, %v2101
    %2193 = vst.msk [vmem:[#allocation2 + $0x1c8] sm:$0xff] %vm2135, %v2102
    %2194 = vst.msk [vmem:[#allocation2 + $0x1d0] sm:$0xff] %vm2135, %v2103
    %2195 = vst.msk [vmem:[#allocation2 + $0x1d8] sm:$0xff] %vm2135, %v2104
    %2196 = vst.msk [vmem:[#allocation2 + $0x1e0] sm:$0xff] %vm2135, %v2105
    %2197 = vst.msk [vmem:[#allocation2 + $0x1e8] sm:$0xff] %vm2135, %v2106
    %2198 = vst.msk [vmem:[#allocation2 + $0x1f0] sm:$0xff] %vm2135, %v2107
    %2199 = vst.msk [vmem:[#allocation2 + $0x1f8] sm:$0xff] %vm2135, %v2108
    %2200 = vst.msk [vmem:[#allocation2 + $0x200] sm:$0xff] %vm2135, %v2109
    %2201 = vst.msk [vmem:[#allocation2 + $0x208] sm:$0xff] %vm2135, %v2110
    %2202 = vst.msk [vmem:[#allocation2 + $0x210] sm:$0xff] %vm2135, %v2111
    %2203 = vst.msk [vmem:[#allocation2 + $0x218] sm:$0xff] %vm2135, %v2112
    %2204 = vst.msk [vmem:[#allocation2 + $0x220] sm:$0xff] %vm2135, %v2113
    %2205 = vst.msk [vmem:[#allocation2 + $0x228] sm:$0xff] %vm2135, %v2114
    %2206 = vst.msk [vmem:[#allocation2 + $0x230] sm:$0xff] %vm2135, %v2115
    %2207 = vst.msk [vmem:[#allocation2 + $0x238] sm:$0xff] %vm2135, %v2116
    %2208 = vst.msk [vmem:[#allocation2 + $0x240] sm:$0xff] %vm2135, %v2117
    %2209 = vst.msk [vmem:[#allocation2 + $0x248] sm:$0xff] %vm2135, %v2118
    %2210 = vst.msk [vmem:[#allocation2 + $0x250] sm:$0xff] %vm2135, %v2119
    %2211 = vst.msk [vmem:[#allocation2 + $0x258] sm:$0xff] %vm2135, %v2120
    %2212 = vst.msk [vmem:[#allocation2 + $0x260] sm:$0xff] %vm2135, %v2121
    %2213 = vst.msk [vmem:[#allocation2 + $0x268] sm:$0xff] %vm2135, %v2122
    %2214 = vst.msk [vmem:[#allocation2 + $0x270] sm:$0xff] %vm2135, %v2123
    %2215 = vst.msk [vmem:[#allocation2 + $0x278] sm:$0xff] %vm2135, %v2124
    %2216 = vst.msk [vmem:[#allocation2 + $0x280] sm:$0xff] %vm2135, %v2125
    %2217 = vst.msk [vmem:[#allocation2 + $0x288] sm:$0xff] %vm2135, %v2126
    %2218 = vst.msk [vmem:[#allocation2 + $0x290] sm:$0xff] %vm2135, %v2127
    %2219 = vst.msk [vmem:[#allocation2 + $0x298] sm:$0xff] %vm2135, %v2128
    %2220 = vst.msk [vmem:[#allocation2 + $0x2a0] sm:$0xff] %vm2135, %v2129
    %2221 = vst.msk [vmem:[#allocation2 + $0x2a8] sm:$0xff] %vm2135, %v2130
    %2222 = vst.msk [vmem:[#allocation2 + $0x2b0] sm:$0xff] %vm2135, %v2131
    %2223 = vst.msk [vmem:[#allocation2 + $0x2b8] sm:$0xff] %vm2135, %v2132
    %2224 = vst.msk [vmem:[#allocation2 + $0x2c0] sm:$0xff] %vm2135, %v2133
    %2225 = vst.msk [vmem:[#allocation2 + $0x2c8] sm:$0xff] %vm2135, %v2134
    %v2226 = vld [vmem:[#allocation2] sm:$0xff]
    %v2227 = vpack.c.bf16 %v2226, %v2226
    %v2228 = vld [vmem:[#allocation8] sm:$0xf]
    %v2229 = vld [vmem:[#allocation8 + $0x4] sm:$0xf]
    %v2230 = vld [vmem:[#allocation8 + $0x8] sm:$0xf]
    %v2231 = vld [vmem:[#allocation8 + $0xc] sm:$0xf]
    %v2232 = vld [vmem:[#allocation8 + $0x10] sm:$0xf]
    %v2233 = vld [vmem:[#allocation8 + $0x14] sm:$0xf]
    %v2234 = vld [vmem:[#allocation8 + $0x18] sm:$0xf]
    %v2235 = vld [vmem:[#allocation8 + $0x1c] sm:$0xf]
    %v2236 = vld [vmem:[#allocation2 + $0x8] sm:$0xff]
    %v2237 = vpack.c.bf16 %v2236, %v2236
    %s2238 = scalar_lea.vmem [#allocation8], 32
    %v2239 = vld [vmem:[%s2238] sm:$0xf]
    %v2240 = vld [vmem:[%s2238 + $0x4] sm:$0xf]
    %v2241 = vld [vmem:[%s2238 + $0x8] sm:$0xf]
    %v2242 = vld [vmem:[%s2238 + $0xc] sm:$0xf]
    %v2243 = vld [vmem:[%s2238 + $0x10] sm:$0xf]
    %v2244 = vld [vmem:[%s2238 + $0x14] sm:$0xf]
    %v2245 = vld [vmem:[%s2238 + $0x18] sm:$0xf]
    %v2246 = vld [vmem:[%s2238 + $0x1c] sm:$0xf]
    %v2247 = vld [vmem:[#allocation2 + $0x10] sm:$0xff]
    %v2248 = vpack.c.bf16 %v2247, %v2247
    %s2249 = scalar_lea.vmem [#allocation8], 64
    %v2250 = vld [vmem:[%s2249] sm:$0xf]
    %v2251 = vld [vmem:[%s2249 + $0x4] sm:$0xf]
    %v2252 = vld [vmem:[%s2249 + $0x8] sm:$0xf]
    %v2253 = vld [vmem:[%s2249 + $0xc] sm:$0xf]
    %v2254 = vld [vmem:[%s2249 + $0x10] sm:$0xf]
    %v2255 = vld [vmem:[%s2249 + $0x14] sm:$0xf]
    %v2256 = vld [vmem:[%s2249 + $0x18] sm:$0xf]
    %v2257 = vld [vmem:[%s2249 + $0x1c] sm:$0xf]
    %v2258 = vld [vmem:[#allocation2 + $0x18] sm:$0xff]
    %v2259 = vpack.c.bf16 %v2258, %v2258
    %s2260 = scalar_lea.vmem [#allocation8], 96
    %v2261 = vld [vmem:[%s2260] sm:$0xf]
    %v2262 = vld [vmem:[%s2260 + $0x4] sm:$0xf]
    %v2263 = vld [vmem:[%s2260 + $0x8] sm:$0xf]
    %v2264 = vld [vmem:[%s2260 + $0xc] sm:$0xf]
    %v2265 = vld [vmem:[%s2260 + $0x10] sm:$0xf]
    %v2266 = vld [vmem:[%s2260 + $0x14] sm:$0xf]
    %v2267 = vld [vmem:[%s2260 + $0x18] sm:$0xf]
    %v2268 = vld [vmem:[%s2260 + $0x1c] sm:$0xf]
    %v2269 = vld [vmem:[#allocation2 + $0x20] sm:$0xff]
    %v2270 = vpack.c.bf16 %v2269, %v2269
    %s2271 = scalar_lea.vmem [#allocation8], 128
    %v2272 = vld [vmem:[%s2271] sm:$0xf]
    %v2273 = vld [vmem:[%s2271 + $0x4] sm:$0xf]
    %v2274 = vld [vmem:[%s2271 + $0x8] sm:$0xf]
    %v2275 = vld [vmem:[%s2271 + $0xc] sm:$0xf]
    %v2276 = vld [vmem:[%s2271 + $0x10] sm:$0xf]
    %v2277 = vld [vmem:[%s2271 + $0x14] sm:$0xf]
    %v2278 = vld [vmem:[%s2271 + $0x18] sm:$0xf]
    %v2279 = vld [vmem:[%s2271 + $0x1c] sm:$0xf]
    %v2280 = vld [vmem:[#allocation2 + $0x28] sm:$0xff]
    %v2281 = vpack.c.bf16 %v2280, %v2280
    %s2282 = scalar_lea.vmem [#allocation8], 160
    %v2283 = vld [vmem:[%s2282] sm:$0xf]
    %v2284 = vld [vmem:[%s2282 + $0x4] sm:$0xf]
    %v2285 = vld [vmem:[%s2282 + $0x8] sm:$0xf]
    %v2286 = vld [vmem:[%s2282 + $0xc] sm:$0xf]
    %v2287 = vld [vmem:[%s2282 + $0x10] sm:$0xf]
    %v2288 = vld [vmem:[%s2282 + $0x14] sm:$0xf]
    %v2289 = vld [vmem:[%s2282 + $0x18] sm:$0xf]
    %v2290 = vld [vmem:[%s2282 + $0x1c] sm:$0xf]
    %v2291 = vld [vmem:[#allocation2 + $0x30] sm:$0xff]
    %v2292 = vpack.c.bf16 %v2291, %v2291
    %s2293 = scalar_lea.vmem [#allocation8], 192
    %v2294 = vld [vmem:[%s2293] sm:$0xf]
    %v2295 = vld [vmem:[%s2293 + $0x4] sm:$0xf]
    %v2296 = vld [vmem:[%s2293 + $0x8] sm:$0xf]
    %v2297 = vld [vmem:[%s2293 + $0xc] sm:$0xf]
    %v2298 = vld [vmem:[%s2293 + $0x10] sm:$0xf]
    %v2299 = vld [vmem:[%s2293 + $0x14] sm:$0xf]
    %v2300 = vld [vmem:[%s2293 + $0x18] sm:$0xf]
    %v2301 = vld [vmem:[%s2293 + $0x1c] sm:$0xf]
    %v2310 = vunpack.c.l.b16 %v2294
    %v2311 = vunpack.c.l.b16 %v2295
    %v2312 = vunpack.c.l.b16 %v2296
    %v2313 = vunpack.c.l.b16 %v2297
    %v2314 = vunpack.c.l.b16 %v2298
    %v2315 = vunpack.c.l.b16 %v2299
    %v2316 = vunpack.c.l.b16 %v2300
    %v2317 = vunpack.c.l.b16 %v2301
    %v2318 = vpack.c.b16 %v2311, %v2310
    %v2319 = vpack.c.b16 %v2313, %v2312
    %v2320 = vpack.c.b16 %v2315, %v2314
    %v2321 = vpack.c.b16 %v2317, %v2316
    %v2327 = vsel %vm2135, %v2292, 0
    %2329 = vmatprep.subr.bf16.mxu0 0
    %2330 = vmatpush1.bf16.msra.mxu0 0
    %2331 = vmatprep.subr.bf16.mxu0 0
    %2332 = vmatpush1.bf16.msra.mxu0 0
    %2333 = vmatprep.subr.bf16.mxu0 0
    %2334 = vmatpush1.bf16.msra.mxu0 0
    %2335 = vmatprep.subr.bf16.mxu0 0
    %2336 = vmatpush1.bf16.msra.mxu0 0
    %2337 = vmatprep.subr.bf16.mxu0 0
    %2338 = vmatpush1.bf16.msra.mxu0 %v2321
    %2339 = vmatprep.subr.bf16.mxu0 0
    %2340 = vmatpush1.bf16.msra.mxu0 %v2320
    %2341 = vmatprep.subr.bf16.mxu0 0
    %2342 = vmatpush1.bf16.msra.mxu0 %v2319
    %2343 = vmatprep.subr.bf16.mxu0 0
    %2344 = vmatpush1.bf16.msra.mxu0 %v2318
    %2345 = vmatprep.subr.bf16.mxu0 0
    %2346 = vmatpush2.bf16.msra.mxu0 0
    %2347 = vmatprep.subr.bf16.mxu0 0
    %2348 = vmatpush2.bf16.msra.mxu0 0
    %2349 = vmatprep.subr.bf16.mxu0 0
    %2350 = vmatpush2.bf16.msra.mxu0 0
    %2351 = vmatprep.subr.bf16.mxu0 0
    %2352 = vmatpush2.bf16.msra.mxu0 0
    %2353 = vmatprep.subr.bf16.mxu0 0
    %2354 = vmatpush2.bf16.msra.mxu0 0
    %2355 = vmatprep.subr.bf16.mxu0 0
    %2356 = vmatpush2.bf16.msra.mxu0 0
    %2357 = vmatprep.subr.bf16.mxu0 0
    %2358 = vmatpush2.bf16.msra.mxu0 0
    %2359 = vmatprep.subr.bf16.mxu0 0
    %2360 = vmatpush2.bf16.msra.mxu0 0
    %2361 = vmatprep.mubr.bf16.mxu0 0
    %2362 = vmatmul.mubr.bf16.gmra.mxu0 %v2327
    %v2363 = vpop.f32.mrf.mxu0
    %v2364 = vadd.f32 0.0, %v2363
    %v2365 = vpop.f32.mrf.mxu0
    %v2366 = vpop.f32.mrf.mxu0
    %v2367 = vpop.f32.mrf.mxu0
    %2368 = vdwg.mxu0
    %v2377 = vunpack.c.l.b16 %v2228
    %v2378 = vunpack.c.l.b16 %v2229
    %v2379 = vunpack.c.l.b16 %v2230
    %v2380 = vunpack.c.l.b16 %v2231
    %v2381 = vunpack.c.l.b16 %v2232
    %v2382 = vunpack.c.l.b16 %v2233
    %v2383 = vunpack.c.l.b16 %v2234
    %v2384 = vunpack.c.l.b16 %v2235
    %v2385 = vpack.c.b16 %v2378, %v2377
    %v2386 = vpack.c.b16 %v2380, %v2379
    %v2387 = vpack.c.b16 %v2382, %v2381
    %v2388 = vpack.c.b16 %v2384, %v2383
    %v2394 = vsel %vm2135, %v2227, 0
    %2396 = vmatprep.subr.bf16.mxu0 0
    %2397 = vmatpush1.bf16.msra.mxu0 0
    %2398 = vmatprep.subr.bf16.mxu0 0
    %2399 = vmatpush1.bf16.msra.mxu0 0
    %2400 = vmatprep.subr.bf16.mxu0 0
    %2401 = vmatpush1.bf16.msra.mxu0 0
    %2402 = vmatprep.subr.bf16.mxu0 0
    %2403 = vmatpush1.bf16.msra.mxu0 0
    %2404 = vmatprep.subr.bf16.mxu0 0
    %2405 = vmatpush1.bf16.msra.mxu0 %v2388
    %2406 = vmatprep.subr.bf16.mxu0 0
    %2407 = vmatpush1.bf16.msra.mxu0 %v2387
    %2408 = vmatprep.subr.bf16.mxu0 0
    %2409 = vmatpush1.bf16.msra.mxu0 %v2386
    %2410 = vmatprep.subr.bf16.mxu0 0
    %2411 = vmatpush1.bf16.msra.mxu0 %v2385
    %2412 = vmatprep.subr.bf16.mxu0 0
    %2413 = vmatpush2.bf16.msra.mxu0 0
    %2414 = vmatprep.subr.bf16.mxu0 0
    %2415 = vmatpush2.bf16.msra.mxu0 0
    %2416 = vmatprep.subr.bf16.mxu0 0
    %2417 = vmatpush2.bf16.msra.mxu0 0
    %2418 = vmatprep.subr.bf16.mxu0 0
    %2419 = vmatpush2.bf16.msra.mxu0 0
    %2420 = vmatprep.subr.bf16.mxu0 0
    %2421 = vmatpush2.bf16.msra.mxu0 0
    %2422 = vmatprep.subr.bf16.mxu0 0
    %2423 = vmatpush2.bf16.msra.mxu0 0
    %2424 = vmatprep.subr.bf16.mxu0 0
    %2425 = vmatpush2.bf16.msra.mxu0 0
    %2426 = vmatprep.subr.bf16.mxu0 0
    %2427 = vmatpush2.bf16.msra.mxu0 0
    %2428 = vmatprep.mubr.bf16.mxu0 0
    %2429 = vmatmul.mubr.bf16.gmra.mxu0 %v2394
    %v2430 = vpop.f32.mrf.mxu0
    %v2431 = vadd.f32 %v2364, %v2430
    %v2432 = vpop.f32.mrf.mxu0
    %v2433 = vpop.f32.mrf.mxu0
    %v2434 = vpop.f32.mrf.mxu0
    %2435 = vdwg.mxu0
    %v2436 = vld [vmem:[#allocation2 + $0x38] sm:$0xff]
    %v2437 = vpack.c.bf16 %v2436, %v2436
    %s2438 = scalar_lea.vmem [#allocation8], 224
    %v2439 = vld [vmem:[%s2438] sm:$0xf]
    %v2440 = vld [vmem:[%s2438 + $0x4] sm:$0xf]
    %v2441 = vld [vmem:[%s2438 + $0x8] sm:$0xf]
    %v2442 = vld [vmem:[%s2438 + $0xc] sm:$0xf]
    %v2443 = vld [vmem:[%s2438 + $0x10] sm:$0xf]
    %v2444 = vld [vmem:[%s2438 + $0x14] sm:$0xf]
    %v2445 = vld [vmem:[%s2438 + $0x18] sm:$0xf]
    %v2446 = vld [vmem:[%s2438 + $0x1c] sm:$0xf]
    %v2455 = vunpack.c.l.b16 %v2439
    %v2456 = vunpack.c.l.b16 %v2440
    %v2457 = vunpack.c.l.b16 %v2441
    %v2458 = vunpack.c.l.b16 %v2442
    %v2459 = vunpack.c.l.b16 %v2443
    %v2460 = vunpack.c.l.b16 %v2444
    %v2461 = vunpack.c.l.b16 %v2445
    %v2462 = vunpack.c.l.b16 %v2446
    %v2463 = vpack.c.b16 %v2456, %v2455
    %v2464 = vpack.c.b16 %v2458, %v2457
    %v2465 = vpack.c.b16 %v2460, %v2459
    %v2466 = vpack.c.b16 %v2462, %v2461
    %v2472 = vsel %vm2135, %v2437, 0
    %2474 = vmatprep.subr.bf16.mxu0 0
    %2475 = vmatpush1.bf16.msra.mxu0 0
    %2476 = vmatprep.subr.bf16.mxu0 0
    %2477 = vmatpush1.bf16.msra.mxu0 0
    %2478 = vmatprep.subr.bf16.mxu0 0
    %2479 = vmatpush1.bf16.msra.mxu0 0
    %2480 = vmatprep.subr.bf16.mxu0 0
    %2481 = vmatpush1.bf16.msra.mxu0 0
    %2482 = vmatprep.subr.bf16.mxu0 0
    %2483 = vmatpush1.bf16.msra.mxu0 %v2466
    %2484 = vmatprep.subr.bf16.mxu0 0
    %2485 = vmatpush1.bf16.msra.mxu0 %v2465
    %2486 = vmatprep.subr.bf16.mxu0 0
    %2487 = vmatpush1.bf16.msra.mxu0 %v2464
    %2488 = vmatprep.subr.bf16.mxu0 0
    %2489 = vmatpush1.bf16.msra.mxu0 %v2463
    %2490 = vmatprep.subr.bf16.mxu0 0
    %2491 = vmatpush2.bf16.msra.mxu0 0
    %2492 = vmatprep.subr.bf16.mxu0 0
    %2493 = vmatpush2.bf16.msra.mxu0 0
    %2494 = vmatprep.subr.bf16.mxu0 0
    %2495 = vmatpush2.bf16.msra.mxu0 0
    %2496 = vmatprep.subr.bf16.mxu0 0
    %2497 = vmatpush2.bf16.msra.mxu0 0
    %2498 = vmatprep.subr.bf16.mxu0 0
    %2499 = vmatpush2.bf16.msra.mxu0 0
    %2500 = vmatprep.subr.bf16.mxu0 0
    %2501 = vmatpush2.bf16.msra.mxu0 0
    %2502 = vmatprep.subr.bf16.mxu0 0
    %2503 = vmatpush2.bf16.msra.mxu0 0
    %2504 = vmatprep.subr.bf16.mxu0 0
    %2505 = vmatpush2.bf16.msra.mxu0 0
    %2506 = vmatprep.mubr.bf16.mxu0 0
    %2507 = vmatmul.mubr.bf16.gmra.mxu0 %v2472
    %v2508 = vpop.f32.mrf.mxu0
    %v2509 = vadd.f32 0.0, %v2508
    %v2510 = vpop.f32.mrf.mxu0
    %v2511 = vpop.f32.mrf.mxu0
    %v2512 = vpop.f32.mrf.mxu0
    %2513 = vdwg.mxu0
    %v2522 = vunpack.c.l.b16 %v2239
    %v2523 = vunpack.c.l.b16 %v2240
    %v2524 = vunpack.c.l.b16 %v2241
    %v2525 = vunpack.c.l.b16 %v2242
    %v2526 = vunpack.c.l.b16 %v2243
    %v2527 = vunpack.c.l.b16 %v2244
    %v2528 = vunpack.c.l.b16 %v2245
    %v2529 = vunpack.c.l.b16 %v2246
    %v2530 = vpack.c.b16 %v2523, %v2522
    %v2531 = vpack.c.b16 %v2525, %v2524
    %v2532 = vpack.c.b16 %v2527, %v2526
    %v2533 = vpack.c.b16 %v2529, %v2528
    %v2539 = vsel %vm2135, %v2237, 0
    %2541 = vmatprep.subr.bf16.mxu0 0
    %2542 = vmatpush1.bf16.msra.mxu0 0
    %2543 = vmatprep.subr.bf16.mxu0 0
    %2544 = vmatpush1.bf16.msra.mxu0 0
    %2545 = vmatprep.subr.bf16.mxu0 0
    %2546 = vmatpush1.bf16.msra.mxu0 0
    %2547 = vmatprep.subr.bf16.mxu0 0
    %2548 = vmatpush1.bf16.msra.mxu0 0
    %2549 = vmatprep.subr.bf16.mxu0 0
    %2550 = vmatpush1.bf16.msra.mxu0 %v2533
    %2551 = vmatprep.subr.bf16.mxu0 0
    %2552 = vmatpush1.bf16.msra.mxu0 %v2532
    %2553 = vmatprep.subr.bf16.mxu0 0
    %2554 = vmatpush1.bf16.msra.mxu0 %v2531
    %2555 = vmatprep.subr.bf16.mxu0 0
    %2556 = vmatpush1.bf16.msra.mxu0 %v2530
    %2557 = vmatprep.subr.bf16.mxu0 0
    %2558 = vmatpush2.bf16.msra.mxu0 0
    %2559 = vmatprep.subr.bf16.mxu0 0
    %2560 = vmatpush2.bf16.msra.mxu0 0
    %2561 = vmatprep.subr.bf16.mxu0 0
    %2562 = vmatpush2.bf16.msra.mxu0 0
    %2563 = vmatprep.subr.bf16.mxu0 0
    %2564 = vmatpush2.bf16.msra.mxu0 0
    %2565 = vmatprep.subr.bf16.mxu0 0
    %2566 = vmatpush2.bf16.msra.mxu0 0
    %2567 = vmatprep.subr.bf16.mxu0 0
    %2568 = vmatpush2.bf16.msra.mxu0 0
    %2569 = vmatprep.subr.bf16.mxu0 0
    %2570 = vmatpush2.bf16.msra.mxu0 0
    %2571 = vmatprep.subr.bf16.mxu0 0
    %2572 = vmatpush2.bf16.msra.mxu0 0
    %2573 = vmatprep.mubr.bf16.mxu0 0
    %2574 = vmatmul.mubr.bf16.gmra.mxu0 %v2539
    %v2575 = vpop.f32.mrf.mxu0
    %v2576 = vadd.f32 %v2509, %v2575
    %v2577 = vpop.f32.mrf.mxu0
    %v2578 = vpop.f32.mrf.mxu0
    %v2579 = vpop.f32.mrf.mxu0
    %2580 = vdwg.mxu0
    %v2581 = vld [vmem:[#allocation2 + $0x40] sm:$0xff]
    %v2582 = vpack.c.bf16 %v2581, %v2581
    %s2583 = scalar_lea.vmem [#allocation8], 256
    %v2584 = vld [vmem:[%s2583] sm:$0xf]
    %v2585 = vld [vmem:[%s2583 + $0x4] sm:$0xf]
    %v2586 = vld [vmem:[%s2583 + $0x8] sm:$0xf]
    %v2587 = vld [vmem:[%s2583 + $0xc] sm:$0xf]
    %v2588 = vld [vmem:[%s2583 + $0x10] sm:$0xf]
    %v2589 = vld [vmem:[%s2583 + $0x14] sm:$0xf]
    %v2590 = vld [vmem:[%s2583 + $0x18] sm:$0xf]
    %v2591 = vld [vmem:[%s2583 + $0x1c] sm:$0xf]
    %v2600 = vunpack.c.l.b16 %v2584
    %v2601 = vunpack.c.l.b16 %v2585
    %v2602 = vunpack.c.l.b16 %v2586
    %v2603 = vunpack.c.l.b16 %v2587
    %v2604 = vunpack.c.l.b16 %v2588
    %v2605 = vunpack.c.l.b16 %v2589
    %v2606 = vunpack.c.l.b16 %v2590
    %v2607 = vunpack.c.l.b16 %v2591
    %v2608 = vpack.c.b16 %v2601, %v2600
    %v2609 = vpack.c.b16 %v2603, %v2602
    %v2610 = vpack.c.b16 %v2605, %v2604
    %v2611 = vpack.c.b16 %v2607, %v2606
    %v2617 = vsel %vm2135, %v2582, 0
    %2619 = vmatprep.subr.bf16.mxu0 0
    %2620 = vmatpush1.bf16.msra.mxu0 0
    %2621 = vmatprep.subr.bf16.mxu0 0
    %2622 = vmatpush1.bf16.msra.mxu0 0
    %2623 = vmatprep.subr.bf16.mxu0 0
    %2624 = vmatpush1.bf16.msra.mxu0 0
    %2625 = vmatprep.subr.bf16.mxu0 0
    %2626 = vmatpush1.bf16.msra.mxu0 0
    %2627 = vmatprep.subr.bf16.mxu0 0
    %2628 = vmatpush1.bf16.msra.mxu0 %v2611
    %2629 = vmatprep.subr.bf16.mxu0 0
    %2630 = vmatpush1.bf16.msra.mxu0 %v2610
    %2631 = vmatprep.subr.bf16.mxu0 0
    %2632 = vmatpush1.bf16.msra.mxu0 %v2609
    %2633 = vmatprep.subr.bf16.mxu0 0
    %2634 = vmatpush1.bf16.msra.mxu0 %v2608
    %2635 = vmatprep.subr.bf16.mxu0 0
    %2636 = vmatpush2.bf16.msra.mxu0 0
    %2637 = vmatprep.subr.bf16.mxu0 0
    %2638 = vmatpush2.bf16.msra.mxu0 0
    %2639 = vmatprep.subr.bf16.mxu0 0
    %2640 = vmatpush2.bf16.msra.mxu0 0
    %2641 = vmatprep.subr.bf16.mxu0 0
    %2642 = vmatpush2.bf16.msra.mxu0 0
    %2643 = vmatprep.subr.bf16.mxu0 0
    %2644 = vmatpush2.bf16.msra.mxu0 0
    %2645 = vmatprep.subr.bf16.mxu0 0
    %2646 = vmatpush2.bf16.msra.mxu0 0
    %2647 = vmatprep.subr.bf16.mxu0 0
    %2648 = vmatpush2.bf16.msra.mxu0 0
    %2649 = vmatprep.subr.bf16.mxu0 0
    %2650 = vmatpush2.bf16.msra.mxu0 0
    %2651 = vmatprep.mubr.bf16.mxu0 0
    %2652 = vmatmul.mubr.bf16.gmra.mxu0 %v2617
    %v2653 = vpop.f32.mrf.mxu0
    %v2654 = vadd.f32 0.0, %v2653
    %v2655 = vpop.f32.mrf.mxu0
    %v2656 = vpop.f32.mrf.mxu0
    %v2657 = vpop.f32.mrf.mxu0
    %2658 = vdwg.mxu0
    %v2667 = vunpack.c.l.b16 %v2250
    %v2668 = vunpack.c.l.b16 %v2251
    %v2669 = vunpack.c.l.b16 %v2252
    %v2670 = vunpack.c.l.b16 %v2253
    %v2671 = vunpack.c.l.b16 %v2254
    %v2672 = vunpack.c.l.b16 %v2255
    %v2673 = vunpack.c.l.b16 %v2256
    %v2674 = vunpack.c.l.b16 %v2257
    %v2675 = vpack.c.b16 %v2668, %v2667
    %v2676 = vpack.c.b16 %v2670, %v2669
    %v2677 = vpack.c.b16 %v2672, %v2671
    %v2678 = vpack.c.b16 %v2674, %v2673
    %v2684 = vsel %vm2135, %v2248, 0
    %2686 = vmatprep.subr.bf16.mxu0 0
    %2687 = vmatpush1.bf16.msra.mxu0 0
    %2688 = vmatprep.subr.bf16.mxu0 0
    %2689 = vmatpush1.bf16.msra.mxu0 0
    %2690 = vmatprep.subr.bf16.mxu0 0
    %2691 = vmatpush1.bf16.msra.mxu0 0
    %2692 = vmatprep.subr.bf16.mxu0 0
    %2693 = vmatpush1.bf16.msra.mxu0 0
    %2694 = vmatprep.subr.bf16.mxu0 0
    %2695 = vmatpush1.bf16.msra.mxu0 %v2678
    %2696 = vmatprep.subr.bf16.mxu0 0
    %2697 = vmatpush1.bf16.msra.mxu0 %v2677
    %2698 = vmatprep.subr.bf16.mxu0 0
    %2699 = vmatpush1.bf16.msra.mxu0 %v2676
    %2700 = vmatprep.subr.bf16.mxu0 0
    %2701 = vmatpush1.bf16.msra.mxu0 %v2675
    %2702 = vmatprep.subr.bf16.mxu0 0
    %2703 = vmatpush2.bf16.msra.mxu0 0
    %2704 = vmatprep.subr.bf16.mxu0 0
    %2705 = vmatpush2.bf16.msra.mxu0 0
    %2706 = vmatprep.subr.bf16.mxu0 0
    %2707 = vmatpush2.bf16.msra.mxu0 0
    %2708 = vmatprep.subr.bf16.mxu0 0
    %2709 = vmatpush2.bf16.msra.mxu0 0
    %2710 = vmatprep.subr.bf16.mxu0 0
    %2711 = vmatpush2.bf16.msra.mxu0 0
    %2712 = vmatprep.subr.bf16.mxu0 0
    %2713 = vmatpush2.bf16.msra.mxu0 0
    %2714 = vmatprep.subr.bf16.mxu0 0
    %2715 = vmatpush2.bf16.msra.mxu0 0
    %2716 = vmatprep.subr.bf16.mxu0 0
    %2717 = vmatpush2.bf16.msra.mxu0 0
    %2718 = vmatprep.mubr.bf16.mxu0 0
    %2719 = vmatmul.mubr.bf16.gmra.mxu0 %v2684
    %v2720 = vpop.f32.mrf.mxu0
    %v2721 = vadd.f32 %v2654, %v2720
    %v2722 = vpop.f32.mrf.mxu0
    %v2723 = vpop.f32.mrf.mxu0
    %v2724 = vpop.f32.mrf.mxu0
    %2725 = vdwg.mxu0
    %v2726 = vld [vmem:[#allocation2 + $0x48] sm:$0xff]
    %v2727 = vpack.c.bf16 %v2726, %v2726
    %s2728 = scalar_lea.vmem [#allocation8], 288
    %v2729 = vld [vmem:[%s2728] sm:$0xf]
    %v2730 = vld [vmem:[%s2728 + $0x4] sm:$0xf]
    %v2731 = vld [vmem:[%s2728 + $0x8] sm:$0xf]
    %v2732 = vld [vmem:[%s2728 + $0xc] sm:$0xf]
    %v2733 = vld [vmem:[%s2728 + $0x10] sm:$0xf]
    %v2734 = vld [vmem:[%s2728 + $0x14] sm:$0xf]
    %v2735 = vld [vmem:[%s2728 + $0x18] sm:$0xf]
    %v2736 = vld [vmem:[%s2728 + $0x1c] sm:$0xf]
    %v2745 = vunpack.c.l.b16 %v2729
    %v2746 = vunpack.c.l.b16 %v2730
    %v2747 = vunpack.c.l.b16 %v2731
    %v2748 = vunpack.c.l.b16 %v2732
    %v2749 = vunpack.c.l.b16 %v2733
    %v2750 = vunpack.c.l.b16 %v2734
    %v2751 = vunpack.c.l.b16 %v2735
    %v2752 = vunpack.c.l.b16 %v2736
    %v2753 = vpack.c.b16 %v2746, %v2745
    %v2754 = vpack.c.b16 %v2748, %v2747
    %v2755 = vpack.c.b16 %v2750, %v2749
    %v2756 = vpack.c.b16 %v2752, %v2751
    %v2762 = vsel %vm2135, %v2727, 0
    %2764 = vmatprep.subr.bf16.mxu0 0
    %2765 = vmatpush1.bf16.msra.mxu0 0
    %2766 = vmatprep.subr.bf16.mxu0 0
    %2767 = vmatpush1.bf16.msra.mxu0 0
    %2768 = vmatprep.subr.bf16.mxu0 0
    %2769 = vmatpush1.bf16.msra.mxu0 0
    %2770 = vmatprep.subr.bf16.mxu0 0
    %2771 = vmatpush1.bf16.msra.mxu0 0
    %2772 = vmatprep.subr.bf16.mxu0 0
    %2773 = vmatpush1.bf16.msra.mxu0 %v2756
    %2774 = vmatprep.subr.bf16.mxu0 0
    %2775 = vmatpush1.bf16.msra.mxu0 %v2755
    %2776 = vmatprep.subr.bf16.mxu0 0
    %2777 = vmatpush1.bf16.msra.mxu0 %v2754
    %2778 = vmatprep.subr.bf16.mxu0 0
    %2779 = vmatpush1.bf16.msra.mxu0 %v2753
    %2780 = vmatprep.subr.bf16.mxu0 0
    %2781 = vmatpush2.bf16.msra.mxu0 0
    %2782 = vmatprep.subr.bf16.mxu0 0
    %2783 = vmatpush2.bf16.msra.mxu0 0
    %2784 = vmatprep.subr.bf16.mxu0 0
    %2785 = vmatpush2.bf16.msra.mxu0 0
    %2786 = vmatprep.subr.bf16.mxu0 0
    %2787 = vmatpush2.bf16.msra.mxu0 0
    %2788 = vmatprep.subr.bf16.mxu0 0
    %2789 = vmatpush2.bf16.msra.mxu0 0
    %2790 = vmatprep.subr.bf16.mxu0 0
    %2791 = vmatpush2.bf16.msra.mxu0 0
    %2792 = vmatprep.subr.bf16.mxu0 0
    %2793 = vmatpush2.bf16.msra.mxu0 0
    %2794 = vmatprep.subr.bf16.mxu0 0
    %2795 = vmatpush2.bf16.msra.mxu0 0
    %2796 = vmatprep.mubr.bf16.mxu0 0
    %2797 = vmatmul.mubr.bf16.gmra.mxu0 %v2762
    %v2798 = vpop.f32.mrf.mxu0
    %v2799 = vadd.f32 0.0, %v2798
    %v2800 = vpop.f32.mrf.mxu0
    %v2801 = vpop.f32.mrf.mxu0
    %v2802 = vpop.f32.mrf.mxu0
    %2803 = vdwg.mxu0
    %v2812 = vunpack.c.l.b16 %v2261
    %v2813 = vunpack.c.l.b16 %v2262
    %v2814 = vunpack.c.l.b16 %v2263
    %v2815 = vunpack.c.l.b16 %v2264
    %v2816 = vunpack.c.l.b16 %v2265
    %v2817 = vunpack.c.l.b16 %v2266
    %v2818 = vunpack.c.l.b16 %v2267
    %v2819 = vunpack.c.l.b16 %v2268
    %v2820 = vpack.c.b16 %v2813, %v2812
    %v2821 = vpack.c.b16 %v2815, %v2814
    %v2822 = vpack.c.b16 %v2817, %v2816
    %v2823 = vpack.c.b16 %v2819, %v2818
    %v2829 = vsel %vm2135, %v2259, 0
    %2831 = vmatprep.subr.bf16.mxu0 0
    %2832 = vmatpush1.bf16.msra.mxu0 0
    %2833 = vmatprep.subr.bf16.mxu0 0
    %2834 = vmatpush1.bf16.msra.mxu0 0
    %2835 = vmatprep.subr.bf16.mxu0 0
    %2836 = vmatpush1.bf16.msra.mxu0 0
    %2837 = vmatprep.subr.bf16.mxu0 0
    %2838 = vmatpush1.bf16.msra.mxu0 0
    %2839 = vmatprep.subr.bf16.mxu0 0
    %2840 = vmatpush1.bf16.msra.mxu0 %v2823
    %2841 = vmatprep.subr.bf16.mxu0 0
    %2842 = vmatpush1.bf16.msra.mxu0 %v2822
    %2843 = vmatprep.subr.bf16.mxu0 0
    %2844 = vmatpush1.bf16.msra.mxu0 %v2821
    %2845 = vmatprep.subr.bf16.mxu0 0
    %2846 = vmatpush1.bf16.msra.mxu0 %v2820
    %2847 = vmatprep.subr.bf16.mxu0 0
    %2848 = vmatpush2.bf16.msra.mxu0 0
    %2849 = vmatprep.subr.bf16.mxu0 0
    %2850 = vmatpush2.bf16.msra.mxu0 0
    %2851 = vmatprep.subr.bf16.mxu0 0
    %2852 = vmatpush2.bf16.msra.mxu0 0
    %2853 = vmatprep.subr.bf16.mxu0 0
    %2854 = vmatpush2.bf16.msra.mxu0 0
    %2855 = vmatprep.subr.bf16.mxu0 0
    %2856 = vmatpush2.bf16.msra.mxu0 0
    %2857 = vmatprep.subr.bf16.mxu0 0
    %2858 = vmatpush2.bf16.msra.mxu0 0
    %2859 = vmatprep.subr.bf16.mxu0 0
    %2860 = vmatpush2.bf16.msra.mxu0 0
    %2861 = vmatprep.subr.bf16.mxu0 0
    %2862 = vmatpush2.bf16.msra.mxu0 0
    %2863 = vmatprep.mubr.bf16.mxu0 0
    %2864 = vmatmul.mubr.bf16.gmra.mxu0 %v2829
    %v2865 = vpop.f32.mrf.mxu0
    %v2866 = vadd.f32 %v2799, %v2865
    %v2867 = vpop.f32.mrf.mxu0
    %v2868 = vpop.f32.mrf.mxu0
    %v2869 = vpop.f32.mrf.mxu0
    %2870 = vdwg.mxu0
    %v2871 = vld [vmem:[#allocation2 + $0x50] sm:$0xff]
    %v2872 = vpack.c.bf16 %v2871, %v2871
    %s2873 = scalar_lea.vmem [#allocation8], 320
    %v2874 = vld [vmem:[%s2873] sm:$0xf]
    %v2875 = vld [vmem:[%s2873 + $0x4] sm:$0xf]
    %v2876 = vld [vmem:[%s2873 + $0x8] sm:$0xf]
    %v2877 = vld [vmem:[%s2873 + $0xc] sm:$0xf]
    %v2878 = vld [vmem:[%s2873 + $0x10] sm:$0xf]
    %v2879 = vld [vmem:[%s2873 + $0x14] sm:$0xf]
    %v2880 = vld [vmem:[%s2873 + $0x18] sm:$0xf]
    %v2881 = vld [vmem:[%s2873 + $0x1c] sm:$0xf]
    %v2890 = vunpack.c.l.b16 %v2874
    %v2891 = vunpack.c.l.b16 %v2875
    %v2892 = vunpack.c.l.b16 %v2876
    %v2893 = vunpack.c.l.b16 %v2877
    %v2894 = vunpack.c.l.b16 %v2878
    %v2895 = vunpack.c.l.b16 %v2879
    %v2896 = vunpack.c.l.b16 %v2880
    %v2897 = vunpack.c.l.b16 %v2881
    %v2898 = vpack.c.b16 %v2891, %v2890
    %v2899 = vpack.c.b16 %v2893, %v2892
    %v2900 = vpack.c.b16 %v2895, %v2894
    %v2901 = vpack.c.b16 %v2897, %v2896
    %v2907 = vsel %vm2135, %v2872, 0
    %2909 = vmatprep.subr.bf16.mxu0 0
    %2910 = vmatpush1.bf16.msra.mxu0 0
    %2911 = vmatprep.subr.bf16.mxu0 0
    %2912 = vmatpush1.bf16.msra.mxu0 0
    %2913 = vmatprep.subr.bf16.mxu0 0
    %2914 = vmatpush1.bf16.msra.mxu0 0
    %2915 = vmatprep.subr.bf16.mxu0 0
    %2916 = vmatpush1.bf16.msra.mxu0 0
    %2917 = vmatprep.subr.bf16.mxu0 0
    %2918 = vmatpush1.bf16.msra.mxu0 %v2901
    %2919 = vmatprep.subr.bf16.mxu0 0
    %2920 = vmatpush1.bf16.msra.mxu0 %v2900
    %2921 = vmatprep.subr.bf16.mxu0 0
    %2922 = vmatpush1.bf16.msra.mxu0 %v2899
    %2923 = vmatprep.subr.bf16.mxu0 0
    %2924 = vmatpush1.bf16.msra.mxu0 %v2898
    %2925 = vmatprep.subr.bf16.mxu0 0
    %2926 = vmatpush2.bf16.msra.mxu0 0
    %2927 = vmatprep.subr.bf16.mxu0 0
    %2928 = vmatpush2.bf16.msra.mxu0 0
    %2929 = vmatprep.subr.bf16.mxu0 0
    %2930 = vmatpush2.bf16.msra.mxu0 0
    %2931 = vmatprep.subr.bf16.mxu0 0
    %2932 = vmatpush2.bf16.msra.mxu0 0
    %2933 = vmatprep.subr.bf16.mxu0 0
    %2934 = vmatpush2.bf16.msra.mxu0 0
    %2935 = vmatprep.subr.bf16.mxu0 0
    %2936 = vmatpush2.bf16.msra.mxu0 0
    %2937 = vmatprep.subr.bf16.mxu0 0
    %2938 = vmatpush2.bf16.msra.mxu0 0
    %2939 = vmatprep.subr.bf16.mxu0 0
    %2940 = vmatpush2.bf16.msra.mxu0 0
    %2941 = vmatprep.mubr.bf16.mxu0 0
    %2942 = vmatmul.mubr.bf16.gmra.mxu0 %v2907
    %v2943 = vpop.f32.mrf.mxu0
    %v2944 = vadd.f32 0.0, %v2943
    %v2945 = vpop.f32.mrf.mxu0
    %v2946 = vpop.f32.mrf.mxu0
    %v2947 = vpop.f32.mrf.mxu0
    %2948 = vdwg.mxu0
    %v2957 = vunpack.c.l.b16 %v2272
    %v2958 = vunpack.c.l.b16 %v2273
    %v2959 = vunpack.c.l.b16 %v2274
    %v2960 = vunpack.c.l.b16 %v2275
    %v2961 = vunpack.c.l.b16 %v2276
    %v2962 = vunpack.c.l.b16 %v2277
    %v2963 = vunpack.c.l.b16 %v2278
    %v2964 = vunpack.c.l.b16 %v2279
    %v2965 = vpack.c.b16 %v2958, %v2957
    %v2966 = vpack.c.b16 %v2960, %v2959
    %v2967 = vpack.c.b16 %v2962, %v2961
    %v2968 = vpack.c.b16 %v2964, %v2963
    %v2974 = vsel %vm2135, %v2270, 0
    %2976 = vmatprep.subr.bf16.mxu0 0
    %2977 = vmatpush1.bf16.msra.mxu0 0
    %2978 = vmatprep.subr.bf16.mxu0 0
    %2979 = vmatpush1.bf16.msra.mxu0 0
    %2980 = vmatprep.subr.bf16.mxu0 0
    %2981 = vmatpush1.bf16.msra.mxu0 0
    %2982 = vmatprep.subr.bf16.mxu0 0
    %2983 = vmatpush1.bf16.msra.mxu0 0
    %2984 = vmatprep.subr.bf16.mxu0 0
    %2985 = vmatpush1.bf16.msra.mxu0 %v2968
    %2986 = vmatprep.subr.bf16.mxu0 0
    %2987 = vmatpush1.bf16.msra.mxu0 %v2967
    %2988 = vmatprep.subr.bf16.mxu0 0
    %2989 = vmatpush1.bf16.msra.mxu0 %v2966
    %2990 = vmatprep.subr.bf16.mxu0 0
    %2991 = vmatpush1.bf16.msra.mxu0 %v2965
    %2992 = vmatprep.subr.bf16.mxu0 0
    %2993 = vmatpush2.bf16.msra.mxu0 0
    %2994 = vmatprep.subr.bf16.mxu0 0
    %2995 = vmatpush2.bf16.msra.mxu0 0
    %2996 = vmatprep.subr.bf16.mxu0 0
    %2997 = vmatpush2.bf16.msra.mxu0 0
    %2998 = vmatprep.subr.bf16.mxu0 0
    %2999 = vmatpush2.bf16.msra.mxu0 0
    %3000 = vmatprep.subr.bf16.mxu0 0
    %3001 = vmatpush2.bf16.msra.mxu0 0
    %3002 = vmatprep.subr.bf16.mxu0 0
    %3003 = vmatpush2.bf16.msra.mxu0 0
    %3004 = vmatprep.subr.bf16.mxu0 0
    %3005 = vmatpush2.bf16.msra.mxu0 0
    %3006 = vmatprep.subr.bf16.mxu0 0
    %3007 = vmatpush2.bf16.msra.mxu0 0
    %3008 = vmatprep.mubr.bf16.mxu0 0
    %3009 = vmatmul.mubr.bf16.gmra.mxu0 %v2974
    %v3010 = vpop.f32.mrf.mxu0
    %v3011 = vadd.f32 %v2944, %v3010
    %v3012 = vpop.f32.mrf.mxu0
    %v3013 = vpop.f32.mrf.mxu0
    %v3014 = vpop.f32.mrf.mxu0
    %3015 = vdwg.mxu0
    %v3016 = vld [vmem:[#allocation2 + $0x58] sm:$0xff]
    %v3017 = vpack.c.bf16 %v3016, %v3016
    %s3018 = scalar_lea.vmem [#allocation8], 352
    %v3019 = vld [vmem:[%s3018] sm:$0xf]
    %v3020 = vld [vmem:[%s3018 + $0x4] sm:$0xf]
    %v3021 = vld [vmem:[%s3018 + $0x8] sm:$0xf]
    %v3022 = vld [vmem:[%s3018 + $0xc] sm:$0xf]
    %v3023 = vld [vmem:[%s3018 + $0x10] sm:$0xf]
    %v3024 = vld [vmem:[%s3018 + $0x14] sm:$0xf]
    %v3025 = vld [vmem:[%s3018 + $0x18] sm:$0xf]
    %v3026 = vld [vmem:[%s3018 + $0x1c] sm:$0xf]
    %v3035 = vunpack.c.l.b16 %v3019
    %v3036 = vunpack.c.l.b16 %v3020
    %v3037 = vunpack.c.l.b16 %v3021
    %v3038 = vunpack.c.l.b16 %v3022
    %v3039 = vunpack.c.l.b16 %v3023
    %v3040 = vunpack.c.l.b16 %v3024
    %v3041 = vunpack.c.l.b16 %v3025
    %v3042 = vunpack.c.l.b16 %v3026
    %v3043 = vpack.c.b16 %v3036, %v3035
    %v3044 = vpack.c.b16 %v3038, %v3037
    %v3045 = vpack.c.b16 %v3040, %v3039
    %v3046 = vpack.c.b16 %v3042, %v3041
    %v3052 = vsel %vm2135, %v3017, 0
    %3054 = vmatprep.subr.bf16.mxu0 0
    %3055 = vmatpush1.bf16.msra.mxu0 0
    %3056 = vmatprep.subr.bf16.mxu0 0
    %3057 = vmatpush1.bf16.msra.mxu0 0
    %3058 = vmatprep.subr.bf16.mxu0 0
    %3059 = vmatpush1.bf16.msra.mxu0 0
    %3060 = vmatprep.subr.bf16.mxu0 0
    %3061 = vmatpush1.bf16.msra.mxu0 0
    %3062 = vmatprep.subr.bf16.mxu0 0
    %3063 = vmatpush1.bf16.msra.mxu0 %v3046
    %3064 = vmatprep.subr.bf16.mxu0 0
    %3065 = vmatpush1.bf16.msra.mxu0 %v3045
    %3066 = vmatprep.subr.bf16.mxu0 0
    %3067 = vmatpush1.bf16.msra.mxu0 %v3044
    %3068 = vmatprep.subr.bf16.mxu0 0
    %3069 = vmatpush1.bf16.msra.mxu0 %v3043
    %3070 = vmatprep.subr.bf16.mxu0 0
    %3071 = vmatpush2.bf16.msra.mxu0 0
    %3072 = vmatprep.subr.bf16.mxu0 0
    %3073 = vmatpush2.bf16.msra.mxu0 0
    %3074 = vmatprep.subr.bf16.mxu0 0
    %3075 = vmatpush2.bf16.msra.mxu0 0
    %3076 = vmatprep.subr.bf16.mxu0 0
    %3077 = vmatpush2.bf16.msra.mxu0 0
    %3078 = vmatprep.subr.bf16.mxu0 0
    %3079 = vmatpush2.bf16.msra.mxu0 0
    %3080 = vmatprep.subr.bf16.mxu0 0
    %3081 = vmatpush2.bf16.msra.mxu0 0
    %3082 = vmatprep.subr.bf16.mxu0 0
    %3083 = vmatpush2.bf16.msra.mxu0 0
    %3084 = vmatprep.subr.bf16.mxu0 0
    %3085 = vmatpush2.bf16.msra.mxu0 0
    %3086 = vmatprep.mubr.bf16.mxu0 0
    %3087 = vmatmul.mubr.bf16.gmra.mxu0 %v3052
    %v3088 = vpop.f32.mrf.mxu0
    %v3089 = vadd.f32 0.0, %v3088
    %v3090 = vpop.f32.mrf.mxu0
    %v3091 = vpop.f32.mrf.mxu0
    %v3092 = vpop.f32.mrf.mxu0
    %3093 = vdwg.mxu0
    %v3102 = vunpack.c.l.b16 %v2283
    %v3103 = vunpack.c.l.b16 %v2284
    %v3104 = vunpack.c.l.b16 %v2285
    %v3105 = vunpack.c.l.b16 %v2286
    %v3106 = vunpack.c.l.b16 %v2287
    %v3107 = vunpack.c.l.b16 %v2288
    %v3108 = vunpack.c.l.b16 %v2289
    %v3109 = vunpack.c.l.b16 %v2290
    %v3110 = vpack.c.b16 %v3103, %v3102
    %v3111 = vpack.c.b16 %v3105, %v3104
    %v3112 = vpack.c.b16 %v3107, %v3106
    %v3113 = vpack.c.b16 %v3109, %v3108
    %v3119 = vsel %vm2135, %v2281, 0
    %3121 = vmatprep.subr.bf16.mxu0 0
    %3122 = vmatpush1.bf16.msra.mxu0 0
    %3123 = vmatprep.subr.bf16.mxu0 0
    %3124 = vmatpush1.bf16.msra.mxu0 0
    %3125 = vmatprep.subr.bf16.mxu0 0
    %3126 = vmatpush1.bf16.msra.mxu0 0
    %3127 = vmatprep.subr.bf16.mxu0 0
    %3128 = vmatpush1.bf16.msra.mxu0 0
    %3129 = vmatprep.subr.bf16.mxu0 0
    %3130 = vmatpush1.bf16.msra.mxu0 %v3113
    %3131 = vmatprep.subr.bf16.mxu0 0
    %3132 = vmatpush1.bf16.msra.mxu0 %v3112
    %3133 = vmatprep.subr.bf16.mxu0 0
    %3134 = vmatpush1.bf16.msra.mxu0 %v3111
    %3135 = vmatprep.subr.bf16.mxu0 0
    %3136 = vmatpush1.bf16.msra.mxu0 %v3110
    %3137 = vmatprep.subr.bf16.mxu0 0
    %3138 = vmatpush2.bf16.msra.mxu0 0
    %3139 = vmatprep.subr.bf16.mxu0 0
    %3140 = vmatpush2.bf16.msra.mxu0 0
    %3141 = vmatprep.subr.bf16.mxu0 0
    %3142 = vmatpush2.bf16.msra.mxu0 0
    %3143 = vmatprep.subr.bf16.mxu0 0
    %3144 = vmatpush2.bf16.msra.mxu0 0
    %3145 = vmatprep.subr.bf16.mxu0 0
    %3146 = vmatpush2.bf16.msra.mxu0 0
    %3147 = vmatprep.subr.bf16.mxu0 0
    %3148 = vmatpush2.bf16.msra.mxu0 0
    %3149 = vmatprep.subr.bf16.mxu0 0
    %3150 = vmatpush2.bf16.msra.mxu0 0
    %3151 = vmatprep.subr.bf16.mxu0 0
    %3152 = vmatpush2.bf16.msra.mxu0 0
    %3153 = vmatprep.mubr.bf16.mxu0 0
    %3154 = vmatmul.mubr.bf16.gmra.mxu0 %v3119
    %v3155 = vpop.f32.mrf.mxu0
    %v3156 = vadd.f32 %v3089, %v3155
    %v3157 = vpop.f32.mrf.mxu0
    %v3158 = vpop.f32.mrf.mxu0
    %v3159 = vpop.f32.mrf.mxu0
    %3160 = vdwg.mxu0
    %v3161 = vld [vmem:[#allocation2 + $0x60] sm:$0xff]
    %v3162 = vpack.c.bf16 %v3161, %v3161
    %s3163 = scalar_lea.vmem [#allocation8], 384
    %v3164 = vld [vmem:[%s3163] sm:$0xf]
    %v3165 = vld [vmem:[%s3163 + $0x4] sm:$0xf]
    %v3166 = vld [vmem:[%s3163 + $0x8] sm:$0xf]
    %v3167 = vld [vmem:[%s3163 + $0xc] sm:$0xf]
    %v3168 = vld [vmem:[%s3163 + $0x10] sm:$0xf]
    %v3169 = vld [vmem:[%s3163 + $0x14] sm:$0xf]
    %v3170 = vld [vmem:[%s3163 + $0x18] sm:$0xf]
    %v3171 = vld [vmem:[%s3163 + $0x1c] sm:$0xf]
    %v3180 = vunpack.c.l.b16 %v3164
    %v3181 = vunpack.c.l.b16 %v3165
    %v3182 = vunpack.c.l.b16 %v3166
    %v3183 = vunpack.c.l.b16 %v3167
    %v3184 = vunpack.c.l.b16 %v3168
    %v3185 = vunpack.c.l.b16 %v3169
    %v3186 = vunpack.c.l.b16 %v3170
    %v3187 = vunpack.c.l.b16 %v3171
    %v3188 = vpack.c.b16 %v3181, %v3180
    %v3189 = vpack.c.b16 %v3183, %v3182
    %v3190 = vpack.c.b16 %v3185, %v3184
    %v3191 = vpack.c.b16 %v3187, %v3186
    %v3197 = vsel %vm2135, %v3162, 0
    %3199 = vmatprep.subr.bf16.mxu0 0
    %3200 = vmatpush1.bf16.msra.mxu0 0
    %3201 = vmatprep.subr.bf16.mxu0 0
    %3202 = vmatpush1.bf16.msra.mxu0 0
    %3203 = vmatprep.subr.bf16.mxu0 0
    %3204 = vmatpush1.bf16.msra.mxu0 0
    %3205 = vmatprep.subr.bf16.mxu0 0
    %3206 = vmatpush1.bf16.msra.mxu0 0
    %3207 = vmatprep.subr.bf16.mxu0 0
    %3208 = vmatpush1.bf16.msra.mxu0 %v3191
    %3209 = vmatprep.subr.bf16.mxu0 0
    %3210 = vmatpush1.bf16.msra.mxu0 %v3190
    %3211 = vmatprep.subr.bf16.mxu0 0
    %3212 = vmatpush1.bf16.msra.mxu0 %v3189
    %3213 = vmatprep.subr.bf16.mxu0 0
    %3214 = vmatpush1.bf16.msra.mxu0 %v3188
    %3215 = vmatprep.subr.bf16.mxu0 0
    %3216 = vmatpush2.bf16.msra.mxu0 0
    %3217 = vmatprep.subr.bf16.mxu0 0
    %3218 = vmatpush2.bf16.msra.mxu0 0
    %3219 = vmatprep.subr.bf16.mxu0 0
    %3220 = vmatpush2.bf16.msra.mxu0 0
    %3221 = vmatprep.subr.bf16.mxu0 0
    %3222 = vmatpush2.bf16.msra.mxu0 0
    %3223 = vmatprep.subr.bf16.mxu0 0
    %3224 = vmatpush2.bf16.msra.mxu0 0
    %3225 = vmatprep.subr.bf16.mxu0 0
    %3226 = vmatpush2.bf16.msra.mxu0 0
    %3227 = vmatprep.subr.bf16.mxu0 0
    %3228 = vmatpush2.bf16.msra.mxu0 0
    %3229 = vmatprep.subr.bf16.mxu0 0
    %3230 = vmatpush2.bf16.msra.mxu0 0
    %3231 = vmatprep.mubr.bf16.mxu0 0
    %3232 = vmatmul.mubr.bf16.gmra.mxu0 %v3197
    %v3233 = vpop.f32.mrf.mxu0
    %v3234 = vadd.f32 0.0, %v3233
    %v3235 = vpop.f32.mrf.mxu0
    %v3236 = vpop.f32.mrf.mxu0
    %v3237 = vpop.f32.mrf.mxu0
    %3238 = vdwg.mxu0
    %v3239 = vadd.f32 %v2431, %v3234
    %v3240 = vld [vmem:[#allocation2 + $0x68] sm:$0xff]
    %v3241 = vpack.c.bf16 %v3240, %v3240
    %s3242 = scalar_lea.vmem [#allocation8], 416
    %v3243 = vld [vmem:[%s3242] sm:$0xf]
    %v3244 = vld [vmem:[%s3242 + $0x4] sm:$0xf]
    %v3245 = vld [vmem:[%s3242 + $0x8] sm:$0xf]
    %v3246 = vld [vmem:[%s3242 + $0xc] sm:$0xf]
    %v3247 = vld [vmem:[%s3242 + $0x10] sm:$0xf]
    %v3248 = vld [vmem:[%s3242 + $0x14] sm:$0xf]
    %v3249 = vld [vmem:[%s3242 + $0x18] sm:$0xf]
    %v3250 = vld [vmem:[%s3242 + $0x1c] sm:$0xf]
    %v3259 = vunpack.c.l.b16 %v3243
    %v3260 = vunpack.c.l.b16 %v3244
    %v3261 = vunpack.c.l.b16 %v3245
    %v3262 = vunpack.c.l.b16 %v3246
    %v3263 = vunpack.c.l.b16 %v3247
    %v3264 = vunpack.c.l.b16 %v3248
    %v3265 = vunpack.c.l.b16 %v3249
    %v3266 = vunpack.c.l.b16 %v3250
    %v3267 = vpack.c.b16 %v3260, %v3259
    %v3268 = vpack.c.b16 %v3262, %v3261
    %v3269 = vpack.c.b16 %v3264, %v3263
    %v3270 = vpack.c.b16 %v3266, %v3265
    %v3276 = vsel %vm2135, %v3241, 0
    %3278 = vmatprep.subr.bf16.mxu0 0
    %3279 = vmatpush1.bf16.msra.mxu0 0
    %3280 = vmatprep.subr.bf16.mxu0 0
    %3281 = vmatpush1.bf16.msra.mxu0 0
    %3282 = vmatprep.subr.bf16.mxu0 0
    %3283 = vmatpush1.bf16.msra.mxu0 0
    %3284 = vmatprep.subr.bf16.mxu0 0
    %3285 = vmatpush1.bf16.msra.mxu0 0
    %3286 = vmatprep.subr.bf16.mxu0 0
    %3287 = vmatpush1.bf16.msra.mxu0 %v3270
    %3288 = vmatprep.subr.bf16.mxu0 0
    %3289 = vmatpush1.bf16.msra.mxu0 %v3269
    %3290 = vmatprep.subr.bf16.mxu0 0
    %3291 = vmatpush1.bf16.msra.mxu0 %v3268
    %3292 = vmatprep.subr.bf16.mxu0 0
    %3293 = vmatpush1.bf16.msra.mxu0 %v3267
    %3294 = vmatprep.subr.bf16.mxu0 0
    %3295 = vmatpush2.bf16.msra.mxu0 0
    %3296 = vmatprep.subr.bf16.mxu0 0
    %3297 = vmatpush2.bf16.msra.mxu0 0
    %3298 = vmatprep.subr.bf16.mxu0 0
    %3299 = vmatpush2.bf16.msra.mxu0 0
    %3300 = vmatprep.subr.bf16.mxu0 0
    %3301 = vmatpush2.bf16.msra.mxu0 0
    %3302 = vmatprep.subr.bf16.mxu0 0
    %3303 = vmatpush2.bf16.msra.mxu0 0
    %3304 = vmatprep.subr.bf16.mxu0 0
    %3305 = vmatpush2.bf16.msra.mxu0 0
    %3306 = vmatprep.subr.bf16.mxu0 0
    %3307 = vmatpush2.bf16.msra.mxu0 0
    %3308 = vmatprep.subr.bf16.mxu0 0
    %3309 = vmatpush2.bf16.msra.mxu0 0
    %3310 = vmatprep.mubr.bf16.mxu0 0
    %3311 = vmatmul.mubr.bf16.gmra.mxu0 %v3276
    %v3312 = vpop.f32.mrf.mxu0
    %v3313 = vadd.f32 0.0, %v3312
    %v3314 = vpop.f32.mrf.mxu0
    %v3315 = vpop.f32.mrf.mxu0
    %v3316 = vpop.f32.mrf.mxu0
    %3317 = vdwg.mxu0
    %v3318 = vadd.f32 %v2576, %v3313
    %v3319 = vld [vmem:[#allocation2 + $0x70] sm:$0xff]
    %v3320 = vpack.c.bf16 %v3319, %v3319
    %s3321 = scalar_lea.vmem [#allocation8], 448
    %v3322 = vld [vmem:[%s3321] sm:$0xf]
    %v3323 = vld [vmem:[%s3321 + $0x4] sm:$0xf]
    %v3324 = vld [vmem:[%s3321 + $0x8] sm:$0xf]
    %v3325 = vld [vmem:[%s3321 + $0xc] sm:$0xf]
    %v3326 = vld [vmem:[%s3321 + $0x10] sm:$0xf]
    %v3327 = vld [vmem:[%s3321 + $0x14] sm:$0xf]
    %v3328 = vld [vmem:[%s3321 + $0x18] sm:$0xf]
    %v3329 = vld [vmem:[%s3321 + $0x1c] sm:$0xf]
    %v3338 = vunpack.c.l.b16 %v3322
    %v3339 = vunpack.c.l.b16 %v3323
    %v3340 = vunpack.c.l.b16 %v3324
    %v3341 = vunpack.c.l.b16 %v3325
    %v3342 = vunpack.c.l.b16 %v3326
    %v3343 = vunpack.c.l.b16 %v3327
    %v3344 = vunpack.c.l.b16 %v3328
    %v3345 = vunpack.c.l.b16 %v3329
    %v3346 = vpack.c.b16 %v3339, %v3338
    %v3347 = vpack.c.b16 %v3341, %v3340
    %v3348 = vpack.c.b16 %v3343, %v3342
    %v3349 = vpack.c.b16 %v3345, %v3344
    %v3355 = vsel %vm2135, %v3320, 0
    %3357 = vmatprep.subr.bf16.mxu0 0
    %3358 = vmatpush1.bf16.msra.mxu0 0
    %3359 = vmatprep.subr.bf16.mxu0 0
    %3360 = vmatpush1.bf16.msra.mxu0 0
    %3361 = vmatprep.subr.bf16.mxu0 0
    %3362 = vmatpush1.bf16.msra.mxu0 0
    %3363 = vmatprep.subr.bf16.mxu0 0
    %3364 = vmatpush1.bf16.msra.mxu0 0
    %3365 = vmatprep.subr.bf16.mxu0 0
    %3366 = vmatpush1.bf16.msra.mxu0 %v3349
    %3367 = vmatprep.subr.bf16.mxu0 0
    %3368 = vmatpush1.bf16.msra.mxu0 %v3348
    %3369 = vmatprep.subr.bf16.mxu0 0
    %3370 = vmatpush1.bf16.msra.mxu0 %v3347
    %3371 = vmatprep.subr.bf16.mxu0 0
    %3372 = vmatpush1.bf16.msra.mxu0 %v3346
    %3373 = vmatprep.subr.bf16.mxu0 0
    %3374 = vmatpush2.bf16.msra.mxu0 0
    %3375 = vmatprep.subr.bf16.mxu0 0
    %3376 = vmatpush2.bf16.msra.mxu0 0
    %3377 = vmatprep.subr.bf16.mxu0 0
    %3378 = vmatpush2.bf16.msra.mxu0 0
    %3379 = vmatprep.subr.bf16.mxu0 0
    %3380 = vmatpush2.bf16.msra.mxu0 0
    %3381 = vmatprep.subr.bf16.mxu0 0
    %3382 = vmatpush2.bf16.msra.mxu0 0
    %3383 = vmatprep.subr.bf16.mxu0 0
    %3384 = vmatpush2.bf16.msra.mxu0 0
    %3385 = vmatprep.subr.bf16.mxu0 0
    %3386 = vmatpush2.bf16.msra.mxu0 0
    %3387 = vmatprep.subr.bf16.mxu0 0
    %3388 = vmatpush2.bf16.msra.mxu0 0
    %3389 = vmatprep.mubr.bf16.mxu0 0
    %3390 = vmatmul.mubr.bf16.gmra.mxu0 %v3355
    %v3391 = vpop.f32.mrf.mxu0
    %v3392 = vadd.f32 0.0, %v3391
    %v3393 = vpop.f32.mrf.mxu0
    %v3394 = vpop.f32.mrf.mxu0
    %v3395 = vpop.f32.mrf.mxu0
    %3396 = vdwg.mxu0
    %v3397 = vadd.f32 %v2721, %v3392
    %v3398 = vld [vmem:[#allocation2 + $0x78] sm:$0xff]
    %v3399 = vpack.c.bf16 %v3398, %v3398
    %s3400 = scalar_lea.vmem [#allocation8], 480
    %v3401 = vld [vmem:[%s3400] sm:$0xf]
    %v3402 = vld [vmem:[%s3400 + $0x4] sm:$0xf]
    %v3403 = vld [vmem:[%s3400 + $0x8] sm:$0xf]
    %v3404 = vld [vmem:[%s3400 + $0xc] sm:$0xf]
    %v3405 = vld [vmem:[%s3400 + $0x10] sm:$0xf]
    %v3406 = vld [vmem:[%s3400 + $0x14] sm:$0xf]
    %v3407 = vld [vmem:[%s3400 + $0x18] sm:$0xf]
    %v3408 = vld [vmem:[%s3400 + $0x1c] sm:$0xf]
    %v3417 = vunpack.c.l.b16 %v3401
    %v3418 = vunpack.c.l.b16 %v3402
    %v3419 = vunpack.c.l.b16 %v3403
    %v3420 = vunpack.c.l.b16 %v3404
    %v3421 = vunpack.c.l.b16 %v3405
    %v3422 = vunpack.c.l.b16 %v3406
    %v3423 = vunpack.c.l.b16 %v3407
    %v3424 = vunpack.c.l.b16 %v3408
    %v3425 = vpack.c.b16 %v3418, %v3417
    %v3426 = vpack.c.b16 %v3420, %v3419
    %v3427 = vpack.c.b16 %v3422, %v3421
    %v3428 = vpack.c.b16 %v3424, %v3423
    %v3434 = vsel %vm2135, %v3399, 0
    %3436 = vmatprep.subr.bf16.mxu0 0
    %3437 = vmatpush1.bf16.msra.mxu0 0
    %3438 = vmatprep.subr.bf16.mxu0 0
    %3439 = vmatpush1.bf16.msra.mxu0 0
    %3440 = vmatprep.subr.bf16.mxu0 0
    %3441 = vmatpush1.bf16.msra.mxu0 0
    %3442 = vmatprep.subr.bf16.mxu0 0
    %3443 = vmatpush1.bf16.msra.mxu0 0
    %3444 = vmatprep.subr.bf16.mxu0 0
    %3445 = vmatpush1.bf16.msra.mxu0 %v3428
    %3446 = vmatprep.subr.bf16.mxu0 0
    %3447 = vmatpush1.bf16.msra.mxu0 %v3427
    %3448 = vmatprep.subr.bf16.mxu0 0
    %3449 = vmatpush1.bf16.msra.mxu0 %v3426
    %3450 = vmatprep.subr.bf16.mxu0 0
    %3451 = vmatpush1.bf16.msra.mxu0 %v3425
    %3452 = vmatprep.subr.bf16.mxu0 0
    %3453 = vmatpush2.bf16.msra.mxu0 0
    %3454 = vmatprep.subr.bf16.mxu0 0
    %3455 = vmatpush2.bf16.msra.mxu0 0
    %3456 = vmatprep.subr.bf16.mxu0 0
    %3457 = vmatpush2.bf16.msra.mxu0 0
    %3458 = vmatprep.subr.bf16.mxu0 0
    %3459 = vmatpush2.bf16.msra.mxu0 0
    %3460 = vmatprep.subr.bf16.mxu0 0
    %3461 = vmatpush2.bf16.msra.mxu0 0
    %3462 = vmatprep.subr.bf16.mxu0 0
    %3463 = vmatpush2.bf16.msra.mxu0 0
    %3464 = vmatprep.subr.bf16.mxu0 0
    %3465 = vmatpush2.bf16.msra.mxu0 0
    %3466 = vmatprep.subr.bf16.mxu0 0
    %3467 = vmatpush2.bf16.msra.mxu0 0
    %3468 = vmatprep.mubr.bf16.mxu0 0
    %3469 = vmatmul.mubr.bf16.gmra.mxu0 %v3434
    %v3470 = vpop.f32.mrf.mxu0
    %v3471 = vadd.f32 0.0, %v3470
    %v3472 = vpop.f32.mrf.mxu0
    %v3473 = vpop.f32.mrf.mxu0
    %v3474 = vpop.f32.mrf.mxu0
    %3475 = vdwg.mxu0
    %v3476 = vadd.f32 %v2866, %v3471
    %v3477 = vld [vmem:[#allocation2 + $0x80] sm:$0xff]
    %v3478 = vpack.c.bf16 %v3477, %v3477
    %s3479 = scalar_lea.vmem [#allocation8], 512
    %v3480 = vld [vmem:[%s3479] sm:$0xf]
    %v3481 = vld [vmem:[%s3479 + $0x4] sm:$0xf]
    %v3482 = vld [vmem:[%s3479 + $0x8] sm:$0xf]
    %v3483 = vld [vmem:[%s3479 + $0xc] sm:$0xf]
    %v3484 = vld [vmem:[%s3479 + $0x10] sm:$0xf]
    %v3485 = vld [vmem:[%s3479 + $0x14] sm:$0xf]
    %v3486 = vld [vmem:[%s3479 + $0x18] sm:$0xf]
    %v3487 = vld [vmem:[%s3479 + $0x1c] sm:$0xf]
    %v3496 = vunpack.c.l.b16 %v3480
    %v3497 = vunpack.c.l.b16 %v3481
    %v3498 = vunpack.c.l.b16 %v3482
    %v3499 = vunpack.c.l.b16 %v3483
    %v3500 = vunpack.c.l.b16 %v3484
    %v3501 = vunpack.c.l.b16 %v3485
    %v3502 = vunpack.c.l.b16 %v3486
    %v3503 = vunpack.c.l.b16 %v3487
    %v3504 = vpack.c.b16 %v3497, %v3496
    %v3505 = vpack.c.b16 %v3499, %v3498
    %v3506 = vpack.c.b16 %v3501, %v3500
    %v3507 = vpack.c.b16 %v3503, %v3502
    %v3513 = vsel %vm2135, %v3478, 0
    %3515 = vmatprep.subr.bf16.mxu0 0
    %3516 = vmatpush1.bf16.msra.mxu0 0
    %3517 = vmatprep.subr.bf16.mxu0 0
    %3518 = vmatpush1.bf16.msra.mxu0 0
    %3519 = vmatprep.subr.bf16.mxu0 0
    %3520 = vmatpush1.bf16.msra.mxu0 0
    %3521 = vmatprep.subr.bf16.mxu0 0
    %3522 = vmatpush1.bf16.msra.mxu0 0
    %3523 = vmatprep.subr.bf16.mxu0 0
    %3524 = vmatpush1.bf16.msra.mxu0 %v3507
    %3525 = vmatprep.subr.bf16.mxu0 0
    %3526 = vmatpush1.bf16.msra.mxu0 %v3506
    %3527 = vmatprep.subr.bf16.mxu0 0
    %3528 = vmatpush1.bf16.msra.mxu0 %v3505
    %3529 = vmatprep.subr.bf16.mxu0 0
    %3530 = vmatpush1.bf16.msra.mxu0 %v3504
    %3531 = vmatprep.subr.bf16.mxu0 0
    %3532 = vmatpush2.bf16.msra.mxu0 0
    %3533 = vmatprep.subr.bf16.mxu0 0
    %3534 = vmatpush2.bf16.msra.mxu0 0
    %3535 = vmatprep.subr.bf16.mxu0 0
    %3536 = vmatpush2.bf16.msra.mxu0 0
    %3537 = vmatprep.subr.bf16.mxu0 0
    %3538 = vmatpush2.bf16.msra.mxu0 0
    %3539 = vmatprep.subr.bf16.mxu0 0
    %3540 = vmatpush2.bf16.msra.mxu0 0
    %3541 = vmatprep.subr.bf16.mxu0 0
    %3542 = vmatpush2.bf16.msra.mxu0 0
    %3543 = vmatprep.subr.bf16.mxu0 0
    %3544 = vmatpush2.bf16.msra.mxu0 0
    %3545 = vmatprep.subr.bf16.mxu0 0
    %3546 = vmatpush2.bf16.msra.mxu0 0
    %3547 = vmatprep.mubr.bf16.mxu0 0
    %3548 = vmatmul.mubr.bf16.gmra.mxu0 %v3513
    %v3549 = vpop.f32.mrf.mxu0
    %v3550 = vadd.f32 0.0, %v3549
    %v3551 = vpop.f32.mrf.mxu0
    %v3552 = vpop.f32.mrf.mxu0
    %v3553 = vpop.f32.mrf.mxu0
    %3554 = vdwg.mxu0
    %v3555 = vadd.f32 %v3011, %v3550
    %v3556 = vld [vmem:[#allocation2 + $0x88] sm:$0xff]
    %v3557 = vpack.c.bf16 %v3556, %v3556
    %s3558 = scalar_lea.vmem [#allocation8], 544
    %v3559 = vld [vmem:[%s3558] sm:$0xf]
    %v3560 = vld [vmem:[%s3558 + $0x4] sm:$0xf]
    %v3561 = vld [vmem:[%s3558 + $0x8] sm:$0xf]
    %v3562 = vld [vmem:[%s3558 + $0xc] sm:$0xf]
    %v3563 = vld [vmem:[%s3558 + $0x10] sm:$0xf]
    %v3564 = vld [vmem:[%s3558 + $0x14] sm:$0xf]
    %v3565 = vld [vmem:[%s3558 + $0x18] sm:$0xf]
    %v3566 = vld [vmem:[%s3558 + $0x1c] sm:$0xf]
    %v3575 = vunpack.c.l.b16 %v3559
    %v3576 = vunpack.c.l.b16 %v3560
    %v3577 = vunpack.c.l.b16 %v3561
    %v3578 = vunpack.c.l.b16 %v3562
    %v3579 = vunpack.c.l.b16 %v3563
    %v3580 = vunpack.c.l.b16 %v3564
    %v3581 = vunpack.c.l.b16 %v3565
    %v3582 = vunpack.c.l.b16 %v3566
    %v3583 = vpack.c.b16 %v3576, %v3575
    %v3584 = vpack.c.b16 %v3578, %v3577
    %v3585 = vpack.c.b16 %v3580, %v3579
    %v3586 = vpack.c.b16 %v3582, %v3581
    %v3592 = vsel %vm2135, %v3557, 0
    %3594 = vmatprep.subr.bf16.mxu0 0
    %3595 = vmatpush1.bf16.msra.mxu0 0
    %3596 = vmatprep.subr.bf16.mxu0 0
    %3597 = vmatpush1.bf16.msra.mxu0 0
    %3598 = vmatprep.subr.bf16.mxu0 0
    %3599 = vmatpush1.bf16.msra.mxu0 0
    %3600 = vmatprep.subr.bf16.mxu0 0
    %3601 = vmatpush1.bf16.msra.mxu0 0
    %3602 = vmatprep.subr.bf16.mxu0 0
    %3603 = vmatpush1.bf16.msra.mxu0 %v3586
    %3604 = vmatprep.subr.bf16.mxu0 0
    %3605 = vmatpush1.bf16.msra.mxu0 %v3585
    %3606 = vmatprep.subr.bf16.mxu0 0
    %3607 = vmatpush1.bf16.msra.mxu0 %v3584
    %3608 = vmatprep.subr.bf16.mxu0 0
    %3609 = vmatpush1.bf16.msra.mxu0 %v3583
    %3610 = vmatprep.subr.bf16.mxu0 0
    %3611 = vmatpush2.bf16.msra.mxu0 0
    %3612 = vmatprep.subr.bf16.mxu0 0
    %3613 = vmatpush2.bf16.msra.mxu0 0
    %3614 = vmatprep.subr.bf16.mxu0 0
    %3615 = vmatpush2.bf16.msra.mxu0 0
    %3616 = vmatprep.subr.bf16.mxu0 0
    %3617 = vmatpush2.bf16.msra.mxu0 0
    %3618 = vmatprep.subr.bf16.mxu0 0
    %3619 = vmatpush2.bf16.msra.mxu0 0
    %3620 = vmatprep.subr.bf16.mxu0 0
    %3621 = vmatpush2.bf16.msra.mxu0 0
    %3622 = vmatprep.subr.bf16.mxu0 0
    %3623 = vmatpush2.bf16.msra.mxu0 0
    %3624 = vmatprep.subr.bf16.mxu0 0
    %3625 = vmatpush2.bf16.msra.mxu0 0
    %3626 = vmatprep.mubr.bf16.mxu0 0
    %3627 = vmatmul.mubr.bf16.gmra.mxu0 %v3592
    %v3628 = vpop.f32.mrf.mxu0
    %v3629 = vadd.f32 0.0, %v3628
    %v3630 = vpop.f32.mrf.mxu0
    %v3631 = vpop.f32.mrf.mxu0
    %v3632 = vpop.f32.mrf.mxu0
    %3633 = vdwg.mxu0
    %v3634 = vadd.f32 %v3156, %v3629
    %v3635 = vld [vmem:[#allocation2 + $0x90] sm:$0xff]
    %v3636 = vpack.c.bf16 %v3635, %v3635
    %s3637 = scalar_lea.vmem [#allocation8], 576
    %v3638 = vld [vmem:[%s3637] sm:$0xf]
    %v3639 = vld [vmem:[%s3637 + $0x4] sm:$0xf]
    %v3640 = vld [vmem:[%s3637 + $0x8] sm:$0xf]
    %v3641 = vld [vmem:[%s3637 + $0xc] sm:$0xf]
    %v3642 = vld [vmem:[%s3637 + $0x10] sm:$0xf]
    %v3643 = vld [vmem:[%s3637 + $0x14] sm:$0xf]
    %v3644 = vld [vmem:[%s3637 + $0x18] sm:$0xf]
    %v3645 = vld [vmem:[%s3637 + $0x1c] sm:$0xf]
    %v3654 = vunpack.c.l.b16 %v3638
    %v3655 = vunpack.c.l.b16 %v3639
    %v3656 = vunpack.c.l.b16 %v3640
    %v3657 = vunpack.c.l.b16 %v3641
    %v3658 = vunpack.c.l.b16 %v3642
    %v3659 = vunpack.c.l.b16 %v3643
    %v3660 = vunpack.c.l.b16 %v3644
    %v3661 = vunpack.c.l.b16 %v3645
    %v3662 = vpack.c.b16 %v3655, %v3654
    %v3663 = vpack.c.b16 %v3657, %v3656
    %v3664 = vpack.c.b16 %v3659, %v3658
    %v3665 = vpack.c.b16 %v3661, %v3660
    %v3671 = vsel %vm2135, %v3636, 0
    %3673 = vmatprep.subr.bf16.mxu0 0
    %3674 = vmatpush1.bf16.msra.mxu0 0
    %3675 = vmatprep.subr.bf16.mxu0 0
    %3676 = vmatpush1.bf16.msra.mxu0 0
    %3677 = vmatprep.subr.bf16.mxu0 0
    %3678 = vmatpush1.bf16.msra.mxu0 0
    %3679 = vmatprep.subr.bf16.mxu0 0
    %3680 = vmatpush1.bf16.msra.mxu0 0
    %3681 = vmatprep.subr.bf16.mxu0 0
    %3682 = vmatpush1.bf16.msra.mxu0 %v3665
    %3683 = vmatprep.subr.bf16.mxu0 0
    %3684 = vmatpush1.bf16.msra.mxu0 %v3664
    %3685 = vmatprep.subr.bf16.mxu0 0
    %3686 = vmatpush1.bf16.msra.mxu0 %v3663
    %3687 = vmatprep.subr.bf16.mxu0 0
    %3688 = vmatpush1.bf16.msra.mxu0 %v3662
    %3689 = vmatprep.subr.bf16.mxu0 0
    %3690 = vmatpush2.bf16.msra.mxu0 0
    %3691 = vmatprep.subr.bf16.mxu0 0
    %3692 = vmatpush2.bf16.msra.mxu0 0
    %3693 = vmatprep.subr.bf16.mxu0 0
    %3694 = vmatpush2.bf16.msra.mxu0 0
    %3695 = vmatprep.subr.bf16.mxu0 0
    %3696 = vmatpush2.bf16.msra.mxu0 0
    %3697 = vmatprep.subr.bf16.mxu0 0
    %3698 = vmatpush2.bf16.msra.mxu0 0
    %3699 = vmatprep.subr.bf16.mxu0 0
    %3700 = vmatpush2.bf16.msra.mxu0 0
    %3701 = vmatprep.subr.bf16.mxu0 0
    %3702 = vmatpush2.bf16.msra.mxu0 0
    %3703 = vmatprep.subr.bf16.mxu0 0
    %3704 = vmatpush2.bf16.msra.mxu0 0
    %3705 = vmatprep.mubr.bf16.mxu0 0
    %3706 = vmatmul.mubr.bf16.gmra.mxu0 %v3671
    %v3707 = vpop.f32.mrf.mxu0
    %v3708 = vadd.f32 0.0, %v3707
    %v3709 = vpop.f32.mrf.mxu0
    %v3710 = vpop.f32.mrf.mxu0
    %v3711 = vpop.f32.mrf.mxu0
    %3712 = vdwg.mxu0
    %v3713 = vadd.f32 %v3239, %v3708
    %v3714 = vld [vmem:[#allocation2 + $0x98] sm:$0xff]
    %v3715 = vpack.c.bf16 %v3714, %v3714
    %s3716 = scalar_lea.vmem [#allocation8], 608
    %v3717 = vld [vmem:[%s3716] sm:$0xf]
    %v3718 = vld [vmem:[%s3716 + $0x4] sm:$0xf]
    %v3719 = vld [vmem:[%s3716 + $0x8] sm:$0xf]
    %v3720 = vld [vmem:[%s3716 + $0xc] sm:$0xf]
    %v3721 = vld [vmem:[%s3716 + $0x10] sm:$0xf]
    %v3722 = vld [vmem:[%s3716 + $0x14] sm:$0xf]
    %v3723 = vld [vmem:[%s3716 + $0x18] sm:$0xf]
    %v3724 = vld [vmem:[%s3716 + $0x1c] sm:$0xf]
    %v3733 = vunpack.c.l.b16 %v3717
    %v3734 = vunpack.c.l.b16 %v3718
    %v3735 = vunpack.c.l.b16 %v3719
    %v3736 = vunpack.c.l.b16 %v3720
    %v3737 = vunpack.c.l.b16 %v3721
    %v3738 = vunpack.c.l.b16 %v3722
    %v3739 = vunpack.c.l.b16 %v3723
    %v3740 = vunpack.c.l.b16 %v3724
    %v3741 = vpack.c.b16 %v3734, %v3733
    %v3742 = vpack.c.b16 %v3736, %v3735
    %v3743 = vpack.c.b16 %v3738, %v3737
    %v3744 = vpack.c.b16 %v3740, %v3739
    %v3750 = vsel %vm2135, %v3715, 0
    %3752 = vmatprep.subr.bf16.mxu0 0
    %3753 = vmatpush1.bf16.msra.mxu0 0
    %3754 = vmatprep.subr.bf16.mxu0 0
    %3755 = vmatpush1.bf16.msra.mxu0 0
    %3756 = vmatprep.subr.bf16.mxu0 0
    %3757 = vmatpush1.bf16.msra.mxu0 0
    %3758 = vmatprep.subr.bf16.mxu0 0
    %3759 = vmatpush1.bf16.msra.mxu0 0
    %3760 = vmatprep.subr.bf16.mxu0 0
    %3761 = vmatpush1.bf16.msra.mxu0 %v3744
    %3762 = vmatprep.subr.bf16.mxu0 0
    %3763 = vmatpush1.bf16.msra.mxu0 %v3743
    %3764 = vmatprep.subr.bf16.mxu0 0
    %3765 = vmatpush1.bf16.msra.mxu0 %v3742
    %3766 = vmatprep.subr.bf16.mxu0 0
    %3767 = vmatpush1.bf16.msra.mxu0 %v3741
    %3768 = vmatprep.subr.bf16.mxu0 0
    %3769 = vmatpush2.bf16.msra.mxu0 0
    %3770 = vmatprep.subr.bf16.mxu0 0
    %3771 = vmatpush2.bf16.msra.mxu0 0
    %3772 = vmatprep.subr.bf16.mxu0 0
    %3773 = vmatpush2.bf16.msra.mxu0 0
    %3774 = vmatprep.subr.bf16.mxu0 0
    %3775 = vmatpush2.bf16.msra.mxu0 0
    %3776 = vmatprep.subr.bf16.mxu0 0
    %3777 = vmatpush2.bf16.msra.mxu0 0
    %3778 = vmatprep.subr.bf16.mxu0 0
    %3779 = vmatpush2.bf16.msra.mxu0 0
    %3780 = vmatprep.subr.bf16.mxu0 0
    %3781 = vmatpush2.bf16.msra.mxu0 0
    %3782 = vmatprep.subr.bf16.mxu0 0
    %3783 = vmatpush2.bf16.msra.mxu0 0
    %3784 = vmatprep.mubr.bf16.mxu0 0
    %3785 = vmatmul.mubr.bf16.gmra.mxu0 %v3750
    %v3786 = vpop.f32.mrf.mxu0
    %v3787 = vadd.f32 0.0, %v3786
    %v3788 = vpop.f32.mrf.mxu0
    %v3789 = vpop.f32.mrf.mxu0
    %v3790 = vpop.f32.mrf.mxu0
    %3791 = vdwg.mxu0
    %v3792 = vadd.f32 %v3318, %v3787
    %v3793 = vld [vmem:[#allocation2 + $0xa0] sm:$0xff]
    %v3794 = vpack.c.bf16 %v3793, %v3793
    %s3795 = scalar_lea.vmem [#allocation8], 640
    %v3796 = vld [vmem:[%s3795] sm:$0xf]
    %v3797 = vld [vmem:[%s3795 + $0x4] sm:$0xf]
    %v3798 = vld [vmem:[%s3795 + $0x8] sm:$0xf]
    %v3799 = vld [vmem:[%s3795 + $0xc] sm:$0xf]
    %v3800 = vld [vmem:[%s3795 + $0x10] sm:$0xf]
    %v3801 = vld [vmem:[%s3795 + $0x14] sm:$0xf]
    %v3802 = vld [vmem:[%s3795 + $0x18] sm:$0xf]
    %v3803 = vld [vmem:[%s3795 + $0x1c] sm:$0xf]
    %v3812 = vunpack.c.l.b16 %v3796
    %v3813 = vunpack.c.l.b16 %v3797
    %v3814 = vunpack.c.l.b16 %v3798
    %v3815 = vunpack.c.l.b16 %v3799
    %v3816 = vunpack.c.l.b16 %v3800
    %v3817 = vunpack.c.l.b16 %v3801
    %v3818 = vunpack.c.l.b16 %v3802
    %v3819 = vunpack.c.l.b16 %v3803
    %v3820 = vpack.c.b16 %v3813, %v3812
    %v3821 = vpack.c.b16 %v3815, %v3814
    %v3822 = vpack.c.b16 %v3817, %v3816
    %v3823 = vpack.c.b16 %v3819, %v3818
    %v3829 = vsel %vm2135, %v3794, 0
    %3831 = vmatprep.subr.bf16.mxu0 0
    %3832 = vmatpush1.bf16.msra.mxu0 0
    %3833 = vmatprep.subr.bf16.mxu0 0
    %3834 = vmatpush1.bf16.msra.mxu0 0
    %3835 = vmatprep.subr.bf16.mxu0 0
    %3836 = vmatpush1.bf16.msra.mxu0 0
    %3837 = vmatprep.subr.bf16.mxu0 0
    %3838 = vmatpush1.bf16.msra.mxu0 0
    %3839 = vmatprep.subr.bf16.mxu0 0
    %3840 = vmatpush1.bf16.msra.mxu0 %v3823
    %3841 = vmatprep.subr.bf16.mxu0 0
    %3842 = vmatpush1.bf16.msra.mxu0 %v3822
    %3843 = vmatprep.subr.bf16.mxu0 0
    %3844 = vmatpush1.bf16.msra.mxu0 %v3821
    %3845 = vmatprep.subr.bf16.mxu0 0
    %3846 = vmatpush1.bf16.msra.mxu0 %v3820
    %3847 = vmatprep.subr.bf16.mxu0 0
    %3848 = vmatpush2.bf16.msra.mxu0 0
    %3849 = vmatprep.subr.bf16.mxu0 0
    %3850 = vmatpush2.bf16.msra.mxu0 0
    %3851 = vmatprep.subr.bf16.mxu0 0
    %3852 = vmatpush2.bf16.msra.mxu0 0
    %3853 = vmatprep.subr.bf16.mxu0 0
    %3854 = vmatpush2.bf16.msra.mxu0 0
    %3855 = vmatprep.subr.bf16.mxu0 0
    %3856 = vmatpush2.bf16.msra.mxu0 0
    %3857 = vmatprep.subr.bf16.mxu0 0
    %3858 = vmatpush2.bf16.msra.mxu0 0
    %3859 = vmatprep.subr.bf16.mxu0 0
    %3860 = vmatpush2.bf16.msra.mxu0 0
    %3861 = vmatprep.subr.bf16.mxu0 0
    %3862 = vmatpush2.bf16.msra.mxu0 0
    %3863 = vmatprep.mubr.bf16.mxu0 0
    %3864 = vmatmul.mubr.bf16.gmra.mxu0 %v3829
    %v3865 = vpop.f32.mrf.mxu0
    %v3866 = vadd.f32 0.0, %v3865
    %v3867 = vpop.f32.mrf.mxu0
    %v3868 = vpop.f32.mrf.mxu0
    %v3869 = vpop.f32.mrf.mxu0
    %3870 = vdwg.mxu0
    %v3871 = vadd.f32 %v3397, %v3866
    %v3872 = vld [vmem:[#allocation2 + $0xa8] sm:$0xff]
    %v3873 = vpack.c.bf16 %v3872, %v3872
    %s3874 = scalar_lea.vmem [#allocation8], 672
    %v3875 = vld [vmem:[%s3874] sm:$0xf]
    %v3876 = vld [vmem:[%s3874 + $0x4] sm:$0xf]
    %v3877 = vld [vmem:[%s3874 + $0x8] sm:$0xf]
    %v3878 = vld [vmem:[%s3874 + $0xc] sm:$0xf]
    %v3879 = vld [vmem:[%s3874 + $0x10] sm:$0xf]
    %v3880 = vld [vmem:[%s3874 + $0x14] sm:$0xf]
    %v3881 = vld [vmem:[%s3874 + $0x18] sm:$0xf]
    %v3882 = vld [vmem:[%s3874 + $0x1c] sm:$0xf]
    %v3891 = vunpack.c.l.b16 %v3875
    %v3892 = vunpack.c.l.b16 %v3876
    %v3893 = vunpack.c.l.b16 %v3877
    %v3894 = vunpack.c.l.b16 %v3878
    %v3895 = vunpack.c.l.b16 %v3879
    %v3896 = vunpack.c.l.b16 %v3880
    %v3897 = vunpack.c.l.b16 %v3881
    %v3898 = vunpack.c.l.b16 %v3882
    %v3899 = vpack.c.b16 %v3892, %v3891
    %v3900 = vpack.c.b16 %v3894, %v3893
    %v3901 = vpack.c.b16 %v3896, %v3895
    %v3902 = vpack.c.b16 %v3898, %v3897
    %v3908 = vsel %vm2135, %v3873, 0
    %3910 = vmatprep.subr.bf16.mxu0 0
    %3911 = vmatpush1.bf16.msra.mxu0 0
    %3912 = vmatprep.subr.bf16.mxu0 0
    %3913 = vmatpush1.bf16.msra.mxu0 0
    %3914 = vmatprep.subr.bf16.mxu0 0
    %3915 = vmatpush1.bf16.msra.mxu0 0
    %3916 = vmatprep.subr.bf16.mxu0 0
    %3917 = vmatpush1.bf16.msra.mxu0 0
    %3918 = vmatprep.subr.bf16.mxu0 0
    %3919 = vmatpush1.bf16.msra.mxu0 %v3902
    %3920 = vmatprep.subr.bf16.mxu0 0
    %3921 = vmatpush1.bf16.msra.mxu0 %v3901
    %3922 = vmatprep.subr.bf16.mxu0 0
    %3923 = vmatpush1.bf16.msra.mxu0 %v3900
    %3924 = vmatprep.subr.bf16.mxu0 0
    %3925 = vmatpush1.bf16.msra.mxu0 %v3899
    %3926 = vmatprep.subr.bf16.mxu0 0
    %3927 = vmatpush2.bf16.msra.mxu0 0
    %3928 = vmatprep.subr.bf16.mxu0 0
    %3929 = vmatpush2.bf16.msra.mxu0 0
    %3930 = vmatprep.subr.bf16.mxu0 0
    %3931 = vmatpush2.bf16.msra.mxu0 0
    %3932 = vmatprep.subr.bf16.mxu0 0
    %3933 = vmatpush2.bf16.msra.mxu0 0
    %3934 = vmatprep.subr.bf16.mxu0 0
    %3935 = vmatpush2.bf16.msra.mxu0 0
    %3936 = vmatprep.subr.bf16.mxu0 0
    %3937 = vmatpush2.bf16.msra.mxu0 0
    %3938 = vmatprep.subr.bf16.mxu0 0
    %3939 = vmatpush2.bf16.msra.mxu0 0
    %3940 = vmatprep.subr.bf16.mxu0 0
    %3941 = vmatpush2.bf16.msra.mxu0 0
    %3942 = vmatprep.mubr.bf16.mxu0 0
    %3943 = vmatmul.mubr.bf16.gmra.mxu0 %v3908
    %v3944 = vpop.f32.mrf.mxu0
    %v3945 = vadd.f32 0.0, %v3944
    %v3946 = vpop.f32.mrf.mxu0
    %v3947 = vpop.f32.mrf.mxu0
    %v3948 = vpop.f32.mrf.mxu0
    %3949 = vdwg.mxu0
    %v3950 = vadd.f32 %v3476, %v3945
    %v3951 = vld [vmem:[#allocation2 + $0xb0] sm:$0xff]
    %v3952 = vpack.c.bf16 %v3951, %v3951
    %s3953 = scalar_lea.vmem [#allocation8], 704
    %v3954 = vld [vmem:[%s3953] sm:$0xf]
    %v3955 = vld [vmem:[%s3953 + $0x4] sm:$0xf]
    %v3956 = vld [vmem:[%s3953 + $0x8] sm:$0xf]
    %v3957 = vld [vmem:[%s3953 + $0xc] sm:$0xf]
    %v3958 = vld [vmem:[%s3953 + $0x10] sm:$0xf]
    %v3959 = vld [vmem:[%s3953 + $0x14] sm:$0xf]
    %v3960 = vld [vmem:[%s3953 + $0x18] sm:$0xf]
    %v3961 = vld [vmem:[%s3953 + $0x1c] sm:$0xf]
    %v3970 = vunpack.c.l.b16 %v3954
    %v3971 = vunpack.c.l.b16 %v3955
    %v3972 = vunpack.c.l.b16 %v3956
    %v3973 = vunpack.c.l.b16 %v3957
    %v3974 = vunpack.c.l.b16 %v3958
    %v3975 = vunpack.c.l.b16 %v3959
    %v3976 = vunpack.c.l.b16 %v3960
    %v3977 = vunpack.c.l.b16 %v3961
    %v3978 = vpack.c.b16 %v3971, %v3970
    %v3979 = vpack.c.b16 %v3973, %v3972
    %v3980 = vpack.c.b16 %v3975, %v3974
    %v3981 = vpack.c.b16 %v3977, %v3976
    %v3987 = vsel %vm2135, %v3952, 0
    %3989 = vmatprep.subr.bf16.mxu0 0
    %3990 = vmatpush1.bf16.msra.mxu0 0
    %3991 = vmatprep.subr.bf16.mxu0 0
    %3992 = vmatpush1.bf16.msra.mxu0 0
    %3993 = vmatprep.subr.bf16.mxu0 0
    %3994 = vmatpush1.bf16.msra.mxu0 0
    %3995 = vmatprep.subr.bf16.mxu0 0
    %3996 = vmatpush1.bf16.msra.mxu0 0
    %3997 = vmatprep.subr.bf16.mxu0 0
    %3998 = vmatpush1.bf16.msra.mxu0 %v3981
    %3999 = vmatprep.subr.bf16.mxu0 0
    %4000 = vmatpush1.bf16.msra.mxu0 %v3980
    %4001 = vmatprep.subr.bf16.mxu0 0
    %4002 = vmatpush1.bf16.msra.mxu0 %v3979
    %4003 = vmatprep.subr.bf16.mxu0 0
    %4004 = vmatpush1.bf16.msra.mxu0 %v3978
    %4005 = vmatprep.subr.bf16.mxu0 0
    %4006 = vmatpush2.bf16.msra.mxu0 0
    %4007 = vmatprep.subr.bf16.mxu0 0
    %4008 = vmatpush2.bf16.msra.mxu0 0
    %4009 = vmatprep.subr.bf16.mxu0 0
    %4010 = vmatpush2.bf16.msra.mxu0 0
    %4011 = vmatprep.subr.bf16.mxu0 0
    %4012 = vmatpush2.bf16.msra.mxu0 0
    %4013 = vmatprep.subr.bf16.mxu0 0
    %4014 = vmatpush2.bf16.msra.mxu0 0
    %4015 = vmatprep.subr.bf16.mxu0 0
    %4016 = vmatpush2.bf16.msra.mxu0 0
    %4017 = vmatprep.subr.bf16.mxu0 0
    %4018 = vmatpush2.bf16.msra.mxu0 0
    %4019 = vmatprep.subr.bf16.mxu0 0
    %4020 = vmatpush2.bf16.msra.mxu0 0
    %4021 = vmatprep.mubr.bf16.mxu0 0
    %4022 = vmatmul.mubr.bf16.gmra.mxu0 %v3987
    %v4023 = vpop.f32.mrf.mxu0
    %v4024 = vadd.f32 0.0, %v4023
    %v4025 = vpop.f32.mrf.mxu0
    %v4026 = vpop.f32.mrf.mxu0
    %v4027 = vpop.f32.mrf.mxu0
    %4028 = vdwg.mxu0
    %v4029 = vadd.f32 %v3555, %v4024
    %v4030 = vld [vmem:[#allocation2 + $0xb8] sm:$0xff]
    %v4031 = vpack.c.bf16 %v4030, %v4030
    %s4032 = scalar_lea.vmem [#allocation8], 736
    %v4033 = vld [vmem:[%s4032] sm:$0xf]
    %v4034 = vld [vmem:[%s4032 + $0x4] sm:$0xf]
    %v4035 = vld [vmem:[%s4032 + $0x8] sm:$0xf]
    %v4036 = vld [vmem:[%s4032 + $0xc] sm:$0xf]
    %v4037 = vld [vmem:[%s4032 + $0x10] sm:$0xf]
    %v4038 = vld [vmem:[%s4032 + $0x14] sm:$0xf]
    %v4039 = vld [vmem:[%s4032 + $0x18] sm:$0xf]
    %v4040 = vld [vmem:[%s4032 + $0x1c] sm:$0xf]
    %v4049 = vunpack.c.l.b16 %v4033
    %v4050 = vunpack.c.l.b16 %v4034
    %v4051 = vunpack.c.l.b16 %v4035
    %v4052 = vunpack.c.l.b16 %v4036
    %v4053 = vunpack.c.l.b16 %v4037
    %v4054 = vunpack.c.l.b16 %v4038
    %v4055 = vunpack.c.l.b16 %v4039
    %v4056 = vunpack.c.l.b16 %v4040
    %v4057 = vpack.c.b16 %v4050, %v4049
    %v4058 = vpack.c.b16 %v4052, %v4051
    %v4059 = vpack.c.b16 %v4054, %v4053
    %v4060 = vpack.c.b16 %v4056, %v4055
    %v4066 = vsel %vm2135, %v4031, 0
    %4068 = vmatprep.subr.bf16.mxu0 0
    %4069 = vmatpush1.bf16.msra.mxu0 0
    %4070 = vmatprep.subr.bf16.mxu0 0
    %4071 = vmatpush1.bf16.msra.mxu0 0
    %4072 = vmatprep.subr.bf16.mxu0 0
    %4073 = vmatpush1.bf16.msra.mxu0 0
    %4074 = vmatprep.subr.bf16.mxu0 0
    %4075 = vmatpush1.bf16.msra.mxu0 0
    %4076 = vmatprep.subr.bf16.mxu0 0
    %4077 = vmatpush1.bf16.msra.mxu0 %v4060
    %4078 = vmatprep.subr.bf16.mxu0 0
    %4079 = vmatpush1.bf16.msra.mxu0 %v4059
    %4080 = vmatprep.subr.bf16.mxu0 0
    %4081 = vmatpush1.bf16.msra.mxu0 %v4058
    %4082 = vmatprep.subr.bf16.mxu0 0
    %4083 = vmatpush1.bf16.msra.mxu0 %v4057
    %4084 = vmatprep.subr.bf16.mxu0 0
    %4085 = vmatpush2.bf16.msra.mxu0 0
    %4086 = vmatprep.subr.bf16.mxu0 0
    %4087 = vmatpush2.bf16.msra.mxu0 0
    %4088 = vmatprep.subr.bf16.mxu0 0
    %4089 = vmatpush2.bf16.msra.mxu0 0
    %4090 = vmatprep.subr.bf16.mxu0 0
    %4091 = vmatpush2.bf16.msra.mxu0 0
    %4092 = vmatprep.subr.bf16.mxu0 0
    %4093 = vmatpush2.bf16.msra.mxu0 0
    %4094 = vmatprep.subr.bf16.mxu0 0
    %4095 = vmatpush2.bf16.msra.mxu0 0
    %4096 = vmatprep.subr.bf16.mxu0 0
    %4097 = vmatpush2.bf16.msra.mxu0 0
    %4098 = vmatprep.subr.bf16.mxu0 0
    %4099 = vmatpush2.bf16.msra.mxu0 0
    %4100 = vmatprep.mubr.bf16.mxu0 0
    %4101 = vmatmul.mubr.bf16.gmra.mxu0 %v4066
    %v4102 = vpop.f32.mrf.mxu0
    %v4103 = vadd.f32 0.0, %v4102
    %v4104 = vpop.f32.mrf.mxu0
    %v4105 = vpop.f32.mrf.mxu0
    %v4106 = vpop.f32.mrf.mxu0
    %4107 = vdwg.mxu0
    %v4108 = vadd.f32 %v3634, %v4103
    %v4109 = vld [vmem:[#allocation2 + $0xc0] sm:$0xff]
    %v4110 = vpack.c.bf16 %v4109, %v4109
    %s4111 = scalar_lea.vmem [#allocation8], 768
    %v4112 = vld [vmem:[%s4111] sm:$0xf]
    %v4113 = vld [vmem:[%s4111 + $0x4] sm:$0xf]
    %v4114 = vld [vmem:[%s4111 + $0x8] sm:$0xf]
    %v4115 = vld [vmem:[%s4111 + $0xc] sm:$0xf]
    %v4116 = vld [vmem:[%s4111 + $0x10] sm:$0xf]
    %v4117 = vld [vmem:[%s4111 + $0x14] sm:$0xf]
    %v4118 = vld [vmem:[%s4111 + $0x18] sm:$0xf]
    %v4119 = vld [vmem:[%s4111 + $0x1c] sm:$0xf]
    %v4128 = vunpack.c.l.b16 %v4112
    %v4129 = vunpack.c.l.b16 %v4113
    %v4130 = vunpack.c.l.b16 %v4114
    %v4131 = vunpack.c.l.b16 %v4115
    %v4132 = vunpack.c.l.b16 %v4116
    %v4133 = vunpack.c.l.b16 %v4117
    %v4134 = vunpack.c.l.b16 %v4118
    %v4135 = vunpack.c.l.b16 %v4119
    %v4136 = vpack.c.b16 %v4129, %v4128
    %v4137 = vpack.c.b16 %v4131, %v4130
    %v4138 = vpack.c.b16 %v4133, %v4132
    %v4139 = vpack.c.b16 %v4135, %v4134
    %v4145 = vsel %vm2135, %v4110, 0
    %4147 = vmatprep.subr.bf16.mxu0 0
    %4148 = vmatpush1.bf16.msra.mxu0 0
    %4149 = vmatprep.subr.bf16.mxu0 0
    %4150 = vmatpush1.bf16.msra.mxu0 0
    %4151 = vmatprep.subr.bf16.mxu0 0
    %4152 = vmatpush1.bf16.msra.mxu0 0
    %4153 = vmatprep.subr.bf16.mxu0 0
    %4154 = vmatpush1.bf16.msra.mxu0 0
    %4155 = vmatprep.subr.bf16.mxu0 0
    %4156 = vmatpush1.bf16.msra.mxu0 %v4139
    %4157 = vmatprep.subr.bf16.mxu0 0
    %4158 = vmatpush1.bf16.msra.mxu0 %v4138
    %4159 = vmatprep.subr.bf16.mxu0 0
    %4160 = vmatpush1.bf16.msra.mxu0 %v4137
    %4161 = vmatprep.subr.bf16.mxu0 0
    %4162 = vmatpush1.bf16.msra.mxu0 %v4136
    %4163 = vmatprep.subr.bf16.mxu0 0
    %4164 = vmatpush2.bf16.msra.mxu0 0
    %4165 = vmatprep.subr.bf16.mxu0 0
    %4166 = vmatpush2.bf16.msra.mxu0 0
    %4167 = vmatprep.subr.bf16.mxu0 0
    %4168 = vmatpush2.bf16.msra.mxu0 0
    %4169 = vmatprep.subr.bf16.mxu0 0
    %4170 = vmatpush2.bf16.msra.mxu0 0
    %4171 = vmatprep.subr.bf16.mxu0 0
    %4172 = vmatpush2.bf16.msra.mxu0 0
    %4173 = vmatprep.subr.bf16.mxu0 0
    %4174 = vmatpush2.bf16.msra.mxu0 0
    %4175 = vmatprep.subr.bf16.mxu0 0
    %4176 = vmatpush2.bf16.msra.mxu0 0
    %4177 = vmatprep.subr.bf16.mxu0 0
    %4178 = vmatpush2.bf16.msra.mxu0 0
    %4179 = vmatprep.mubr.bf16.mxu0 0
    %4180 = vmatmul.mubr.bf16.gmra.mxu0 %v4145
    %v4181 = vpop.f32.mrf.mxu0
    %v4182 = vadd.f32 0.0, %v4181
    %v4183 = vpop.f32.mrf.mxu0
    %v4184 = vpop.f32.mrf.mxu0
    %v4185 = vpop.f32.mrf.mxu0
    %4186 = vdwg.mxu0
    %v4187 = vadd.f32 %v3713, %v4182
    %v4188 = vld [vmem:[#allocation2 + $0xc8] sm:$0xff]
    %v4189 = vpack.c.bf16 %v4188, %v4188
    %s4190 = scalar_lea.vmem [#allocation8], 800
    %v4191 = vld [vmem:[%s4190] sm:$0xf]
    %v4192 = vld [vmem:[%s4190 + $0x4] sm:$0xf]
    %v4193 = vld [vmem:[%s4190 + $0x8] sm:$0xf]
    %v4194 = vld [vmem:[%s4190 + $0xc] sm:$0xf]
    %v4195 = vld [vmem:[%s4190 + $0x10] sm:$0xf]
    %v4196 = vld [vmem:[%s4190 + $0x14] sm:$0xf]
    %v4197 = vld [vmem:[%s4190 + $0x18] sm:$0xf]
    %v4198 = vld [vmem:[%s4190 + $0x1c] sm:$0xf]
    %v4207 = vunpack.c.l.b16 %v4191
    %v4208 = vunpack.c.l.b16 %v4192
    %v4209 = vunpack.c.l.b16 %v4193
    %v4210 = vunpack.c.l.b16 %v4194
    %v4211 = vunpack.c.l.b16 %v4195
    %v4212 = vunpack.c.l.b16 %v4196
    %v4213 = vunpack.c.l.b16 %v4197
    %v4214 = vunpack.c.l.b16 %v4198
    %v4215 = vpack.c.b16 %v4208, %v4207
    %v4216 = vpack.c.b16 %v4210, %v4209
    %v4217 = vpack.c.b16 %v4212, %v4211
    %v4218 = vpack.c.b16 %v4214, %v4213
    %v4224 = vsel %vm2135, %v4189, 0
    %4226 = vmatprep.subr.bf16.mxu0 0
    %4227 = vmatpush1.bf16.msra.mxu0 0
    %4228 = vmatprep.subr.bf16.mxu0 0
    %4229 = vmatpush1.bf16.msra.mxu0 0
    %4230 = vmatprep.subr.bf16.mxu0 0
    %4231 = vmatpush1.bf16.msra.mxu0 0
    %4232 = vmatprep.subr.bf16.mxu0 0
    %4233 = vmatpush1.bf16.msra.mxu0 0
    %4234 = vmatprep.subr.bf16.mxu0 0
    %4235 = vmatpush1.bf16.msra.mxu0 %v4218
    %4236 = vmatprep.subr.bf16.mxu0 0
    %4237 = vmatpush1.bf16.msra.mxu0 %v4217
    %4238 = vmatprep.subr.bf16.mxu0 0
    %4239 = vmatpush1.bf16.msra.mxu0 %v4216
    %4240 = vmatprep.subr.bf16.mxu0 0
    %4241 = vmatpush1.bf16.msra.mxu0 %v4215
    %4242 = vmatprep.subr.bf16.mxu0 0
    %4243 = vmatpush2.bf16.msra.mxu0 0
    %4244 = vmatprep.subr.bf16.mxu0 0
    %4245 = vmatpush2.bf16.msra.mxu0 0
    %4246 = vmatprep.subr.bf16.mxu0 0
    %4247 = vmatpush2.bf16.msra.mxu0 0
    %4248 = vmatprep.subr.bf16.mxu0 0
    %4249 = vmatpush2.bf16.msra.mxu0 0
    %4250 = vmatprep.subr.bf16.mxu0 0
    %4251 = vmatpush2.bf16.msra.mxu0 0
    %4252 = vmatprep.subr.bf16.mxu0 0
    %4253 = vmatpush2.bf16.msra.mxu0 0
    %4254 = vmatprep.subr.bf16.mxu0 0
    %4255 = vmatpush2.bf16.msra.mxu0 0
    %4256 = vmatprep.subr.bf16.mxu0 0
    %4257 = vmatpush2.bf16.msra.mxu0 0
    %4258 = vmatprep.mubr.bf16.mxu0 0
    %4259 = vmatmul.mubr.bf16.gmra.mxu0 %v4224
    %v4260 = vpop.f32.mrf.mxu0
    %v4261 = vadd.f32 0.0, %v4260
    %v4262 = vpop.f32.mrf.mxu0
    %v4263 = vpop.f32.mrf.mxu0
    %v4264 = vpop.f32.mrf.mxu0
    %4265 = vdwg.mxu0
    %v4266 = vadd.f32 %v3792, %v4261
    %v4267 = vld [vmem:[#allocation2 + $0xd0] sm:$0xff]
    %v4268 = vpack.c.bf16 %v4267, %v4267
    %s4269 = scalar_lea.vmem [#allocation8], 832
    %v4270 = vld [vmem:[%s4269] sm:$0xf]
    %v4271 = vld [vmem:[%s4269 + $0x4] sm:$0xf]
    %v4272 = vld [vmem:[%s4269 + $0x8] sm:$0xf]
    %v4273 = vld [vmem:[%s4269 + $0xc] sm:$0xf]
    %v4274 = vld [vmem:[%s4269 + $0x10] sm:$0xf]
    %v4275 = vld [vmem:[%s4269 + $0x14] sm:$0xf]
    %v4276 = vld [vmem:[%s4269 + $0x18] sm:$0xf]
    %v4277 = vld [vmem:[%s4269 + $0x1c] sm:$0xf]
    %v4286 = vunpack.c.l.b16 %v4270
    %v4287 = vunpack.c.l.b16 %v4271
    %v4288 = vunpack.c.l.b16 %v4272
    %v4289 = vunpack.c.l.b16 %v4273
    %v4290 = vunpack.c.l.b16 %v4274
    %v4291 = vunpack.c.l.b16 %v4275
    %v4292 = vunpack.c.l.b16 %v4276
    %v4293 = vunpack.c.l.b16 %v4277
    %v4294 = vpack.c.b16 %v4287, %v4286
    %v4295 = vpack.c.b16 %v4289, %v4288
    %v4296 = vpack.c.b16 %v4291, %v4290
    %v4297 = vpack.c.b16 %v4293, %v4292
    %v4303 = vsel %vm2135, %v4268, 0
    %4305 = vmatprep.subr.bf16.mxu0 0
    %4306 = vmatpush1.bf16.msra.mxu0 0
    %4307 = vmatprep.subr.bf16.mxu0 0
    %4308 = vmatpush1.bf16.msra.mxu0 0
    %4309 = vmatprep.subr.bf16.mxu0 0
    %4310 = vmatpush1.bf16.msra.mxu0 0
    %4311 = vmatprep.subr.bf16.mxu0 0
    %4312 = vmatpush1.bf16.msra.mxu0 0
    %4313 = vmatprep.subr.bf16.mxu0 0
    %4314 = vmatpush1.bf16.msra.mxu0 %v4297
    %4315 = vmatprep.subr.bf16.mxu0 0
    %4316 = vmatpush1.bf16.msra.mxu0 %v4296
    %4317 = vmatprep.subr.bf16.mxu0 0
    %4318 = vmatpush1.bf16.msra.mxu0 %v4295
    %4319 = vmatprep.subr.bf16.mxu0 0
    %4320 = vmatpush1.bf16.msra.mxu0 %v4294
    %4321 = vmatprep.subr.bf16.mxu0 0
    %4322 = vmatpush2.bf16.msra.mxu0 0
    %4323 = vmatprep.subr.bf16.mxu0 0
    %4324 = vmatpush2.bf16.msra.mxu0 0
    %4325 = vmatprep.subr.bf16.mxu0 0
    %4326 = vmatpush2.bf16.msra.mxu0 0
    %4327 = vmatprep.subr.bf16.mxu0 0
    %4328 = vmatpush2.bf16.msra.mxu0 0
    %4329 = vmatprep.subr.bf16.mxu0 0
    %4330 = vmatpush2.bf16.msra.mxu0 0
    %4331 = vmatprep.subr.bf16.mxu0 0
    %4332 = vmatpush2.bf16.msra.mxu0 0
    %4333 = vmatprep.subr.bf16.mxu0 0
    %4334 = vmatpush2.bf16.msra.mxu0 0
    %4335 = vmatprep.subr.bf16.mxu0 0
    %4336 = vmatpush2.bf16.msra.mxu0 0
    %4337 = vmatprep.mubr.bf16.mxu0 0
    %4338 = vmatmul.mubr.bf16.gmra.mxu0 %v4303
    %v4339 = vpop.f32.mrf.mxu0
    %v4340 = vadd.f32 0.0, %v4339
    %v4341 = vpop.f32.mrf.mxu0
    %v4342 = vpop.f32.mrf.mxu0
    %v4343 = vpop.f32.mrf.mxu0
    %4344 = vdwg.mxu0
    %v4345 = vadd.f32 %v3871, %v4340
    %v4346 = vld [vmem:[#allocation2 + $0xd8] sm:$0xff]
    %v4347 = vpack.c.bf16 %v4346, %v4346
    %s4348 = scalar_lea.vmem [#allocation8], 864
    %v4349 = vld [vmem:[%s4348] sm:$0xf]
    %v4350 = vld [vmem:[%s4348 + $0x4] sm:$0xf]
    %v4351 = vld [vmem:[%s4348 + $0x8] sm:$0xf]
    %v4352 = vld [vmem:[%s4348 + $0xc] sm:$0xf]
    %v4353 = vld [vmem:[%s4348 + $0x10] sm:$0xf]
    %v4354 = vld [vmem:[%s4348 + $0x14] sm:$0xf]
    %v4355 = vld [vmem:[%s4348 + $0x18] sm:$0xf]
    %v4356 = vld [vmem:[%s4348 + $0x1c] sm:$0xf]
    %v4365 = vunpack.c.l.b16 %v4349
    %v4366 = vunpack.c.l.b16 %v4350
    %v4367 = vunpack.c.l.b16 %v4351
    %v4368 = vunpack.c.l.b16 %v4352
    %v4369 = vunpack.c.l.b16 %v4353
    %v4370 = vunpack.c.l.b16 %v4354
    %v4371 = vunpack.c.l.b16 %v4355
    %v4372 = vunpack.c.l.b16 %v4356
    %v4373 = vpack.c.b16 %v4366, %v4365
    %v4374 = vpack.c.b16 %v4368, %v4367
    %v4375 = vpack.c.b16 %v4370, %v4369
    %v4376 = vpack.c.b16 %v4372, %v4371
    %v4382 = vsel %vm2135, %v4347, 0
    %4384 = vmatprep.subr.bf16.mxu0 0
    %4385 = vmatpush1.bf16.msra.mxu0 0
    %4386 = vmatprep.subr.bf16.mxu0 0
    %4387 = vmatpush1.bf16.msra.mxu0 0
    %4388 = vmatprep.subr.bf16.mxu0 0
    %4389 = vmatpush1.bf16.msra.mxu0 0
    %4390 = vmatprep.subr.bf16.mxu0 0
    %4391 = vmatpush1.bf16.msra.mxu0 0
    %4392 = vmatprep.subr.bf16.mxu0 0
    %4393 = vmatpush1.bf16.msra.mxu0 %v4376
    %4394 = vmatprep.subr.bf16.mxu0 0
    %4395 = vmatpush1.bf16.msra.mxu0 %v4375
    %4396 = vmatprep.subr.bf16.mxu0 0
    %4397 = vmatpush1.bf16.msra.mxu0 %v4374
    %4398 = vmatprep.subr.bf16.mxu0 0
    %4399 = vmatpush1.bf16.msra.mxu0 %v4373
    %4400 = vmatprep.subr.bf16.mxu0 0
    %4401 = vmatpush2.bf16.msra.mxu0 0
    %4402 = vmatprep.subr.bf16.mxu0 0
    %4403 = vmatpush2.bf16.msra.mxu0 0
    %4404 = vmatprep.subr.bf16.mxu0 0
    %4405 = vmatpush2.bf16.msra.mxu0 0
    %4406 = vmatprep.subr.bf16.mxu0 0
    %4407 = vmatpush2.bf16.msra.mxu0 0
    %4408 = vmatprep.subr.bf16.mxu0 0
    %4409 = vmatpush2.bf16.msra.mxu0 0
    %4410 = vmatprep.subr.bf16.mxu0 0
    %4411 = vmatpush2.bf16.msra.mxu0 0
    %4412 = vmatprep.subr.bf16.mxu0 0
    %4413 = vmatpush2.bf16.msra.mxu0 0
    %4414 = vmatprep.subr.bf16.mxu0 0
    %4415 = vmatpush2.bf16.msra.mxu0 0
    %4416 = vmatprep.mubr.bf16.mxu0 0
    %4417 = vmatmul.mubr.bf16.gmra.mxu0 %v4382
    %v4418 = vpop.f32.mrf.mxu0
    %v4419 = vadd.f32 0.0, %v4418
    %v4420 = vpop.f32.mrf.mxu0
    %v4421 = vpop.f32.mrf.mxu0
    %v4422 = vpop.f32.mrf.mxu0
    %4423 = vdwg.mxu0
    %v4424 = vadd.f32 %v3950, %v4419
    %v4425 = vld [vmem:[#allocation2 + $0xe0] sm:$0xff]
    %v4426 = vpack.c.bf16 %v4425, %v4425
    %s4427 = scalar_lea.vmem [#allocation8], 896
    %v4428 = vld [vmem:[%s4427] sm:$0xf]
    %v4429 = vld [vmem:[%s4427 + $0x4] sm:$0xf]
    %v4430 = vld [vmem:[%s4427 + $0x8] sm:$0xf]
    %v4431 = vld [vmem:[%s4427 + $0xc] sm:$0xf]
    %v4432 = vld [vmem:[%s4427 + $0x10] sm:$0xf]
    %v4433 = vld [vmem:[%s4427 + $0x14] sm:$0xf]
    %v4434 = vld [vmem:[%s4427 + $0x18] sm:$0xf]
    %v4435 = vld [vmem:[%s4427 + $0x1c] sm:$0xf]
    %v4444 = vunpack.c.l.b16 %v4428
    %v4445 = vunpack.c.l.b16 %v4429
    %v4446 = vunpack.c.l.b16 %v4430
    %v4447 = vunpack.c.l.b16 %v4431
    %v4448 = vunpack.c.l.b16 %v4432
    %v4449 = vunpack.c.l.b16 %v4433
    %v4450 = vunpack.c.l.b16 %v4434
    %v4451 = vunpack.c.l.b16 %v4435
    %v4452 = vpack.c.b16 %v4445, %v4444
    %v4453 = vpack.c.b16 %v4447, %v4446
    %v4454 = vpack.c.b16 %v4449, %v4448
    %v4455 = vpack.c.b16 %v4451, %v4450
    %v4461 = vsel %vm2135, %v4426, 0
    %4463 = vmatprep.subr.bf16.mxu0 0
    %4464 = vmatpush1.bf16.msra.mxu0 0
    %4465 = vmatprep.subr.bf16.mxu0 0
    %4466 = vmatpush1.bf16.msra.mxu0 0
    %4467 = vmatprep.subr.bf16.mxu0 0
    %4468 = vmatpush1.bf16.msra.mxu0 0
    %4469 = vmatprep.subr.bf16.mxu0 0
    %4470 = vmatpush1.bf16.msra.mxu0 0
    %4471 = vmatprep.subr.bf16.mxu0 0
    %4472 = vmatpush1.bf16.msra.mxu0 %v4455
    %4473 = vmatprep.subr.bf16.mxu0 0
    %4474 = vmatpush1.bf16.msra.mxu0 %v4454
    %4475 = vmatprep.subr.bf16.mxu0 0
    %4476 = vmatpush1.bf16.msra.mxu0 %v4453
    %4477 = vmatprep.subr.bf16.mxu0 0
    %4478 = vmatpush1.bf16.msra.mxu0 %v4452
    %4479 = vmatprep.subr.bf16.mxu0 0
    %4480 = vmatpush2.bf16.msra.mxu0 0
    %4481 = vmatprep.subr.bf16.mxu0 0
    %4482 = vmatpush2.bf16.msra.mxu0 0
    %4483 = vmatprep.subr.bf16.mxu0 0
    %4484 = vmatpush2.bf16.msra.mxu0 0
    %4485 = vmatprep.subr.bf16.mxu0 0
    %4486 = vmatpush2.bf16.msra.mxu0 0
    %4487 = vmatprep.subr.bf16.mxu0 0
    %4488 = vmatpush2.bf16.msra.mxu0 0
    %4489 = vmatprep.subr.bf16.mxu0 0
    %4490 = vmatpush2.bf16.msra.mxu0 0
    %4491 = vmatprep.subr.bf16.mxu0 0
    %4492 = vmatpush2.bf16.msra.mxu0 0
    %4493 = vmatprep.subr.bf16.mxu0 0
    %4494 = vmatpush2.bf16.msra.mxu0 0
    %4495 = vmatprep.mubr.bf16.mxu0 0
    %4496 = vmatmul.mubr.bf16.gmra.mxu0 %v4461
    %v4497 = vpop.f32.mrf.mxu0
    %v4498 = vadd.f32 0.0, %v4497
    %v4499 = vpop.f32.mrf.mxu0
    %v4500 = vpop.f32.mrf.mxu0
    %v4501 = vpop.f32.mrf.mxu0
    %4502 = vdwg.mxu0
    %v4503 = vadd.f32 %v4029, %v4498
    %v4504 = vld [vmem:[#allocation2 + $0xe8] sm:$0xff]
    %v4505 = vpack.c.bf16 %v4504, %v4504
    %s4506 = scalar_lea.vmem [#allocation8], 928
    %v4507 = vld [vmem:[%s4506] sm:$0xf]
    %v4508 = vld [vmem:[%s4506 + $0x4] sm:$0xf]
    %v4509 = vld [vmem:[%s4506 + $0x8] sm:$0xf]
    %v4510 = vld [vmem:[%s4506 + $0xc] sm:$0xf]
    %v4511 = vld [vmem:[%s4506 + $0x10] sm:$0xf]
    %v4512 = vld [vmem:[%s4506 + $0x14] sm:$0xf]
    %v4513 = vld [vmem:[%s4506 + $0x18] sm:$0xf]
    %v4514 = vld [vmem:[%s4506 + $0x1c] sm:$0xf]
    %v4523 = vunpack.c.l.b16 %v4507
    %v4524 = vunpack.c.l.b16 %v4508
    %v4525 = vunpack.c.l.b16 %v4509
    %v4526 = vunpack.c.l.b16 %v4510
    %v4527 = vunpack.c.l.b16 %v4511
    %v4528 = vunpack.c.l.b16 %v4512
    %v4529 = vunpack.c.l.b16 %v4513
    %v4530 = vunpack.c.l.b16 %v4514
    %v4531 = vpack.c.b16 %v4524, %v4523
    %v4532 = vpack.c.b16 %v4526, %v4525
    %v4533 = vpack.c.b16 %v4528, %v4527
    %v4534 = vpack.c.b16 %v4530, %v4529
    %v4540 = vsel %vm2135, %v4505, 0
    %4542 = vmatprep.subr.bf16.mxu0 0
    %4543 = vmatpush1.bf16.msra.mxu0 0
    %4544 = vmatprep.subr.bf16.mxu0 0
    %4545 = vmatpush1.bf16.msra.mxu0 0
    %4546 = vmatprep.subr.bf16.mxu0 0
    %4547 = vmatpush1.bf16.msra.mxu0 0
    %4548 = vmatprep.subr.bf16.mxu0 0
    %4549 = vmatpush1.bf16.msra.mxu0 0
    %4550 = vmatprep.subr.bf16.mxu0 0
    %4551 = vmatpush1.bf16.msra.mxu0 %v4534
    %4552 = vmatprep.subr.bf16.mxu0 0
    %4553 = vmatpush1.bf16.msra.mxu0 %v4533
    %4554 = vmatprep.subr.bf16.mxu0 0
    %4555 = vmatpush1.bf16.msra.mxu0 %v4532
    %4556 = vmatprep.subr.bf16.mxu0 0
    %4557 = vmatpush1.bf16.msra.mxu0 %v4531
    %4558 = vmatprep.subr.bf16.mxu0 0
    %4559 = vmatpush2.bf16.msra.mxu0 0
    %4560 = vmatprep.subr.bf16.mxu0 0
    %4561 = vmatpush2.bf16.msra.mxu0 0
    %4562 = vmatprep.subr.bf16.mxu0 0
    %4563 = vmatpush2.bf16.msra.mxu0 0
    %4564 = vmatprep.subr.bf16.mxu0 0
    %4565 = vmatpush2.bf16.msra.mxu0 0
    %4566 = vmatprep.subr.bf16.mxu0 0
    %4567 = vmatpush2.bf16.msra.mxu0 0
    %4568 = vmatprep.subr.bf16.mxu0 0
    %4569 = vmatpush2.bf16.msra.mxu0 0
    %4570 = vmatprep.subr.bf16.mxu0 0
    %4571 = vmatpush2.bf16.msra.mxu0 0
    %4572 = vmatprep.subr.bf16.mxu0 0
    %4573 = vmatpush2.bf16.msra.mxu0 0
    %4574 = vmatprep.mubr.bf16.mxu0 0
    %4575 = vmatmul.mubr.bf16.gmra.mxu0 %v4540
    %v4576 = vpop.f32.mrf.mxu0
    %v4577 = vadd.f32 0.0, %v4576
    %v4578 = vpop.f32.mrf.mxu0
    %v4579 = vpop.f32.mrf.mxu0
    %v4580 = vpop.f32.mrf.mxu0
    %4581 = vdwg.mxu0
    %v4582 = vadd.f32 %v4108, %v4577
    %v4583 = vld [vmem:[#allocation2 + $0xf0] sm:$0xff]
    %v4584 = vpack.c.bf16 %v4583, %v4583
    %s4585 = scalar_lea.vmem [#allocation8], 960
    %v4586 = vld [vmem:[%s4585] sm:$0xf]
    %v4587 = vld [vmem:[%s4585 + $0x4] sm:$0xf]
    %v4588 = vld [vmem:[%s4585 + $0x8] sm:$0xf]
    %v4589 = vld [vmem:[%s4585 + $0xc] sm:$0xf]
    %v4590 = vld [vmem:[%s4585 + $0x10] sm:$0xf]
    %v4591 = vld [vmem:[%s4585 + $0x14] sm:$0xf]
    %v4592 = vld [vmem:[%s4585 + $0x18] sm:$0xf]
    %v4593 = vld [vmem:[%s4585 + $0x1c] sm:$0xf]
    %v4602 = vunpack.c.l.b16 %v4586
    %v4603 = vunpack.c.l.b16 %v4587
    %v4604 = vunpack.c.l.b16 %v4588
    %v4605 = vunpack.c.l.b16 %v4589
    %v4606 = vunpack.c.l.b16 %v4590
    %v4607 = vunpack.c.l.b16 %v4591
    %v4608 = vunpack.c.l.b16 %v4592
    %v4609 = vunpack.c.l.b16 %v4593
    %v4610 = vpack.c.b16 %v4603, %v4602
    %v4611 = vpack.c.b16 %v4605, %v4604
    %v4612 = vpack.c.b16 %v4607, %v4606
    %v4613 = vpack.c.b16 %v4609, %v4608
    %v4619 = vsel %vm2135, %v4584, 0
    %4621 = vmatprep.subr.bf16.mxu0 0
    %4622 = vmatpush1.bf16.msra.mxu0 0
    %4623 = vmatprep.subr.bf16.mxu0 0
    %4624 = vmatpush1.bf16.msra.mxu0 0
    %4625 = vmatprep.subr.bf16.mxu0 0
    %4626 = vmatpush1.bf16.msra.mxu0 0
    %4627 = vmatprep.subr.bf16.mxu0 0
    %4628 = vmatpush1.bf16.msra.mxu0 0
    %4629 = vmatprep.subr.bf16.mxu0 0
    %4630 = vmatpush1.bf16.msra.mxu0 %v4613
    %4631 = vmatprep.subr.bf16.mxu0 0
    %4632 = vmatpush1.bf16.msra.mxu0 %v4612
    %4633 = vmatprep.subr.bf16.mxu0 0
    %4634 = vmatpush1.bf16.msra.mxu0 %v4611
    %4635 = vmatprep.subr.bf16.mxu0 0
    %4636 = vmatpush1.bf16.msra.mxu0 %v4610
    %4637 = vmatprep.subr.bf16.mxu0 0
    %4638 = vmatpush2.bf16.msra.mxu0 0
    %4639 = vmatprep.subr.bf16.mxu0 0
    %4640 = vmatpush2.bf16.msra.mxu0 0
    %4641 = vmatprep.subr.bf16.mxu0 0
    %4642 = vmatpush2.bf16.msra.mxu0 0
    %4643 = vmatprep.subr.bf16.mxu0 0
    %4644 = vmatpush2.bf16.msra.mxu0 0
    %4645 = vmatprep.subr.bf16.mxu0 0
    %4646 = vmatpush2.bf16.msra.mxu0 0
    %4647 = vmatprep.subr.bf16.mxu0 0
    %4648 = vmatpush2.bf16.msra.mxu0 0
    %4649 = vmatprep.subr.bf16.mxu0 0
    %4650 = vmatpush2.bf16.msra.mxu0 0
    %4651 = vmatprep.subr.bf16.mxu0 0
    %4652 = vmatpush2.bf16.msra.mxu0 0
    %4653 = vmatprep.mubr.bf16.mxu0 0
    %4654 = vmatmul.mubr.bf16.gmra.mxu0 %v4619
    %v4655 = vpop.f32.mrf.mxu0
    %v4656 = vadd.f32 0.0, %v4655
    %v4657 = vpop.f32.mrf.mxu0
    %v4658 = vpop.f32.mrf.mxu0
    %v4659 = vpop.f32.mrf.mxu0
    %4660 = vdwg.mxu0
    %v4661 = vadd.f32 %v4187, %v4656
    %v4662 = vld [vmem:[#allocation2 + $0xf8] sm:$0xff]
    %v4663 = vpack.c.bf16 %v4662, %v4662
    %s4664 = scalar_lea.vmem [#allocation8], 992
    %v4665 = vld [vmem:[%s4664] sm:$0xf]
    %v4666 = vld [vmem:[%s4664 + $0x4] sm:$0xf]
    %v4667 = vld [vmem:[%s4664 + $0x8] sm:$0xf]
    %v4668 = vld [vmem:[%s4664 + $0xc] sm:$0xf]
    %v4669 = vld [vmem:[%s4664 + $0x10] sm:$0xf]
    %v4670 = vld [vmem:[%s4664 + $0x14] sm:$0xf]
    %v4671 = vld [vmem:[%s4664 + $0x18] sm:$0xf]
    %v4672 = vld [vmem:[%s4664 + $0x1c] sm:$0xf]
    %v4681 = vunpack.c.l.b16 %v4665
    %v4682 = vunpack.c.l.b16 %v4666
    %v4683 = vunpack.c.l.b16 %v4667
    %v4684 = vunpack.c.l.b16 %v4668
    %v4685 = vunpack.c.l.b16 %v4669
    %v4686 = vunpack.c.l.b16 %v4670
    %v4687 = vunpack.c.l.b16 %v4671
    %v4688 = vunpack.c.l.b16 %v4672
    %v4689 = vpack.c.b16 %v4682, %v4681
    %v4690 = vpack.c.b16 %v4684, %v4683
    %v4691 = vpack.c.b16 %v4686, %v4685
    %v4692 = vpack.c.b16 %v4688, %v4687
    %v4698 = vsel %vm2135, %v4663, 0
    %4700 = vmatprep.subr.bf16.mxu0 0
    %4701 = vmatpush1.bf16.msra.mxu0 0
    %4702 = vmatprep.subr.bf16.mxu0 0
    %4703 = vmatpush1.bf16.msra.mxu0 0
    %4704 = vmatprep.subr.bf16.mxu0 0
    %4705 = vmatpush1.bf16.msra.mxu0 0
    %4706 = vmatprep.subr.bf16.mxu0 0
    %4707 = vmatpush1.bf16.msra.mxu0 0
    %4708 = vmatprep.subr.bf16.mxu0 0
    %4709 = vmatpush1.bf16.msra.mxu0 %v4692
    %4710 = vmatprep.subr.bf16.mxu0 0
    %4711 = vmatpush1.bf16.msra.mxu0 %v4691
    %4712 = vmatprep.subr.bf16.mxu0 0
    %4713 = vmatpush1.bf16.msra.mxu0 %v4690
    %4714 = vmatprep.subr.bf16.mxu0 0
    %4715 = vmatpush1.bf16.msra.mxu0 %v4689
    %4716 = vmatprep.subr.bf16.mxu0 0
    %4717 = vmatpush2.bf16.msra.mxu0 0
    %4718 = vmatprep.subr.bf16.mxu0 0
    %4719 = vmatpush2.bf16.msra.mxu0 0
    %4720 = vmatprep.subr.bf16.mxu0 0
    %4721 = vmatpush2.bf16.msra.mxu0 0
    %4722 = vmatprep.subr.bf16.mxu0 0
    %4723 = vmatpush2.bf16.msra.mxu0 0
    %4724 = vmatprep.subr.bf16.mxu0 0
    %4725 = vmatpush2.bf16.msra.mxu0 0
    %4726 = vmatprep.subr.bf16.mxu0 0
    %4727 = vmatpush2.bf16.msra.mxu0 0
    %4728 = vmatprep.subr.bf16.mxu0 0
    %4729 = vmatpush2.bf16.msra.mxu0 0
    %4730 = vmatprep.subr.bf16.mxu0 0
    %4731 = vmatpush2.bf16.msra.mxu0 0
    %4732 = vmatprep.mubr.bf16.mxu0 0
    %4733 = vmatmul.mubr.bf16.gmra.mxu0 %v4698
    %v4734 = vpop.f32.mrf.mxu0
    %v4735 = vadd.f32 0.0, %v4734
    %v4736 = vpop.f32.mrf.mxu0
    %v4737 = vpop.f32.mrf.mxu0
    %v4738 = vpop.f32.mrf.mxu0
    %4739 = vdwg.mxu0
    %v4740 = vadd.f32 %v4266, %v4735
    %v4741 = vld [vmem:[#allocation2 + $0x100] sm:$0xff]
    %v4742 = vpack.c.bf16 %v4741, %v4741
    %s4743 = scalar_lea.vmem [#allocation8], 1024
    %v4744 = vld [vmem:[%s4743] sm:$0xf]
    %v4745 = vld [vmem:[%s4743 + $0x4] sm:$0xf]
    %v4746 = vld [vmem:[%s4743 + $0x8] sm:$0xf]
    %v4747 = vld [vmem:[%s4743 + $0xc] sm:$0xf]
    %v4748 = vld [vmem:[%s4743 + $0x10] sm:$0xf]
    %v4749 = vld [vmem:[%s4743 + $0x14] sm:$0xf]
    %v4750 = vld [vmem:[%s4743 + $0x18] sm:$0xf]
    %v4751 = vld [vmem:[%s4743 + $0x1c] sm:$0xf]
    %v4760 = vunpack.c.l.b16 %v4744
    %v4761 = vunpack.c.l.b16 %v4745
    %v4762 = vunpack.c.l.b16 %v4746
    %v4763 = vunpack.c.l.b16 %v4747
    %v4764 = vunpack.c.l.b16 %v4748
    %v4765 = vunpack.c.l.b16 %v4749
    %v4766 = vunpack.c.l.b16 %v4750
    %v4767 = vunpack.c.l.b16 %v4751
    %v4768 = vpack.c.b16 %v4761, %v4760
    %v4769 = vpack.c.b16 %v4763, %v4762
    %v4770 = vpack.c.b16 %v4765, %v4764
    %v4771 = vpack.c.b16 %v4767, %v4766
    %v4777 = vsel %vm2135, %v4742, 0
    %4779 = vmatprep.subr.bf16.mxu0 0
    %4780 = vmatpush1.bf16.msra.mxu0 0
    %4781 = vmatprep.subr.bf16.mxu0 0
    %4782 = vmatpush1.bf16.msra.mxu0 0
    %4783 = vmatprep.subr.bf16.mxu0 0
    %4784 = vmatpush1.bf16.msra.mxu0 0
    %4785 = vmatprep.subr.bf16.mxu0 0
    %4786 = vmatpush1.bf16.msra.mxu0 0
    %4787 = vmatprep.subr.bf16.mxu0 0
    %4788 = vmatpush1.bf16.msra.mxu0 %v4771
    %4789 = vmatprep.subr.bf16.mxu0 0
    %4790 = vmatpush1.bf16.msra.mxu0 %v4770
    %4791 = vmatprep.subr.bf16.mxu0 0
    %4792 = vmatpush1.bf16.msra.mxu0 %v4769
    %4793 = vmatprep.subr.bf16.mxu0 0
    %4794 = vmatpush1.bf16.msra.mxu0 %v4768
    %4795 = vmatprep.subr.bf16.mxu0 0
    %4796 = vmatpush2.bf16.msra.mxu0 0
    %4797 = vmatprep.subr.bf16.mxu0 0
    %4798 = vmatpush2.bf16.msra.mxu0 0
    %4799 = vmatprep.subr.bf16.mxu0 0
    %4800 = vmatpush2.bf16.msra.mxu0 0
    %4801 = vmatprep.subr.bf16.mxu0 0
    %4802 = vmatpush2.bf16.msra.mxu0 0
    %4803 = vmatprep.subr.bf16.mxu0 0
    %4804 = vmatpush2.bf16.msra.mxu0 0
    %4805 = vmatprep.subr.bf16.mxu0 0
    %4806 = vmatpush2.bf16.msra.mxu0 0
    %4807 = vmatprep.subr.bf16.mxu0 0
    %4808 = vmatpush2.bf16.msra.mxu0 0
    %4809 = vmatprep.subr.bf16.mxu0 0
    %4810 = vmatpush2.bf16.msra.mxu0 0
    %4811 = vmatprep.mubr.bf16.mxu0 0
    %4812 = vmatmul.mubr.bf16.gmra.mxu0 %v4777
    %v4813 = vpop.f32.mrf.mxu0
    %v4814 = vadd.f32 0.0, %v4813
    %v4815 = vpop.f32.mrf.mxu0
    %v4816 = vpop.f32.mrf.mxu0
    %v4817 = vpop.f32.mrf.mxu0
    %4818 = vdwg.mxu0
    %v4819 = vadd.f32 %v4345, %v4814
    %v4820 = vld [vmem:[#allocation2 + $0x108] sm:$0xff]
    %v4821 = vpack.c.bf16 %v4820, %v4820
    %s4822 = scalar_lea.vmem [#allocation8], 1056
    %v4823 = vld [vmem:[%s4822] sm:$0xf]
    %v4824 = vld [vmem:[%s4822 + $0x4] sm:$0xf]
    %v4825 = vld [vmem:[%s4822 + $0x8] sm:$0xf]
    %v4826 = vld [vmem:[%s4822 + $0xc] sm:$0xf]
    %v4827 = vld [vmem:[%s4822 + $0x10] sm:$0xf]
    %v4828 = vld [vmem:[%s4822 + $0x14] sm:$0xf]
    %v4829 = vld [vmem:[%s4822 + $0x18] sm:$0xf]
    %v4830 = vld [vmem:[%s4822 + $0x1c] sm:$0xf]
    %v4839 = vunpack.c.l.b16 %v4823
    %v4840 = vunpack.c.l.b16 %v4824
    %v4841 = vunpack.c.l.b16 %v4825
    %v4842 = vunpack.c.l.b16 %v4826
    %v4843 = vunpack.c.l.b16 %v4827
    %v4844 = vunpack.c.l.b16 %v4828
    %v4845 = vunpack.c.l.b16 %v4829
    %v4846 = vunpack.c.l.b16 %v4830
    %v4847 = vpack.c.b16 %v4840, %v4839
    %v4848 = vpack.c.b16 %v4842, %v4841
    %v4849 = vpack.c.b16 %v4844, %v4843
    %v4850 = vpack.c.b16 %v4846, %v4845
    %v4856 = vsel %vm2135, %v4821, 0
    %4858 = vmatprep.subr.bf16.mxu0 0
    %4859 = vmatpush1.bf16.msra.mxu0 0
    %4860 = vmatprep.subr.bf16.mxu0 0
    %4861 = vmatpush1.bf16.msra.mxu0 0
    %4862 = vmatprep.subr.bf16.mxu0 0
    %4863 = vmatpush1.bf16.msra.mxu0 0
    %4864 = vmatprep.subr.bf16.mxu0 0
    %4865 = vmatpush1.bf16.msra.mxu0 0
    %4866 = vmatprep.subr.bf16.mxu0 0
    %4867 = vmatpush1.bf16.msra.mxu0 %v4850
    %4868 = vmatprep.subr.bf16.mxu0 0
    %4869 = vmatpush1.bf16.msra.mxu0 %v4849
    %4870 = vmatprep.subr.bf16.mxu0 0
    %4871 = vmatpush1.bf16.msra.mxu0 %v4848
    %4872 = vmatprep.subr.bf16.mxu0 0
    %4873 = vmatpush1.bf16.msra.mxu0 %v4847
    %4874 = vmatprep.subr.bf16.mxu0 0
    %4875 = vmatpush2.bf16.msra.mxu0 0
    %4876 = vmatprep.subr.bf16.mxu0 0
    %4877 = vmatpush2.bf16.msra.mxu0 0
    %4878 = vmatprep.subr.bf16.mxu0 0
    %4879 = vmatpush2.bf16.msra.mxu0 0
    %4880 = vmatprep.subr.bf16.mxu0 0
    %4881 = vmatpush2.bf16.msra.mxu0 0
    %4882 = vmatprep.subr.bf16.mxu0 0
    %4883 = vmatpush2.bf16.msra.mxu0 0
    %4884 = vmatprep.subr.bf16.mxu0 0
    %4885 = vmatpush2.bf16.msra.mxu0 0
    %4886 = vmatprep.subr.bf16.mxu0 0
    %4887 = vmatpush2.bf16.msra.mxu0 0
    %4888 = vmatprep.subr.bf16.mxu0 0
    %4889 = vmatpush2.bf16.msra.mxu0 0
    %4890 = vmatprep.mubr.bf16.mxu0 0
    %4891 = vmatmul.mubr.bf16.gmra.mxu0 %v4856
    %v4892 = vpop.f32.mrf.mxu0
    %v4893 = vadd.f32 0.0, %v4892
    %v4894 = vpop.f32.mrf.mxu0
    %v4895 = vpop.f32.mrf.mxu0
    %v4896 = vpop.f32.mrf.mxu0
    %4897 = vdwg.mxu0
    %v4898 = vadd.f32 %v4424, %v4893
    %v4899 = vld [vmem:[#allocation2 + $0x110] sm:$0xff]
    %v4900 = vpack.c.bf16 %v4899, %v4899
    %s4901 = scalar_lea.vmem [#allocation8], 1088
    %v4902 = vld [vmem:[%s4901] sm:$0xf]
    %v4903 = vld [vmem:[%s4901 + $0x4] sm:$0xf]
    %v4904 = vld [vmem:[%s4901 + $0x8] sm:$0xf]
    %v4905 = vld [vmem:[%s4901 + $0xc] sm:$0xf]
    %v4906 = vld [vmem:[%s4901 + $0x10] sm:$0xf]
    %v4907 = vld [vmem:[%s4901 + $0x14] sm:$0xf]
    %v4908 = vld [vmem:[%s4901 + $0x18] sm:$0xf]
    %v4909 = vld [vmem:[%s4901 + $0x1c] sm:$0xf]
    %v4918 = vunpack.c.l.b16 %v4902
    %v4919 = vunpack.c.l.b16 %v4903
    %v4920 = vunpack.c.l.b16 %v4904
    %v4921 = vunpack.c.l.b16 %v4905
    %v4922 = vunpack.c.l.b16 %v4906
    %v4923 = vunpack.c.l.b16 %v4907
    %v4924 = vunpack.c.l.b16 %v4908
    %v4925 = vunpack.c.l.b16 %v4909
    %v4926 = vpack.c.b16 %v4919, %v4918
    %v4927 = vpack.c.b16 %v4921, %v4920
    %v4928 = vpack.c.b16 %v4923, %v4922
    %v4929 = vpack.c.b16 %v4925, %v4924
    %v4935 = vsel %vm2135, %v4900, 0
    %4937 = vmatprep.subr.bf16.mxu0 0
    %4938 = vmatpush1.bf16.msra.mxu0 0
    %4939 = vmatprep.subr.bf16.mxu0 0
    %4940 = vmatpush1.bf16.msra.mxu0 0
    %4941 = vmatprep.subr.bf16.mxu0 0
    %4942 = vmatpush1.bf16.msra.mxu0 0
    %4943 = vmatprep.subr.bf16.mxu0 0
    %4944 = vmatpush1.bf16.msra.mxu0 0
    %4945 = vmatprep.subr.bf16.mxu0 0
    %4946 = vmatpush1.bf16.msra.mxu0 %v4929
    %4947 = vmatprep.subr.bf16.mxu0 0
    %4948 = vmatpush1.bf16.msra.mxu0 %v4928
    %4949 = vmatprep.subr.bf16.mxu0 0
    %4950 = vmatpush1.bf16.msra.mxu0 %v4927
    %4951 = vmatprep.subr.bf16.mxu0 0
    %4952 = vmatpush1.bf16.msra.mxu0 %v4926
    %4953 = vmatprep.subr.bf16.mxu0 0
    %4954 = vmatpush2.bf16.msra.mxu0 0
    %4955 = vmatprep.subr.bf16.mxu0 0
    %4956 = vmatpush2.bf16.msra.mxu0 0
    %4957 = vmatprep.subr.bf16.mxu0 0
    %4958 = vmatpush2.bf16.msra.mxu0 0
    %4959 = vmatprep.subr.bf16.mxu0 0
    %4960 = vmatpush2.bf16.msra.mxu0 0
    %4961 = vmatprep.subr.bf16.mxu0 0
    %4962 = vmatpush2.bf16.msra.mxu0 0
    %4963 = vmatprep.subr.bf16.mxu0 0
    %4964 = vmatpush2.bf16.msra.mxu0 0
    %4965 = vmatprep.subr.bf16.mxu0 0
    %4966 = vmatpush2.bf16.msra.mxu0 0
    %4967 = vmatprep.subr.bf16.mxu0 0
    %4968 = vmatpush2.bf16.msra.mxu0 0
    %4969 = vmatprep.mubr.bf16.mxu0 0
    %4970 = vmatmul.mubr.bf16.gmra.mxu0 %v4935
    %v4971 = vpop.f32.mrf.mxu0
    %v4972 = vadd.f32 0.0, %v4971
    %v4973 = vpop.f32.mrf.mxu0
    %v4974 = vpop.f32.mrf.mxu0
    %v4975 = vpop.f32.mrf.mxu0
    %4976 = vdwg.mxu0
    %v4977 = vadd.f32 %v4503, %v4972
    %v4978 = vld [vmem:[#allocation2 + $0x118] sm:$0xff]
    %v4979 = vpack.c.bf16 %v4978, %v4978
    %s4980 = scalar_lea.vmem [#allocation8], 1120
    %v4981 = vld [vmem:[%s4980] sm:$0xf]
    %v4982 = vld [vmem:[%s4980 + $0x4] sm:$0xf]
    %v4983 = vld [vmem:[%s4980 + $0x8] sm:$0xf]
    %v4984 = vld [vmem:[%s4980 + $0xc] sm:$0xf]
    %v4985 = vld [vmem:[%s4980 + $0x10] sm:$0xf]
    %v4986 = vld [vmem:[%s4980 + $0x14] sm:$0xf]
    %v4987 = vld [vmem:[%s4980 + $0x18] sm:$0xf]
    %v4988 = vld [vmem:[%s4980 + $0x1c] sm:$0xf]
    %v4997 = vunpack.c.l.b16 %v4981
    %v4998 = vunpack.c.l.b16 %v4982
    %v4999 = vunpack.c.l.b16 %v4983
    %v5000 = vunpack.c.l.b16 %v4984
    %v5001 = vunpack.c.l.b16 %v4985
    %v5002 = vunpack.c.l.b16 %v4986
    %v5003 = vunpack.c.l.b16 %v4987
    %v5004 = vunpack.c.l.b16 %v4988
    %v5005 = vpack.c.b16 %v4998, %v4997
    %v5006 = vpack.c.b16 %v5000, %v4999
    %v5007 = vpack.c.b16 %v5002, %v5001
    %v5008 = vpack.c.b16 %v5004, %v5003
    %v5014 = vsel %vm2135, %v4979, 0
    %5016 = vmatprep.subr.bf16.mxu0 0
    %5017 = vmatpush1.bf16.msra.mxu0 0
    %5018 = vmatprep.subr.bf16.mxu0 0
    %5019 = vmatpush1.bf16.msra.mxu0 0
    %5020 = vmatprep.subr.bf16.mxu0 0
    %5021 = vmatpush1.bf16.msra.mxu0 0
    %5022 = vmatprep.subr.bf16.mxu0 0
    %5023 = vmatpush1.bf16.msra.mxu0 0
    %5024 = vmatprep.subr.bf16.mxu0 0
    %5025 = vmatpush1.bf16.msra.mxu0 %v5008
    %5026 = vmatprep.subr.bf16.mxu0 0
    %5027 = vmatpush1.bf16.msra.mxu0 %v5007
    %5028 = vmatprep.subr.bf16.mxu0 0
    %5029 = vmatpush1.bf16.msra.mxu0 %v5006
    %5030 = vmatprep.subr.bf16.mxu0 0
    %5031 = vmatpush1.bf16.msra.mxu0 %v5005
    %5032 = vmatprep.subr.bf16.mxu0 0
    %5033 = vmatpush2.bf16.msra.mxu0 0
    %5034 = vmatprep.subr.bf16.mxu0 0
    %5035 = vmatpush2.bf16.msra.mxu0 0
    %5036 = vmatprep.subr.bf16.mxu0 0
    %5037 = vmatpush2.bf16.msra.mxu0 0
    %5038 = vmatprep.subr.bf16.mxu0 0
    %5039 = vmatpush2.bf16.msra.mxu0 0
    %5040 = vmatprep.subr.bf16.mxu0 0
    %5041 = vmatpush2.bf16.msra.mxu0 0
    %5042 = vmatprep.subr.bf16.mxu0 0
    %5043 = vmatpush2.bf16.msra.mxu0 0
    %5044 = vmatprep.subr.bf16.mxu0 0
    %5045 = vmatpush2.bf16.msra.mxu0 0
    %5046 = vmatprep.subr.bf16.mxu0 0
    %5047 = vmatpush2.bf16.msra.mxu0 0
    %5048 = vmatprep.mubr.bf16.mxu0 0
    %5049 = vmatmul.mubr.bf16.gmra.mxu0 %v5014
    %v5050 = vpop.f32.mrf.mxu0
    %v5051 = vadd.f32 0.0, %v5050
    %v5052 = vpop.f32.mrf.mxu0
    %v5053 = vpop.f32.mrf.mxu0
    %v5054 = vpop.f32.mrf.mxu0
    %5055 = vdwg.mxu0
    %v5056 = vadd.f32 %v4582, %v5051
    %v5057 = vld [vmem:[#allocation2 + $0x120] sm:$0xff]
    %v5058 = vpack.c.bf16 %v5057, %v5057
    %s5059 = scalar_lea.vmem [#allocation8], 1152
    %v5060 = vld [vmem:[%s5059] sm:$0xf]
    %v5061 = vld [vmem:[%s5059 + $0x4] sm:$0xf]
    %v5062 = vld [vmem:[%s5059 + $0x8] sm:$0xf]
    %v5063 = vld [vmem:[%s5059 + $0xc] sm:$0xf]
    %v5064 = vld [vmem:[%s5059 + $0x10] sm:$0xf]
    %v5065 = vld [vmem:[%s5059 + $0x14] sm:$0xf]
    %v5066 = vld [vmem:[%s5059 + $0x18] sm:$0xf]
    %v5067 = vld [vmem:[%s5059 + $0x1c] sm:$0xf]
    %v5076 = vunpack.c.l.b16 %v5060
    %v5077 = vunpack.c.l.b16 %v5061
    %v5078 = vunpack.c.l.b16 %v5062
    %v5079 = vunpack.c.l.b16 %v5063
    %v5080 = vunpack.c.l.b16 %v5064
    %v5081 = vunpack.c.l.b16 %v5065
    %v5082 = vunpack.c.l.b16 %v5066
    %v5083 = vunpack.c.l.b16 %v5067
    %v5084 = vpack.c.b16 %v5077, %v5076
    %v5085 = vpack.c.b16 %v5079, %v5078
    %v5086 = vpack.c.b16 %v5081, %v5080
    %v5087 = vpack.c.b16 %v5083, %v5082
    %v5093 = vsel %vm2135, %v5058, 0
    %5095 = vmatprep.subr.bf16.mxu0 0
    %5096 = vmatpush1.bf16.msra.mxu0 0
    %5097 = vmatprep.subr.bf16.mxu0 0
    %5098 = vmatpush1.bf16.msra.mxu0 0
    %5099 = vmatprep.subr.bf16.mxu0 0
    %5100 = vmatpush1.bf16.msra.mxu0 0
    %5101 = vmatprep.subr.bf16.mxu0 0
    %5102 = vmatpush1.bf16.msra.mxu0 0
    %5103 = vmatprep.subr.bf16.mxu0 0
    %5104 = vmatpush1.bf16.msra.mxu0 %v5087
    %5105 = vmatprep.subr.bf16.mxu0 0
    %5106 = vmatpush1.bf16.msra.mxu0 %v5086
    %5107 = vmatprep.subr.bf16.mxu0 0
    %5108 = vmatpush1.bf16.msra.mxu0 %v5085
    %5109 = vmatprep.subr.bf16.mxu0 0
    %5110 = vmatpush1.bf16.msra.mxu0 %v5084
    %5111 = vmatprep.subr.bf16.mxu0 0
    %5112 = vmatpush2.bf16.msra.mxu0 0
    %5113 = vmatprep.subr.bf16.mxu0 0
    %5114 = vmatpush2.bf16.msra.mxu0 0
    %5115 = vmatprep.subr.bf16.mxu0 0
    %5116 = vmatpush2.bf16.msra.mxu0 0
    %5117 = vmatprep.subr.bf16.mxu0 0
    %5118 = vmatpush2.bf16.msra.mxu0 0
    %5119 = vmatprep.subr.bf16.mxu0 0
    %5120 = vmatpush2.bf16.msra.mxu0 0
    %5121 = vmatprep.subr.bf16.mxu0 0
    %5122 = vmatpush2.bf16.msra.mxu0 0
    %5123 = vmatprep.subr.bf16.mxu0 0
    %5124 = vmatpush2.bf16.msra.mxu0 0
    %5125 = vmatprep.subr.bf16.mxu0 0
    %5126 = vmatpush2.bf16.msra.mxu0 0
    %5127 = vmatprep.mubr.bf16.mxu0 0
    %5128 = vmatmul.mubr.bf16.gmra.mxu0 %v5093
    %v5129 = vpop.f32.mrf.mxu0
    %v5130 = vadd.f32 0.0, %v5129
    %v5131 = vpop.f32.mrf.mxu0
    %v5132 = vpop.f32.mrf.mxu0
    %v5133 = vpop.f32.mrf.mxu0
    %5134 = vdwg.mxu0
    %v5135 = vadd.f32 %v4661, %v5130
    %v5136 = vld [vmem:[#allocation2 + $0x128] sm:$0xff]
    %v5137 = vpack.c.bf16 %v5136, %v5136
    %s5138 = scalar_lea.vmem [#allocation8], 1184
    %v5139 = vld [vmem:[%s5138] sm:$0xf]
    %v5140 = vld [vmem:[%s5138 + $0x4] sm:$0xf]
    %v5141 = vld [vmem:[%s5138 + $0x8] sm:$0xf]
    %v5142 = vld [vmem:[%s5138 + $0xc] sm:$0xf]
    %v5143 = vld [vmem:[%s5138 + $0x10] sm:$0xf]
    %v5144 = vld [vmem:[%s5138 + $0x14] sm:$0xf]
    %v5145 = vld [vmem:[%s5138 + $0x18] sm:$0xf]
    %v5146 = vld [vmem:[%s5138 + $0x1c] sm:$0xf]
    %v5155 = vunpack.c.l.b16 %v5139
    %v5156 = vunpack.c.l.b16 %v5140
    %v5157 = vunpack.c.l.b16 %v5141
    %v5158 = vunpack.c.l.b16 %v5142
    %v5159 = vunpack.c.l.b16 %v5143
    %v5160 = vunpack.c.l.b16 %v5144
    %v5161 = vunpack.c.l.b16 %v5145
    %v5162 = vunpack.c.l.b16 %v5146
    %v5163 = vpack.c.b16 %v5156, %v5155
    %v5164 = vpack.c.b16 %v5158, %v5157
    %v5165 = vpack.c.b16 %v5160, %v5159
    %v5166 = vpack.c.b16 %v5162, %v5161
    %v5172 = vsel %vm2135, %v5137, 0
    %5174 = vmatprep.subr.bf16.mxu0 0
    %5175 = vmatpush1.bf16.msra.mxu0 0
    %5176 = vmatprep.subr.bf16.mxu0 0
    %5177 = vmatpush1.bf16.msra.mxu0 0
    %5178 = vmatprep.subr.bf16.mxu0 0
    %5179 = vmatpush1.bf16.msra.mxu0 0
    %5180 = vmatprep.subr.bf16.mxu0 0
    %5181 = vmatpush1.bf16.msra.mxu0 0
    %5182 = vmatprep.subr.bf16.mxu0 0
    %5183 = vmatpush1.bf16.msra.mxu0 %v5166
    %5184 = vmatprep.subr.bf16.mxu0 0
    %5185 = vmatpush1.bf16.msra.mxu0 %v5165
    %5186 = vmatprep.subr.bf16.mxu0 0
    %5187 = vmatpush1.bf16.msra.mxu0 %v5164
    %5188 = vmatprep.subr.bf16.mxu0 0
    %5189 = vmatpush1.bf16.msra.mxu0 %v5163
    %5190 = vmatprep.subr.bf16.mxu0 0
    %5191 = vmatpush2.bf16.msra.mxu0 0
    %5192 = vmatprep.subr.bf16.mxu0 0
    %5193 = vmatpush2.bf16.msra.mxu0 0
    %5194 = vmatprep.subr.bf16.mxu0 0
    %5195 = vmatpush2.bf16.msra.mxu0 0
    %5196 = vmatprep.subr.bf16.mxu0 0
    %5197 = vmatpush2.bf16.msra.mxu0 0
    %5198 = vmatprep.subr.bf16.mxu0 0
    %5199 = vmatpush2.bf16.msra.mxu0 0
    %5200 = vmatprep.subr.bf16.mxu0 0
    %5201 = vmatpush2.bf16.msra.mxu0 0
    %5202 = vmatprep.subr.bf16.mxu0 0
    %5203 = vmatpush2.bf16.msra.mxu0 0
    %5204 = vmatprep.subr.bf16.mxu0 0
    %5205 = vmatpush2.bf16.msra.mxu0 0
    %5206 = vmatprep.mubr.bf16.mxu0 0
    %5207 = vmatmul.mubr.bf16.gmra.mxu0 %v5172
    %v5208 = vpop.f32.mrf.mxu0
    %v5209 = vadd.f32 0.0, %v5208
    %v5210 = vpop.f32.mrf.mxu0
    %v5211 = vpop.f32.mrf.mxu0
    %v5212 = vpop.f32.mrf.mxu0
    %5213 = vdwg.mxu0
    %v5214 = vadd.f32 %v4740, %v5209
    %v5215 = vld [vmem:[#allocation2 + $0x130] sm:$0xff]
    %v5216 = vpack.c.bf16 %v5215, %v5215
    %s5217 = scalar_lea.vmem [#allocation8], 1216
    %v5218 = vld [vmem:[%s5217] sm:$0xf]
    %v5219 = vld [vmem:[%s5217 + $0x4] sm:$0xf]
    %v5220 = vld [vmem:[%s5217 + $0x8] sm:$0xf]
    %v5221 = vld [vmem:[%s5217 + $0xc] sm:$0xf]
    %v5222 = vld [vmem:[%s5217 + $0x10] sm:$0xf]
    %v5223 = vld [vmem:[%s5217 + $0x14] sm:$0xf]
    %v5224 = vld [vmem:[%s5217 + $0x18] sm:$0xf]
    %v5225 = vld [vmem:[%s5217 + $0x1c] sm:$0xf]
    %v5234 = vunpack.c.l.b16 %v5218
    %v5235 = vunpack.c.l.b16 %v5219
    %v5236 = vunpack.c.l.b16 %v5220
    %v5237 = vunpack.c.l.b16 %v5221
    %v5238 = vunpack.c.l.b16 %v5222
    %v5239 = vunpack.c.l.b16 %v5223
    %v5240 = vunpack.c.l.b16 %v5224
    %v5241 = vunpack.c.l.b16 %v5225
    %v5242 = vpack.c.b16 %v5235, %v5234
    %v5243 = vpack.c.b16 %v5237, %v5236
    %v5244 = vpack.c.b16 %v5239, %v5238
    %v5245 = vpack.c.b16 %v5241, %v5240
    %v5251 = vsel %vm2135, %v5216, 0
    %5253 = vmatprep.subr.bf16.mxu0 0
    %5254 = vmatpush1.bf16.msra.mxu0 0
    %5255 = vmatprep.subr.bf16.mxu0 0
    %5256 = vmatpush1.bf16.msra.mxu0 0
    %5257 = vmatprep.subr.bf16.mxu0 0
    %5258 = vmatpush1.bf16.msra.mxu0 0
    %5259 = vmatprep.subr.bf16.mxu0 0
    %5260 = vmatpush1.bf16.msra.mxu0 0
    %5261 = vmatprep.subr.bf16.mxu0 0
    %5262 = vmatpush1.bf16.msra.mxu0 %v5245
    %5263 = vmatprep.subr.bf16.mxu0 0
    %5264 = vmatpush1.bf16.msra.mxu0 %v5244
    %5265 = vmatprep.subr.bf16.mxu0 0
    %5266 = vmatpush1.bf16.msra.mxu0 %v5243
    %5267 = vmatprep.subr.bf16.mxu0 0
    %5268 = vmatpush1.bf16.msra.mxu0 %v5242
    %5269 = vmatprep.subr.bf16.mxu0 0
    %5270 = vmatpush2.bf16.msra.mxu0 0
    %5271 = vmatprep.subr.bf16.mxu0 0
    %5272 = vmatpush2.bf16.msra.mxu0 0
    %5273 = vmatprep.subr.bf16.mxu0 0
    %5274 = vmatpush2.bf16.msra.mxu0 0
    %5275 = vmatprep.subr.bf16.mxu0 0
    %5276 = vmatpush2.bf16.msra.mxu0 0
    %5277 = vmatprep.subr.bf16.mxu0 0
    %5278 = vmatpush2.bf16.msra.mxu0 0
    %5279 = vmatprep.subr.bf16.mxu0 0
    %5280 = vmatpush2.bf16.msra.mxu0 0
    %5281 = vmatprep.subr.bf16.mxu0 0
    %5282 = vmatpush2.bf16.msra.mxu0 0
    %5283 = vmatprep.subr.bf16.mxu0 0
    %5284 = vmatpush2.bf16.msra.mxu0 0
    %5285 = vmatprep.mubr.bf16.mxu0 0
    %5286 = vmatmul.mubr.bf16.gmra.mxu0 %v5251
    %v5287 = vpop.f32.mrf.mxu0
    %v5288 = vadd.f32 0.0, %v5287
    %v5289 = vpop.f32.mrf.mxu0
    %v5290 = vpop.f32.mrf.mxu0
    %v5291 = vpop.f32.mrf.mxu0
    %5292 = vdwg.mxu0
    %v5293 = vadd.f32 %v4819, %v5288
    %v5294 = vld [vmem:[#allocation2 + $0x138] sm:$0xff]
    %v5295 = vpack.c.bf16 %v5294, %v5294
    %s5296 = scalar_lea.vmem [#allocation8], 1248
    %v5297 = vld [vmem:[%s5296] sm:$0xf]
    %v5298 = vld [vmem:[%s5296 + $0x4] sm:$0xf]
    %v5299 = vld [vmem:[%s5296 + $0x8] sm:$0xf]
    %v5300 = vld [vmem:[%s5296 + $0xc] sm:$0xf]
    %v5301 = vld [vmem:[%s5296 + $0x10] sm:$0xf]
    %v5302 = vld [vmem:[%s5296 + $0x14] sm:$0xf]
    %v5303 = vld [vmem:[%s5296 + $0x18] sm:$0xf]
    %v5304 = vld [vmem:[%s5296 + $0x1c] sm:$0xf]
    %v5313 = vunpack.c.l.b16 %v5297
    %v5314 = vunpack.c.l.b16 %v5298
    %v5315 = vunpack.c.l.b16 %v5299
    %v5316 = vunpack.c.l.b16 %v5300
    %v5317 = vunpack.c.l.b16 %v5301
    %v5318 = vunpack.c.l.b16 %v5302
    %v5319 = vunpack.c.l.b16 %v5303
    %v5320 = vunpack.c.l.b16 %v5304
    %v5321 = vpack.c.b16 %v5314, %v5313
    %v5322 = vpack.c.b16 %v5316, %v5315
    %v5323 = vpack.c.b16 %v5318, %v5317
    %v5324 = vpack.c.b16 %v5320, %v5319
    %v5330 = vsel %vm2135, %v5295, 0
    %5332 = vmatprep.subr.bf16.mxu0 0
    %5333 = vmatpush1.bf16.msra.mxu0 0
    %5334 = vmatprep.subr.bf16.mxu0 0
    %5335 = vmatpush1.bf16.msra.mxu0 0
    %5336 = vmatprep.subr.bf16.mxu0 0
    %5337 = vmatpush1.bf16.msra.mxu0 0
    %5338 = vmatprep.subr.bf16.mxu0 0
    %5339 = vmatpush1.bf16.msra.mxu0 0
    %5340 = vmatprep.subr.bf16.mxu0 0
    %5341 = vmatpush1.bf16.msra.mxu0 %v5324
    %5342 = vmatprep.subr.bf16.mxu0 0
    %5343 = vmatpush1.bf16.msra.mxu0 %v5323
    %5344 = vmatprep.subr.bf16.mxu0 0
    %5345 = vmatpush1.bf16.msra.mxu0 %v5322
    %5346 = vmatprep.subr.bf16.mxu0 0
    %5347 = vmatpush1.bf16.msra.mxu0 %v5321
    %5348 = vmatprep.subr.bf16.mxu0 0
    %5349 = vmatpush2.bf16.msra.mxu0 0
    %5350 = vmatprep.subr.bf16.mxu0 0
    %5351 = vmatpush2.bf16.msra.mxu0 0
    %5352 = vmatprep.subr.bf16.mxu0 0
    %5353 = vmatpush2.bf16.msra.mxu0 0
    %5354 = vmatprep.subr.bf16.mxu0 0
    %5355 = vmatpush2.bf16.msra.mxu0 0
    %5356 = vmatprep.subr.bf16.mxu0 0
    %5357 = vmatpush2.bf16.msra.mxu0 0
    %5358 = vmatprep.subr.bf16.mxu0 0
    %5359 = vmatpush2.bf16.msra.mxu0 0
    %5360 = vmatprep.subr.bf16.mxu0 0
    %5361 = vmatpush2.bf16.msra.mxu0 0
    %5362 = vmatprep.subr.bf16.mxu0 0
    %5363 = vmatpush2.bf16.msra.mxu0 0
    %5364 = vmatprep.mubr.bf16.mxu0 0
    %5365 = vmatmul.mubr.bf16.gmra.mxu0 %v5330
    %v5366 = vpop.f32.mrf.mxu0
    %v5367 = vadd.f32 0.0, %v5366
    %v5368 = vpop.f32.mrf.mxu0
    %v5369 = vpop.f32.mrf.mxu0
    %v5370 = vpop.f32.mrf.mxu0
    %5371 = vdwg.mxu0
    %v5372 = vadd.f32 %v4898, %v5367
    %v5373 = vld [vmem:[#allocation2 + $0x140] sm:$0xff]
    %v5374 = vpack.c.bf16 %v5373, %v5373
    %s5375 = scalar_lea.vmem [#allocation8], 1280
    %v5376 = vld [vmem:[%s5375] sm:$0xf]
    %v5377 = vld [vmem:[%s5375 + $0x4] sm:$0xf]
    %v5378 = vld [vmem:[%s5375 + $0x8] sm:$0xf]
    %v5379 = vld [vmem:[%s5375 + $0xc] sm:$0xf]
    %v5380 = vld [vmem:[%s5375 + $0x10] sm:$0xf]
    %v5381 = vld [vmem:[%s5375 + $0x14] sm:$0xf]
    %v5382 = vld [vmem:[%s5375 + $0x18] sm:$0xf]
    %v5383 = vld [vmem:[%s5375 + $0x1c] sm:$0xf]
    %v5392 = vunpack.c.l.b16 %v5376
    %v5393 = vunpack.c.l.b16 %v5377
    %v5394 = vunpack.c.l.b16 %v5378
    %v5395 = vunpack.c.l.b16 %v5379
    %v5396 = vunpack.c.l.b16 %v5380
    %v5397 = vunpack.c.l.b16 %v5381
    %v5398 = vunpack.c.l.b16 %v5382
    %v5399 = vunpack.c.l.b16 %v5383
    %v5400 = vpack.c.b16 %v5393, %v5392
    %v5401 = vpack.c.b16 %v5395, %v5394
    %v5402 = vpack.c.b16 %v5397, %v5396
    %v5403 = vpack.c.b16 %v5399, %v5398
    %v5409 = vsel %vm2135, %v5374, 0
    %5411 = vmatprep.subr.bf16.mxu0 0
    %5412 = vmatpush1.bf16.msra.mxu0 0
    %5413 = vmatprep.subr.bf16.mxu0 0
    %5414 = vmatpush1.bf16.msra.mxu0 0
    %5415 = vmatprep.subr.bf16.mxu0 0
    %5416 = vmatpush1.bf16.msra.mxu0 0
    %5417 = vmatprep.subr.bf16.mxu0 0
    %5418 = vmatpush1.bf16.msra.mxu0 0
    %5419 = vmatprep.subr.bf16.mxu0 0
    %5420 = vmatpush1.bf16.msra.mxu0 %v5403
    %5421 = vmatprep.subr.bf16.mxu0 0
    %5422 = vmatpush1.bf16.msra.mxu0 %v5402
    %5423 = vmatprep.subr.bf16.mxu0 0
    %5424 = vmatpush1.bf16.msra.mxu0 %v5401
    %5425 = vmatprep.subr.bf16.mxu0 0
    %5426 = vmatpush1.bf16.msra.mxu0 %v5400
    %5427 = vmatprep.subr.bf16.mxu0 0
    %5428 = vmatpush2.bf16.msra.mxu0 0
    %5429 = vmatprep.subr.bf16.mxu0 0
    %5430 = vmatpush2.bf16.msra.mxu0 0
    %5431 = vmatprep.subr.bf16.mxu0 0
    %5432 = vmatpush2.bf16.msra.mxu0 0
    %5433 = vmatprep.subr.bf16.mxu0 0
    %5434 = vmatpush2.bf16.msra.mxu0 0
    %5435 = vmatprep.subr.bf16.mxu0 0
    %5436 = vmatpush2.bf16.msra.mxu0 0
    %5437 = vmatprep.subr.bf16.mxu0 0
    %5438 = vmatpush2.bf16.msra.mxu0 0
    %5439 = vmatprep.subr.bf16.mxu0 0
    %5440 = vmatpush2.bf16.msra.mxu0 0
    %5441 = vmatprep.subr.bf16.mxu0 0
    %5442 = vmatpush2.bf16.msra.mxu0 0
    %5443 = vmatprep.mubr.bf16.mxu0 0
    %5444 = vmatmul.mubr.bf16.gmra.mxu0 %v5409
    %v5445 = vpop.f32.mrf.mxu0
    %v5446 = vadd.f32 0.0, %v5445
    %v5447 = vpop.f32.mrf.mxu0
    %v5448 = vpop.f32.mrf.mxu0
    %v5449 = vpop.f32.mrf.mxu0
    %5450 = vdwg.mxu0
    %v5451 = vadd.f32 %v4977, %v5446
    %v5452 = vld [vmem:[#allocation2 + $0x148] sm:$0xff]
    %v5453 = vpack.c.bf16 %v5452, %v5452
    %s5454 = scalar_lea.vmem [#allocation8], 1312
    %v5455 = vld [vmem:[%s5454] sm:$0xf]
    %v5456 = vld [vmem:[%s5454 + $0x4] sm:$0xf]
    %v5457 = vld [vmem:[%s5454 + $0x8] sm:$0xf]
    %v5458 = vld [vmem:[%s5454 + $0xc] sm:$0xf]
    %v5459 = vld [vmem:[%s5454 + $0x10] sm:$0xf]
    %v5460 = vld [vmem:[%s5454 + $0x14] sm:$0xf]
    %v5461 = vld [vmem:[%s5454 + $0x18] sm:$0xf]
    %v5462 = vld [vmem:[%s5454 + $0x1c] sm:$0xf]
    %v5471 = vunpack.c.l.b16 %v5455
    %v5472 = vunpack.c.l.b16 %v5456
    %v5473 = vunpack.c.l.b16 %v5457
    %v5474 = vunpack.c.l.b16 %v5458
    %v5475 = vunpack.c.l.b16 %v5459
    %v5476 = vunpack.c.l.b16 %v5460
    %v5477 = vunpack.c.l.b16 %v5461
    %v5478 = vunpack.c.l.b16 %v5462
    %v5479 = vpack.c.b16 %v5472, %v5471
    %v5480 = vpack.c.b16 %v5474, %v5473
    %v5481 = vpack.c.b16 %v5476, %v5475
    %v5482 = vpack.c.b16 %v5478, %v5477
    %v5488 = vsel %vm2135, %v5453, 0
    %5490 = vmatprep.subr.bf16.mxu0 0
    %5491 = vmatpush1.bf16.msra.mxu0 0
    %5492 = vmatprep.subr.bf16.mxu0 0
    %5493 = vmatpush1.bf16.msra.mxu0 0
    %5494 = vmatprep.subr.bf16.mxu0 0
    %5495 = vmatpush1.bf16.msra.mxu0 0
    %5496 = vmatprep.subr.bf16.mxu0 0
    %5497 = vmatpush1.bf16.msra.mxu0 0
    %5498 = vmatprep.subr.bf16.mxu0 0
    %5499 = vmatpush1.bf16.msra.mxu0 %v5482
    %5500 = vmatprep.subr.bf16.mxu0 0
    %5501 = vmatpush1.bf16.msra.mxu0 %v5481
    %5502 = vmatprep.subr.bf16.mxu0 0
    %5503 = vmatpush1.bf16.msra.mxu0 %v5480
    %5504 = vmatprep.subr.bf16.mxu0 0
    %5505 = vmatpush1.bf16.msra.mxu0 %v5479
    %5506 = vmatprep.subr.bf16.mxu0 0
    %5507 = vmatpush2.bf16.msra.mxu0 0
    %5508 = vmatprep.subr.bf16.mxu0 0
    %5509 = vmatpush2.bf16.msra.mxu0 0
    %5510 = vmatprep.subr.bf16.mxu0 0
    %5511 = vmatpush2.bf16.msra.mxu0 0
    %5512 = vmatprep.subr.bf16.mxu0 0
    %5513 = vmatpush2.bf16.msra.mxu0 0
    %5514 = vmatprep.subr.bf16.mxu0 0
    %5515 = vmatpush2.bf16.msra.mxu0 0
    %5516 = vmatprep.subr.bf16.mxu0 0
    %5517 = vmatpush2.bf16.msra.mxu0 0
    %5518 = vmatprep.subr.bf16.mxu0 0
    %5519 = vmatpush2.bf16.msra.mxu0 0
    %5520 = vmatprep.subr.bf16.mxu0 0
    %5521 = vmatpush2.bf16.msra.mxu0 0
    %5522 = vmatprep.mubr.bf16.mxu0 0
    %5523 = vmatmul.mubr.bf16.gmra.mxu0 %v5488
    %v5524 = vpop.f32.mrf.mxu0
    %v5525 = vadd.f32 0.0, %v5524
    %v5526 = vpop.f32.mrf.mxu0
    %v5527 = vpop.f32.mrf.mxu0
    %v5528 = vpop.f32.mrf.mxu0
    %5529 = vdwg.mxu0
    %v5530 = vadd.f32 %v5056, %v5525
    %v5531 = vld [vmem:[#allocation2 + $0x150] sm:$0xff]
    %v5532 = vpack.c.bf16 %v5531, %v5531
    %s5533 = scalar_lea.vmem [#allocation8], 1344
    %v5534 = vld [vmem:[%s5533] sm:$0xf]
    %v5535 = vld [vmem:[%s5533 + $0x4] sm:$0xf]
    %v5536 = vld [vmem:[%s5533 + $0x8] sm:$0xf]
    %v5537 = vld [vmem:[%s5533 + $0xc] sm:$0xf]
    %v5538 = vld [vmem:[%s5533 + $0x10] sm:$0xf]
    %v5539 = vld [vmem:[%s5533 + $0x14] sm:$0xf]
    %v5540 = vld [vmem:[%s5533 + $0x18] sm:$0xf]
    %v5541 = vld [vmem:[%s5533 + $0x1c] sm:$0xf]
    %v5550 = vunpack.c.l.b16 %v5534
    %v5551 = vunpack.c.l.b16 %v5535
    %v5552 = vunpack.c.l.b16 %v5536
    %v5553 = vunpack.c.l.b16 %v5537
    %v5554 = vunpack.c.l.b16 %v5538
    %v5555 = vunpack.c.l.b16 %v5539
    %v5556 = vunpack.c.l.b16 %v5540
    %v5557 = vunpack.c.l.b16 %v5541
    %v5558 = vpack.c.b16 %v5551, %v5550
    %v5559 = vpack.c.b16 %v5553, %v5552
    %v5560 = vpack.c.b16 %v5555, %v5554
    %v5561 = vpack.c.b16 %v5557, %v5556
    %v5567 = vsel %vm2135, %v5532, 0
    %5569 = vmatprep.subr.bf16.mxu0 0
    %5570 = vmatpush1.bf16.msra.mxu0 0
    %5571 = vmatprep.subr.bf16.mxu0 0
    %5572 = vmatpush1.bf16.msra.mxu0 0
    %5573 = vmatprep.subr.bf16.mxu0 0
    %5574 = vmatpush1.bf16.msra.mxu0 0
    %5575 = vmatprep.subr.bf16.mxu0 0
    %5576 = vmatpush1.bf16.msra.mxu0 0
    %5577 = vmatprep.subr.bf16.mxu0 0
    %5578 = vmatpush1.bf16.msra.mxu0 %v5561
    %5579 = vmatprep.subr.bf16.mxu0 0
    %5580 = vmatpush1.bf16.msra.mxu0 %v5560
    %5581 = vmatprep.subr.bf16.mxu0 0
    %5582 = vmatpush1.bf16.msra.mxu0 %v5559
    %5583 = vmatprep.subr.bf16.mxu0 0
    %5584 = vmatpush1.bf16.msra.mxu0 %v5558
    %5585 = vmatprep.subr.bf16.mxu0 0
    %5586 = vmatpush2.bf16.msra.mxu0 0
    %5587 = vmatprep.subr.bf16.mxu0 0
    %5588 = vmatpush2.bf16.msra.mxu0 0
    %5589 = vmatprep.subr.bf16.mxu0 0
    %5590 = vmatpush2.bf16.msra.mxu0 0
    %5591 = vmatprep.subr.bf16.mxu0 0
    %5592 = vmatpush2.bf16.msra.mxu0 0
    %5593 = vmatprep.subr.bf16.mxu0 0
    %5594 = vmatpush2.bf16.msra.mxu0 0
    %5595 = vmatprep.subr.bf16.mxu0 0
    %5596 = vmatpush2.bf16.msra.mxu0 0
    %5597 = vmatprep.subr.bf16.mxu0 0
    %5598 = vmatpush2.bf16.msra.mxu0 0
    %5599 = vmatprep.subr.bf16.mxu0 0
    %5600 = vmatpush2.bf16.msra.mxu0 0
    %5601 = vmatprep.mubr.bf16.mxu0 0
    %5602 = vmatmul.mubr.bf16.gmra.mxu0 %v5567
    %v5603 = vpop.f32.mrf.mxu0
    %v5604 = vadd.f32 0.0, %v5603
    %v5605 = vpop.f32.mrf.mxu0
    %v5606 = vpop.f32.mrf.mxu0
    %v5607 = vpop.f32.mrf.mxu0
    %5608 = vdwg.mxu0
    %v5609 = vadd.f32 %v5135, %v5604
    %v5610 = vld [vmem:[#allocation2 + $0x158] sm:$0xff]
    %v5611 = vpack.c.bf16 %v5610, %v5610
    %s5612 = scalar_lea.vmem [#allocation8], 1376
    %v5613 = vld [vmem:[%s5612] sm:$0xf]
    %v5614 = vld [vmem:[%s5612 + $0x4] sm:$0xf]
    %v5615 = vld [vmem:[%s5612 + $0x8] sm:$0xf]
    %v5616 = vld [vmem:[%s5612 + $0xc] sm:$0xf]
    %v5617 = vld [vmem:[%s5612 + $0x10] sm:$0xf]
    %v5618 = vld [vmem:[%s5612 + $0x14] sm:$0xf]
    %v5619 = vld [vmem:[%s5612 + $0x18] sm:$0xf]
    %v5620 = vld [vmem:[%s5612 + $0x1c] sm:$0xf]
    %v5629 = vunpack.c.l.b16 %v5613
    %v5630 = vunpack.c.l.b16 %v5614
    %v5631 = vunpack.c.l.b16 %v5615
    %v5632 = vunpack.c.l.b16 %v5616
    %v5633 = vunpack.c.l.b16 %v5617
    %v5634 = vunpack.c.l.b16 %v5618
    %v5635 = vunpack.c.l.b16 %v5619
    %v5636 = vunpack.c.l.b16 %v5620
    %v5637 = vpack.c.b16 %v5630, %v5629
    %v5638 = vpack.c.b16 %v5632, %v5631
    %v5639 = vpack.c.b16 %v5634, %v5633
    %v5640 = vpack.c.b16 %v5636, %v5635
    %v5646 = vsel %vm2135, %v5611, 0
    %5648 = vmatprep.subr.bf16.mxu0 0
    %5649 = vmatpush1.bf16.msra.mxu0 0
    %5650 = vmatprep.subr.bf16.mxu0 0
    %5651 = vmatpush1.bf16.msra.mxu0 0
    %5652 = vmatprep.subr.bf16.mxu0 0
    %5653 = vmatpush1.bf16.msra.mxu0 0
    %5654 = vmatprep.subr.bf16.mxu0 0
    %5655 = vmatpush1.bf16.msra.mxu0 0
    %5656 = vmatprep.subr.bf16.mxu0 0
    %5657 = vmatpush1.bf16.msra.mxu0 %v5640
    %5658 = vmatprep.subr.bf16.mxu0 0
    %5659 = vmatpush1.bf16.msra.mxu0 %v5639
    %5660 = vmatprep.subr.bf16.mxu0 0
    %5661 = vmatpush1.bf16.msra.mxu0 %v5638
    %5662 = vmatprep.subr.bf16.mxu0 0
    %5663 = vmatpush1.bf16.msra.mxu0 %v5637
    %5664 = vmatprep.subr.bf16.mxu0 0
    %5665 = vmatpush2.bf16.msra.mxu0 0
    %5666 = vmatprep.subr.bf16.mxu0 0
    %5667 = vmatpush2.bf16.msra.mxu0 0
    %5668 = vmatprep.subr.bf16.mxu0 0
    %5669 = vmatpush2.bf16.msra.mxu0 0
    %5670 = vmatprep.subr.bf16.mxu0 0
    %5671 = vmatpush2.bf16.msra.mxu0 0
    %5672 = vmatprep.subr.bf16.mxu0 0
    %5673 = vmatpush2.bf16.msra.mxu0 0
    %5674 = vmatprep.subr.bf16.mxu0 0
    %5675 = vmatpush2.bf16.msra.mxu0 0
    %5676 = vmatprep.subr.bf16.mxu0 0
    %5677 = vmatpush2.bf16.msra.mxu0 0
    %5678 = vmatprep.subr.bf16.mxu0 0
    %5679 = vmatpush2.bf16.msra.mxu0 0
    %5680 = vmatprep.mubr.bf16.mxu0 0
    %5681 = vmatmul.mubr.bf16.gmra.mxu0 %v5646
    %v5682 = vpop.f32.mrf.mxu0
    %v5683 = vadd.f32 0.0, %v5682
    %v5684 = vpop.f32.mrf.mxu0
    %v5685 = vpop.f32.mrf.mxu0
    %v5686 = vpop.f32.mrf.mxu0
    %5687 = vdwg.mxu0
    %v5688 = vadd.f32 %v5214, %v5683
    %v5689 = vld [vmem:[#allocation2 + $0x160] sm:$0xff]
    %v5690 = vpack.c.bf16 %v5689, %v5689
    %s5691 = scalar_lea.vmem [#allocation8], 1408
    %v5692 = vld [vmem:[%s5691] sm:$0xf]
    %v5693 = vld [vmem:[%s5691 + $0x4] sm:$0xf]
    %v5694 = vld [vmem:[%s5691 + $0x8] sm:$0xf]
    %v5695 = vld [vmem:[%s5691 + $0xc] sm:$0xf]
    %v5696 = vld [vmem:[%s5691 + $0x10] sm:$0xf]
    %v5697 = vld [vmem:[%s5691 + $0x14] sm:$0xf]
    %v5698 = vld [vmem:[%s5691 + $0x18] sm:$0xf]
    %v5699 = vld [vmem:[%s5691 + $0x1c] sm:$0xf]
    %v5708 = vunpack.c.l.b16 %v5692
    %v5709 = vunpack.c.l.b16 %v5693
    %v5710 = vunpack.c.l.b16 %v5694
    %v5711 = vunpack.c.l.b16 %v5695
    %v5712 = vunpack.c.l.b16 %v5696
    %v5713 = vunpack.c.l.b16 %v5697
    %v5714 = vunpack.c.l.b16 %v5698
    %v5715 = vunpack.c.l.b16 %v5699
    %v5716 = vpack.c.b16 %v5709, %v5708
    %v5717 = vpack.c.b16 %v5711, %v5710
    %v5718 = vpack.c.b16 %v5713, %v5712
    %v5719 = vpack.c.b16 %v5715, %v5714
    %v5725 = vsel %vm2135, %v5690, 0
    %5727 = vmatprep.subr.bf16.mxu0 0
    %5728 = vmatpush1.bf16.msra.mxu0 0
    %5729 = vmatprep.subr.bf16.mxu0 0
    %5730 = vmatpush1.bf16.msra.mxu0 0
    %5731 = vmatprep.subr.bf16.mxu0 0
    %5732 = vmatpush1.bf16.msra.mxu0 0
    %5733 = vmatprep.subr.bf16.mxu0 0
    %5734 = vmatpush1.bf16.msra.mxu0 0
    %5735 = vmatprep.subr.bf16.mxu0 0
    %5736 = vmatpush1.bf16.msra.mxu0 %v5719
    %5737 = vmatprep.subr.bf16.mxu0 0
    %5738 = vmatpush1.bf16.msra.mxu0 %v5718
    %5739 = vmatprep.subr.bf16.mxu0 0
    %5740 = vmatpush1.bf16.msra.mxu0 %v5717
    %5741 = vmatprep.subr.bf16.mxu0 0
    %5742 = vmatpush1.bf16.msra.mxu0 %v5716
    %5743 = vmatprep.subr.bf16.mxu0 0
    %5744 = vmatpush2.bf16.msra.mxu0 0
    %5745 = vmatprep.subr.bf16.mxu0 0
    %5746 = vmatpush2.bf16.msra.mxu0 0
    %5747 = vmatprep.subr.bf16.mxu0 0
    %5748 = vmatpush2.bf16.msra.mxu0 0
    %5749 = vmatprep.subr.bf16.mxu0 0
    %5750 = vmatpush2.bf16.msra.mxu0 0
    %5751 = vmatprep.subr.bf16.mxu0 0
    %5752 = vmatpush2.bf16.msra.mxu0 0
    %5753 = vmatprep.subr.bf16.mxu0 0
    %5754 = vmatpush2.bf16.msra.mxu0 0
    %5755 = vmatprep.subr.bf16.mxu0 0
    %5756 = vmatpush2.bf16.msra.mxu0 0
    %5757 = vmatprep.subr.bf16.mxu0 0
    %5758 = vmatpush2.bf16.msra.mxu0 0
    %5759 = vmatprep.mubr.bf16.mxu0 0
    %5760 = vmatmul.mubr.bf16.gmra.mxu0 %v5725
    %v5761 = vpop.f32.mrf.mxu0
    %v5762 = vadd.f32 0.0, %v5761
    %v5763 = vpop.f32.mrf.mxu0
    %v5764 = vpop.f32.mrf.mxu0
    %v5765 = vpop.f32.mrf.mxu0
    %5766 = vdwg.mxu0
    %v5767 = vadd.f32 %v5293, %v5762
    %v5768 = vld [vmem:[#allocation2 + $0x168] sm:$0xff]
    %v5769 = vpack.c.bf16 %v5768, %v5768
    %s5770 = scalar_lea.vmem [#allocation8], 1440
    %v5771 = vld [vmem:[%s5770] sm:$0xf]
    %v5772 = vld [vmem:[%s5770 + $0x4] sm:$0xf]
    %v5773 = vld [vmem:[%s5770 + $0x8] sm:$0xf]
    %v5774 = vld [vmem:[%s5770 + $0xc] sm:$0xf]
    %v5775 = vld [vmem:[%s5770 + $0x10] sm:$0xf]
    %v5776 = vld [vmem:[%s5770 + $0x14] sm:$0xf]
    %v5777 = vld [vmem:[%s5770 + $0x18] sm:$0xf]
    %v5778 = vld [vmem:[%s5770 + $0x1c] sm:$0xf]
    %v5787 = vunpack.c.l.b16 %v5771
    %v5788 = vunpack.c.l.b16 %v5772
    %v5789 = vunpack.c.l.b16 %v5773
    %v5790 = vunpack.c.l.b16 %v5774
    %v5791 = vunpack.c.l.b16 %v5775
    %v5792 = vunpack.c.l.b16 %v5776
    %v5793 = vunpack.c.l.b16 %v5777
    %v5794 = vunpack.c.l.b16 %v5778
    %v5795 = vpack.c.b16 %v5788, %v5787
    %v5796 = vpack.c.b16 %v5790, %v5789
    %v5797 = vpack.c.b16 %v5792, %v5791
    %v5798 = vpack.c.b16 %v5794, %v5793
    %v5804 = vsel %vm2135, %v5769, 0
    %5806 = vmatprep.subr.bf16.mxu0 0
    %5807 = vmatpush1.bf16.msra.mxu0 0
    %5808 = vmatprep.subr.bf16.mxu0 0
    %5809 = vmatpush1.bf16.msra.mxu0 0
    %5810 = vmatprep.subr.bf16.mxu0 0
    %5811 = vmatpush1.bf16.msra.mxu0 0
    %5812 = vmatprep.subr.bf16.mxu0 0
    %5813 = vmatpush1.bf16.msra.mxu0 0
    %5814 = vmatprep.subr.bf16.mxu0 0
    %5815 = vmatpush1.bf16.msra.mxu0 %v5798
    %5816 = vmatprep.subr.bf16.mxu0 0
    %5817 = vmatpush1.bf16.msra.mxu0 %v5797
    %5818 = vmatprep.subr.bf16.mxu0 0
    %5819 = vmatpush1.bf16.msra.mxu0 %v5796
    %5820 = vmatprep.subr.bf16.mxu0 0
    %5821 = vmatpush1.bf16.msra.mxu0 %v5795
    %5822 = vmatprep.subr.bf16.mxu0 0
    %5823 = vmatpush2.bf16.msra.mxu0 0
    %5824 = vmatprep.subr.bf16.mxu0 0
    %5825 = vmatpush2.bf16.msra.mxu0 0
    %5826 = vmatprep.subr.bf16.mxu0 0
    %5827 = vmatpush2.bf16.msra.mxu0 0
    %5828 = vmatprep.subr.bf16.mxu0 0
    %5829 = vmatpush2.bf16.msra.mxu0 0
    %5830 = vmatprep.subr.bf16.mxu0 0
    %5831 = vmatpush2.bf16.msra.mxu0 0
    %5832 = vmatprep.subr.bf16.mxu0 0
    %5833 = vmatpush2.bf16.msra.mxu0 0
    %5834 = vmatprep.subr.bf16.mxu0 0
    %5835 = vmatpush2.bf16.msra.mxu0 0
    %5836 = vmatprep.subr.bf16.mxu0 0
    %5837 = vmatpush2.bf16.msra.mxu0 0
    %5838 = vmatprep.mubr.bf16.mxu0 0
    %5839 = vmatmul.mubr.bf16.gmra.mxu0 %v5804
    %v5840 = vpop.f32.mrf.mxu0
    %v5841 = vadd.f32 0.0, %v5840
    %v5842 = vpop.f32.mrf.mxu0
    %v5843 = vpop.f32.mrf.mxu0
    %v5844 = vpop.f32.mrf.mxu0
    %5845 = vdwg.mxu0
    %v5846 = vadd.f32 %v5372, %v5841
    %v5847 = vld [vmem:[#allocation2 + $0x170] sm:$0xff]
    %v5848 = vpack.c.bf16 %v5847, %v5847
    %s5849 = scalar_lea.vmem [#allocation8], 1472
    %v5850 = vld [vmem:[%s5849] sm:$0xf]
    %v5851 = vld [vmem:[%s5849 + $0x4] sm:$0xf]
    %v5852 = vld [vmem:[%s5849 + $0x8] sm:$0xf]
    %v5853 = vld [vmem:[%s5849 + $0xc] sm:$0xf]
    %v5854 = vld [vmem:[%s5849 + $0x10] sm:$0xf]
    %v5855 = vld [vmem:[%s5849 + $0x14] sm:$0xf]
    %v5856 = vld [vmem:[%s5849 + $0x18] sm:$0xf]
    %v5857 = vld [vmem:[%s5849 + $0x1c] sm:$0xf]
    %v5866 = vunpack.c.l.b16 %v5850
    %v5867 = vunpack.c.l.b16 %v5851
    %v5868 = vunpack.c.l.b16 %v5852
    %v5869 = vunpack.c.l.b16 %v5853
    %v5870 = vunpack.c.l.b16 %v5854
    %v5871 = vunpack.c.l.b16 %v5855
    %v5872 = vunpack.c.l.b16 %v5856
    %v5873 = vunpack.c.l.b16 %v5857
    %v5874 = vpack.c.b16 %v5867, %v5866
    %v5875 = vpack.c.b16 %v5869, %v5868
    %v5876 = vpack.c.b16 %v5871, %v5870
    %v5877 = vpack.c.b16 %v5873, %v5872
    %v5883 = vsel %vm2135, %v5848, 0
    %5885 = vmatprep.subr.bf16.mxu0 0
    %5886 = vmatpush1.bf16.msra.mxu0 0
    %5887 = vmatprep.subr.bf16.mxu0 0
    %5888 = vmatpush1.bf16.msra.mxu0 0
    %5889 = vmatprep.subr.bf16.mxu0 0
    %5890 = vmatpush1.bf16.msra.mxu0 0
    %5891 = vmatprep.subr.bf16.mxu0 0
    %5892 = vmatpush1.bf16.msra.mxu0 0
    %5893 = vmatprep.subr.bf16.mxu0 0
    %5894 = vmatpush1.bf16.msra.mxu0 %v5877
    %5895 = vmatprep.subr.bf16.mxu0 0
    %5896 = vmatpush1.bf16.msra.mxu0 %v5876
    %5897 = vmatprep.subr.bf16.mxu0 0
    %5898 = vmatpush1.bf16.msra.mxu0 %v5875
    %5899 = vmatprep.subr.bf16.mxu0 0
    %5900 = vmatpush1.bf16.msra.mxu0 %v5874
    %5901 = vmatprep.subr.bf16.mxu0 0
    %5902 = vmatpush2.bf16.msra.mxu0 0
    %5903 = vmatprep.subr.bf16.mxu0 0
    %5904 = vmatpush2.bf16.msra.mxu0 0
    %5905 = vmatprep.subr.bf16.mxu0 0
    %5906 = vmatpush2.bf16.msra.mxu0 0
    %5907 = vmatprep.subr.bf16.mxu0 0
    %5908 = vmatpush2.bf16.msra.mxu0 0
    %5909 = vmatprep.subr.bf16.mxu0 0
    %5910 = vmatpush2.bf16.msra.mxu0 0
    %5911 = vmatprep.subr.bf16.mxu0 0
    %5912 = vmatpush2.bf16.msra.mxu0 0
    %5913 = vmatprep.subr.bf16.mxu0 0
    %5914 = vmatpush2.bf16.msra.mxu0 0
    %5915 = vmatprep.subr.bf16.mxu0 0
    %5916 = vmatpush2.bf16.msra.mxu0 0
    %5917 = vmatprep.mubr.bf16.mxu0 0
    %5918 = vmatmul.mubr.bf16.gmra.mxu0 %v5883
    %v5919 = vpop.f32.mrf.mxu0
    %v5920 = vadd.f32 0.0, %v5919
    %v5921 = vpop.f32.mrf.mxu0
    %v5922 = vpop.f32.mrf.mxu0
    %v5923 = vpop.f32.mrf.mxu0
    %5924 = vdwg.mxu0
    %v5925 = vadd.f32 %v5451, %v5920
    %v5926 = vld [vmem:[#allocation2 + $0x178] sm:$0xff]
    %v5927 = vpack.c.bf16 %v5926, %v5926
    %s5928 = scalar_lea.vmem [#allocation8], 1504
    %v5929 = vld [vmem:[%s5928] sm:$0xf]
    %v5930 = vld [vmem:[%s5928 + $0x4] sm:$0xf]
    %v5931 = vld [vmem:[%s5928 + $0x8] sm:$0xf]
    %v5932 = vld [vmem:[%s5928 + $0xc] sm:$0xf]
    %v5933 = vld [vmem:[%s5928 + $0x10] sm:$0xf]
    %v5934 = vld [vmem:[%s5928 + $0x14] sm:$0xf]
    %v5935 = vld [vmem:[%s5928 + $0x18] sm:$0xf]
    %v5936 = vld [vmem:[%s5928 + $0x1c] sm:$0xf]
    %v5945 = vunpack.c.l.b16 %v5929
    %v5946 = vunpack.c.l.b16 %v5930
    %v5947 = vunpack.c.l.b16 %v5931
    %v5948 = vunpack.c.l.b16 %v5932
    %v5949 = vunpack.c.l.b16 %v5933
    %v5950 = vunpack.c.l.b16 %v5934
    %v5951 = vunpack.c.l.b16 %v5935
    %v5952 = vunpack.c.l.b16 %v5936
    %v5953 = vpack.c.b16 %v5946, %v5945
    %v5954 = vpack.c.b16 %v5948, %v5947
    %v5955 = vpack.c.b16 %v5950, %v5949
    %v5956 = vpack.c.b16 %v5952, %v5951
    %v5962 = vsel %vm2135, %v5927, 0
    %5964 = vmatprep.subr.bf16.mxu0 0
    %5965 = vmatpush1.bf16.msra.mxu0 0
    %5966 = vmatprep.subr.bf16.mxu0 0
    %5967 = vmatpush1.bf16.msra.mxu0 0
    %5968 = vmatprep.subr.bf16.mxu0 0
    %5969 = vmatpush1.bf16.msra.mxu0 0
    %5970 = vmatprep.subr.bf16.mxu0 0
    %5971 = vmatpush1.bf16.msra.mxu0 0
    %5972 = vmatprep.subr.bf16.mxu0 0
    %5973 = vmatpush1.bf16.msra.mxu0 %v5956
    %5974 = vmatprep.subr.bf16.mxu0 0
    %5975 = vmatpush1.bf16.msra.mxu0 %v5955
    %5976 = vmatprep.subr.bf16.mxu0 0
    %5977 = vmatpush1.bf16.msra.mxu0 %v5954
    %5978 = vmatprep.subr.bf16.mxu0 0
    %5979 = vmatpush1.bf16.msra.mxu0 %v5953
    %5980 = vmatprep.subr.bf16.mxu0 0
    %5981 = vmatpush2.bf16.msra.mxu0 0
    %5982 = vmatprep.subr.bf16.mxu0 0
    %5983 = vmatpush2.bf16.msra.mxu0 0
    %5984 = vmatprep.subr.bf16.mxu0 0
    %5985 = vmatpush2.bf16.msra.mxu0 0
    %5986 = vmatprep.subr.bf16.mxu0 0
    %5987 = vmatpush2.bf16.msra.mxu0 0
    %5988 = vmatprep.subr.bf16.mxu0 0
    %5989 = vmatpush2.bf16.msra.mxu0 0
    %5990 = vmatprep.subr.bf16.mxu0 0
    %5991 = vmatpush2.bf16.msra.mxu0 0
    %5992 = vmatprep.subr.bf16.mxu0 0
    %5993 = vmatpush2.bf16.msra.mxu0 0
    %5994 = vmatprep.subr.bf16.mxu0 0
    %5995 = vmatpush2.bf16.msra.mxu0 0
    %5996 = vmatprep.mubr.bf16.mxu0 0
    %5997 = vmatmul.mubr.bf16.gmra.mxu0 %v5962
    %v5998 = vpop.f32.mrf.mxu0
    %v5999 = vadd.f32 0.0, %v5998
    %v6000 = vpop.f32.mrf.mxu0
    %v6001 = vpop.f32.mrf.mxu0
    %v6002 = vpop.f32.mrf.mxu0
    %6003 = vdwg.mxu0
    %v6004 = vadd.f32 %v5530, %v5999
    %v6005 = vld [vmem:[#allocation2 + $0x180] sm:$0xff]
    %v6006 = vpack.c.bf16 %v6005, %v6005
    %s6007 = scalar_lea.vmem [#allocation8], 1536
    %v6008 = vld [vmem:[%s6007] sm:$0xf]
    %v6009 = vld [vmem:[%s6007 + $0x4] sm:$0xf]
    %v6010 = vld [vmem:[%s6007 + $0x8] sm:$0xf]
    %v6011 = vld [vmem:[%s6007 + $0xc] sm:$0xf]
    %v6012 = vld [vmem:[%s6007 + $0x10] sm:$0xf]
    %v6013 = vld [vmem:[%s6007 + $0x14] sm:$0xf]
    %v6014 = vld [vmem:[%s6007 + $0x18] sm:$0xf]
    %v6015 = vld [vmem:[%s6007 + $0x1c] sm:$0xf]
    %v6024 = vunpack.c.l.b16 %v6008
    %v6025 = vunpack.c.l.b16 %v6009
    %v6026 = vunpack.c.l.b16 %v6010
    %v6027 = vunpack.c.l.b16 %v6011
    %v6028 = vunpack.c.l.b16 %v6012
    %v6029 = vunpack.c.l.b16 %v6013
    %v6030 = vunpack.c.l.b16 %v6014
    %v6031 = vunpack.c.l.b16 %v6015
    %v6032 = vpack.c.b16 %v6025, %v6024
    %v6033 = vpack.c.b16 %v6027, %v6026
    %v6034 = vpack.c.b16 %v6029, %v6028
    %v6035 = vpack.c.b16 %v6031, %v6030
    %v6041 = vsel %vm2135, %v6006, 0
    %6043 = vmatprep.subr.bf16.mxu0 0
    %6044 = vmatpush1.bf16.msra.mxu0 0
    %6045 = vmatprep.subr.bf16.mxu0 0
    %6046 = vmatpush1.bf16.msra.mxu0 0
    %6047 = vmatprep.subr.bf16.mxu0 0
    %6048 = vmatpush1.bf16.msra.mxu0 0
    %6049 = vmatprep.subr.bf16.mxu0 0
    %6050 = vmatpush1.bf16.msra.mxu0 0
    %6051 = vmatprep.subr.bf16.mxu0 0
    %6052 = vmatpush1.bf16.msra.mxu0 %v6035
    %6053 = vmatprep.subr.bf16.mxu0 0
    %6054 = vmatpush1.bf16.msra.mxu0 %v6034
    %6055 = vmatprep.subr.bf16.mxu0 0
    %6056 = vmatpush1.bf16.msra.mxu0 %v6033
    %6057 = vmatprep.subr.bf16.mxu0 0
    %6058 = vmatpush1.bf16.msra.mxu0 %v6032
    %6059 = vmatprep.subr.bf16.mxu0 0
    %6060 = vmatpush2.bf16.msra.mxu0 0
    %6061 = vmatprep.subr.bf16.mxu0 0
    %6062 = vmatpush2.bf16.msra.mxu0 0
    %6063 = vmatprep.subr.bf16.mxu0 0
    %6064 = vmatpush2.bf16.msra.mxu0 0
    %6065 = vmatprep.subr.bf16.mxu0 0
    %6066 = vmatpush2.bf16.msra.mxu0 0
    %6067 = vmatprep.subr.bf16.mxu0 0
    %6068 = vmatpush2.bf16.msra.mxu0 0
    %6069 = vmatprep.subr.bf16.mxu0 0
    %6070 = vmatpush2.bf16.msra.mxu0 0
    %6071 = vmatprep.subr.bf16.mxu0 0
    %6072 = vmatpush2.bf16.msra.mxu0 0
    %6073 = vmatprep.subr.bf16.mxu0 0
    %6074 = vmatpush2.bf16.msra.mxu0 0
    %6075 = vmatprep.mubr.bf16.mxu0 0
    %6076 = vmatmul.mubr.bf16.gmra.mxu0 %v6041
    %v6077 = vpop.f32.mrf.mxu0
    %v6078 = vadd.f32 0.0, %v6077
    %v6079 = vpop.f32.mrf.mxu0
    %v6080 = vpop.f32.mrf.mxu0
    %v6081 = vpop.f32.mrf.mxu0
    %6082 = vdwg.mxu0
    %v6083 = vadd.f32 %v5609, %v6078
    %v6084 = vld [vmem:[#allocation2 + $0x188] sm:$0xff]
    %v6085 = vpack.c.bf16 %v6084, %v6084
    %s6086 = scalar_lea.vmem [#allocation8], 1568
    %v6087 = vld [vmem:[%s6086] sm:$0xf]
    %v6088 = vld [vmem:[%s6086 + $0x4] sm:$0xf]
    %v6089 = vld [vmem:[%s6086 + $0x8] sm:$0xf]
    %v6090 = vld [vmem:[%s6086 + $0xc] sm:$0xf]
    %v6091 = vld [vmem:[%s6086 + $0x10] sm:$0xf]
    %v6092 = vld [vmem:[%s6086 + $0x14] sm:$0xf]
    %v6093 = vld [vmem:[%s6086 + $0x18] sm:$0xf]
    %v6094 = vld [vmem:[%s6086 + $0x1c] sm:$0xf]
    %v6103 = vunpack.c.l.b16 %v6087
    %v6104 = vunpack.c.l.b16 %v6088
    %v6105 = vunpack.c.l.b16 %v6089
    %v6106 = vunpack.c.l.b16 %v6090
    %v6107 = vunpack.c.l.b16 %v6091
    %v6108 = vunpack.c.l.b16 %v6092
    %v6109 = vunpack.c.l.b16 %v6093
    %v6110 = vunpack.c.l.b16 %v6094
    %v6111 = vpack.c.b16 %v6104, %v6103
    %v6112 = vpack.c.b16 %v6106, %v6105
    %v6113 = vpack.c.b16 %v6108, %v6107
    %v6114 = vpack.c.b16 %v6110, %v6109
    %v6120 = vsel %vm2135, %v6085, 0
    %6122 = vmatprep.subr.bf16.mxu0 0
    %6123 = vmatpush1.bf16.msra.mxu0 0
    %6124 = vmatprep.subr.bf16.mxu0 0
    %6125 = vmatpush1.bf16.msra.mxu0 0
    %6126 = vmatprep.subr.bf16.mxu0 0
    %6127 = vmatpush1.bf16.msra.mxu0 0
    %6128 = vmatprep.subr.bf16.mxu0 0
    %6129 = vmatpush1.bf16.msra.mxu0 0
    %6130 = vmatprep.subr.bf16.mxu0 0
    %6131 = vmatpush1.bf16.msra.mxu0 %v6114
    %6132 = vmatprep.subr.bf16.mxu0 0
    %6133 = vmatpush1.bf16.msra.mxu0 %v6113
    %6134 = vmatprep.subr.bf16.mxu0 0
    %6135 = vmatpush1.bf16.msra.mxu0 %v6112
    %6136 = vmatprep.subr.bf16.mxu0 0
    %6137 = vmatpush1.bf16.msra.mxu0 %v6111
    %6138 = vmatprep.subr.bf16.mxu0 0
    %6139 = vmatpush2.bf16.msra.mxu0 0
    %6140 = vmatprep.subr.bf16.mxu0 0
    %6141 = vmatpush2.bf16.msra.mxu0 0
    %6142 = vmatprep.subr.bf16.mxu0 0
    %6143 = vmatpush2.bf16.msra.mxu0 0
    %6144 = vmatprep.subr.bf16.mxu0 0
    %6145 = vmatpush2.bf16.msra.mxu0 0
    %6146 = vmatprep.subr.bf16.mxu0 0
    %6147 = vmatpush2.bf16.msra.mxu0 0
    %6148 = vmatprep.subr.bf16.mxu0 0
    %6149 = vmatpush2.bf16.msra.mxu0 0
    %6150 = vmatprep.subr.bf16.mxu0 0
    %6151 = vmatpush2.bf16.msra.mxu0 0
    %6152 = vmatprep.subr.bf16.mxu0 0
    %6153 = vmatpush2.bf16.msra.mxu0 0
    %6154 = vmatprep.mubr.bf16.mxu0 0
    %6155 = vmatmul.mubr.bf16.gmra.mxu0 %v6120
    %v6156 = vpop.f32.mrf.mxu0
    %v6157 = vadd.f32 0.0, %v6156
    %v6158 = vpop.f32.mrf.mxu0
    %v6159 = vpop.f32.mrf.mxu0
    %v6160 = vpop.f32.mrf.mxu0
    %6161 = vdwg.mxu0
    %v6162 = vadd.f32 %v5688, %v6157
    %v6163 = vld [vmem:[#allocation2 + $0x190] sm:$0xff]
    %v6164 = vpack.c.bf16 %v6163, %v6163
    %s6165 = scalar_lea.vmem [#allocation8], 1600
    %v6166 = vld [vmem:[%s6165] sm:$0xf]
    %v6167 = vld [vmem:[%s6165 + $0x4] sm:$0xf]
    %v6168 = vld [vmem:[%s6165 + $0x8] sm:$0xf]
    %v6169 = vld [vmem:[%s6165 + $0xc] sm:$0xf]
    %v6170 = vld [vmem:[%s6165 + $0x10] sm:$0xf]
    %v6171 = vld [vmem:[%s6165 + $0x14] sm:$0xf]
    %v6172 = vld [vmem:[%s6165 + $0x18] sm:$0xf]
    %v6173 = vld [vmem:[%s6165 + $0x1c] sm:$0xf]
    %v6182 = vunpack.c.l.b16 %v6166
    %v6183 = vunpack.c.l.b16 %v6167
    %v6184 = vunpack.c.l.b16 %v6168
    %v6185 = vunpack.c.l.b16 %v6169
    %v6186 = vunpack.c.l.b16 %v6170
    %v6187 = vunpack.c.l.b16 %v6171
    %v6188 = vunpack.c.l.b16 %v6172
    %v6189 = vunpack.c.l.b16 %v6173
    %v6190 = vpack.c.b16 %v6183, %v6182
    %v6191 = vpack.c.b16 %v6185, %v6184
    %v6192 = vpack.c.b16 %v6187, %v6186
    %v6193 = vpack.c.b16 %v6189, %v6188
    %v6199 = vsel %vm2135, %v6164, 0
    %6201 = vmatprep.subr.bf16.mxu0 0
    %6202 = vmatpush1.bf16.msra.mxu0 0
    %6203 = vmatprep.subr.bf16.mxu0 0
    %6204 = vmatpush1.bf16.msra.mxu0 0
    %6205 = vmatprep.subr.bf16.mxu0 0
    %6206 = vmatpush1.bf16.msra.mxu0 0
    %6207 = vmatprep.subr.bf16.mxu0 0
    %6208 = vmatpush1.bf16.msra.mxu0 0
    %6209 = vmatprep.subr.bf16.mxu0 0
    %6210 = vmatpush1.bf16.msra.mxu0 %v6193
    %6211 = vmatprep.subr.bf16.mxu0 0
    %6212 = vmatpush1.bf16.msra.mxu0 %v6192
    %6213 = vmatprep.subr.bf16.mxu0 0
    %6214 = vmatpush1.bf16.msra.mxu0 %v6191
    %6215 = vmatprep.subr.bf16.mxu0 0
    %6216 = vmatpush1.bf16.msra.mxu0 %v6190
    %6217 = vmatprep.subr.bf16.mxu0 0
    %6218 = vmatpush2.bf16.msra.mxu0 0
    %6219 = vmatprep.subr.bf16.mxu0 0
    %6220 = vmatpush2.bf16.msra.mxu0 0
    %6221 = vmatprep.subr.bf16.mxu0 0
    %6222 = vmatpush2.bf16.msra.mxu0 0
    %6223 = vmatprep.subr.bf16.mxu0 0
    %6224 = vmatpush2.bf16.msra.mxu0 0
    %6225 = vmatprep.subr.bf16.mxu0 0
    %6226 = vmatpush2.bf16.msra.mxu0 0
    %6227 = vmatprep.subr.bf16.mxu0 0
    %6228 = vmatpush2.bf16.msra.mxu0 0
    %6229 = vmatprep.subr.bf16.mxu0 0
    %6230 = vmatpush2.bf16.msra.mxu0 0
    %6231 = vmatprep.subr.bf16.mxu0 0
    %6232 = vmatpush2.bf16.msra.mxu0 0
    %6233 = vmatprep.mubr.bf16.mxu0 0
    %6234 = vmatmul.mubr.bf16.gmra.mxu0 %v6199
    %v6235 = vpop.f32.mrf.mxu0
    %v6236 = vadd.f32 0.0, %v6235
    %v6237 = vpop.f32.mrf.mxu0
    %v6238 = vpop.f32.mrf.mxu0
    %v6239 = vpop.f32.mrf.mxu0
    %6240 = vdwg.mxu0
    %v6241 = vadd.f32 %v5767, %v6236
    %v6242 = vld [vmem:[#allocation2 + $0x198] sm:$0xff]
    %v6243 = vpack.c.bf16 %v6242, %v6242
    %s6244 = scalar_lea.vmem [#allocation8], 1632
    %v6245 = vld [vmem:[%s6244] sm:$0xf]
    %v6246 = vld [vmem:[%s6244 + $0x4] sm:$0xf]
    %v6247 = vld [vmem:[%s6244 + $0x8] sm:$0xf]
    %v6248 = vld [vmem:[%s6244 + $0xc] sm:$0xf]
    %v6249 = vld [vmem:[%s6244 + $0x10] sm:$0xf]
    %v6250 = vld [vmem:[%s6244 + $0x14] sm:$0xf]
    %v6251 = vld [vmem:[%s6244 + $0x18] sm:$0xf]
    %v6252 = vld [vmem:[%s6244 + $0x1c] sm:$0xf]
    %v6261 = vunpack.c.l.b16 %v6245
    %v6262 = vunpack.c.l.b16 %v6246
    %v6263 = vunpack.c.l.b16 %v6247
    %v6264 = vunpack.c.l.b16 %v6248
    %v6265 = vunpack.c.l.b16 %v6249
    %v6266 = vunpack.c.l.b16 %v6250
    %v6267 = vunpack.c.l.b16 %v6251
    %v6268 = vunpack.c.l.b16 %v6252
    %v6269 = vpack.c.b16 %v6262, %v6261
    %v6270 = vpack.c.b16 %v6264, %v6263
    %v6271 = vpack.c.b16 %v6266, %v6265
    %v6272 = vpack.c.b16 %v6268, %v6267
    %v6278 = vsel %vm2135, %v6243, 0
    %6280 = vmatprep.subr.bf16.mxu0 0
    %6281 = vmatpush1.bf16.msra.mxu0 0
    %6282 = vmatprep.subr.bf16.mxu0 0
    %6283 = vmatpush1.bf16.msra.mxu0 0
    %6284 = vmatprep.subr.bf16.mxu0 0
    %6285 = vmatpush1.bf16.msra.mxu0 0
    %6286 = vmatprep.subr.bf16.mxu0 0
    %6287 = vmatpush1.bf16.msra.mxu0 0
    %6288 = vmatprep.subr.bf16.mxu0 0
    %6289 = vmatpush1.bf16.msra.mxu0 %v6272
    %6290 = vmatprep.subr.bf16.mxu0 0
    %6291 = vmatpush1.bf16.msra.mxu0 %v6271
    %6292 = vmatprep.subr.bf16.mxu0 0
    %6293 = vmatpush1.bf16.msra.mxu0 %v6270
    %6294 = vmatprep.subr.bf16.mxu0 0
    %6295 = vmatpush1.bf16.msra.mxu0 %v6269
    %6296 = vmatprep.subr.bf16.mxu0 0
    %6297 = vmatpush2.bf16.msra.mxu0 0
    %6298 = vmatprep.subr.bf16.mxu0 0
    %6299 = vmatpush2.bf16.msra.mxu0 0
    %6300 = vmatprep.subr.bf16.mxu0 0
    %6301 = vmatpush2.bf16.msra.mxu0 0
    %6302 = vmatprep.subr.bf16.mxu0 0
    %6303 = vmatpush2.bf16.msra.mxu0 0
    %6304 = vmatprep.subr.bf16.mxu0 0
    %6305 = vmatpush2.bf16.msra.mxu0 0
    %6306 = vmatprep.subr.bf16.mxu0 0
    %6307 = vmatpush2.bf16.msra.mxu0 0
    %6308 = vmatprep.subr.bf16.mxu0 0
    %6309 = vmatpush2.bf16.msra.mxu0 0
    %6310 = vmatprep.subr.bf16.mxu0 0
    %6311 = vmatpush2.bf16.msra.mxu0 0
    %6312 = vmatprep.mubr.bf16.mxu0 0
    %6313 = vmatmul.mubr.bf16.gmra.mxu0 %v6278
    %v6314 = vpop.f32.mrf.mxu0
    %v6315 = vadd.f32 0.0, %v6314
    %v6316 = vpop.f32.mrf.mxu0
    %v6317 = vpop.f32.mrf.mxu0
    %v6318 = vpop.f32.mrf.mxu0
    %6319 = vdwg.mxu0
    %v6320 = vadd.f32 %v5846, %v6315
    %v6321 = vld [vmem:[#allocation2 + $0x1a0] sm:$0xff]
    %v6322 = vpack.c.bf16 %v6321, %v6321
    %s6323 = scalar_lea.vmem [#allocation8], 1664
    %v6324 = vld [vmem:[%s6323] sm:$0xf]
    %v6325 = vld [vmem:[%s6323 + $0x4] sm:$0xf]
    %v6326 = vld [vmem:[%s6323 + $0x8] sm:$0xf]
    %v6327 = vld [vmem:[%s6323 + $0xc] sm:$0xf]
    %v6328 = vld [vmem:[%s6323 + $0x10] sm:$0xf]
    %v6329 = vld [vmem:[%s6323 + $0x14] sm:$0xf]
    %v6330 = vld [vmem:[%s6323 + $0x18] sm:$0xf]
    %v6331 = vld [vmem:[%s6323 + $0x1c] sm:$0xf]
    %v6340 = vunpack.c.l.b16 %v6324
    %v6341 = vunpack.c.l.b16 %v6325
    %v6342 = vunpack.c.l.b16 %v6326
    %v6343 = vunpack.c.l.b16 %v6327
    %v6344 = vunpack.c.l.b16 %v6328
    %v6345 = vunpack.c.l.b16 %v6329
    %v6346 = vunpack.c.l.b16 %v6330
    %v6347 = vunpack.c.l.b16 %v6331
    %v6348 = vpack.c.b16 %v6341, %v6340
    %v6349 = vpack.c.b16 %v6343, %v6342
    %v6350 = vpack.c.b16 %v6345, %v6344
    %v6351 = vpack.c.b16 %v6347, %v6346
    %v6357 = vsel %vm2135, %v6322, 0
    %6359 = vmatprep.subr.bf16.mxu0 0
    %6360 = vmatpush1.bf16.msra.mxu0 0
    %6361 = vmatprep.subr.bf16.mxu0 0
    %6362 = vmatpush1.bf16.msra.mxu0 0
    %6363 = vmatprep.subr.bf16.mxu0 0
    %6364 = vmatpush1.bf16.msra.mxu0 0
    %6365 = vmatprep.subr.bf16.mxu0 0
    %6366 = vmatpush1.bf16.msra.mxu0 0
    %6367 = vmatprep.subr.bf16.mxu0 0
    %6368 = vmatpush1.bf16.msra.mxu0 %v6351
    %6369 = vmatprep.subr.bf16.mxu0 0
    %6370 = vmatpush1.bf16.msra.mxu0 %v6350
    %6371 = vmatprep.subr.bf16.mxu0 0
    %6372 = vmatpush1.bf16.msra.mxu0 %v6349
    %6373 = vmatprep.subr.bf16.mxu0 0
    %6374 = vmatpush1.bf16.msra.mxu0 %v6348
    %6375 = vmatprep.subr.bf16.mxu0 0
    %6376 = vmatpush2.bf16.msra.mxu0 0
    %6377 = vmatprep.subr.bf16.mxu0 0
    %6378 = vmatpush2.bf16.msra.mxu0 0
    %6379 = vmatprep.subr.bf16.mxu0 0
    %6380 = vmatpush2.bf16.msra.mxu0 0
    %6381 = vmatprep.subr.bf16.mxu0 0
    %6382 = vmatpush2.bf16.msra.mxu0 0
    %6383 = vmatprep.subr.bf16.mxu0 0
    %6384 = vmatpush2.bf16.msra.mxu0 0
    %6385 = vmatprep.subr.bf16.mxu0 0
    %6386 = vmatpush2.bf16.msra.mxu0 0
    %6387 = vmatprep.subr.bf16.mxu0 0
    %6388 = vmatpush2.bf16.msra.mxu0 0
    %6389 = vmatprep.subr.bf16.mxu0 0
    %6390 = vmatpush2.bf16.msra.mxu0 0
    %6391 = vmatprep.mubr.bf16.mxu0 0
    %6392 = vmatmul.mubr.bf16.gmra.mxu0 %v6357
    %v6393 = vpop.f32.mrf.mxu0
    %v6394 = vadd.f32 0.0, %v6393
    %v6395 = vpop.f32.mrf.mxu0
    %v6396 = vpop.f32.mrf.mxu0
    %v6397 = vpop.f32.mrf.mxu0
    %6398 = vdwg.mxu0
    %v6399 = vadd.f32 %v5925, %v6394
    %v6400 = vld [vmem:[#allocation2 + $0x1a8] sm:$0xff]
    %v6401 = vpack.c.bf16 %v6400, %v6400
    %s6402 = scalar_lea.vmem [#allocation8], 1696
    %v6403 = vld [vmem:[%s6402] sm:$0xf]
    %v6404 = vld [vmem:[%s6402 + $0x4] sm:$0xf]
    %v6405 = vld [vmem:[%s6402 + $0x8] sm:$0xf]
    %v6406 = vld [vmem:[%s6402 + $0xc] sm:$0xf]
    %v6407 = vld [vmem:[%s6402 + $0x10] sm:$0xf]
    %v6408 = vld [vmem:[%s6402 + $0x14] sm:$0xf]
    %v6409 = vld [vmem:[%s6402 + $0x18] sm:$0xf]
    %v6410 = vld [vmem:[%s6402 + $0x1c] sm:$0xf]
    %v6419 = vunpack.c.l.b16 %v6403
    %v6420 = vunpack.c.l.b16 %v6404
    %v6421 = vunpack.c.l.b16 %v6405
    %v6422 = vunpack.c.l.b16 %v6406
    %v6423 = vunpack.c.l.b16 %v6407
    %v6424 = vunpack.c.l.b16 %v6408
    %v6425 = vunpack.c.l.b16 %v6409
    %v6426 = vunpack.c.l.b16 %v6410
    %v6427 = vpack.c.b16 %v6420, %v6419
    %v6428 = vpack.c.b16 %v6422, %v6421
    %v6429 = vpack.c.b16 %v6424, %v6423
    %v6430 = vpack.c.b16 %v6426, %v6425
    %v6436 = vsel %vm2135, %v6401, 0
    %6438 = vmatprep.subr.bf16.mxu0 0
    %6439 = vmatpush1.bf16.msra.mxu0 0
    %6440 = vmatprep.subr.bf16.mxu0 0
    %6441 = vmatpush1.bf16.msra.mxu0 0
    %6442 = vmatprep.subr.bf16.mxu0 0
    %6443 = vmatpush1.bf16.msra.mxu0 0
    %6444 = vmatprep.subr.bf16.mxu0 0
    %6445 = vmatpush1.bf16.msra.mxu0 0
    %6446 = vmatprep.subr.bf16.mxu0 0
    %6447 = vmatpush1.bf16.msra.mxu0 %v6430
    %6448 = vmatprep.subr.bf16.mxu0 0
    %6449 = vmatpush1.bf16.msra.mxu0 %v6429
    %6450 = vmatprep.subr.bf16.mxu0 0
    %6451 = vmatpush1.bf16.msra.mxu0 %v6428
    %6452 = vmatprep.subr.bf16.mxu0 0
    %6453 = vmatpush1.bf16.msra.mxu0 %v6427
    %6454 = vmatprep.subr.bf16.mxu0 0
    %6455 = vmatpush2.bf16.msra.mxu0 0
    %6456 = vmatprep.subr.bf16.mxu0 0
    %6457 = vmatpush2.bf16.msra.mxu0 0
    %6458 = vmatprep.subr.bf16.mxu0 0
    %6459 = vmatpush2.bf16.msra.mxu0 0
    %6460 = vmatprep.subr.bf16.mxu0 0
    %6461 = vmatpush2.bf16.msra.mxu0 0
    %6462 = vmatprep.subr.bf16.mxu0 0
    %6463 = vmatpush2.bf16.msra.mxu0 0
    %6464 = vmatprep.subr.bf16.mxu0 0
    %6465 = vmatpush2.bf16.msra.mxu0 0
    %6466 = vmatprep.subr.bf16.mxu0 0
    %6467 = vmatpush2.bf16.msra.mxu0 0
    %6468 = vmatprep.subr.bf16.mxu0 0
    %6469 = vmatpush2.bf16.msra.mxu0 0
    %6470 = vmatprep.mubr.bf16.mxu0 0
    %6471 = vmatmul.mubr.bf16.gmra.mxu0 %v6436
    %v6472 = vpop.f32.mrf.mxu0
    %v6473 = vadd.f32 0.0, %v6472
    %v6474 = vpop.f32.mrf.mxu0
    %v6475 = vpop.f32.mrf.mxu0
    %v6476 = vpop.f32.mrf.mxu0
    %6477 = vdwg.mxu0
    %v6478 = vadd.f32 %v6004, %v6473
    %v6479 = vld [vmem:[#allocation2 + $0x1b0] sm:$0xff]
    %v6480 = vpack.c.bf16 %v6479, %v6479
    %s6481 = scalar_lea.vmem [#allocation8], 1728
    %v6482 = vld [vmem:[%s6481] sm:$0xf]
    %v6483 = vld [vmem:[%s6481 + $0x4] sm:$0xf]
    %v6484 = vld [vmem:[%s6481 + $0x8] sm:$0xf]
    %v6485 = vld [vmem:[%s6481 + $0xc] sm:$0xf]
    %v6486 = vld [vmem:[%s6481 + $0x10] sm:$0xf]
    %v6487 = vld [vmem:[%s6481 + $0x14] sm:$0xf]
    %v6488 = vld [vmem:[%s6481 + $0x18] sm:$0xf]
    %v6489 = vld [vmem:[%s6481 + $0x1c] sm:$0xf]
    %v6498 = vunpack.c.l.b16 %v6482
    %v6499 = vunpack.c.l.b16 %v6483
    %v6500 = vunpack.c.l.b16 %v6484
    %v6501 = vunpack.c.l.b16 %v6485
    %v6502 = vunpack.c.l.b16 %v6486
    %v6503 = vunpack.c.l.b16 %v6487
    %v6504 = vunpack.c.l.b16 %v6488
    %v6505 = vunpack.c.l.b16 %v6489
    %v6506 = vpack.c.b16 %v6499, %v6498
    %v6507 = vpack.c.b16 %v6501, %v6500
    %v6508 = vpack.c.b16 %v6503, %v6502
    %v6509 = vpack.c.b16 %v6505, %v6504
    %v6515 = vsel %vm2135, %v6480, 0
    %6517 = vmatprep.subr.bf16.mxu0 0
    %6518 = vmatpush1.bf16.msra.mxu0 0
    %6519 = vmatprep.subr.bf16.mxu0 0
    %6520 = vmatpush1.bf16.msra.mxu0 0
    %6521 = vmatprep.subr.bf16.mxu0 0
    %6522 = vmatpush1.bf16.msra.mxu0 0
    %6523 = vmatprep.subr.bf16.mxu0 0
    %6524 = vmatpush1.bf16.msra.mxu0 0
    %6525 = vmatprep.subr.bf16.mxu0 0
    %6526 = vmatpush1.bf16.msra.mxu0 %v6509
    %6527 = vmatprep.subr.bf16.mxu0 0
    %6528 = vmatpush1.bf16.msra.mxu0 %v6508
    %6529 = vmatprep.subr.bf16.mxu0 0
    %6530 = vmatpush1.bf16.msra.mxu0 %v6507
    %6531 = vmatprep.subr.bf16.mxu0 0
    %6532 = vmatpush1.bf16.msra.mxu0 %v6506
    %6533 = vmatprep.subr.bf16.mxu0 0
    %6534 = vmatpush2.bf16.msra.mxu0 0
    %6535 = vmatprep.subr.bf16.mxu0 0
    %6536 = vmatpush2.bf16.msra.mxu0 0
    %6537 = vmatprep.subr.bf16.mxu0 0
    %6538 = vmatpush2.bf16.msra.mxu0 0
    %6539 = vmatprep.subr.bf16.mxu0 0
    %6540 = vmatpush2.bf16.msra.mxu0 0
    %6541 = vmatprep.subr.bf16.mxu0 0
    %6542 = vmatpush2.bf16.msra.mxu0 0
    %6543 = vmatprep.subr.bf16.mxu0 0
    %6544 = vmatpush2.bf16.msra.mxu0 0
    %6545 = vmatprep.subr.bf16.mxu0 0
    %6546 = vmatpush2.bf16.msra.mxu0 0
    %6547 = vmatprep.subr.bf16.mxu0 0
    %6548 = vmatpush2.bf16.msra.mxu0 0
    %6549 = vmatprep.mubr.bf16.mxu0 0
    %6550 = vmatmul.mubr.bf16.gmra.mxu0 %v6515
    %v6551 = vpop.f32.mrf.mxu0
    %v6552 = vadd.f32 0.0, %v6551
    %v6553 = vpop.f32.mrf.mxu0
    %v6554 = vpop.f32.mrf.mxu0
    %v6555 = vpop.f32.mrf.mxu0
    %6556 = vdwg.mxu0
    %v6557 = vadd.f32 %v6083, %v6552
    %v6558 = vld [vmem:[#allocation2 + $0x1b8] sm:$0xff]
    %v6559 = vpack.c.bf16 %v6558, %v6558
    %s6560 = scalar_lea.vmem [#allocation8], 1760
    %v6561 = vld [vmem:[%s6560] sm:$0xf]
    %v6562 = vld [vmem:[%s6560 + $0x4] sm:$0xf]
    %v6563 = vld [vmem:[%s6560 + $0x8] sm:$0xf]
    %v6564 = vld [vmem:[%s6560 + $0xc] sm:$0xf]
    %v6565 = vld [vmem:[%s6560 + $0x10] sm:$0xf]
    %v6566 = vld [vmem:[%s6560 + $0x14] sm:$0xf]
    %v6567 = vld [vmem:[%s6560 + $0x18] sm:$0xf]
    %v6568 = vld [vmem:[%s6560 + $0x1c] sm:$0xf]
    %v6577 = vunpack.c.l.b16 %v6561
    %v6578 = vunpack.c.l.b16 %v6562
    %v6579 = vunpack.c.l.b16 %v6563
    %v6580 = vunpack.c.l.b16 %v6564
    %v6581 = vunpack.c.l.b16 %v6565
    %v6582 = vunpack.c.l.b16 %v6566
    %v6583 = vunpack.c.l.b16 %v6567
    %v6584 = vunpack.c.l.b16 %v6568
    %v6585 = vpack.c.b16 %v6578, %v6577
    %v6586 = vpack.c.b16 %v6580, %v6579
    %v6587 = vpack.c.b16 %v6582, %v6581
    %v6588 = vpack.c.b16 %v6584, %v6583
    %v6594 = vsel %vm2135, %v6559, 0
    %6596 = vmatprep.subr.bf16.mxu0 0
    %6597 = vmatpush1.bf16.msra.mxu0 0
    %6598 = vmatprep.subr.bf16.mxu0 0
    %6599 = vmatpush1.bf16.msra.mxu0 0
    %6600 = vmatprep.subr.bf16.mxu0 0
    %6601 = vmatpush1.bf16.msra.mxu0 0
    %6602 = vmatprep.subr.bf16.mxu0 0
    %6603 = vmatpush1.bf16.msra.mxu0 0
    %6604 = vmatprep.subr.bf16.mxu0 0
    %6605 = vmatpush1.bf16.msra.mxu0 %v6588
    %6606 = vmatprep.subr.bf16.mxu0 0
    %6607 = vmatpush1.bf16.msra.mxu0 %v6587
    %6608 = vmatprep.subr.bf16.mxu0 0
    %6609 = vmatpush1.bf16.msra.mxu0 %v6586
    %6610 = vmatprep.subr.bf16.mxu0 0
    %6611 = vmatpush1.bf16.msra.mxu0 %v6585
    %6612 = vmatprep.subr.bf16.mxu0 0
    %6613 = vmatpush2.bf16.msra.mxu0 0
    %6614 = vmatprep.subr.bf16.mxu0 0
    %6615 = vmatpush2.bf16.msra.mxu0 0
    %6616 = vmatprep.subr.bf16.mxu0 0
    %6617 = vmatpush2.bf16.msra.mxu0 0
    %6618 = vmatprep.subr.bf16.mxu0 0
    %6619 = vmatpush2.bf16.msra.mxu0 0
    %6620 = vmatprep.subr.bf16.mxu0 0
    %6621 = vmatpush2.bf16.msra.mxu0 0
    %6622 = vmatprep.subr.bf16.mxu0 0
    %6623 = vmatpush2.bf16.msra.mxu0 0
    %6624 = vmatprep.subr.bf16.mxu0 0
    %6625 = vmatpush2.bf16.msra.mxu0 0
    %6626 = vmatprep.subr.bf16.mxu0 0
    %6627 = vmatpush2.bf16.msra.mxu0 0
    %6628 = vmatprep.mubr.bf16.mxu0 0
    %6629 = vmatmul.mubr.bf16.gmra.mxu0 %v6594
    %v6630 = vpop.f32.mrf.mxu0
    %v6631 = vadd.f32 0.0, %v6630
    %v6632 = vpop.f32.mrf.mxu0
    %v6633 = vpop.f32.mrf.mxu0
    %v6634 = vpop.f32.mrf.mxu0
    %6635 = vdwg.mxu0
    %v6636 = vadd.f32 %v6162, %v6631
    %v6637 = vld [vmem:[#allocation2 + $0x1c0] sm:$0xff]
    %v6638 = vpack.c.bf16 %v6637, %v6637
    %s6639 = scalar_lea.vmem [#allocation8], 1792
    %v6640 = vld [vmem:[%s6639] sm:$0xf]
    %v6641 = vld [vmem:[%s6639 + $0x4] sm:$0xf]
    %v6642 = vld [vmem:[%s6639 + $0x8] sm:$0xf]
    %v6643 = vld [vmem:[%s6639 + $0xc] sm:$0xf]
    %v6644 = vld [vmem:[%s6639 + $0x10] sm:$0xf]
    %v6645 = vld [vmem:[%s6639 + $0x14] sm:$0xf]
    %v6646 = vld [vmem:[%s6639 + $0x18] sm:$0xf]
    %v6647 = vld [vmem:[%s6639 + $0x1c] sm:$0xf]
    %v6656 = vunpack.c.l.b16 %v6640
    %v6657 = vunpack.c.l.b16 %v6641
    %v6658 = vunpack.c.l.b16 %v6642
    %v6659 = vunpack.c.l.b16 %v6643
    %v6660 = vunpack.c.l.b16 %v6644
    %v6661 = vunpack.c.l.b16 %v6645
    %v6662 = vunpack.c.l.b16 %v6646
    %v6663 = vunpack.c.l.b16 %v6647
    %v6664 = vpack.c.b16 %v6657, %v6656
    %v6665 = vpack.c.b16 %v6659, %v6658
    %v6666 = vpack.c.b16 %v6661, %v6660
    %v6667 = vpack.c.b16 %v6663, %v6662
    %v6673 = vsel %vm2135, %v6638, 0
    %6675 = vmatprep.subr.bf16.mxu0 0
    %6676 = vmatpush1.bf16.msra.mxu0 0
    %6677 = vmatprep.subr.bf16.mxu0 0
    %6678 = vmatpush1.bf16.msra.mxu0 0
    %6679 = vmatprep.subr.bf16.mxu0 0
    %6680 = vmatpush1.bf16.msra.mxu0 0
    %6681 = vmatprep.subr.bf16.mxu0 0
    %6682 = vmatpush1.bf16.msra.mxu0 0
    %6683 = vmatprep.subr.bf16.mxu0 0
    %6684 = vmatpush1.bf16.msra.mxu0 %v6667
    %6685 = vmatprep.subr.bf16.mxu0 0
    %6686 = vmatpush1.bf16.msra.mxu0 %v6666
    %6687 = vmatprep.subr.bf16.mxu0 0
    %6688 = vmatpush1.bf16.msra.mxu0 %v6665
    %6689 = vmatprep.subr.bf16.mxu0 0
    %6690 = vmatpush1.bf16.msra.mxu0 %v6664
    %6691 = vmatprep.subr.bf16.mxu0 0
    %6692 = vmatpush2.bf16.msra.mxu0 0
    %6693 = vmatprep.subr.bf16.mxu0 0
    %6694 = vmatpush2.bf16.msra.mxu0 0
    %6695 = vmatprep.subr.bf16.mxu0 0
    %6696 = vmatpush2.bf16.msra.mxu0 0
    %6697 = vmatprep.subr.bf16.mxu0 0
    %6698 = vmatpush2.bf16.msra.mxu0 0
    %6699 = vmatprep.subr.bf16.mxu0 0
    %6700 = vmatpush2.bf16.msra.mxu0 0
    %6701 = vmatprep.subr.bf16.mxu0 0
    %6702 = vmatpush2.bf16.msra.mxu0 0
    %6703 = vmatprep.subr.bf16.mxu0 0
    %6704 = vmatpush2.bf16.msra.mxu0 0
    %6705 = vmatprep.subr.bf16.mxu0 0
    %6706 = vmatpush2.bf16.msra.mxu0 0
    %6707 = vmatprep.mubr.bf16.mxu0 0
    %6708 = vmatmul.mubr.bf16.gmra.mxu0 %v6673
    %v6709 = vpop.f32.mrf.mxu0
    %v6710 = vadd.f32 0.0, %v6709
    %v6711 = vpop.f32.mrf.mxu0
    %v6712 = vpop.f32.mrf.mxu0
    %v6713 = vpop.f32.mrf.mxu0
    %6714 = vdwg.mxu0
    %v6715 = vadd.f32 %v6241, %v6710
    %v6716 = vld [vmem:[#allocation2 + $0x1c8] sm:$0xff]
    %v6717 = vpack.c.bf16 %v6716, %v6716
    %s6718 = scalar_lea.vmem [#allocation8], 1824
    %v6719 = vld [vmem:[%s6718] sm:$0xf]
    %v6720 = vld [vmem:[%s6718 + $0x4] sm:$0xf]
    %v6721 = vld [vmem:[%s6718 + $0x8] sm:$0xf]
    %v6722 = vld [vmem:[%s6718 + $0xc] sm:$0xf]
    %v6723 = vld [vmem:[%s6718 + $0x10] sm:$0xf]
    %v6724 = vld [vmem:[%s6718 + $0x14] sm:$0xf]
    %v6725 = vld [vmem:[%s6718 + $0x18] sm:$0xf]
    %v6726 = vld [vmem:[%s6718 + $0x1c] sm:$0xf]
    %v6735 = vunpack.c.l.b16 %v6719
    %v6736 = vunpack.c.l.b16 %v6720
    %v6737 = vunpack.c.l.b16 %v6721
    %v6738 = vunpack.c.l.b16 %v6722
    %v6739 = vunpack.c.l.b16 %v6723
    %v6740 = vunpack.c.l.b16 %v6724
    %v6741 = vunpack.c.l.b16 %v6725
    %v6742 = vunpack.c.l.b16 %v6726
    %v6743 = vpack.c.b16 %v6736, %v6735
    %v6744 = vpack.c.b16 %v6738, %v6737
    %v6745 = vpack.c.b16 %v6740, %v6739
    %v6746 = vpack.c.b16 %v6742, %v6741
    %v6752 = vsel %vm2135, %v6717, 0
    %6754 = vmatprep.subr.bf16.mxu0 0
    %6755 = vmatpush1.bf16.msra.mxu0 0
    %6756 = vmatprep.subr.bf16.mxu0 0
    %6757 = vmatpush1.bf16.msra.mxu0 0
    %6758 = vmatprep.subr.bf16.mxu0 0
    %6759 = vmatpush1.bf16.msra.mxu0 0
    %6760 = vmatprep.subr.bf16.mxu0 0
    %6761 = vmatpush1.bf16.msra.mxu0 0
    %6762 = vmatprep.subr.bf16.mxu0 0
    %6763 = vmatpush1.bf16.msra.mxu0 %v6746
    %6764 = vmatprep.subr.bf16.mxu0 0
    %6765 = vmatpush1.bf16.msra.mxu0 %v6745
    %6766 = vmatprep.subr.bf16.mxu0 0
    %6767 = vmatpush1.bf16.msra.mxu0 %v6744
    %6768 = vmatprep.subr.bf16.mxu0 0
    %6769 = vmatpush1.bf16.msra.mxu0 %v6743
    %6770 = vmatprep.subr.bf16.mxu0 0
    %6771 = vmatpush2.bf16.msra.mxu0 0
    %6772 = vmatprep.subr.bf16.mxu0 0
    %6773 = vmatpush2.bf16.msra.mxu0 0
    %6774 = vmatprep.subr.bf16.mxu0 0
    %6775 = vmatpush2.bf16.msra.mxu0 0
    %6776 = vmatprep.subr.bf16.mxu0 0
    %6777 = vmatpush2.bf16.msra.mxu0 0
    %6778 = vmatprep.subr.bf16.mxu0 0
    %6779 = vmatpush2.bf16.msra.mxu0 0
    %6780 = vmatprep.subr.bf16.mxu0 0
    %6781 = vmatpush2.bf16.msra.mxu0 0
    %6782 = vmatprep.subr.bf16.mxu0 0
    %6783 = vmatpush2.bf16.msra.mxu0 0
    %6784 = vmatprep.subr.bf16.mxu0 0
    %6785 = vmatpush2.bf16.msra.mxu0 0
    %6786 = vmatprep.mubr.bf16.mxu0 0
    %6787 = vmatmul.mubr.bf16.gmra.mxu0 %v6752
    %v6788 = vpop.f32.mrf.mxu0
    %v6789 = vadd.f32 0.0, %v6788
    %v6790 = vpop.f32.mrf.mxu0
    %v6791 = vpop.f32.mrf.mxu0
    %v6792 = vpop.f32.mrf.mxu0
    %6793 = vdwg.mxu0
    %v6794 = vadd.f32 %v6320, %v6789
    %v6795 = vld [vmem:[#allocation2 + $0x1d0] sm:$0xff]
    %v6796 = vpack.c.bf16 %v6795, %v6795
    %s6797 = scalar_lea.vmem [#allocation8], 1856
    %v6798 = vld [vmem:[%s6797] sm:$0xf]
    %v6799 = vld [vmem:[%s6797 + $0x4] sm:$0xf]
    %v6800 = vld [vmem:[%s6797 + $0x8] sm:$0xf]
    %v6801 = vld [vmem:[%s6797 + $0xc] sm:$0xf]
    %v6802 = vld [vmem:[%s6797 + $0x10] sm:$0xf]
    %v6803 = vld [vmem:[%s6797 + $0x14] sm:$0xf]
    %v6804 = vld [vmem:[%s6797 + $0x18] sm:$0xf]
    %v6805 = vld [vmem:[%s6797 + $0x1c] sm:$0xf]
    %v6814 = vunpack.c.l.b16 %v6798
    %v6815 = vunpack.c.l.b16 %v6799
    %v6816 = vunpack.c.l.b16 %v6800
    %v6817 = vunpack.c.l.b16 %v6801
    %v6818 = vunpack.c.l.b16 %v6802
    %v6819 = vunpack.c.l.b16 %v6803
    %v6820 = vunpack.c.l.b16 %v6804
    %v6821 = vunpack.c.l.b16 %v6805
    %v6822 = vpack.c.b16 %v6815, %v6814
    %v6823 = vpack.c.b16 %v6817, %v6816
    %v6824 = vpack.c.b16 %v6819, %v6818
    %v6825 = vpack.c.b16 %v6821, %v6820
    %v6831 = vsel %vm2135, %v6796, 0
    %6833 = vmatprep.subr.bf16.mxu0 0
    %6834 = vmatpush1.bf16.msra.mxu0 0
    %6835 = vmatprep.subr.bf16.mxu0 0
    %6836 = vmatpush1.bf16.msra.mxu0 0
    %6837 = vmatprep.subr.bf16.mxu0 0
    %6838 = vmatpush1.bf16.msra.mxu0 0
    %6839 = vmatprep.subr.bf16.mxu0 0
    %6840 = vmatpush1.bf16.msra.mxu0 0
    %6841 = vmatprep.subr.bf16.mxu0 0
    %6842 = vmatpush1.bf16.msra.mxu0 %v6825
    %6843 = vmatprep.subr.bf16.mxu0 0
    %6844 = vmatpush1.bf16.msra.mxu0 %v6824
    %6845 = vmatprep.subr.bf16.mxu0 0
    %6846 = vmatpush1.bf16.msra.mxu0 %v6823
    %6847 = vmatprep.subr.bf16.mxu0 0
    %6848 = vmatpush1.bf16.msra.mxu0 %v6822
    %6849 = vmatprep.subr.bf16.mxu0 0
    %6850 = vmatpush2.bf16.msra.mxu0 0
    %6851 = vmatprep.subr.bf16.mxu0 0
    %6852 = vmatpush2.bf16.msra.mxu0 0
    %6853 = vmatprep.subr.bf16.mxu0 0
    %6854 = vmatpush2.bf16.msra.mxu0 0
    %6855 = vmatprep.subr.bf16.mxu0 0
    %6856 = vmatpush2.bf16.msra.mxu0 0
    %6857 = vmatprep.subr.bf16.mxu0 0
    %6858 = vmatpush2.bf16.msra.mxu0 0
    %6859 = vmatprep.subr.bf16.mxu0 0
    %6860 = vmatpush2.bf16.msra.mxu0 0
    %6861 = vmatprep.subr.bf16.mxu0 0
    %6862 = vmatpush2.bf16.msra.mxu0 0
    %6863 = vmatprep.subr.bf16.mxu0 0
    %6864 = vmatpush2.bf16.msra.mxu0 0
    %6865 = vmatprep.mubr.bf16.mxu0 0
    %6866 = vmatmul.mubr.bf16.gmra.mxu0 %v6831
    %v6867 = vpop.f32.mrf.mxu0
    %v6868 = vadd.f32 0.0, %v6867
    %v6869 = vpop.f32.mrf.mxu0
    %v6870 = vpop.f32.mrf.mxu0
    %v6871 = vpop.f32.mrf.mxu0
    %6872 = vdwg.mxu0
    %v6873 = vadd.f32 %v6399, %v6868
    %v6874 = vld [vmem:[#allocation2 + $0x1d8] sm:$0xff]
    %v6875 = vpack.c.bf16 %v6874, %v6874
    %s6876 = scalar_lea.vmem [#allocation8], 1888
    %v6877 = vld [vmem:[%s6876] sm:$0xf]
    %v6878 = vld [vmem:[%s6876 + $0x4] sm:$0xf]
    %v6879 = vld [vmem:[%s6876 + $0x8] sm:$0xf]
    %v6880 = vld [vmem:[%s6876 + $0xc] sm:$0xf]
    %v6881 = vld [vmem:[%s6876 + $0x10] sm:$0xf]
    %v6882 = vld [vmem:[%s6876 + $0x14] sm:$0xf]
    %v6883 = vld [vmem:[%s6876 + $0x18] sm:$0xf]
    %v6884 = vld [vmem:[%s6876 + $0x1c] sm:$0xf]
    %v6893 = vunpack.c.l.b16 %v6877
    %v6894 = vunpack.c.l.b16 %v6878
    %v6895 = vunpack.c.l.b16 %v6879
    %v6896 = vunpack.c.l.b16 %v6880
    %v6897 = vunpack.c.l.b16 %v6881
    %v6898 = vunpack.c.l.b16 %v6882
    %v6899 = vunpack.c.l.b16 %v6883
    %v6900 = vunpack.c.l.b16 %v6884
    %v6901 = vpack.c.b16 %v6894, %v6893
    %v6902 = vpack.c.b16 %v6896, %v6895
    %v6903 = vpack.c.b16 %v6898, %v6897
    %v6904 = vpack.c.b16 %v6900, %v6899
    %v6910 = vsel %vm2135, %v6875, 0
    %6912 = vmatprep.subr.bf16.mxu0 0
    %6913 = vmatpush1.bf16.msra.mxu0 0
    %6914 = vmatprep.subr.bf16.mxu0 0
    %6915 = vmatpush1.bf16.msra.mxu0 0
    %6916 = vmatprep.subr.bf16.mxu0 0
    %6917 = vmatpush1.bf16.msra.mxu0 0
    %6918 = vmatprep.subr.bf16.mxu0 0
    %6919 = vmatpush1.bf16.msra.mxu0 0
    %6920 = vmatprep.subr.bf16.mxu0 0
    %6921 = vmatpush1.bf16.msra.mxu0 %v6904
    %6922 = vmatprep.subr.bf16.mxu0 0
    %6923 = vmatpush1.bf16.msra.mxu0 %v6903
    %6924 = vmatprep.subr.bf16.mxu0 0
    %6925 = vmatpush1.bf16.msra.mxu0 %v6902
    %6926 = vmatprep.subr.bf16.mxu0 0
    %6927 = vmatpush1.bf16.msra.mxu0 %v6901
    %6928 = vmatprep.subr.bf16.mxu0 0
    %6929 = vmatpush2.bf16.msra.mxu0 0
    %6930 = vmatprep.subr.bf16.mxu0 0
    %6931 = vmatpush2.bf16.msra.mxu0 0
    %6932 = vmatprep.subr.bf16.mxu0 0
    %6933 = vmatpush2.bf16.msra.mxu0 0
    %6934 = vmatprep.subr.bf16.mxu0 0
    %6935 = vmatpush2.bf16.msra.mxu0 0
    %6936 = vmatprep.subr.bf16.mxu0 0
    %6937 = vmatpush2.bf16.msra.mxu0 0
    %6938 = vmatprep.subr.bf16.mxu0 0
    %6939 = vmatpush2.bf16.msra.mxu0 0
    %6940 = vmatprep.subr.bf16.mxu0 0
    %6941 = vmatpush2.bf16.msra.mxu0 0
    %6942 = vmatprep.subr.bf16.mxu0 0
    %6943 = vmatpush2.bf16.msra.mxu0 0
    %6944 = vmatprep.mubr.bf16.mxu0 0
    %6945 = vmatmul.mubr.bf16.gmra.mxu0 %v6910
    %v6946 = vpop.f32.mrf.mxu0
    %v6947 = vadd.f32 0.0, %v6946
    %v6948 = vpop.f32.mrf.mxu0
    %v6949 = vpop.f32.mrf.mxu0
    %v6950 = vpop.f32.mrf.mxu0
    %6951 = vdwg.mxu0
    %v6952 = vadd.f32 %v6478, %v6947
    %v6953 = vld [vmem:[#allocation2 + $0x1e0] sm:$0xff]
    %v6954 = vpack.c.bf16 %v6953, %v6953
    %s6955 = scalar_lea.vmem [#allocation8], 1920
    %v6956 = vld [vmem:[%s6955] sm:$0xf]
    %v6957 = vld [vmem:[%s6955 + $0x4] sm:$0xf]
    %v6958 = vld [vmem:[%s6955 + $0x8] sm:$0xf]
    %v6959 = vld [vmem:[%s6955 + $0xc] sm:$0xf]
    %v6960 = vld [vmem:[%s6955 + $0x10] sm:$0xf]
    %v6961 = vld [vmem:[%s6955 + $0x14] sm:$0xf]
    %v6962 = vld [vmem:[%s6955 + $0x18] sm:$0xf]
    %v6963 = vld [vmem:[%s6955 + $0x1c] sm:$0xf]
    %v6972 = vunpack.c.l.b16 %v6956
    %v6973 = vunpack.c.l.b16 %v6957
    %v6974 = vunpack.c.l.b16 %v6958
    %v6975 = vunpack.c.l.b16 %v6959
    %v6976 = vunpack.c.l.b16 %v6960
    %v6977 = vunpack.c.l.b16 %v6961
    %v6978 = vunpack.c.l.b16 %v6962
    %v6979 = vunpack.c.l.b16 %v6963
    %v6980 = vpack.c.b16 %v6973, %v6972
    %v6981 = vpack.c.b16 %v6975, %v6974
    %v6982 = vpack.c.b16 %v6977, %v6976
    %v6983 = vpack.c.b16 %v6979, %v6978
    %v6989 = vsel %vm2135, %v6954, 0
    %6991 = vmatprep.subr.bf16.mxu0 0
    %6992 = vmatpush1.bf16.msra.mxu0 0
    %6993 = vmatprep.subr.bf16.mxu0 0
    %6994 = vmatpush1.bf16.msra.mxu0 0
    %6995 = vmatprep.subr.bf16.mxu0 0
    %6996 = vmatpush1.bf16.msra.mxu0 0
    %6997 = vmatprep.subr.bf16.mxu0 0
    %6998 = vmatpush1.bf16.msra.mxu0 0
    %6999 = vmatprep.subr.bf16.mxu0 0
    %7000 = vmatpush1.bf16.msra.mxu0 %v6983
    %7001 = vmatprep.subr.bf16.mxu0 0
    %7002 = vmatpush1.bf16.msra.mxu0 %v6982
    %7003 = vmatprep.subr.bf16.mxu0 0
    %7004 = vmatpush1.bf16.msra.mxu0 %v6981
    %7005 = vmatprep.subr.bf16.mxu0 0
    %7006 = vmatpush1.bf16.msra.mxu0 %v6980
    %7007 = vmatprep.subr.bf16.mxu0 0
    %7008 = vmatpush2.bf16.msra.mxu0 0
    %7009 = vmatprep.subr.bf16.mxu0 0
    %7010 = vmatpush2.bf16.msra.mxu0 0
    %7011 = vmatprep.subr.bf16.mxu0 0
    %7012 = vmatpush2.bf16.msra.mxu0 0
    %7013 = vmatprep.subr.bf16.mxu0 0
    %7014 = vmatpush2.bf16.msra.mxu0 0
    %7015 = vmatprep.subr.bf16.mxu0 0
    %7016 = vmatpush2.bf16.msra.mxu0 0
    %7017 = vmatprep.subr.bf16.mxu0 0
    %7018 = vmatpush2.bf16.msra.mxu0 0
    %7019 = vmatprep.subr.bf16.mxu0 0
    %7020 = vmatpush2.bf16.msra.mxu0 0
    %7021 = vmatprep.subr.bf16.mxu0 0
    %7022 = vmatpush2.bf16.msra.mxu0 0
    %7023 = vmatprep.mubr.bf16.mxu0 0
    %7024 = vmatmul.mubr.bf16.gmra.mxu0 %v6989
    %v7025 = vpop.f32.mrf.mxu0
    %v7026 = vadd.f32 0.0, %v7025
    %v7027 = vpop.f32.mrf.mxu0
    %v7028 = vpop.f32.mrf.mxu0
    %v7029 = vpop.f32.mrf.mxu0
    %7030 = vdwg.mxu0
    %v7031 = vadd.f32 %v6557, %v7026
    %v7032 = vld [vmem:[#allocation2 + $0x1e8] sm:$0xff]
    %v7033 = vpack.c.bf16 %v7032, %v7032
    %s7034 = scalar_lea.vmem [#allocation8], 1952
    %v7035 = vld [vmem:[%s7034] sm:$0xf]
    %v7036 = vld [vmem:[%s7034 + $0x4] sm:$0xf]
    %v7037 = vld [vmem:[%s7034 + $0x8] sm:$0xf]
    %v7038 = vld [vmem:[%s7034 + $0xc] sm:$0xf]
    %v7039 = vld [vmem:[%s7034 + $0x10] sm:$0xf]
    %v7040 = vld [vmem:[%s7034 + $0x14] sm:$0xf]
    %v7041 = vld [vmem:[%s7034 + $0x18] sm:$0xf]
    %v7042 = vld [vmem:[%s7034 + $0x1c] sm:$0xf]
    %v7051 = vunpack.c.l.b16 %v7035
    %v7052 = vunpack.c.l.b16 %v7036
    %v7053 = vunpack.c.l.b16 %v7037
    %v7054 = vunpack.c.l.b16 %v7038
    %v7055 = vunpack.c.l.b16 %v7039
    %v7056 = vunpack.c.l.b16 %v7040
    %v7057 = vunpack.c.l.b16 %v7041
    %v7058 = vunpack.c.l.b16 %v7042
    %v7059 = vpack.c.b16 %v7052, %v7051
    %v7060 = vpack.c.b16 %v7054, %v7053
    %v7061 = vpack.c.b16 %v7056, %v7055
    %v7062 = vpack.c.b16 %v7058, %v7057
    %v7068 = vsel %vm2135, %v7033, 0
    %7070 = vmatprep.subr.bf16.mxu0 0
    %7071 = vmatpush1.bf16.msra.mxu0 0
    %7072 = vmatprep.subr.bf16.mxu0 0
    %7073 = vmatpush1.bf16.msra.mxu0 0
    %7074 = vmatprep.subr.bf16.mxu0 0
    %7075 = vmatpush1.bf16.msra.mxu0 0
    %7076 = vmatprep.subr.bf16.mxu0 0
    %7077 = vmatpush1.bf16.msra.mxu0 0
    %7078 = vmatprep.subr.bf16.mxu0 0
    %7079 = vmatpush1.bf16.msra.mxu0 %v7062
    %7080 = vmatprep.subr.bf16.mxu0 0
    %7081 = vmatpush1.bf16.msra.mxu0 %v7061
    %7082 = vmatprep.subr.bf16.mxu0 0
    %7083 = vmatpush1.bf16.msra.mxu0 %v7060
    %7084 = vmatprep.subr.bf16.mxu0 0
    %7085 = vmatpush1.bf16.msra.mxu0 %v7059
    %7086 = vmatprep.subr.bf16.mxu0 0
    %7087 = vmatpush2.bf16.msra.mxu0 0
    %7088 = vmatprep.subr.bf16.mxu0 0
    %7089 = vmatpush2.bf16.msra.mxu0 0
    %7090 = vmatprep.subr.bf16.mxu0 0
    %7091 = vmatpush2.bf16.msra.mxu0 0
    %7092 = vmatprep.subr.bf16.mxu0 0
    %7093 = vmatpush2.bf16.msra.mxu0 0
    %7094 = vmatprep.subr.bf16.mxu0 0
    %7095 = vmatpush2.bf16.msra.mxu0 0
    %7096 = vmatprep.subr.bf16.mxu0 0
    %7097 = vmatpush2.bf16.msra.mxu0 0
    %7098 = vmatprep.subr.bf16.mxu0 0
    %7099 = vmatpush2.bf16.msra.mxu0 0
    %7100 = vmatprep.subr.bf16.mxu0 0
    %7101 = vmatpush2.bf16.msra.mxu0 0
    %7102 = vmatprep.mubr.bf16.mxu0 0
    %7103 = vmatmul.mubr.bf16.gmra.mxu0 %v7068
    %v7104 = vpop.f32.mrf.mxu0
    %v7105 = vadd.f32 0.0, %v7104
    %v7106 = vpop.f32.mrf.mxu0
    %v7107 = vpop.f32.mrf.mxu0
    %v7108 = vpop.f32.mrf.mxu0
    %7109 = vdwg.mxu0
    %v7110 = vadd.f32 %v6636, %v7105
    %v7111 = vld [vmem:[#allocation2 + $0x1f0] sm:$0xff]
    %v7112 = vpack.c.bf16 %v7111, %v7111
    %s7113 = scalar_lea.vmem [#allocation8], 1984
    %v7114 = vld [vmem:[%s7113] sm:$0xf]
    %v7115 = vld [vmem:[%s7113 + $0x4] sm:$0xf]
    %v7116 = vld [vmem:[%s7113 + $0x8] sm:$0xf]
    %v7117 = vld [vmem:[%s7113 + $0xc] sm:$0xf]
    %v7118 = vld [vmem:[%s7113 + $0x10] sm:$0xf]
    %v7119 = vld [vmem:[%s7113 + $0x14] sm:$0xf]
    %v7120 = vld [vmem:[%s7113 + $0x18] sm:$0xf]
    %v7121 = vld [vmem:[%s7113 + $0x1c] sm:$0xf]
    %v7130 = vunpack.c.l.b16 %v7114
    %v7131 = vunpack.c.l.b16 %v7115
    %v7132 = vunpack.c.l.b16 %v7116
    %v7133 = vunpack.c.l.b16 %v7117
    %v7134 = vunpack.c.l.b16 %v7118
    %v7135 = vunpack.c.l.b16 %v7119
    %v7136 = vunpack.c.l.b16 %v7120
    %v7137 = vunpack.c.l.b16 %v7121
    %v7138 = vpack.c.b16 %v7131, %v7130
    %v7139 = vpack.c.b16 %v7133, %v7132
    %v7140 = vpack.c.b16 %v7135, %v7134
    %v7141 = vpack.c.b16 %v7137, %v7136
    %v7147 = vsel %vm2135, %v7112, 0
    %7149 = vmatprep.subr.bf16.mxu0 0
    %7150 = vmatpush1.bf16.msra.mxu0 0
    %7151 = vmatprep.subr.bf16.mxu0 0
    %7152 = vmatpush1.bf16.msra.mxu0 0
    %7153 = vmatprep.subr.bf16.mxu0 0
    %7154 = vmatpush1.bf16.msra.mxu0 0
    %7155 = vmatprep.subr.bf16.mxu0 0
    %7156 = vmatpush1.bf16.msra.mxu0 0
    %7157 = vmatprep.subr.bf16.mxu0 0
    %7158 = vmatpush1.bf16.msra.mxu0 %v7141
    %7159 = vmatprep.subr.bf16.mxu0 0
    %7160 = vmatpush1.bf16.msra.mxu0 %v7140
    %7161 = vmatprep.subr.bf16.mxu0 0
    %7162 = vmatpush1.bf16.msra.mxu0 %v7139
    %7163 = vmatprep.subr.bf16.mxu0 0
    %7164 = vmatpush1.bf16.msra.mxu0 %v7138
    %7165 = vmatprep.subr.bf16.mxu0 0
    %7166 = vmatpush2.bf16.msra.mxu0 0
    %7167 = vmatprep.subr.bf16.mxu0 0
    %7168 = vmatpush2.bf16.msra.mxu0 0
    %7169 = vmatprep.subr.bf16.mxu0 0
    %7170 = vmatpush2.bf16.msra.mxu0 0
    %7171 = vmatprep.subr.bf16.mxu0 0
    %7172 = vmatpush2.bf16.msra.mxu0 0
    %7173 = vmatprep.subr.bf16.mxu0 0
    %7174 = vmatpush2.bf16.msra.mxu0 0
    %7175 = vmatprep.subr.bf16.mxu0 0
    %7176 = vmatpush2.bf16.msra.mxu0 0
    %7177 = vmatprep.subr.bf16.mxu0 0
    %7178 = vmatpush2.bf16.msra.mxu0 0
    %7179 = vmatprep.subr.bf16.mxu0 0
    %7180 = vmatpush2.bf16.msra.mxu0 0
    %7181 = vmatprep.mubr.bf16.mxu0 0
    %7182 = vmatmul.mubr.bf16.gmra.mxu0 %v7147
    %v7183 = vpop.f32.mrf.mxu0
    %v7184 = vadd.f32 0.0, %v7183
    %v7185 = vpop.f32.mrf.mxu0
    %v7186 = vpop.f32.mrf.mxu0
    %v7187 = vpop.f32.mrf.mxu0
    %7188 = vdwg.mxu0
    %v7189 = vadd.f32 %v6715, %v7184
    %v7190 = vld [vmem:[#allocation2 + $0x1f8] sm:$0xff]
    %v7191 = vpack.c.bf16 %v7190, %v7190
    %s7192 = scalar_lea.vmem [#allocation8], 2016
    %v7193 = vld [vmem:[%s7192] sm:$0xf]
    %v7194 = vld [vmem:[%s7192 + $0x4] sm:$0xf]
    %v7195 = vld [vmem:[%s7192 + $0x8] sm:$0xf]
    %v7196 = vld [vmem:[%s7192 + $0xc] sm:$0xf]
    %v7197 = vld [vmem:[%s7192 + $0x10] sm:$0xf]
    %v7198 = vld [vmem:[%s7192 + $0x14] sm:$0xf]
    %v7199 = vld [vmem:[%s7192 + $0x18] sm:$0xf]
    %v7200 = vld [vmem:[%s7192 + $0x1c] sm:$0xf]
    %v7209 = vunpack.c.l.b16 %v7193
    %v7210 = vunpack.c.l.b16 %v7194
    %v7211 = vunpack.c.l.b16 %v7195
    %v7212 = vunpack.c.l.b16 %v7196
    %v7213 = vunpack.c.l.b16 %v7197
    %v7214 = vunpack.c.l.b16 %v7198
    %v7215 = vunpack.c.l.b16 %v7199
    %v7216 = vunpack.c.l.b16 %v7200
    %v7217 = vpack.c.b16 %v7210, %v7209
    %v7218 = vpack.c.b16 %v7212, %v7211
    %v7219 = vpack.c.b16 %v7214, %v7213
    %v7220 = vpack.c.b16 %v7216, %v7215
    %v7226 = vsel %vm2135, %v7191, 0
    %7228 = vmatprep.subr.bf16.mxu0 0
    %7229 = vmatpush1.bf16.msra.mxu0 0
    %7230 = vmatprep.subr.bf16.mxu0 0
    %7231 = vmatpush1.bf16.msra.mxu0 0
    %7232 = vmatprep.subr.bf16.mxu0 0
    %7233 = vmatpush1.bf16.msra.mxu0 0
    %7234 = vmatprep.subr.bf16.mxu0 0
    %7235 = vmatpush1.bf16.msra.mxu0 0
    %7236 = vmatprep.subr.bf16.mxu0 0
    %7237 = vmatpush1.bf16.msra.mxu0 %v7220
    %7238 = vmatprep.subr.bf16.mxu0 0
    %7239 = vmatpush1.bf16.msra.mxu0 %v7219
    %7240 = vmatprep.subr.bf16.mxu0 0
    %7241 = vmatpush1.bf16.msra.mxu0 %v7218
    %7242 = vmatprep.subr.bf16.mxu0 0
    %7243 = vmatpush1.bf16.msra.mxu0 %v7217
    %7244 = vmatprep.subr.bf16.mxu0 0
    %7245 = vmatpush2.bf16.msra.mxu0 0
    %7246 = vmatprep.subr.bf16.mxu0 0
    %7247 = vmatpush2.bf16.msra.mxu0 0
    %7248 = vmatprep.subr.bf16.mxu0 0
    %7249 = vmatpush2.bf16.msra.mxu0 0
    %7250 = vmatprep.subr.bf16.mxu0 0
    %7251 = vmatpush2.bf16.msra.mxu0 0
    %7252 = vmatprep.subr.bf16.mxu0 0
    %7253 = vmatpush2.bf16.msra.mxu0 0
    %7254 = vmatprep.subr.bf16.mxu0 0
    %7255 = vmatpush2.bf16.msra.mxu0 0
    %7256 = vmatprep.subr.bf16.mxu0 0
    %7257 = vmatpush2.bf16.msra.mxu0 0
    %7258 = vmatprep.subr.bf16.mxu0 0
    %7259 = vmatpush2.bf16.msra.mxu0 0
    %7260 = vmatprep.mubr.bf16.mxu0 0
    %7261 = vmatmul.mubr.bf16.gmra.mxu0 %v7226
    %v7262 = vpop.f32.mrf.mxu0
    %v7263 = vadd.f32 0.0, %v7262
    %v7264 = vpop.f32.mrf.mxu0
    %v7265 = vpop.f32.mrf.mxu0
    %v7266 = vpop.f32.mrf.mxu0
    %7267 = vdwg.mxu0
    %v7268 = vadd.f32 %v6794, %v7263
    %v7269 = vld [vmem:[#allocation2 + $0x200] sm:$0xff]
    %v7270 = vpack.c.bf16 %v7269, %v7269
    %s7271 = scalar_lea.vmem [#allocation8], 2048
    %v7272 = vld [vmem:[%s7271] sm:$0xf]
    %v7273 = vld [vmem:[%s7271 + $0x4] sm:$0xf]
    %v7274 = vld [vmem:[%s7271 + $0x8] sm:$0xf]
    %v7275 = vld [vmem:[%s7271 + $0xc] sm:$0xf]
    %v7276 = vld [vmem:[%s7271 + $0x10] sm:$0xf]
    %v7277 = vld [vmem:[%s7271 + $0x14] sm:$0xf]
    %v7278 = vld [vmem:[%s7271 + $0x18] sm:$0xf]
    %v7279 = vld [vmem:[%s7271 + $0x1c] sm:$0xf]
    %v7288 = vunpack.c.l.b16 %v7272
    %v7289 = vunpack.c.l.b16 %v7273
    %v7290 = vunpack.c.l.b16 %v7274
    %v7291 = vunpack.c.l.b16 %v7275
    %v7292 = vunpack.c.l.b16 %v7276
    %v7293 = vunpack.c.l.b16 %v7277
    %v7294 = vunpack.c.l.b16 %v7278
    %v7295 = vunpack.c.l.b16 %v7279
    %v7296 = vpack.c.b16 %v7289, %v7288
    %v7297 = vpack.c.b16 %v7291, %v7290
    %v7298 = vpack.c.b16 %v7293, %v7292
    %v7299 = vpack.c.b16 %v7295, %v7294
    %v7305 = vsel %vm2135, %v7270, 0
    %7307 = vmatprep.subr.bf16.mxu0 0
    %7308 = vmatpush1.bf16.msra.mxu0 0
    %7309 = vmatprep.subr.bf16.mxu0 0
    %7310 = vmatpush1.bf16.msra.mxu0 0
    %7311 = vmatprep.subr.bf16.mxu0 0
    %7312 = vmatpush1.bf16.msra.mxu0 0
    %7313 = vmatprep.subr.bf16.mxu0 0
    %7314 = vmatpush1.bf16.msra.mxu0 0
    %7315 = vmatprep.subr.bf16.mxu0 0
    %7316 = vmatpush1.bf16.msra.mxu0 %v7299
    %7317 = vmatprep.subr.bf16.mxu0 0
    %7318 = vmatpush1.bf16.msra.mxu0 %v7298
    %7319 = vmatprep.subr.bf16.mxu0 0
    %7320 = vmatpush1.bf16.msra.mxu0 %v7297
    %7321 = vmatprep.subr.bf16.mxu0 0
    %7322 = vmatpush1.bf16.msra.mxu0 %v7296
    %7323 = vmatprep.subr.bf16.mxu0 0
    %7324 = vmatpush2.bf16.msra.mxu0 0
    %7325 = vmatprep.subr.bf16.mxu0 0
    %7326 = vmatpush2.bf16.msra.mxu0 0
    %7327 = vmatprep.subr.bf16.mxu0 0
    %7328 = vmatpush2.bf16.msra.mxu0 0
    %7329 = vmatprep.subr.bf16.mxu0 0
    %7330 = vmatpush2.bf16.msra.mxu0 0
    %7331 = vmatprep.subr.bf16.mxu0 0
    %7332 = vmatpush2.bf16.msra.mxu0 0
    %7333 = vmatprep.subr.bf16.mxu0 0
    %7334 = vmatpush2.bf16.msra.mxu0 0
    %7335 = vmatprep.subr.bf16.mxu0 0
    %7336 = vmatpush2.bf16.msra.mxu0 0
    %7337 = vmatprep.subr.bf16.mxu0 0
    %7338 = vmatpush2.bf16.msra.mxu0 0
    %7339 = vmatprep.mubr.bf16.mxu0 0
    %7340 = vmatmul.mubr.bf16.gmra.mxu0 %v7305
    %v7341 = vpop.f32.mrf.mxu0
    %v7342 = vadd.f32 0.0, %v7341
    %v7343 = vpop.f32.mrf.mxu0
    %v7344 = vpop.f32.mrf.mxu0
    %v7345 = vpop.f32.mrf.mxu0
    %7346 = vdwg.mxu0
    %v7347 = vadd.f32 %v6873, %v7342
    %v7348 = vld [vmem:[#allocation2 + $0x208] sm:$0xff]
    %v7349 = vpack.c.bf16 %v7348, %v7348
    %s7350 = scalar_lea.vmem [#allocation8], 2080
    %v7351 = vld [vmem:[%s7350] sm:$0xf]
    %v7352 = vld [vmem:[%s7350 + $0x4] sm:$0xf]
    %v7353 = vld [vmem:[%s7350 + $0x8] sm:$0xf]
    %v7354 = vld [vmem:[%s7350 + $0xc] sm:$0xf]
    %v7355 = vld [vmem:[%s7350 + $0x10] sm:$0xf]
    %v7356 = vld [vmem:[%s7350 + $0x14] sm:$0xf]
    %v7357 = vld [vmem:[%s7350 + $0x18] sm:$0xf]
    %v7358 = vld [vmem:[%s7350 + $0x1c] sm:$0xf]
    %v7367 = vunpack.c.l.b16 %v7351
    %v7368 = vunpack.c.l.b16 %v7352
    %v7369 = vunpack.c.l.b16 %v7353
    %v7370 = vunpack.c.l.b16 %v7354
    %v7371 = vunpack.c.l.b16 %v7355
    %v7372 = vunpack.c.l.b16 %v7356
    %v7373 = vunpack.c.l.b16 %v7357
    %v7374 = vunpack.c.l.b16 %v7358
    %v7375 = vpack.c.b16 %v7368, %v7367
    %v7376 = vpack.c.b16 %v7370, %v7369
    %v7377 = vpack.c.b16 %v7372, %v7371
    %v7378 = vpack.c.b16 %v7374, %v7373
    %v7384 = vsel %vm2135, %v7349, 0
    %7386 = vmatprep.subr.bf16.mxu0 0
    %7387 = vmatpush1.bf16.msra.mxu0 0
    %7388 = vmatprep.subr.bf16.mxu0 0
    %7389 = vmatpush1.bf16.msra.mxu0 0
    %7390 = vmatprep.subr.bf16.mxu0 0
    %7391 = vmatpush1.bf16.msra.mxu0 0
    %7392 = vmatprep.subr.bf16.mxu0 0
    %7393 = vmatpush1.bf16.msra.mxu0 0
    %7394 = vmatprep.subr.bf16.mxu0 0
    %7395 = vmatpush1.bf16.msra.mxu0 %v7378
    %7396 = vmatprep.subr.bf16.mxu0 0
    %7397 = vmatpush1.bf16.msra.mxu0 %v7377
    %7398 = vmatprep.subr.bf16.mxu0 0
    %7399 = vmatpush1.bf16.msra.mxu0 %v7376
    %7400 = vmatprep.subr.bf16.mxu0 0
    %7401 = vmatpush1.bf16.msra.mxu0 %v7375
    %7402 = vmatprep.subr.bf16.mxu0 0
    %7403 = vmatpush2.bf16.msra.mxu0 0
    %7404 = vmatprep.subr.bf16.mxu0 0
    %7405 = vmatpush2.bf16.msra.mxu0 0
    %7406 = vmatprep.subr.bf16.mxu0 0
    %7407 = vmatpush2.bf16.msra.mxu0 0
    %7408 = vmatprep.subr.bf16.mxu0 0
    %7409 = vmatpush2.bf16.msra.mxu0 0
    %7410 = vmatprep.subr.bf16.mxu0 0
    %7411 = vmatpush2.bf16.msra.mxu0 0
    %7412 = vmatprep.subr.bf16.mxu0 0
    %7413 = vmatpush2.bf16.msra.mxu0 0
    %7414 = vmatprep.subr.bf16.mxu0 0
    %7415 = vmatpush2.bf16.msra.mxu0 0
    %7416 = vmatprep.subr.bf16.mxu0 0
    %7417 = vmatpush2.bf16.msra.mxu0 0
    %7418 = vmatprep.mubr.bf16.mxu0 0
    %7419 = vmatmul.mubr.bf16.gmra.mxu0 %v7384
    %v7420 = vpop.f32.mrf.mxu0
    %v7421 = vadd.f32 0.0, %v7420
    %v7422 = vpop.f32.mrf.mxu0
    %v7423 = vpop.f32.mrf.mxu0
    %v7424 = vpop.f32.mrf.mxu0
    %7425 = vdwg.mxu0
    %v7426 = vadd.f32 %v6952, %v7421
    %v7427 = vld [vmem:[#allocation2 + $0x210] sm:$0xff]
    %v7428 = vpack.c.bf16 %v7427, %v7427
    %s7429 = scalar_lea.vmem [#allocation8], 2112
    %v7430 = vld [vmem:[%s7429] sm:$0xf]
    %v7431 = vld [vmem:[%s7429 + $0x4] sm:$0xf]
    %v7432 = vld [vmem:[%s7429 + $0x8] sm:$0xf]
    %v7433 = vld [vmem:[%s7429 + $0xc] sm:$0xf]
    %v7434 = vld [vmem:[%s7429 + $0x10] sm:$0xf]
    %v7435 = vld [vmem:[%s7429 + $0x14] sm:$0xf]
    %v7436 = vld [vmem:[%s7429 + $0x18] sm:$0xf]
    %v7437 = vld [vmem:[%s7429 + $0x1c] sm:$0xf]
    %v7446 = vunpack.c.l.b16 %v7430
    %v7447 = vunpack.c.l.b16 %v7431
    %v7448 = vunpack.c.l.b16 %v7432
    %v7449 = vunpack.c.l.b16 %v7433
    %v7450 = vunpack.c.l.b16 %v7434
    %v7451 = vunpack.c.l.b16 %v7435
    %v7452 = vunpack.c.l.b16 %v7436
    %v7453 = vunpack.c.l.b16 %v7437
    %v7454 = vpack.c.b16 %v7447, %v7446
    %v7455 = vpack.c.b16 %v7449, %v7448
    %v7456 = vpack.c.b16 %v7451, %v7450
    %v7457 = vpack.c.b16 %v7453, %v7452
    %v7463 = vsel %vm2135, %v7428, 0
    %7465 = vmatprep.subr.bf16.mxu0 0
    %7466 = vmatpush1.bf16.msra.mxu0 0
    %7467 = vmatprep.subr.bf16.mxu0 0
    %7468 = vmatpush1.bf16.msra.mxu0 0
    %7469 = vmatprep.subr.bf16.mxu0 0
    %7470 = vmatpush1.bf16.msra.mxu0 0
    %7471 = vmatprep.subr.bf16.mxu0 0
    %7472 = vmatpush1.bf16.msra.mxu0 0
    %7473 = vmatprep.subr.bf16.mxu0 0
    %7474 = vmatpush1.bf16.msra.mxu0 %v7457
    %7475 = vmatprep.subr.bf16.mxu0 0
    %7476 = vmatpush1.bf16.msra.mxu0 %v7456
    %7477 = vmatprep.subr.bf16.mxu0 0
    %7478 = vmatpush1.bf16.msra.mxu0 %v7455
    %7479 = vmatprep.subr.bf16.mxu0 0
    %7480 = vmatpush1.bf16.msra.mxu0 %v7454
    %7481 = vmatprep.subr.bf16.mxu0 0
    %7482 = vmatpush2.bf16.msra.mxu0 0
    %7483 = vmatprep.subr.bf16.mxu0 0
    %7484 = vmatpush2.bf16.msra.mxu0 0
    %7485 = vmatprep.subr.bf16.mxu0 0
    %7486 = vmatpush2.bf16.msra.mxu0 0
    %7487 = vmatprep.subr.bf16.mxu0 0
    %7488 = vmatpush2.bf16.msra.mxu0 0
    %7489 = vmatprep.subr.bf16.mxu0 0
    %7490 = vmatpush2.bf16.msra.mxu0 0
    %7491 = vmatprep.subr.bf16.mxu0 0
    %7492 = vmatpush2.bf16.msra.mxu0 0
    %7493 = vmatprep.subr.bf16.mxu0 0
    %7494 = vmatpush2.bf16.msra.mxu0 0
    %7495 = vmatprep.subr.bf16.mxu0 0
    %7496 = vmatpush2.bf16.msra.mxu0 0
    %7497 = vmatprep.mubr.bf16.mxu0 0
    %7498 = vmatmul.mubr.bf16.gmra.mxu0 %v7463
    %v7499 = vpop.f32.mrf.mxu0
    %v7500 = vadd.f32 0.0, %v7499
    %v7501 = vpop.f32.mrf.mxu0
    %v7502 = vpop.f32.mrf.mxu0
    %v7503 = vpop.f32.mrf.mxu0
    %7504 = vdwg.mxu0
    %v7505 = vadd.f32 %v7031, %v7500
    %v7506 = vld [vmem:[#allocation2 + $0x218] sm:$0xff]
    %v7507 = vpack.c.bf16 %v7506, %v7506
    %s7508 = scalar_lea.vmem [#allocation8], 2144
    %v7509 = vld [vmem:[%s7508] sm:$0xf]
    %v7510 = vld [vmem:[%s7508 + $0x4] sm:$0xf]
    %v7511 = vld [vmem:[%s7508 + $0x8] sm:$0xf]
    %v7512 = vld [vmem:[%s7508 + $0xc] sm:$0xf]
    %v7513 = vld [vmem:[%s7508 + $0x10] sm:$0xf]
    %v7514 = vld [vmem:[%s7508 + $0x14] sm:$0xf]
    %v7515 = vld [vmem:[%s7508 + $0x18] sm:$0xf]
    %v7516 = vld [vmem:[%s7508 + $0x1c] sm:$0xf]
    %v7525 = vunpack.c.l.b16 %v7509
    %v7526 = vunpack.c.l.b16 %v7510
    %v7527 = vunpack.c.l.b16 %v7511
    %v7528 = vunpack.c.l.b16 %v7512
    %v7529 = vunpack.c.l.b16 %v7513
    %v7530 = vunpack.c.l.b16 %v7514
    %v7531 = vunpack.c.l.b16 %v7515
    %v7532 = vunpack.c.l.b16 %v7516
    %v7533 = vpack.c.b16 %v7526, %v7525
    %v7534 = vpack.c.b16 %v7528, %v7527
    %v7535 = vpack.c.b16 %v7530, %v7529
    %v7536 = vpack.c.b16 %v7532, %v7531
    %v7542 = vsel %vm2135, %v7507, 0
    %7544 = vmatprep.subr.bf16.mxu0 0
    %7545 = vmatpush1.bf16.msra.mxu0 0
    %7546 = vmatprep.subr.bf16.mxu0 0
    %7547 = vmatpush1.bf16.msra.mxu0 0
    %7548 = vmatprep.subr.bf16.mxu0 0
    %7549 = vmatpush1.bf16.msra.mxu0 0
    %7550 = vmatprep.subr.bf16.mxu0 0
    %7551 = vmatpush1.bf16.msra.mxu0 0
    %7552 = vmatprep.subr.bf16.mxu0 0
    %7553 = vmatpush1.bf16.msra.mxu0 %v7536
    %7554 = vmatprep.subr.bf16.mxu0 0
    %7555 = vmatpush1.bf16.msra.mxu0 %v7535
    %7556 = vmatprep.subr.bf16.mxu0 0
    %7557 = vmatpush1.bf16.msra.mxu0 %v7534
    %7558 = vmatprep.subr.bf16.mxu0 0
    %7559 = vmatpush1.bf16.msra.mxu0 %v7533
    %7560 = vmatprep.subr.bf16.mxu0 0
    %7561 = vmatpush2.bf16.msra.mxu0 0
    %7562 = vmatprep.subr.bf16.mxu0 0
    %7563 = vmatpush2.bf16.msra.mxu0 0
    %7564 = vmatprep.subr.bf16.mxu0 0
    %7565 = vmatpush2.bf16.msra.mxu0 0
    %7566 = vmatprep.subr.bf16.mxu0 0
    %7567 = vmatpush2.bf16.msra.mxu0 0
    %7568 = vmatprep.subr.bf16.mxu0 0
    %7569 = vmatpush2.bf16.msra.mxu0 0
    %7570 = vmatprep.subr.bf16.mxu0 0
    %7571 = vmatpush2.bf16.msra.mxu0 0
    %7572 = vmatprep.subr.bf16.mxu0 0
    %7573 = vmatpush2.bf16.msra.mxu0 0
    %7574 = vmatprep.subr.bf16.mxu0 0
    %7575 = vmatpush2.bf16.msra.mxu0 0
    %7576 = vmatprep.mubr.bf16.mxu0 0
    %7577 = vmatmul.mubr.bf16.gmra.mxu0 %v7542
    %v7578 = vpop.f32.mrf.mxu0
    %v7579 = vadd.f32 0.0, %v7578
    %v7580 = vpop.f32.mrf.mxu0
    %v7581 = vpop.f32.mrf.mxu0
    %v7582 = vpop.f32.mrf.mxu0
    %7583 = vdwg.mxu0
    %v7584 = vadd.f32 %v7110, %v7579
    %v7585 = vld [vmem:[#allocation2 + $0x220] sm:$0xff]
    %v7586 = vpack.c.bf16 %v7585, %v7585
    %s7587 = scalar_lea.vmem [#allocation8], 2176
    %v7588 = vld [vmem:[%s7587] sm:$0xf]
    %v7589 = vld [vmem:[%s7587 + $0x4] sm:$0xf]
    %v7590 = vld [vmem:[%s7587 + $0x8] sm:$0xf]
    %v7591 = vld [vmem:[%s7587 + $0xc] sm:$0xf]
    %v7592 = vld [vmem:[%s7587 + $0x10] sm:$0xf]
    %v7593 = vld [vmem:[%s7587 + $0x14] sm:$0xf]
    %v7594 = vld [vmem:[%s7587 + $0x18] sm:$0xf]
    %v7595 = vld [vmem:[%s7587 + $0x1c] sm:$0xf]
    %v7604 = vunpack.c.l.b16 %v7588
    %v7605 = vunpack.c.l.b16 %v7589
    %v7606 = vunpack.c.l.b16 %v7590
    %v7607 = vunpack.c.l.b16 %v7591
    %v7608 = vunpack.c.l.b16 %v7592
    %v7609 = vunpack.c.l.b16 %v7593
    %v7610 = vunpack.c.l.b16 %v7594
    %v7611 = vunpack.c.l.b16 %v7595
    %v7612 = vpack.c.b16 %v7605, %v7604
    %v7613 = vpack.c.b16 %v7607, %v7606
    %v7614 = vpack.c.b16 %v7609, %v7608
    %v7615 = vpack.c.b16 %v7611, %v7610
    %v7621 = vsel %vm2135, %v7586, 0
    %7623 = vmatprep.subr.bf16.mxu0 0
    %7624 = vmatpush1.bf16.msra.mxu0 0
    %7625 = vmatprep.subr.bf16.mxu0 0
    %7626 = vmatpush1.bf16.msra.mxu0 0
    %7627 = vmatprep.subr.bf16.mxu0 0
    %7628 = vmatpush1.bf16.msra.mxu0 0
    %7629 = vmatprep.subr.bf16.mxu0 0
    %7630 = vmatpush1.bf16.msra.mxu0 0
    %7631 = vmatprep.subr.bf16.mxu0 0
    %7632 = vmatpush1.bf16.msra.mxu0 %v7615
    %7633 = vmatprep.subr.bf16.mxu0 0
    %7634 = vmatpush1.bf16.msra.mxu0 %v7614
    %7635 = vmatprep.subr.bf16.mxu0 0
    %7636 = vmatpush1.bf16.msra.mxu0 %v7613
    %7637 = vmatprep.subr.bf16.mxu0 0
    %7638 = vmatpush1.bf16.msra.mxu0 %v7612
    %7639 = vmatprep.subr.bf16.mxu0 0
    %7640 = vmatpush2.bf16.msra.mxu0 0
    %7641 = vmatprep.subr.bf16.mxu0 0
    %7642 = vmatpush2.bf16.msra.mxu0 0
    %7643 = vmatprep.subr.bf16.mxu0 0
    %7644 = vmatpush2.bf16.msra.mxu0 0
    %7645 = vmatprep.subr.bf16.mxu0 0
    %7646 = vmatpush2.bf16.msra.mxu0 0
    %7647 = vmatprep.subr.bf16.mxu0 0
    %7648 = vmatpush2.bf16.msra.mxu0 0
    %7649 = vmatprep.subr.bf16.mxu0 0
    %7650 = vmatpush2.bf16.msra.mxu0 0
    %7651 = vmatprep.subr.bf16.mxu0 0
    %7652 = vmatpush2.bf16.msra.mxu0 0
    %7653 = vmatprep.subr.bf16.mxu0 0
    %7654 = vmatpush2.bf16.msra.mxu0 0
    %7655 = vmatprep.mubr.bf16.mxu0 0
    %7656 = vmatmul.mubr.bf16.gmra.mxu0 %v7621
    %v7657 = vpop.f32.mrf.mxu0
    %v7658 = vadd.f32 0.0, %v7657
    %v7659 = vpop.f32.mrf.mxu0
    %v7660 = vpop.f32.mrf.mxu0
    %v7661 = vpop.f32.mrf.mxu0
    %7662 = vdwg.mxu0
    %v7663 = vadd.f32 %v7189, %v7658
    %v7664 = vld [vmem:[#allocation2 + $0x228] sm:$0xff]
    %v7665 = vpack.c.bf16 %v7664, %v7664
    %s7666 = scalar_lea.vmem [#allocation8], 2208
    %v7667 = vld [vmem:[%s7666] sm:$0xf]
    %v7668 = vld [vmem:[%s7666 + $0x4] sm:$0xf]
    %v7669 = vld [vmem:[%s7666 + $0x8] sm:$0xf]
    %v7670 = vld [vmem:[%s7666 + $0xc] sm:$0xf]
    %v7671 = vld [vmem:[%s7666 + $0x10] sm:$0xf]
    %v7672 = vld [vmem:[%s7666 + $0x14] sm:$0xf]
    %v7673 = vld [vmem:[%s7666 + $0x18] sm:$0xf]
    %v7674 = vld [vmem:[%s7666 + $0x1c] sm:$0xf]
    %v7683 = vunpack.c.l.b16 %v7667
    %v7684 = vunpack.c.l.b16 %v7668
    %v7685 = vunpack.c.l.b16 %v7669
    %v7686 = vunpack.c.l.b16 %v7670
    %v7687 = vunpack.c.l.b16 %v7671
    %v7688 = vunpack.c.l.b16 %v7672
    %v7689 = vunpack.c.l.b16 %v7673
    %v7690 = vunpack.c.l.b16 %v7674
    %v7691 = vpack.c.b16 %v7684, %v7683
    %v7692 = vpack.c.b16 %v7686, %v7685
    %v7693 = vpack.c.b16 %v7688, %v7687
    %v7694 = vpack.c.b16 %v7690, %v7689
    %v7700 = vsel %vm2135, %v7665, 0
    %7702 = vmatprep.subr.bf16.mxu0 0
    %7703 = vmatpush1.bf16.msra.mxu0 0
    %7704 = vmatprep.subr.bf16.mxu0 0
    %7705 = vmatpush1.bf16.msra.mxu0 0
    %7706 = vmatprep.subr.bf16.mxu0 0
    %7707 = vmatpush1.bf16.msra.mxu0 0
    %7708 = vmatprep.subr.bf16.mxu0 0
    %7709 = vmatpush1.bf16.msra.mxu0 0
    %7710 = vmatprep.subr.bf16.mxu0 0
    %7711 = vmatpush1.bf16.msra.mxu0 %v7694
    %7712 = vmatprep.subr.bf16.mxu0 0
    %7713 = vmatpush1.bf16.msra.mxu0 %v7693
    %7714 = vmatprep.subr.bf16.mxu0 0
    %7715 = vmatpush1.bf16.msra.mxu0 %v7692
    %7716 = vmatprep.subr.bf16.mxu0 0
    %7717 = vmatpush1.bf16.msra.mxu0 %v7691
    %7718 = vmatprep.subr.bf16.mxu0 0
    %7719 = vmatpush2.bf16.msra.mxu0 0
    %7720 = vmatprep.subr.bf16.mxu0 0
    %7721 = vmatpush2.bf16.msra.mxu0 0
    %7722 = vmatprep.subr.bf16.mxu0 0
    %7723 = vmatpush2.bf16.msra.mxu0 0
    %7724 = vmatprep.subr.bf16.mxu0 0
    %7725 = vmatpush2.bf16.msra.mxu0 0
    %7726 = vmatprep.subr.bf16.mxu0 0
    %7727 = vmatpush2.bf16.msra.mxu0 0
    %7728 = vmatprep.subr.bf16.mxu0 0
    %7729 = vmatpush2.bf16.msra.mxu0 0
    %7730 = vmatprep.subr.bf16.mxu0 0
    %7731 = vmatpush2.bf16.msra.mxu0 0
    %7732 = vmatprep.subr.bf16.mxu0 0
    %7733 = vmatpush2.bf16.msra.mxu0 0
    %7734 = vmatprep.mubr.bf16.mxu0 0
    %7735 = vmatmul.mubr.bf16.gmra.mxu0 %v7700
    %v7736 = vpop.f32.mrf.mxu0
    %v7737 = vadd.f32 0.0, %v7736
    %v7738 = vpop.f32.mrf.mxu0
    %v7739 = vpop.f32.mrf.mxu0
    %v7740 = vpop.f32.mrf.mxu0
    %7741 = vdwg.mxu0
    %v7742 = vadd.f32 %v7268, %v7737
    %v7743 = vld [vmem:[#allocation2 + $0x230] sm:$0xff]
    %v7744 = vpack.c.bf16 %v7743, %v7743
    %s7745 = scalar_lea.vmem [#allocation8], 2240
    %v7746 = vld [vmem:[%s7745] sm:$0xf]
    %v7747 = vld [vmem:[%s7745 + $0x4] sm:$0xf]
    %v7748 = vld [vmem:[%s7745 + $0x8] sm:$0xf]
    %v7749 = vld [vmem:[%s7745 + $0xc] sm:$0xf]
    %v7750 = vld [vmem:[%s7745 + $0x10] sm:$0xf]
    %v7751 = vld [vmem:[%s7745 + $0x14] sm:$0xf]
    %v7752 = vld [vmem:[%s7745 + $0x18] sm:$0xf]
    %v7753 = vld [vmem:[%s7745 + $0x1c] sm:$0xf]
    %v7762 = vunpack.c.l.b16 %v7746
    %v7763 = vunpack.c.l.b16 %v7747
    %v7764 = vunpack.c.l.b16 %v7748
    %v7765 = vunpack.c.l.b16 %v7749
    %v7766 = vunpack.c.l.b16 %v7750
    %v7767 = vunpack.c.l.b16 %v7751
    %v7768 = vunpack.c.l.b16 %v7752
    %v7769 = vunpack.c.l.b16 %v7753
    %v7770 = vpack.c.b16 %v7763, %v7762
    %v7771 = vpack.c.b16 %v7765, %v7764
    %v7772 = vpack.c.b16 %v7767, %v7766
    %v7773 = vpack.c.b16 %v7769, %v7768
    %v7779 = vsel %vm2135, %v7744, 0
    %7781 = vmatprep.subr.bf16.mxu0 0
    %7782 = vmatpush1.bf16.msra.mxu0 0
    %7783 = vmatprep.subr.bf16.mxu0 0
    %7784 = vmatpush1.bf16.msra.mxu0 0
    %7785 = vmatprep.subr.bf16.mxu0 0
    %7786 = vmatpush1.bf16.msra.mxu0 0
    %7787 = vmatprep.subr.bf16.mxu0 0
    %7788 = vmatpush1.bf16.msra.mxu0 0
    %7789 = vmatprep.subr.bf16.mxu0 0
    %7790 = vmatpush1.bf16.msra.mxu0 %v7773
    %7791 = vmatprep.subr.bf16.mxu0 0
    %7792 = vmatpush1.bf16.msra.mxu0 %v7772
    %7793 = vmatprep.subr.bf16.mxu0 0
    %7794 = vmatpush1.bf16.msra.mxu0 %v7771
    %7795 = vmatprep.subr.bf16.mxu0 0
    %7796 = vmatpush1.bf16.msra.mxu0 %v7770
    %7797 = vmatprep.subr.bf16.mxu0 0
    %7798 = vmatpush2.bf16.msra.mxu0 0
    %7799 = vmatprep.subr.bf16.mxu0 0
    %7800 = vmatpush2.bf16.msra.mxu0 0
    %7801 = vmatprep.subr.bf16.mxu0 0
    %7802 = vmatpush2.bf16.msra.mxu0 0
    %7803 = vmatprep.subr.bf16.mxu0 0
    %7804 = vmatpush2.bf16.msra.mxu0 0
    %7805 = vmatprep.subr.bf16.mxu0 0
    %7806 = vmatpush2.bf16.msra.mxu0 0
    %7807 = vmatprep.subr.bf16.mxu0 0
    %7808 = vmatpush2.bf16.msra.mxu0 0
    %7809 = vmatprep.subr.bf16.mxu0 0
    %7810 = vmatpush2.bf16.msra.mxu0 0
    %7811 = vmatprep.subr.bf16.mxu0 0
    %7812 = vmatpush2.bf16.msra.mxu0 0
    %7813 = vmatprep.mubr.bf16.mxu0 0
    %7814 = vmatmul.mubr.bf16.gmra.mxu0 %v7779
    %v7815 = vpop.f32.mrf.mxu0
    %v7816 = vadd.f32 0.0, %v7815
    %v7817 = vpop.f32.mrf.mxu0
    %v7818 = vpop.f32.mrf.mxu0
    %v7819 = vpop.f32.mrf.mxu0
    %7820 = vdwg.mxu0
    %v7821 = vadd.f32 %v7347, %v7816
    %v7822 = vld [vmem:[#allocation2 + $0x238] sm:$0xff]
    %v7823 = vpack.c.bf16 %v7822, %v7822
    %s7824 = scalar_lea.vmem [#allocation8], 2272
    %v7825 = vld [vmem:[%s7824] sm:$0xf]
    %v7826 = vld [vmem:[%s7824 + $0x4] sm:$0xf]
    %v7827 = vld [vmem:[%s7824 + $0x8] sm:$0xf]
    %v7828 = vld [vmem:[%s7824 + $0xc] sm:$0xf]
    %v7829 = vld [vmem:[%s7824 + $0x10] sm:$0xf]
    %v7830 = vld [vmem:[%s7824 + $0x14] sm:$0xf]
    %v7831 = vld [vmem:[%s7824 + $0x18] sm:$0xf]
    %v7832 = vld [vmem:[%s7824 + $0x1c] sm:$0xf]
    %v7841 = vunpack.c.l.b16 %v7825
    %v7842 = vunpack.c.l.b16 %v7826
    %v7843 = vunpack.c.l.b16 %v7827
    %v7844 = vunpack.c.l.b16 %v7828
    %v7845 = vunpack.c.l.b16 %v7829
    %v7846 = vunpack.c.l.b16 %v7830
    %v7847 = vunpack.c.l.b16 %v7831
    %v7848 = vunpack.c.l.b16 %v7832
    %v7849 = vpack.c.b16 %v7842, %v7841
    %v7850 = vpack.c.b16 %v7844, %v7843
    %v7851 = vpack.c.b16 %v7846, %v7845
    %v7852 = vpack.c.b16 %v7848, %v7847
    %v7858 = vsel %vm2135, %v7823, 0
    %7860 = vmatprep.subr.bf16.mxu0 0
    %7861 = vmatpush1.bf16.msra.mxu0 0
    %7862 = vmatprep.subr.bf16.mxu0 0
    %7863 = vmatpush1.bf16.msra.mxu0 0
    %7864 = vmatprep.subr.bf16.mxu0 0
    %7865 = vmatpush1.bf16.msra.mxu0 0
    %7866 = vmatprep.subr.bf16.mxu0 0
    %7867 = vmatpush1.bf16.msra.mxu0 0
    %7868 = vmatprep.subr.bf16.mxu0 0
    %7869 = vmatpush1.bf16.msra.mxu0 %v7852
    %7870 = vmatprep.subr.bf16.mxu0 0
    %7871 = vmatpush1.bf16.msra.mxu0 %v7851
    %7872 = vmatprep.subr.bf16.mxu0 0
    %7873 = vmatpush1.bf16.msra.mxu0 %v7850
    %7874 = vmatprep.subr.bf16.mxu0 0
    %7875 = vmatpush1.bf16.msra.mxu0 %v7849
    %7876 = vmatprep.subr.bf16.mxu0 0
    %7877 = vmatpush2.bf16.msra.mxu0 0
    %7878 = vmatprep.subr.bf16.mxu0 0
    %7879 = vmatpush2.bf16.msra.mxu0 0
    %7880 = vmatprep.subr.bf16.mxu0 0
    %7881 = vmatpush2.bf16.msra.mxu0 0
    %7882 = vmatprep.subr.bf16.mxu0 0
    %7883 = vmatpush2.bf16.msra.mxu0 0
    %7884 = vmatprep.subr.bf16.mxu0 0
    %7885 = vmatpush2.bf16.msra.mxu0 0
    %7886 = vmatprep.subr.bf16.mxu0 0
    %7887 = vmatpush2.bf16.msra.mxu0 0
    %7888 = vmatprep.subr.bf16.mxu0 0
    %7889 = vmatpush2.bf16.msra.mxu0 0
    %7890 = vmatprep.subr.bf16.mxu0 0
    %7891 = vmatpush2.bf16.msra.mxu0 0
    %7892 = vmatprep.mubr.bf16.mxu0 0
    %7893 = vmatmul.mubr.bf16.gmra.mxu0 %v7858
    %v7894 = vpop.f32.mrf.mxu0
    %v7895 = vadd.f32 0.0, %v7894
    %v7896 = vpop.f32.mrf.mxu0
    %v7897 = vpop.f32.mrf.mxu0
    %v7898 = vpop.f32.mrf.mxu0
    %7899 = vdwg.mxu0
    %v7900 = vadd.f32 %v7426, %v7895
    %v7901 = vld [vmem:[#allocation2 + $0x240] sm:$0xff]
    %v7902 = vpack.c.bf16 %v7901, %v7901
    %s7903 = scalar_lea.vmem [#allocation8], 2304
    %v7904 = vld [vmem:[%s7903] sm:$0xf]
    %v7905 = vld [vmem:[%s7903 + $0x4] sm:$0xf]
    %v7906 = vld [vmem:[%s7903 + $0x8] sm:$0xf]
    %v7907 = vld [vmem:[%s7903 + $0xc] sm:$0xf]
    %v7908 = vld [vmem:[%s7903 + $0x10] sm:$0xf]
    %v7909 = vld [vmem:[%s7903 + $0x14] sm:$0xf]
    %v7910 = vld [vmem:[%s7903 + $0x18] sm:$0xf]
    %v7911 = vld [vmem:[%s7903 + $0x1c] sm:$0xf]
    %v7920 = vunpack.c.l.b16 %v7904
    %v7921 = vunpack.c.l.b16 %v7905
    %v7922 = vunpack.c.l.b16 %v7906
    %v7923 = vunpack.c.l.b16 %v7907
    %v7924 = vunpack.c.l.b16 %v7908
    %v7925 = vunpack.c.l.b16 %v7909
    %v7926 = vunpack.c.l.b16 %v7910
    %v7927 = vunpack.c.l.b16 %v7911
    %v7928 = vpack.c.b16 %v7921, %v7920
    %v7929 = vpack.c.b16 %v7923, %v7922
    %v7930 = vpack.c.b16 %v7925, %v7924
    %v7931 = vpack.c.b16 %v7927, %v7926
    %v7937 = vsel %vm2135, %v7902, 0
    %7939 = vmatprep.subr.bf16.mxu0 0
    %7940 = vmatpush1.bf16.msra.mxu0 0
    %7941 = vmatprep.subr.bf16.mxu0 0
    %7942 = vmatpush1.bf16.msra.mxu0 0
    %7943 = vmatprep.subr.bf16.mxu0 0
    %7944 = vmatpush1.bf16.msra.mxu0 0
    %7945 = vmatprep.subr.bf16.mxu0 0
    %7946 = vmatpush1.bf16.msra.mxu0 0
    %7947 = vmatprep.subr.bf16.mxu0 0
    %7948 = vmatpush1.bf16.msra.mxu0 %v7931
    %7949 = vmatprep.subr.bf16.mxu0 0
    %7950 = vmatpush1.bf16.msra.mxu0 %v7930
    %7951 = vmatprep.subr.bf16.mxu0 0
    %7952 = vmatpush1.bf16.msra.mxu0 %v7929
    %7953 = vmatprep.subr.bf16.mxu0 0
    %7954 = vmatpush1.bf16.msra.mxu0 %v7928
    %7955 = vmatprep.subr.bf16.mxu0 0
    %7956 = vmatpush2.bf16.msra.mxu0 0
    %7957 = vmatprep.subr.bf16.mxu0 0
    %7958 = vmatpush2.bf16.msra.mxu0 0
    %7959 = vmatprep.subr.bf16.mxu0 0
    %7960 = vmatpush2.bf16.msra.mxu0 0
    %7961 = vmatprep.subr.bf16.mxu0 0
    %7962 = vmatpush2.bf16.msra.mxu0 0
    %7963 = vmatprep.subr.bf16.mxu0 0
    %7964 = vmatpush2.bf16.msra.mxu0 0
    %7965 = vmatprep.subr.bf16.mxu0 0
    %7966 = vmatpush2.bf16.msra.mxu0 0
    %7967 = vmatprep.subr.bf16.mxu0 0
    %7968 = vmatpush2.bf16.msra.mxu0 0
    %7969 = vmatprep.subr.bf16.mxu0 0
    %7970 = vmatpush2.bf16.msra.mxu0 0
    %7971 = vmatprep.mubr.bf16.mxu0 0
    %7972 = vmatmul.mubr.bf16.gmra.mxu0 %v7937
    %v7973 = vpop.f32.mrf.mxu0
    %v7974 = vadd.f32 0.0, %v7973
    %v7975 = vpop.f32.mrf.mxu0
    %v7976 = vpop.f32.mrf.mxu0
    %v7977 = vpop.f32.mrf.mxu0
    %7978 = vdwg.mxu0
    %v7979 = vadd.f32 %v7505, %v7974
    %v7980 = vld [vmem:[#allocation2 + $0x248] sm:$0xff]
    %v7981 = vpack.c.bf16 %v7980, %v7980
    %s7982 = scalar_lea.vmem [#allocation8], 2336
    %v7983 = vld [vmem:[%s7982] sm:$0xf]
    %v7984 = vld [vmem:[%s7982 + $0x4] sm:$0xf]
    %v7985 = vld [vmem:[%s7982 + $0x8] sm:$0xf]
    %v7986 = vld [vmem:[%s7982 + $0xc] sm:$0xf]
    %v7987 = vld [vmem:[%s7982 + $0x10] sm:$0xf]
    %v7988 = vld [vmem:[%s7982 + $0x14] sm:$0xf]
    %v7989 = vld [vmem:[%s7982 + $0x18] sm:$0xf]
    %v7990 = vld [vmem:[%s7982 + $0x1c] sm:$0xf]
    %v7999 = vunpack.c.l.b16 %v7983
    %v8000 = vunpack.c.l.b16 %v7984
    %v8001 = vunpack.c.l.b16 %v7985
    %v8002 = vunpack.c.l.b16 %v7986
    %v8003 = vunpack.c.l.b16 %v7987
    %v8004 = vunpack.c.l.b16 %v7988
    %v8005 = vunpack.c.l.b16 %v7989
    %v8006 = vunpack.c.l.b16 %v7990
    %v8007 = vpack.c.b16 %v8000, %v7999
    %v8008 = vpack.c.b16 %v8002, %v8001
    %v8009 = vpack.c.b16 %v8004, %v8003
    %v8010 = vpack.c.b16 %v8006, %v8005
    %v8016 = vsel %vm2135, %v7981, 0
    %8018 = vmatprep.subr.bf16.mxu0 0
    %8019 = vmatpush1.bf16.msra.mxu0 0
    %8020 = vmatprep.subr.bf16.mxu0 0
    %8021 = vmatpush1.bf16.msra.mxu0 0
    %8022 = vmatprep.subr.bf16.mxu0 0
    %8023 = vmatpush1.bf16.msra.mxu0 0
    %8024 = vmatprep.subr.bf16.mxu0 0
    %8025 = vmatpush1.bf16.msra.mxu0 0
    %8026 = vmatprep.subr.bf16.mxu0 0
    %8027 = vmatpush1.bf16.msra.mxu0 %v8010
    %8028 = vmatprep.subr.bf16.mxu0 0
    %8029 = vmatpush1.bf16.msra.mxu0 %v8009
    %8030 = vmatprep.subr.bf16.mxu0 0
    %8031 = vmatpush1.bf16.msra.mxu0 %v8008
    %8032 = vmatprep.subr.bf16.mxu0 0
    %8033 = vmatpush1.bf16.msra.mxu0 %v8007
    %8034 = vmatprep.subr.bf16.mxu0 0
    %8035 = vmatpush2.bf16.msra.mxu0 0
    %8036 = vmatprep.subr.bf16.mxu0 0
    %8037 = vmatpush2.bf16.msra.mxu0 0
    %8038 = vmatprep.subr.bf16.mxu0 0
    %8039 = vmatpush2.bf16.msra.mxu0 0
    %8040 = vmatprep.subr.bf16.mxu0 0
    %8041 = vmatpush2.bf16.msra.mxu0 0
    %8042 = vmatprep.subr.bf16.mxu0 0
    %8043 = vmatpush2.bf16.msra.mxu0 0
    %8044 = vmatprep.subr.bf16.mxu0 0
    %8045 = vmatpush2.bf16.msra.mxu0 0
    %8046 = vmatprep.subr.bf16.mxu0 0
    %8047 = vmatpush2.bf16.msra.mxu0 0
    %8048 = vmatprep.subr.bf16.mxu0 0
    %8049 = vmatpush2.bf16.msra.mxu0 0
    %8050 = vmatprep.mubr.bf16.mxu0 0
    %8051 = vmatmul.mubr.bf16.gmra.mxu0 %v8016
    %v8052 = vpop.f32.mrf.mxu0
    %v8053 = vadd.f32 0.0, %v8052
    %v8054 = vpop.f32.mrf.mxu0
    %v8055 = vpop.f32.mrf.mxu0
    %v8056 = vpop.f32.mrf.mxu0
    %8057 = vdwg.mxu0
    %v8058 = vadd.f32 %v7584, %v8053
    %v8059 = vld [vmem:[#allocation2 + $0x250] sm:$0xff]
    %v8060 = vpack.c.bf16 %v8059, %v8059
    %s8061 = scalar_lea.vmem [#allocation8], 2368
    %v8062 = vld [vmem:[%s8061] sm:$0xf]
    %v8063 = vld [vmem:[%s8061 + $0x4] sm:$0xf]
    %v8064 = vld [vmem:[%s8061 + $0x8] sm:$0xf]
    %v8065 = vld [vmem:[%s8061 + $0xc] sm:$0xf]
    %v8066 = vld [vmem:[%s8061 + $0x10] sm:$0xf]
    %v8067 = vld [vmem:[%s8061 + $0x14] sm:$0xf]
    %v8068 = vld [vmem:[%s8061 + $0x18] sm:$0xf]
    %v8069 = vld [vmem:[%s8061 + $0x1c] sm:$0xf]
    %v8078 = vunpack.c.l.b16 %v8062
    %v8079 = vunpack.c.l.b16 %v8063
    %v8080 = vunpack.c.l.b16 %v8064
    %v8081 = vunpack.c.l.b16 %v8065
    %v8082 = vunpack.c.l.b16 %v8066
    %v8083 = vunpack.c.l.b16 %v8067
    %v8084 = vunpack.c.l.b16 %v8068
    %v8085 = vunpack.c.l.b16 %v8069
    %v8086 = vpack.c.b16 %v8079, %v8078
    %v8087 = vpack.c.b16 %v8081, %v8080
    %v8088 = vpack.c.b16 %v8083, %v8082
    %v8089 = vpack.c.b16 %v8085, %v8084
    %v8095 = vsel %vm2135, %v8060, 0
    %8097 = vmatprep.subr.bf16.mxu0 0
    %8098 = vmatpush1.bf16.msra.mxu0 0
    %8099 = vmatprep.subr.bf16.mxu0 0
    %8100 = vmatpush1.bf16.msra.mxu0 0
    %8101 = vmatprep.subr.bf16.mxu0 0
    %8102 = vmatpush1.bf16.msra.mxu0 0
    %8103 = vmatprep.subr.bf16.mxu0 0
    %8104 = vmatpush1.bf16.msra.mxu0 0
    %8105 = vmatprep.subr.bf16.mxu0 0
    %8106 = vmatpush1.bf16.msra.mxu0 %v8089
    %8107 = vmatprep.subr.bf16.mxu0 0
    %8108 = vmatpush1.bf16.msra.mxu0 %v8088
    %8109 = vmatprep.subr.bf16.mxu0 0
    %8110 = vmatpush1.bf16.msra.mxu0 %v8087
    %8111 = vmatprep.subr.bf16.mxu0 0
    %8112 = vmatpush1.bf16.msra.mxu0 %v8086
    %8113 = vmatprep.subr.bf16.mxu0 0
    %8114 = vmatpush2.bf16.msra.mxu0 0
    %8115 = vmatprep.subr.bf16.mxu0 0
    %8116 = vmatpush2.bf16.msra.mxu0 0
    %8117 = vmatprep.subr.bf16.mxu0 0
    %8118 = vmatpush2.bf16.msra.mxu0 0
    %8119 = vmatprep.subr.bf16.mxu0 0
    %8120 = vmatpush2.bf16.msra.mxu0 0
    %8121 = vmatprep.subr.bf16.mxu0 0
    %8122 = vmatpush2.bf16.msra.mxu0 0
    %8123 = vmatprep.subr.bf16.mxu0 0
    %8124 = vmatpush2.bf16.msra.mxu0 0
    %8125 = vmatprep.subr.bf16.mxu0 0
    %8126 = vmatpush2.bf16.msra.mxu0 0
    %8127 = vmatprep.subr.bf16.mxu0 0
    %8128 = vmatpush2.bf16.msra.mxu0 0
    %8129 = vmatprep.mubr.bf16.mxu0 0
    %8130 = vmatmul.mubr.bf16.gmra.mxu0 %v8095
    %v8131 = vpop.f32.mrf.mxu0
    %v8132 = vadd.f32 0.0, %v8131
    %v8133 = vpop.f32.mrf.mxu0
    %v8134 = vpop.f32.mrf.mxu0
    %v8135 = vpop.f32.mrf.mxu0
    %8136 = vdwg.mxu0
    %v8137 = vadd.f32 %v7663, %v8132
    %v8138 = vld [vmem:[#allocation2 + $0x258] sm:$0xff]
    %v8139 = vpack.c.bf16 %v8138, %v8138
    %s8140 = scalar_lea.vmem [#allocation8], 2400
    %v8141 = vld [vmem:[%s8140] sm:$0xf]
    %v8142 = vld [vmem:[%s8140 + $0x4] sm:$0xf]
    %v8143 = vld [vmem:[%s8140 + $0x8] sm:$0xf]
    %v8144 = vld [vmem:[%s8140 + $0xc] sm:$0xf]
    %v8145 = vld [vmem:[%s8140 + $0x10] sm:$0xf]
    %v8146 = vld [vmem:[%s8140 + $0x14] sm:$0xf]
    %v8147 = vld [vmem:[%s8140 + $0x18] sm:$0xf]
    %v8148 = vld [vmem:[%s8140 + $0x1c] sm:$0xf]
    %v8157 = vunpack.c.l.b16 %v8141
    %v8158 = vunpack.c.l.b16 %v8142
    %v8159 = vunpack.c.l.b16 %v8143
    %v8160 = vunpack.c.l.b16 %v8144
    %v8161 = vunpack.c.l.b16 %v8145
    %v8162 = vunpack.c.l.b16 %v8146
    %v8163 = vunpack.c.l.b16 %v8147
    %v8164 = vunpack.c.l.b16 %v8148
    %v8165 = vpack.c.b16 %v8158, %v8157
    %v8166 = vpack.c.b16 %v8160, %v8159
    %v8167 = vpack.c.b16 %v8162, %v8161
    %v8168 = vpack.c.b16 %v8164, %v8163
    %v8174 = vsel %vm2135, %v8139, 0
    %8176 = vmatprep.subr.bf16.mxu0 0
    %8177 = vmatpush1.bf16.msra.mxu0 0
    %8178 = vmatprep.subr.bf16.mxu0 0
    %8179 = vmatpush1.bf16.msra.mxu0 0
    %8180 = vmatprep.subr.bf16.mxu0 0
    %8181 = vmatpush1.bf16.msra.mxu0 0
    %8182 = vmatprep.subr.bf16.mxu0 0
    %8183 = vmatpush1.bf16.msra.mxu0 0
    %8184 = vmatprep.subr.bf16.mxu0 0
    %8185 = vmatpush1.bf16.msra.mxu0 %v8168
    %8186 = vmatprep.subr.bf16.mxu0 0
    %8187 = vmatpush1.bf16.msra.mxu0 %v8167
    %8188 = vmatprep.subr.bf16.mxu0 0
    %8189 = vmatpush1.bf16.msra.mxu0 %v8166
    %8190 = vmatprep.subr.bf16.mxu0 0
    %8191 = vmatpush1.bf16.msra.mxu0 %v8165
    %8192 = vmatprep.subr.bf16.mxu0 0
    %8193 = vmatpush2.bf16.msra.mxu0 0
    %8194 = vmatprep.subr.bf16.mxu0 0
    %8195 = vmatpush2.bf16.msra.mxu0 0
    %8196 = vmatprep.subr.bf16.mxu0 0
    %8197 = vmatpush2.bf16.msra.mxu0 0
    %8198 = vmatprep.subr.bf16.mxu0 0
    %8199 = vmatpush2.bf16.msra.mxu0 0
    %8200 = vmatprep.subr.bf16.mxu0 0
    %8201 = vmatpush2.bf16.msra.mxu0 0
    %8202 = vmatprep.subr.bf16.mxu0 0
    %8203 = vmatpush2.bf16.msra.mxu0 0
    %8204 = vmatprep.subr.bf16.mxu0 0
    %8205 = vmatpush2.bf16.msra.mxu0 0
    %8206 = vmatprep.subr.bf16.mxu0 0
    %8207 = vmatpush2.bf16.msra.mxu0 0
    %8208 = vmatprep.mubr.bf16.mxu0 0
    %8209 = vmatmul.mubr.bf16.gmra.mxu0 %v8174
    %v8210 = vpop.f32.mrf.mxu0
    %v8211 = vadd.f32 0.0, %v8210
    %v8212 = vpop.f32.mrf.mxu0
    %v8213 = vpop.f32.mrf.mxu0
    %v8214 = vpop.f32.mrf.mxu0
    %8215 = vdwg.mxu0
    %v8216 = vadd.f32 %v7742, %v8211
    %v8217 = vld [vmem:[#allocation2 + $0x260] sm:$0xff]
    %v8218 = vpack.c.bf16 %v8217, %v8217
    %s8219 = scalar_lea.vmem [#allocation8], 2432
    %v8220 = vld [vmem:[%s8219] sm:$0xf]
    %v8221 = vld [vmem:[%s8219 + $0x4] sm:$0xf]
    %v8222 = vld [vmem:[%s8219 + $0x8] sm:$0xf]
    %v8223 = vld [vmem:[%s8219 + $0xc] sm:$0xf]
    %v8224 = vld [vmem:[%s8219 + $0x10] sm:$0xf]
    %v8225 = vld [vmem:[%s8219 + $0x14] sm:$0xf]
    %v8226 = vld [vmem:[%s8219 + $0x18] sm:$0xf]
    %v8227 = vld [vmem:[%s8219 + $0x1c] sm:$0xf]
    %v8236 = vunpack.c.l.b16 %v8220
    %v8237 = vunpack.c.l.b16 %v8221
    %v8238 = vunpack.c.l.b16 %v8222
    %v8239 = vunpack.c.l.b16 %v8223
    %v8240 = vunpack.c.l.b16 %v8224
    %v8241 = vunpack.c.l.b16 %v8225
    %v8242 = vunpack.c.l.b16 %v8226
    %v8243 = vunpack.c.l.b16 %v8227
    %v8244 = vpack.c.b16 %v8237, %v8236
    %v8245 = vpack.c.b16 %v8239, %v8238
    %v8246 = vpack.c.b16 %v8241, %v8240
    %v8247 = vpack.c.b16 %v8243, %v8242
    %v8253 = vsel %vm2135, %v8218, 0
    %8255 = vmatprep.subr.bf16.mxu0 0
    %8256 = vmatpush1.bf16.msra.mxu0 0
    %8257 = vmatprep.subr.bf16.mxu0 0
    %8258 = vmatpush1.bf16.msra.mxu0 0
    %8259 = vmatprep.subr.bf16.mxu0 0
    %8260 = vmatpush1.bf16.msra.mxu0 0
    %8261 = vmatprep.subr.bf16.mxu0 0
    %8262 = vmatpush1.bf16.msra.mxu0 0
    %8263 = vmatprep.subr.bf16.mxu0 0
    %8264 = vmatpush1.bf16.msra.mxu0 %v8247
    %8265 = vmatprep.subr.bf16.mxu0 0
    %8266 = vmatpush1.bf16.msra.mxu0 %v8246
    %8267 = vmatprep.subr.bf16.mxu0 0
    %8268 = vmatpush1.bf16.msra.mxu0 %v8245
    %8269 = vmatprep.subr.bf16.mxu0 0
    %8270 = vmatpush1.bf16.msra.mxu0 %v8244
    %8271 = vmatprep.subr.bf16.mxu0 0
    %8272 = vmatpush2.bf16.msra.mxu0 0
    %8273 = vmatprep.subr.bf16.mxu0 0
    %8274 = vmatpush2.bf16.msra.mxu0 0
    %8275 = vmatprep.subr.bf16.mxu0 0
    %8276 = vmatpush2.bf16.msra.mxu0 0
    %8277 = vmatprep.subr.bf16.mxu0 0
    %8278 = vmatpush2.bf16.msra.mxu0 0
    %8279 = vmatprep.subr.bf16.mxu0 0
    %8280 = vmatpush2.bf16.msra.mxu0 0
    %8281 = vmatprep.subr.bf16.mxu0 0
    %8282 = vmatpush2.bf16.msra.mxu0 0
    %8283 = vmatprep.subr.bf16.mxu0 0
    %8284 = vmatpush2.bf16.msra.mxu0 0
    %8285 = vmatprep.subr.bf16.mxu0 0
    %8286 = vmatpush2.bf16.msra.mxu0 0
    %8287 = vmatprep.mubr.bf16.mxu0 0
    %8288 = vmatmul.mubr.bf16.gmra.mxu0 %v8253
    %v8289 = vpop.f32.mrf.mxu0
    %v8290 = vadd.f32 0.0, %v8289
    %v8291 = vpop.f32.mrf.mxu0
    %v8292 = vpop.f32.mrf.mxu0
    %v8293 = vpop.f32.mrf.mxu0
    %8294 = vdwg.mxu0
    %v8295 = vadd.f32 %v7821, %v8290
    %v8296 = vld [vmem:[#allocation2 + $0x268] sm:$0xff]
    %v8297 = vpack.c.bf16 %v8296, %v8296
    %s8298 = scalar_lea.vmem [#allocation8], 2464
    %v8299 = vld [vmem:[%s8298] sm:$0xf]
    %v8300 = vld [vmem:[%s8298 + $0x4] sm:$0xf]
    %v8301 = vld [vmem:[%s8298 + $0x8] sm:$0xf]
    %v8302 = vld [vmem:[%s8298 + $0xc] sm:$0xf]
    %v8303 = vld [vmem:[%s8298 + $0x10] sm:$0xf]
    %v8304 = vld [vmem:[%s8298 + $0x14] sm:$0xf]
    %v8305 = vld [vmem:[%s8298 + $0x18] sm:$0xf]
    %v8306 = vld [vmem:[%s8298 + $0x1c] sm:$0xf]
    %v8315 = vunpack.c.l.b16 %v8299
    %v8316 = vunpack.c.l.b16 %v8300
    %v8317 = vunpack.c.l.b16 %v8301
    %v8318 = vunpack.c.l.b16 %v8302
    %v8319 = vunpack.c.l.b16 %v8303
    %v8320 = vunpack.c.l.b16 %v8304
    %v8321 = vunpack.c.l.b16 %v8305
    %v8322 = vunpack.c.l.b16 %v8306
    %v8323 = vpack.c.b16 %v8316, %v8315
    %v8324 = vpack.c.b16 %v8318, %v8317
    %v8325 = vpack.c.b16 %v8320, %v8319
    %v8326 = vpack.c.b16 %v8322, %v8321
    %v8332 = vsel %vm2135, %v8297, 0
    %8334 = vmatprep.subr.bf16.mxu0 0
    %8335 = vmatpush1.bf16.msra.mxu0 0
    %8336 = vmatprep.subr.bf16.mxu0 0
    %8337 = vmatpush1.bf16.msra.mxu0 0
    %8338 = vmatprep.subr.bf16.mxu0 0
    %8339 = vmatpush1.bf16.msra.mxu0 0
    %8340 = vmatprep.subr.bf16.mxu0 0
    %8341 = vmatpush1.bf16.msra.mxu0 0
    %8342 = vmatprep.subr.bf16.mxu0 0
    %8343 = vmatpush1.bf16.msra.mxu0 %v8326
    %8344 = vmatprep.subr.bf16.mxu0 0
    %8345 = vmatpush1.bf16.msra.mxu0 %v8325
    %8346 = vmatprep.subr.bf16.mxu0 0
    %8347 = vmatpush1.bf16.msra.mxu0 %v8324
    %8348 = vmatprep.subr.bf16.mxu0 0
    %8349 = vmatpush1.bf16.msra.mxu0 %v8323
    %8350 = vmatprep.subr.bf16.mxu0 0
    %8351 = vmatpush2.bf16.msra.mxu0 0
    %8352 = vmatprep.subr.bf16.mxu0 0
    %8353 = vmatpush2.bf16.msra.mxu0 0
    %8354 = vmatprep.subr.bf16.mxu0 0
    %8355 = vmatpush2.bf16.msra.mxu0 0
    %8356 = vmatprep.subr.bf16.mxu0 0
    %8357 = vmatpush2.bf16.msra.mxu0 0
    %8358 = vmatprep.subr.bf16.mxu0 0
    %8359 = vmatpush2.bf16.msra.mxu0 0
    %8360 = vmatprep.subr.bf16.mxu0 0
    %8361 = vmatpush2.bf16.msra.mxu0 0
    %8362 = vmatprep.subr.bf16.mxu0 0
    %8363 = vmatpush2.bf16.msra.mxu0 0
    %8364 = vmatprep.subr.bf16.mxu0 0
    %8365 = vmatpush2.bf16.msra.mxu0 0
    %8366 = vmatprep.mubr.bf16.mxu0 0
    %8367 = vmatmul.mubr.bf16.gmra.mxu0 %v8332
    %v8368 = vpop.f32.mrf.mxu0
    %v8369 = vadd.f32 0.0, %v8368
    %v8370 = vpop.f32.mrf.mxu0
    %v8371 = vpop.f32.mrf.mxu0
    %v8372 = vpop.f32.mrf.mxu0
    %8373 = vdwg.mxu0
    %v8374 = vadd.f32 %v7900, %v8369
    %v8375 = vld [vmem:[#allocation2 + $0x270] sm:$0xff]
    %v8376 = vpack.c.bf16 %v8375, %v8375
    %s8377 = scalar_lea.vmem [#allocation8], 2496
    %v8378 = vld [vmem:[%s8377] sm:$0xf]
    %v8379 = vld [vmem:[%s8377 + $0x4] sm:$0xf]
    %v8380 = vld [vmem:[%s8377 + $0x8] sm:$0xf]
    %v8381 = vld [vmem:[%s8377 + $0xc] sm:$0xf]
    %v8382 = vld [vmem:[%s8377 + $0x10] sm:$0xf]
    %v8383 = vld [vmem:[%s8377 + $0x14] sm:$0xf]
    %v8384 = vld [vmem:[%s8377 + $0x18] sm:$0xf]
    %v8385 = vld [vmem:[%s8377 + $0x1c] sm:$0xf]
    %v8394 = vunpack.c.l.b16 %v8378
    %v8395 = vunpack.c.l.b16 %v8379
    %v8396 = vunpack.c.l.b16 %v8380
    %v8397 = vunpack.c.l.b16 %v8381
    %v8398 = vunpack.c.l.b16 %v8382
    %v8399 = vunpack.c.l.b16 %v8383
    %v8400 = vunpack.c.l.b16 %v8384
    %v8401 = vunpack.c.l.b16 %v8385
    %v8402 = vpack.c.b16 %v8395, %v8394
    %v8403 = vpack.c.b16 %v8397, %v8396
    %v8404 = vpack.c.b16 %v8399, %v8398
    %v8405 = vpack.c.b16 %v8401, %v8400
    %v8411 = vsel %vm2135, %v8376, 0
    %8413 = vmatprep.subr.bf16.mxu0 0
    %8414 = vmatpush1.bf16.msra.mxu0 0
    %8415 = vmatprep.subr.bf16.mxu0 0
    %8416 = vmatpush1.bf16.msra.mxu0 0
    %8417 = vmatprep.subr.bf16.mxu0 0
    %8418 = vmatpush1.bf16.msra.mxu0 0
    %8419 = vmatprep.subr.bf16.mxu0 0
    %8420 = vmatpush1.bf16.msra.mxu0 0
    %8421 = vmatprep.subr.bf16.mxu0 0
    %8422 = vmatpush1.bf16.msra.mxu0 %v8405
    %8423 = vmatprep.subr.bf16.mxu0 0
    %8424 = vmatpush1.bf16.msra.mxu0 %v8404
    %8425 = vmatprep.subr.bf16.mxu0 0
    %8426 = vmatpush1.bf16.msra.mxu0 %v8403
    %8427 = vmatprep.subr.bf16.mxu0 0
    %8428 = vmatpush1.bf16.msra.mxu0 %v8402
    %8429 = vmatprep.subr.bf16.mxu0 0
    %8430 = vmatpush2.bf16.msra.mxu0 0
    %8431 = vmatprep.subr.bf16.mxu0 0
    %8432 = vmatpush2.bf16.msra.mxu0 0
    %8433 = vmatprep.subr.bf16.mxu0 0
    %8434 = vmatpush2.bf16.msra.mxu0 0
    %8435 = vmatprep.subr.bf16.mxu0 0
    %8436 = vmatpush2.bf16.msra.mxu0 0
    %8437 = vmatprep.subr.bf16.mxu0 0
    %8438 = vmatpush2.bf16.msra.mxu0 0
    %8439 = vmatprep.subr.bf16.mxu0 0
    %8440 = vmatpush2.bf16.msra.mxu0 0
    %8441 = vmatprep.subr.bf16.mxu0 0
    %8442 = vmatpush2.bf16.msra.mxu0 0
    %8443 = vmatprep.subr.bf16.mxu0 0
    %8444 = vmatpush2.bf16.msra.mxu0 0
    %8445 = vmatprep.mubr.bf16.mxu0 0
    %8446 = vmatmul.mubr.bf16.gmra.mxu0 %v8411
    %v8447 = vpop.f32.mrf.mxu0
    %v8448 = vadd.f32 0.0, %v8447
    %v8449 = vpop.f32.mrf.mxu0
    %v8450 = vpop.f32.mrf.mxu0
    %v8451 = vpop.f32.mrf.mxu0
    %8452 = vdwg.mxu0
    %v8453 = vadd.f32 %v7979, %v8448
    %v8454 = vld [vmem:[#allocation2 + $0x278] sm:$0xff]
    %v8455 = vpack.c.bf16 %v8454, %v8454
    %s8456 = scalar_lea.vmem [#allocation8], 2528
    %v8457 = vld [vmem:[%s8456] sm:$0xf]
    %v8458 = vld [vmem:[%s8456 + $0x4] sm:$0xf]
    %v8459 = vld [vmem:[%s8456 + $0x8] sm:$0xf]
    %v8460 = vld [vmem:[%s8456 + $0xc] sm:$0xf]
    %v8461 = vld [vmem:[%s8456 + $0x10] sm:$0xf]
    %v8462 = vld [vmem:[%s8456 + $0x14] sm:$0xf]
    %v8463 = vld [vmem:[%s8456 + $0x18] sm:$0xf]
    %v8464 = vld [vmem:[%s8456 + $0x1c] sm:$0xf]
    %v8473 = vunpack.c.l.b16 %v8457
    %v8474 = vunpack.c.l.b16 %v8458
    %v8475 = vunpack.c.l.b16 %v8459
    %v8476 = vunpack.c.l.b16 %v8460
    %v8477 = vunpack.c.l.b16 %v8461
    %v8478 = vunpack.c.l.b16 %v8462
    %v8479 = vunpack.c.l.b16 %v8463
    %v8480 = vunpack.c.l.b16 %v8464
    %v8481 = vpack.c.b16 %v8474, %v8473
    %v8482 = vpack.c.b16 %v8476, %v8475
    %v8483 = vpack.c.b16 %v8478, %v8477
    %v8484 = vpack.c.b16 %v8480, %v8479
    %v8490 = vsel %vm2135, %v8455, 0
    %8492 = vmatprep.subr.bf16.mxu0 0
    %8493 = vmatpush1.bf16.msra.mxu0 0
    %8494 = vmatprep.subr.bf16.mxu0 0
    %8495 = vmatpush1.bf16.msra.mxu0 0
    %8496 = vmatprep.subr.bf16.mxu0 0
    %8497 = vmatpush1.bf16.msra.mxu0 0
    %8498 = vmatprep.subr.bf16.mxu0 0
    %8499 = vmatpush1.bf16.msra.mxu0 0
    %8500 = vmatprep.subr.bf16.mxu0 0
    %8501 = vmatpush1.bf16.msra.mxu0 %v8484
    %8502 = vmatprep.subr.bf16.mxu0 0
    %8503 = vmatpush1.bf16.msra.mxu0 %v8483
    %8504 = vmatprep.subr.bf16.mxu0 0
    %8505 = vmatpush1.bf16.msra.mxu0 %v8482
    %8506 = vmatprep.subr.bf16.mxu0 0
    %8507 = vmatpush1.bf16.msra.mxu0 %v8481
    %8508 = vmatprep.subr.bf16.mxu0 0
    %8509 = vmatpush2.bf16.msra.mxu0 0
    %8510 = vmatprep.subr.bf16.mxu0 0
    %8511 = vmatpush2.bf16.msra.mxu0 0
    %8512 = vmatprep.subr.bf16.mxu0 0
    %8513 = vmatpush2.bf16.msra.mxu0 0
    %8514 = vmatprep.subr.bf16.mxu0 0
    %8515 = vmatpush2.bf16.msra.mxu0 0
    %8516 = vmatprep.subr.bf16.mxu0 0
    %8517 = vmatpush2.bf16.msra.mxu0 0
    %8518 = vmatprep.subr.bf16.mxu0 0
    %8519 = vmatpush2.bf16.msra.mxu0 0
    %8520 = vmatprep.subr.bf16.mxu0 0
    %8521 = vmatpush2.bf16.msra.mxu0 0
    %8522 = vmatprep.subr.bf16.mxu0 0
    %8523 = vmatpush2.bf16.msra.mxu0 0
    %8524 = vmatprep.mubr.bf16.mxu0 0
    %8525 = vmatmul.mubr.bf16.gmra.mxu0 %v8490
    %v8526 = vpop.f32.mrf.mxu0
    %v8527 = vadd.f32 0.0, %v8526
    %v8528 = vpop.f32.mrf.mxu0
    %v8529 = vpop.f32.mrf.mxu0
    %v8530 = vpop.f32.mrf.mxu0
    %8531 = vdwg.mxu0
    %v8532 = vadd.f32 %v8058, %v8527
    %v8533 = vld [vmem:[#allocation2 + $0x280] sm:$0xff]
    %v8534 = vpack.c.bf16 %v8533, %v8533
    %s8535 = scalar_lea.vmem [#allocation8], 2560
    %v8536 = vld [vmem:[%s8535] sm:$0xf]
    %v8537 = vld [vmem:[%s8535 + $0x4] sm:$0xf]
    %v8538 = vld [vmem:[%s8535 + $0x8] sm:$0xf]
    %v8539 = vld [vmem:[%s8535 + $0xc] sm:$0xf]
    %v8540 = vld [vmem:[%s8535 + $0x10] sm:$0xf]
    %v8541 = vld [vmem:[%s8535 + $0x14] sm:$0xf]
    %v8542 = vld [vmem:[%s8535 + $0x18] sm:$0xf]
    %v8543 = vld [vmem:[%s8535 + $0x1c] sm:$0xf]
    %v8552 = vunpack.c.l.b16 %v8536
    %v8553 = vunpack.c.l.b16 %v8537
    %v8554 = vunpack.c.l.b16 %v8538
    %v8555 = vunpack.c.l.b16 %v8539
    %v8556 = vunpack.c.l.b16 %v8540
    %v8557 = vunpack.c.l.b16 %v8541
    %v8558 = vunpack.c.l.b16 %v8542
    %v8559 = vunpack.c.l.b16 %v8543
    %v8560 = vpack.c.b16 %v8553, %v8552
    %v8561 = vpack.c.b16 %v8555, %v8554
    %v8562 = vpack.c.b16 %v8557, %v8556
    %v8563 = vpack.c.b16 %v8559, %v8558
    %v8569 = vsel %vm2135, %v8534, 0
    %8571 = vmatprep.subr.bf16.mxu0 0
    %8572 = vmatpush1.bf16.msra.mxu0 0
    %8573 = vmatprep.subr.bf16.mxu0 0
    %8574 = vmatpush1.bf16.msra.mxu0 0
    %8575 = vmatprep.subr.bf16.mxu0 0
    %8576 = vmatpush1.bf16.msra.mxu0 0
    %8577 = vmatprep.subr.bf16.mxu0 0
    %8578 = vmatpush1.bf16.msra.mxu0 0
    %8579 = vmatprep.subr.bf16.mxu0 0
    %8580 = vmatpush1.bf16.msra.mxu0 %v8563
    %8581 = vmatprep.subr.bf16.mxu0 0
    %8582 = vmatpush1.bf16.msra.mxu0 %v8562
    %8583 = vmatprep.subr.bf16.mxu0 0
    %8584 = vmatpush1.bf16.msra.mxu0 %v8561
    %8585 = vmatprep.subr.bf16.mxu0 0
    %8586 = vmatpush1.bf16.msra.mxu0 %v8560
    %8587 = vmatprep.subr.bf16.mxu0 0
    %8588 = vmatpush2.bf16.msra.mxu0 0
    %8589 = vmatprep.subr.bf16.mxu0 0
    %8590 = vmatpush2.bf16.msra.mxu0 0
    %8591 = vmatprep.subr.bf16.mxu0 0
    %8592 = vmatpush2.bf16.msra.mxu0 0
    %8593 = vmatprep.subr.bf16.mxu0 0
    %8594 = vmatpush2.bf16.msra.mxu0 0
    %8595 = vmatprep.subr.bf16.mxu0 0
    %8596 = vmatpush2.bf16.msra.mxu0 0
    %8597 = vmatprep.subr.bf16.mxu0 0
    %8598 = vmatpush2.bf16.msra.mxu0 0
    %8599 = vmatprep.subr.bf16.mxu0 0
    %8600 = vmatpush2.bf16.msra.mxu0 0
    %8601 = vmatprep.subr.bf16.mxu0 0
    %8602 = vmatpush2.bf16.msra.mxu0 0
    %8603 = vmatprep.mubr.bf16.mxu0 0
    %8604 = vmatmul.mubr.bf16.gmra.mxu0 %v8569
    %v8605 = vpop.f32.mrf.mxu0
    %v8606 = vadd.f32 0.0, %v8605
    %v8607 = vpop.f32.mrf.mxu0
    %v8608 = vpop.f32.mrf.mxu0
    %v8609 = vpop.f32.mrf.mxu0
    %8610 = vdwg.mxu0
    %v8611 = vadd.f32 %v8137, %v8606
    %v8612 = vld [vmem:[#allocation2 + $0x288] sm:$0xff]
    %v8613 = vpack.c.bf16 %v8612, %v8612
    %s8614 = scalar_lea.vmem [#allocation8], 2592
    %v8615 = vld [vmem:[%s8614] sm:$0xf]
    %v8616 = vld [vmem:[%s8614 + $0x4] sm:$0xf]
    %v8617 = vld [vmem:[%s8614 + $0x8] sm:$0xf]
    %v8618 = vld [vmem:[%s8614 + $0xc] sm:$0xf]
    %v8619 = vld [vmem:[%s8614 + $0x10] sm:$0xf]
    %v8620 = vld [vmem:[%s8614 + $0x14] sm:$0xf]
    %v8621 = vld [vmem:[%s8614 + $0x18] sm:$0xf]
    %v8622 = vld [vmem:[%s8614 + $0x1c] sm:$0xf]
    %v8631 = vunpack.c.l.b16 %v8615
    %v8632 = vunpack.c.l.b16 %v8616
    %v8633 = vunpack.c.l.b16 %v8617
    %v8634 = vunpack.c.l.b16 %v8618
    %v8635 = vunpack.c.l.b16 %v8619
    %v8636 = vunpack.c.l.b16 %v8620
    %v8637 = vunpack.c.l.b16 %v8621
    %v8638 = vunpack.c.l.b16 %v8622
    %v8639 = vpack.c.b16 %v8632, %v8631
    %v8640 = vpack.c.b16 %v8634, %v8633
    %v8641 = vpack.c.b16 %v8636, %v8635
    %v8642 = vpack.c.b16 %v8638, %v8637
    %v8648 = vsel %vm2135, %v8613, 0
    %8650 = vmatprep.subr.bf16.mxu0 0
    %8651 = vmatpush1.bf16.msra.mxu0 0
    %8652 = vmatprep.subr.bf16.mxu0 0
    %8653 = vmatpush1.bf16.msra.mxu0 0
    %8654 = vmatprep.subr.bf16.mxu0 0
    %8655 = vmatpush1.bf16.msra.mxu0 0
    %8656 = vmatprep.subr.bf16.mxu0 0
    %8657 = vmatpush1.bf16.msra.mxu0 0
    %8658 = vmatprep.subr.bf16.mxu0 0
    %8659 = vmatpush1.bf16.msra.mxu0 %v8642
    %8660 = vmatprep.subr.bf16.mxu0 0
    %8661 = vmatpush1.bf16.msra.mxu0 %v8641
    %8662 = vmatprep.subr.bf16.mxu0 0
    %8663 = vmatpush1.bf16.msra.mxu0 %v8640
    %8664 = vmatprep.subr.bf16.mxu0 0
    %8665 = vmatpush1.bf16.msra.mxu0 %v8639
    %8666 = vmatprep.subr.bf16.mxu0 0
    %8667 = vmatpush2.bf16.msra.mxu0 0
    %8668 = vmatprep.subr.bf16.mxu0 0
    %8669 = vmatpush2.bf16.msra.mxu0 0
    %8670 = vmatprep.subr.bf16.mxu0 0
    %8671 = vmatpush2.bf16.msra.mxu0 0
    %8672 = vmatprep.subr.bf16.mxu0 0
    %8673 = vmatpush2.bf16.msra.mxu0 0
    %8674 = vmatprep.subr.bf16.mxu0 0
    %8675 = vmatpush2.bf16.msra.mxu0 0
    %8676 = vmatprep.subr.bf16.mxu0 0
    %8677 = vmatpush2.bf16.msra.mxu0 0
    %8678 = vmatprep.subr.bf16.mxu0 0
    %8679 = vmatpush2.bf16.msra.mxu0 0
    %8680 = vmatprep.subr.bf16.mxu0 0
    %8681 = vmatpush2.bf16.msra.mxu0 0
    %8682 = vmatprep.mubr.bf16.mxu0 0
    %8683 = vmatmul.mubr.bf16.gmra.mxu0 %v8648
    %v8684 = vpop.f32.mrf.mxu0
    %v8685 = vadd.f32 0.0, %v8684
    %v8686 = vpop.f32.mrf.mxu0
    %v8687 = vpop.f32.mrf.mxu0
    %v8688 = vpop.f32.mrf.mxu0
    %8689 = vdwg.mxu0
    %v8690 = vadd.f32 %v8216, %v8685
    %v8691 = vld [vmem:[#allocation2 + $0x290] sm:$0xff]
    %v8692 = vpack.c.bf16 %v8691, %v8691
    %s8693 = scalar_lea.vmem [#allocation8], 2624
    %v8694 = vld [vmem:[%s8693] sm:$0xf]
    %v8695 = vld [vmem:[%s8693 + $0x4] sm:$0xf]
    %v8696 = vld [vmem:[%s8693 + $0x8] sm:$0xf]
    %v8697 = vld [vmem:[%s8693 + $0xc] sm:$0xf]
    %v8698 = vld [vmem:[%s8693 + $0x10] sm:$0xf]
    %v8699 = vld [vmem:[%s8693 + $0x14] sm:$0xf]
    %v8700 = vld [vmem:[%s8693 + $0x18] sm:$0xf]
    %v8701 = vld [vmem:[%s8693 + $0x1c] sm:$0xf]
    %v8710 = vunpack.c.l.b16 %v8694
    %v8711 = vunpack.c.l.b16 %v8695
    %v8712 = vunpack.c.l.b16 %v8696
    %v8713 = vunpack.c.l.b16 %v8697
    %v8714 = vunpack.c.l.b16 %v8698
    %v8715 = vunpack.c.l.b16 %v8699
    %v8716 = vunpack.c.l.b16 %v8700
    %v8717 = vunpack.c.l.b16 %v8701
    %v8718 = vpack.c.b16 %v8711, %v8710
    %v8719 = vpack.c.b16 %v8713, %v8712
    %v8720 = vpack.c.b16 %v8715, %v8714
    %v8721 = vpack.c.b16 %v8717, %v8716
    %v8727 = vsel %vm2135, %v8692, 0
    %8729 = vmatprep.subr.bf16.mxu0 0
    %8730 = vmatpush1.bf16.msra.mxu0 0
    %8731 = vmatprep.subr.bf16.mxu0 0
    %8732 = vmatpush1.bf16.msra.mxu0 0
    %8733 = vmatprep.subr.bf16.mxu0 0
    %8734 = vmatpush1.bf16.msra.mxu0 0
    %8735 = vmatprep.subr.bf16.mxu0 0
    %8736 = vmatpush1.bf16.msra.mxu0 0
    %8737 = vmatprep.subr.bf16.mxu0 0
    %8738 = vmatpush1.bf16.msra.mxu0 %v8721
    %8739 = vmatprep.subr.bf16.mxu0 0
    %8740 = vmatpush1.bf16.msra.mxu0 %v8720
    %8741 = vmatprep.subr.bf16.mxu0 0
    %8742 = vmatpush1.bf16.msra.mxu0 %v8719
    %8743 = vmatprep.subr.bf16.mxu0 0
    %8744 = vmatpush1.bf16.msra.mxu0 %v8718
    %8745 = vmatprep.subr.bf16.mxu0 0
    %8746 = vmatpush2.bf16.msra.mxu0 0
    %8747 = vmatprep.subr.bf16.mxu0 0
    %8748 = vmatpush2.bf16.msra.mxu0 0
    %8749 = vmatprep.subr.bf16.mxu0 0
    %8750 = vmatpush2.bf16.msra.mxu0 0
    %8751 = vmatprep.subr.bf16.mxu0 0
    %8752 = vmatpush2.bf16.msra.mxu0 0
    %8753 = vmatprep.subr.bf16.mxu0 0
    %8754 = vmatpush2.bf16.msra.mxu0 0
    %8755 = vmatprep.subr.bf16.mxu0 0
    %8756 = vmatpush2.bf16.msra.mxu0 0
    %8757 = vmatprep.subr.bf16.mxu0 0
    %8758 = vmatpush2.bf16.msra.mxu0 0
    %8759 = vmatprep.subr.bf16.mxu0 0
    %8760 = vmatpush2.bf16.msra.mxu0 0
    %8761 = vmatprep.mubr.bf16.mxu0 0
    %8762 = vmatmul.mubr.bf16.gmra.mxu0 %v8727
    %v8763 = vpop.f32.mrf.mxu0
    %v8764 = vadd.f32 0.0, %v8763
    %v8765 = vpop.f32.mrf.mxu0
    %v8766 = vpop.f32.mrf.mxu0
    %v8767 = vpop.f32.mrf.mxu0
    %8768 = vdwg.mxu0
    %v8769 = vadd.f32 %v8295, %v8764
    %v8770 = vld [vmem:[#allocation2 + $0x298] sm:$0xff]
    %v8771 = vpack.c.bf16 %v8770, %v8770
    %s8772 = scalar_lea.vmem [#allocation8], 2656
    %v8773 = vld [vmem:[%s8772] sm:$0xf]
    %v8774 = vld [vmem:[%s8772 + $0x4] sm:$0xf]
    %v8775 = vld [vmem:[%s8772 + $0x8] sm:$0xf]
    %v8776 = vld [vmem:[%s8772 + $0xc] sm:$0xf]
    %v8777 = vld [vmem:[%s8772 + $0x10] sm:$0xf]
    %v8778 = vld [vmem:[%s8772 + $0x14] sm:$0xf]
    %v8779 = vld [vmem:[%s8772 + $0x18] sm:$0xf]
    %v8780 = vld [vmem:[%s8772 + $0x1c] sm:$0xf]
    %v8789 = vunpack.c.l.b16 %v8773
    %v8790 = vunpack.c.l.b16 %v8774
    %v8791 = vunpack.c.l.b16 %v8775
    %v8792 = vunpack.c.l.b16 %v8776
    %v8793 = vunpack.c.l.b16 %v8777
    %v8794 = vunpack.c.l.b16 %v8778
    %v8795 = vunpack.c.l.b16 %v8779
    %v8796 = vunpack.c.l.b16 %v8780
    %v8797 = vpack.c.b16 %v8790, %v8789
    %v8798 = vpack.c.b16 %v8792, %v8791
    %v8799 = vpack.c.b16 %v8794, %v8793
    %v8800 = vpack.c.b16 %v8796, %v8795
    %v8806 = vsel %vm2135, %v8771, 0
    %8808 = vmatprep.subr.bf16.mxu0 0
    %8809 = vmatpush1.bf16.msra.mxu0 0
    %8810 = vmatprep.subr.bf16.mxu0 0
    %8811 = vmatpush1.bf16.msra.mxu0 0
    %8812 = vmatprep.subr.bf16.mxu0 0
    %8813 = vmatpush1.bf16.msra.mxu0 0
    %8814 = vmatprep.subr.bf16.mxu0 0
    %8815 = vmatpush1.bf16.msra.mxu0 0
    %8816 = vmatprep.subr.bf16.mxu0 0
    %8817 = vmatpush1.bf16.msra.mxu0 %v8800
    %8818 = vmatprep.subr.bf16.mxu0 0
    %8819 = vmatpush1.bf16.msra.mxu0 %v8799
    %8820 = vmatprep.subr.bf16.mxu0 0
    %8821 = vmatpush1.bf16.msra.mxu0 %v8798
    %8822 = vmatprep.subr.bf16.mxu0 0
    %8823 = vmatpush1.bf16.msra.mxu0 %v8797
    %8824 = vmatprep.subr.bf16.mxu0 0
    %8825 = vmatpush2.bf16.msra.mxu0 0
    %8826 = vmatprep.subr.bf16.mxu0 0
    %8827 = vmatpush2.bf16.msra.mxu0 0
    %8828 = vmatprep.subr.bf16.mxu0 0
    %8829 = vmatpush2.bf16.msra.mxu0 0
    %8830 = vmatprep.subr.bf16.mxu0 0
    %8831 = vmatpush2.bf16.msra.mxu0 0
    %8832 = vmatprep.subr.bf16.mxu0 0
    %8833 = vmatpush2.bf16.msra.mxu0 0
    %8834 = vmatprep.subr.bf16.mxu0 0
    %8835 = vmatpush2.bf16.msra.mxu0 0
    %8836 = vmatprep.subr.bf16.mxu0 0
    %8837 = vmatpush2.bf16.msra.mxu0 0
    %8838 = vmatprep.subr.bf16.mxu0 0
    %8839 = vmatpush2.bf16.msra.mxu0 0
    %8840 = vmatprep.mubr.bf16.mxu0 0
    %8841 = vmatmul.mubr.bf16.gmra.mxu0 %v8806
    %v8842 = vpop.f32.mrf.mxu0
    %v8843 = vadd.f32 0.0, %v8842
    %v8844 = vpop.f32.mrf.mxu0
    %v8845 = vpop.f32.mrf.mxu0
    %v8846 = vpop.f32.mrf.mxu0
    %8847 = vdwg.mxu0
    %v8848 = vadd.f32 %v8374, %v8843
    %v8849 = vld [vmem:[#allocation2 + $0x2a0] sm:$0xff]
    %v8850 = vpack.c.bf16 %v8849, %v8849
    %s8851 = scalar_lea.vmem [#allocation8], 2688
    %v8852 = vld [vmem:[%s8851] sm:$0xf]
    %v8853 = vld [vmem:[%s8851 + $0x4] sm:$0xf]
    %v8854 = vld [vmem:[%s8851 + $0x8] sm:$0xf]
    %v8855 = vld [vmem:[%s8851 + $0xc] sm:$0xf]
    %v8856 = vld [vmem:[%s8851 + $0x10] sm:$0xf]
    %v8857 = vld [vmem:[%s8851 + $0x14] sm:$0xf]
    %v8858 = vld [vmem:[%s8851 + $0x18] sm:$0xf]
    %v8859 = vld [vmem:[%s8851 + $0x1c] sm:$0xf]
    %v8868 = vunpack.c.l.b16 %v8852
    %v8869 = vunpack.c.l.b16 %v8853
    %v8870 = vunpack.c.l.b16 %v8854
    %v8871 = vunpack.c.l.b16 %v8855
    %v8872 = vunpack.c.l.b16 %v8856
    %v8873 = vunpack.c.l.b16 %v8857
    %v8874 = vunpack.c.l.b16 %v8858
    %v8875 = vunpack.c.l.b16 %v8859
    %v8876 = vpack.c.b16 %v8869, %v8868
    %v8877 = vpack.c.b16 %v8871, %v8870
    %v8878 = vpack.c.b16 %v8873, %v8872
    %v8879 = vpack.c.b16 %v8875, %v8874
    %v8885 = vsel %vm2135, %v8850, 0
    %8887 = vmatprep.subr.bf16.mxu0 0
    %8888 = vmatpush1.bf16.msra.mxu0 0
    %8889 = vmatprep.subr.bf16.mxu0 0
    %8890 = vmatpush1.bf16.msra.mxu0 0
    %8891 = vmatprep.subr.bf16.mxu0 0
    %8892 = vmatpush1.bf16.msra.mxu0 0
    %8893 = vmatprep.subr.bf16.mxu0 0
    %8894 = vmatpush1.bf16.msra.mxu0 0
    %8895 = vmatprep.subr.bf16.mxu0 0
    %8896 = vmatpush1.bf16.msra.mxu0 %v8879
    %8897 = vmatprep.subr.bf16.mxu0 0
    %8898 = vmatpush1.bf16.msra.mxu0 %v8878
    %8899 = vmatprep.subr.bf16.mxu0 0
    %8900 = vmatpush1.bf16.msra.mxu0 %v8877
    %8901 = vmatprep.subr.bf16.mxu0 0
    %8902 = vmatpush1.bf16.msra.mxu0 %v8876
    %8903 = vmatprep.subr.bf16.mxu0 0
    %8904 = vmatpush2.bf16.msra.mxu0 0
    %8905 = vmatprep.subr.bf16.mxu0 0
    %8906 = vmatpush2.bf16.msra.mxu0 0
    %8907 = vmatprep.subr.bf16.mxu0 0
    %8908 = vmatpush2.bf16.msra.mxu0 0
    %8909 = vmatprep.subr.bf16.mxu0 0
    %8910 = vmatpush2.bf16.msra.mxu0 0
    %8911 = vmatprep.subr.bf16.mxu0 0
    %8912 = vmatpush2.bf16.msra.mxu0 0
    %8913 = vmatprep.subr.bf16.mxu0 0
    %8914 = vmatpush2.bf16.msra.mxu0 0
    %8915 = vmatprep.subr.bf16.mxu0 0
    %8916 = vmatpush2.bf16.msra.mxu0 0
    %8917 = vmatprep.subr.bf16.mxu0 0
    %8918 = vmatpush2.bf16.msra.mxu0 0
    %8919 = vmatprep.mubr.bf16.mxu0 0
    %8920 = vmatmul.mubr.bf16.gmra.mxu0 %v8885
    %v8921 = vpop.f32.mrf.mxu0
    %v8922 = vadd.f32 0.0, %v8921
    %v8923 = vpop.f32.mrf.mxu0
    %v8924 = vpop.f32.mrf.mxu0
    %v8925 = vpop.f32.mrf.mxu0
    %8926 = vdwg.mxu0
    %v8927 = vadd.f32 %v8453, %v8922
    %v8928 = vld [vmem:[#allocation2 + $0x2a8] sm:$0xff]
    %v8929 = vpack.c.bf16 %v8928, %v8928
    %s8930 = scalar_lea.vmem [#allocation8], 2720
    %v8931 = vld [vmem:[%s8930] sm:$0xf]
    %v8932 = vld [vmem:[%s8930 + $0x4] sm:$0xf]
    %v8933 = vld [vmem:[%s8930 + $0x8] sm:$0xf]
    %v8934 = vld [vmem:[%s8930 + $0xc] sm:$0xf]
    %v8935 = vld [vmem:[%s8930 + $0x10] sm:$0xf]
    %v8936 = vld [vmem:[%s8930 + $0x14] sm:$0xf]
    %v8937 = vld [vmem:[%s8930 + $0x18] sm:$0xf]
    %v8938 = vld [vmem:[%s8930 + $0x1c] sm:$0xf]
    %v8947 = vunpack.c.l.b16 %v8931
    %v8948 = vunpack.c.l.b16 %v8932
    %v8949 = vunpack.c.l.b16 %v8933
    %v8950 = vunpack.c.l.b16 %v8934
    %v8951 = vunpack.c.l.b16 %v8935
    %v8952 = vunpack.c.l.b16 %v8936
    %v8953 = vunpack.c.l.b16 %v8937
    %v8954 = vunpack.c.l.b16 %v8938
    %v8955 = vpack.c.b16 %v8948, %v8947
    %v8956 = vpack.c.b16 %v8950, %v8949
    %v8957 = vpack.c.b16 %v8952, %v8951
    %v8958 = vpack.c.b16 %v8954, %v8953
    %v8964 = vsel %vm2135, %v8929, 0
    %8966 = vmatprep.subr.bf16.mxu0 0
    %8967 = vmatpush1.bf16.msra.mxu0 0
    %8968 = vmatprep.subr.bf16.mxu0 0
    %8969 = vmatpush1.bf16.msra.mxu0 0
    %8970 = vmatprep.subr.bf16.mxu0 0
    %8971 = vmatpush1.bf16.msra.mxu0 0
    %8972 = vmatprep.subr.bf16.mxu0 0
    %8973 = vmatpush1.bf16.msra.mxu0 0
    %8974 = vmatprep.subr.bf16.mxu0 0
    %8975 = vmatpush1.bf16.msra.mxu0 %v8958
    %8976 = vmatprep.subr.bf16.mxu0 0
    %8977 = vmatpush1.bf16.msra.mxu0 %v8957
    %8978 = vmatprep.subr.bf16.mxu0 0
    %8979 = vmatpush1.bf16.msra.mxu0 %v8956
    %8980 = vmatprep.subr.bf16.mxu0 0
    %8981 = vmatpush1.bf16.msra.mxu0 %v8955
    %8982 = vmatprep.subr.bf16.mxu0 0
    %8983 = vmatpush2.bf16.msra.mxu0 0
    %8984 = vmatprep.subr.bf16.mxu0 0
    %8985 = vmatpush2.bf16.msra.mxu0 0
    %8986 = vmatprep.subr.bf16.mxu0 0
    %8987 = vmatpush2.bf16.msra.mxu0 0
    %8988 = vmatprep.subr.bf16.mxu0 0
    %8989 = vmatpush2.bf16.msra.mxu0 0
    %8990 = vmatprep.subr.bf16.mxu0 0
    %8991 = vmatpush2.bf16.msra.mxu0 0
    %8992 = vmatprep.subr.bf16.mxu0 0
    %8993 = vmatpush2.bf16.msra.mxu0 0
    %8994 = vmatprep.subr.bf16.mxu0 0
    %8995 = vmatpush2.bf16.msra.mxu0 0
    %8996 = vmatprep.subr.bf16.mxu0 0
    %8997 = vmatpush2.bf16.msra.mxu0 0
    %8998 = vmatprep.mubr.bf16.mxu0 0
    %8999 = vmatmul.mubr.bf16.gmra.mxu0 %v8964
    %v9000 = vpop.f32.mrf.mxu0
    %v9001 = vadd.f32 0.0, %v9000
    %v9002 = vpop.f32.mrf.mxu0
    %v9003 = vpop.f32.mrf.mxu0
    %v9004 = vpop.f32.mrf.mxu0
    %9005 = vdwg.mxu0
    %v9006 = vadd.f32 %v8532, %v9001
    %v9007 = vld [vmem:[#allocation2 + $0x2b0] sm:$0xff]
    %v9008 = vpack.c.bf16 %v9007, %v9007
    %s9009 = scalar_lea.vmem [#allocation8], 2752
    %v9010 = vld [vmem:[%s9009] sm:$0xf]
    %v9011 = vld [vmem:[%s9009 + $0x4] sm:$0xf]
    %v9012 = vld [vmem:[%s9009 + $0x8] sm:$0xf]
    %v9013 = vld [vmem:[%s9009 + $0xc] sm:$0xf]
    %v9014 = vld [vmem:[%s9009 + $0x10] sm:$0xf]
    %v9015 = vld [vmem:[%s9009 + $0x14] sm:$0xf]
    %v9016 = vld [vmem:[%s9009 + $0x18] sm:$0xf]
    %v9017 = vld [vmem:[%s9009 + $0x1c] sm:$0xf]
    %v9026 = vunpack.c.l.b16 %v9010
    %v9027 = vunpack.c.l.b16 %v9011
    %v9028 = vunpack.c.l.b16 %v9012
    %v9029 = vunpack.c.l.b16 %v9013
    %v9030 = vunpack.c.l.b16 %v9014
    %v9031 = vunpack.c.l.b16 %v9015
    %v9032 = vunpack.c.l.b16 %v9016
    %v9033 = vunpack.c.l.b16 %v9017
    %v9034 = vpack.c.b16 %v9027, %v9026
    %v9035 = vpack.c.b16 %v9029, %v9028
    %v9036 = vpack.c.b16 %v9031, %v9030
    %v9037 = vpack.c.b16 %v9033, %v9032
    %v9043 = vsel %vm2135, %v9008, 0
    %9045 = vmatprep.subr.bf16.mxu0 0
    %9046 = vmatpush1.bf16.msra.mxu0 0
    %9047 = vmatprep.subr.bf16.mxu0 0
    %9048 = vmatpush1.bf16.msra.mxu0 0
    %9049 = vmatprep.subr.bf16.mxu0 0
    %9050 = vmatpush1.bf16.msra.mxu0 0
    %9051 = vmatprep.subr.bf16.mxu0 0
    %9052 = vmatpush1.bf16.msra.mxu0 0
    %9053 = vmatprep.subr.bf16.mxu0 0
    %9054 = vmatpush1.bf16.msra.mxu0 %v9037
    %9055 = vmatprep.subr.bf16.mxu0 0
    %9056 = vmatpush1.bf16.msra.mxu0 %v9036
    %9057 = vmatprep.subr.bf16.mxu0 0
    %9058 = vmatpush1.bf16.msra.mxu0 %v9035
    %9059 = vmatprep.subr.bf16.mxu0 0
    %9060 = vmatpush1.bf16.msra.mxu0 %v9034
    %9061 = vmatprep.subr.bf16.mxu0 0
    %9062 = vmatpush2.bf16.msra.mxu0 0
    %9063 = vmatprep.subr.bf16.mxu0 0
    %9064 = vmatpush2.bf16.msra.mxu0 0
    %9065 = vmatprep.subr.bf16.mxu0 0
    %9066 = vmatpush2.bf16.msra.mxu0 0
    %9067 = vmatprep.subr.bf16.mxu0 0
    %9068 = vmatpush2.bf16.msra.mxu0 0
    %9069 = vmatprep.subr.bf16.mxu0 0
    %9070 = vmatpush2.bf16.msra.mxu0 0
    %9071 = vmatprep.subr.bf16.mxu0 0
    %9072 = vmatpush2.bf16.msra.mxu0 0
    %9073 = vmatprep.subr.bf16.mxu0 0
    %9074 = vmatpush2.bf16.msra.mxu0 0
    %9075 = vmatprep.subr.bf16.mxu0 0
    %9076 = vmatpush2.bf16.msra.mxu0 0
    %9077 = vmatprep.mubr.bf16.mxu0 0
    %9078 = vmatmul.mubr.bf16.gmra.mxu0 %v9043
    %v9079 = vpop.f32.mrf.mxu0
    %v9080 = vadd.f32 0.0, %v9079
    %v9081 = vpop.f32.mrf.mxu0
    %v9082 = vpop.f32.mrf.mxu0
    %v9083 = vpop.f32.mrf.mxu0
    %9084 = vdwg.mxu0
    %v9085 = vadd.f32 %v8611, %v9080
    %v9086 = vld [vmem:[#allocation2 + $0x2b8] sm:$0xff]
    %v9087 = vpack.c.bf16 %v9086, %v9086
    %s9088 = scalar_lea.vmem [#allocation8], 2784
    %v9089 = vld [vmem:[%s9088] sm:$0xf]
    %v9090 = vld [vmem:[%s9088 + $0x4] sm:$0xf]
    %v9091 = vld [vmem:[%s9088 + $0x8] sm:$0xf]
    %v9092 = vld [vmem:[%s9088 + $0xc] sm:$0xf]
    %v9093 = vld [vmem:[%s9088 + $0x10] sm:$0xf]
    %v9094 = vld [vmem:[%s9088 + $0x14] sm:$0xf]
    %v9095 = vld [vmem:[%s9088 + $0x18] sm:$0xf]
    %v9096 = vld [vmem:[%s9088 + $0x1c] sm:$0xf]
    %v9105 = vunpack.c.l.b16 %v9089
    %v9106 = vunpack.c.l.b16 %v9090
    %v9107 = vunpack.c.l.b16 %v9091
    %v9108 = vunpack.c.l.b16 %v9092
    %v9109 = vunpack.c.l.b16 %v9093
    %v9110 = vunpack.c.l.b16 %v9094
    %v9111 = vunpack.c.l.b16 %v9095
    %v9112 = vunpack.c.l.b16 %v9096
    %v9113 = vpack.c.b16 %v9106, %v9105
    %v9114 = vpack.c.b16 %v9108, %v9107
    %v9115 = vpack.c.b16 %v9110, %v9109
    %v9116 = vpack.c.b16 %v9112, %v9111
    %v9122 = vsel %vm2135, %v9087, 0
    %9124 = vmatprep.subr.bf16.mxu0 0
    %9125 = vmatpush1.bf16.msra.mxu0 0
    %9126 = vmatprep.subr.bf16.mxu0 0
    %9127 = vmatpush1.bf16.msra.mxu0 0
    %9128 = vmatprep.subr.bf16.mxu0 0
    %9129 = vmatpush1.bf16.msra.mxu0 0
    %9130 = vmatprep.subr.bf16.mxu0 0
    %9131 = vmatpush1.bf16.msra.mxu0 0
    %9132 = vmatprep.subr.bf16.mxu0 0
    %9133 = vmatpush1.bf16.msra.mxu0 %v9116
    %9134 = vmatprep.subr.bf16.mxu0 0
    %9135 = vmatpush1.bf16.msra.mxu0 %v9115
    %9136 = vmatprep.subr.bf16.mxu0 0
    %9137 = vmatpush1.bf16.msra.mxu0 %v9114
    %9138 = vmatprep.subr.bf16.mxu0 0
    %9139 = vmatpush1.bf16.msra.mxu0 %v9113
    %9140 = vmatprep.subr.bf16.mxu0 0
    %9141 = vmatpush2.bf16.msra.mxu0 0
    %9142 = vmatprep.subr.bf16.mxu0 0
    %9143 = vmatpush2.bf16.msra.mxu0 0
    %9144 = vmatprep.subr.bf16.mxu0 0
    %9145 = vmatpush2.bf16.msra.mxu0 0
    %9146 = vmatprep.subr.bf16.mxu0 0
    %9147 = vmatpush2.bf16.msra.mxu0 0
    %9148 = vmatprep.subr.bf16.mxu0 0
    %9149 = vmatpush2.bf16.msra.mxu0 0
    %9150 = vmatprep.subr.bf16.mxu0 0
    %9151 = vmatpush2.bf16.msra.mxu0 0
    %9152 = vmatprep.subr.bf16.mxu0 0
    %9153 = vmatpush2.bf16.msra.mxu0 0
    %9154 = vmatprep.subr.bf16.mxu0 0
    %9155 = vmatpush2.bf16.msra.mxu0 0
    %9156 = vmatprep.mubr.bf16.mxu0 0
    %9157 = vmatmul.mubr.bf16.gmra.mxu0 %v9122
    %v9158 = vpop.f32.mrf.mxu0
    %v9159 = vadd.f32 0.0, %v9158
    %v9160 = vpop.f32.mrf.mxu0
    %v9161 = vpop.f32.mrf.mxu0
    %v9162 = vpop.f32.mrf.mxu0
    %9163 = vdwg.mxu0
    %v9164 = vadd.f32 %v8690, %v9159
    %v9165 = vld [vmem:[#allocation2 + $0x2c0] sm:$0xff]
    %v9166 = vpack.c.bf16 %v9165, %v9165
    %s9167 = scalar_lea.vmem [#allocation8], 2816
    %v9168 = vld [vmem:[%s9167] sm:$0xf]
    %v9169 = vld [vmem:[%s9167 + $0x4] sm:$0xf]
    %v9170 = vld [vmem:[%s9167 + $0x8] sm:$0xf]
    %v9171 = vld [vmem:[%s9167 + $0xc] sm:$0xf]
    %v9172 = vld [vmem:[%s9167 + $0x10] sm:$0xf]
    %v9173 = vld [vmem:[%s9167 + $0x14] sm:$0xf]
    %v9174 = vld [vmem:[%s9167 + $0x18] sm:$0xf]
    %v9175 = vld [vmem:[%s9167 + $0x1c] sm:$0xf]
    %v9184 = vunpack.c.l.b16 %v9168
    %v9185 = vunpack.c.l.b16 %v9169
    %v9186 = vunpack.c.l.b16 %v9170
    %v9187 = vunpack.c.l.b16 %v9171
    %v9188 = vunpack.c.l.b16 %v9172
    %v9189 = vunpack.c.l.b16 %v9173
    %v9190 = vunpack.c.l.b16 %v9174
    %v9191 = vunpack.c.l.b16 %v9175
    %v9192 = vpack.c.b16 %v9185, %v9184
    %v9193 = vpack.c.b16 %v9187, %v9186
    %v9194 = vpack.c.b16 %v9189, %v9188
    %v9195 = vpack.c.b16 %v9191, %v9190
    %v9201 = vsel %vm2135, %v9166, 0
    %9203 = vmatprep.subr.bf16.mxu0 0
    %9204 = vmatpush1.bf16.msra.mxu0 0
    %9205 = vmatprep.subr.bf16.mxu0 0
    %9206 = vmatpush1.bf16.msra.mxu0 0
    %9207 = vmatprep.subr.bf16.mxu0 0
    %9208 = vmatpush1.bf16.msra.mxu0 0
    %9209 = vmatprep.subr.bf16.mxu0 0
    %9210 = vmatpush1.bf16.msra.mxu0 0
    %9211 = vmatprep.subr.bf16.mxu0 0
    %9212 = vmatpush1.bf16.msra.mxu0 %v9195
    %9213 = vmatprep.subr.bf16.mxu0 0
    %9214 = vmatpush1.bf16.msra.mxu0 %v9194
    %9215 = vmatprep.subr.bf16.mxu0 0
    %9216 = vmatpush1.bf16.msra.mxu0 %v9193
    %9217 = vmatprep.subr.bf16.mxu0 0
    %9218 = vmatpush1.bf16.msra.mxu0 %v9192
    %9219 = vmatprep.subr.bf16.mxu0 0
    %9220 = vmatpush2.bf16.msra.mxu0 0
    %9221 = vmatprep.subr.bf16.mxu0 0
    %9222 = vmatpush2.bf16.msra.mxu0 0
    %9223 = vmatprep.subr.bf16.mxu0 0
    %9224 = vmatpush2.bf16.msra.mxu0 0
    %9225 = vmatprep.subr.bf16.mxu0 0
    %9226 = vmatpush2.bf16.msra.mxu0 0
    %9227 = vmatprep.subr.bf16.mxu0 0
    %9228 = vmatpush2.bf16.msra.mxu0 0
    %9229 = vmatprep.subr.bf16.mxu0 0
    %9230 = vmatpush2.bf16.msra.mxu0 0
    %9231 = vmatprep.subr.bf16.mxu0 0
    %9232 = vmatpush2.bf16.msra.mxu0 0
    %9233 = vmatprep.subr.bf16.mxu0 0
    %9234 = vmatpush2.bf16.msra.mxu0 0
    %9235 = vmatprep.mubr.bf16.mxu0 0
    %9236 = vmatmul.mubr.bf16.gmra.mxu0 %v9201
    %v9237 = vpop.f32.mrf.mxu0
    %v9238 = vadd.f32 0.0, %v9237
    %v9239 = vpop.f32.mrf.mxu0
    %v9240 = vpop.f32.mrf.mxu0
    %v9241 = vpop.f32.mrf.mxu0
    %9242 = vdwg.mxu0
    %v9243 = vadd.f32 %v8769, %v9238
    %v9244 = vld [vmem:[#allocation2 + $0x2c8] sm:$0xff]
    %v9245 = vpack.c.bf16 %v9244, %v9244
    %s9246 = scalar_lea.vmem [#allocation8], 2848
    %v9247 = vld [vmem:[%s9246] sm:$0xf]
    %v9248 = vld [vmem:[%s9246 + $0x4] sm:$0xf]
    %v9249 = vld [vmem:[%s9246 + $0x8] sm:$0xf]
    %v9250 = vld [vmem:[%s9246 + $0xc] sm:$0xf]
    %v9251 = vld [vmem:[%s9246 + $0x10] sm:$0xf]
    %v9252 = vld [vmem:[%s9246 + $0x14] sm:$0xf]
    %v9253 = vld [vmem:[%s9246 + $0x18] sm:$0xf]
    %v9254 = vld [vmem:[%s9246 + $0x1c] sm:$0xf]
    %v9263 = vunpack.c.l.b16 %v9247
    %v9264 = vunpack.c.l.b16 %v9248
    %v9265 = vunpack.c.l.b16 %v9249
    %v9266 = vunpack.c.l.b16 %v9250
    %v9267 = vunpack.c.l.b16 %v9251
    %v9268 = vunpack.c.l.b16 %v9252
    %v9269 = vunpack.c.l.b16 %v9253
    %v9270 = vunpack.c.l.b16 %v9254
    %v9271 = vpack.c.b16 %v9264, %v9263
    %v9272 = vpack.c.b16 %v9266, %v9265
    %v9273 = vpack.c.b16 %v9268, %v9267
    %v9274 = vpack.c.b16 %v9270, %v9269
    %v9280 = vsel %vm2135, %v9245, 0
    %9282 = vmatprep.subr.bf16.mxu0 0
    %9283 = vmatpush1.bf16.msra.mxu0 0
    %9284 = vmatprep.subr.bf16.mxu0 0
    %9285 = vmatpush1.bf16.msra.mxu0 0
    %9286 = vmatprep.subr.bf16.mxu0 0
    %9287 = vmatpush1.bf16.msra.mxu0 0
    %9288 = vmatprep.subr.bf16.mxu0 0
    %9289 = vmatpush1.bf16.msra.mxu0 0
    %9290 = vmatprep.subr.bf16.mxu0 0
    %9291 = vmatpush1.bf16.msra.mxu0 %v9274
    %9292 = vmatprep.subr.bf16.mxu0 0
    %9293 = vmatpush1.bf16.msra.mxu0 %v9273
    %9294 = vmatprep.subr.bf16.mxu0 0
    %9295 = vmatpush1.bf16.msra.mxu0 %v9272
    %9296 = vmatprep.subr.bf16.mxu0 0
    %9297 = vmatpush1.bf16.msra.mxu0 %v9271
    %9298 = vmatprep.subr.bf16.mxu0 0
    %9299 = vmatpush2.bf16.msra.mxu0 0
    %9300 = vmatprep.subr.bf16.mxu0 0
    %9301 = vmatpush2.bf16.msra.mxu0 0
    %9302 = vmatprep.subr.bf16.mxu0 0
    %9303 = vmatpush2.bf16.msra.mxu0 0
    %9304 = vmatprep.subr.bf16.mxu0 0
    %9305 = vmatpush2.bf16.msra.mxu0 0
    %9306 = vmatprep.subr.bf16.mxu0 0
    %9307 = vmatpush2.bf16.msra.mxu0 0
    %9308 = vmatprep.subr.bf16.mxu0 0
    %9309 = vmatpush2.bf16.msra.mxu0 0
    %9310 = vmatprep.subr.bf16.mxu0 0
    %9311 = vmatpush2.bf16.msra.mxu0 0
    %9312 = vmatprep.subr.bf16.mxu0 0
    %9313 = vmatpush2.bf16.msra.mxu0 0
    %9314 = vmatprep.mubr.bf16.mxu0 0
    %9315 = vmatmul.mubr.bf16.gmra.mxu0 %v9280
    %v9316 = vpop.f32.mrf.mxu0
    %v9317 = vadd.f32 0.0, %v9316
    %v9318 = vpop.f32.mrf.mxu0
    %v9319 = vpop.f32.mrf.mxu0
    %v9320 = vpop.f32.mrf.mxu0
    %9321 = vdwg.mxu0
    %v9322 = vadd.f32 %v8848, %v9317
    %v9323 = vadd.f32 %v8927, %v9006
    %v9324 = vadd.f32 %v9323, %v9085
    %v9325 = vadd.f32 %v9324, %v9164
    %v9326 = vadd.f32 %v9325, %v9243
    %v9327 = vadd.f32 %v9326, %v9322
    %v9328 = vld [vmem:[#allocation10] sm:$0x1]
    %v9330 = vlaneseq
    %v9331 = vshrl.u32 %v9330, 7
    %v9332 = vsub.s32 0, %v9331
    %v9333 = vrot.slane %v9328, %v9332
    %v9335 = vadd.f32 %v9327, %v9333
    %v9336 = vmax.f32 %v9335, 0.0
    %v9337 = vpack.c.bf16 %v9336, %v9336
    %v9338 = vld [vmem:[%s6] sm:$0xff]
    %v9339 = vld [vmem:[%s6 + $0x8] sm:$0xff]
    %v9340 = vld [vmem:[%s6 + $0x10] sm:$0xff]
    %v9341 = vld [vmem:[%s6 + $0x18] sm:$0xff]
    %v9342 = vld [vmem:[%s6 + $0x20] sm:$0xff]
    %v9343 = vld [vmem:[%s6 + $0x28] sm:$0xff]
    %v9344 = vld [vmem:[%s6 + $0x30] sm:$0xff]
    %v9345 = vld [vmem:[%s6 + $0x38] sm:$0xff]
    %v9346 = vld [vmem:[%s6 + $0x40] sm:$0xff]
    %v9347 = vld [vmem:[%s6 + $0x48] sm:$0xff]
    %v9348 = vld [vmem:[%s6 + $0x50] sm:$0xff]
    %v9349 = vld [vmem:[%s6 + $0x58] sm:$0xff]
    %v9350 = vld [vmem:[%s6 + $0x60] sm:$0xff]
    %v9351 = vld [vmem:[%s6 + $0x68] sm:$0xff]
    %v9352 = vld [vmem:[%s6 + $0x70] sm:$0xff]
    %v9353 = vld [vmem:[%s6 + $0x78] sm:$0xff]
    %v9354 = vld [vmem:[#allocation11] sm:$0x3]
    %v9356 = vlaneseq
    %v9357 = vshrl.u32 %v9356, 7
    %v9358 = vsub.s32 0, %v9357
    %v9359 = vrot.slane %v9354, %v9358
    %v9360 = vlaneseq
    %v9361 = vshrl.u32 %v9360, 7
    %v9362 = vsub.s32 1, %v9361
    %v9363 = vrot.slane %v9354, %v9362
    %v9382 = vunpack.c.l.b16 %v9338
    %v9383 = vunpack.c.h.b16 %v9338
    %v9384 = vunpack.c.l.b16 %v9339
    %v9385 = vunpack.c.h.b16 %v9339
    %v9386 = vunpack.c.l.b16 %v9340
    %v9387 = vunpack.c.h.b16 %v9340
    %v9388 = vunpack.c.l.b16 %v9341
    %v9389 = vunpack.c.h.b16 %v9341
    %v9390 = vunpack.c.l.b16 %v9342
    %v9391 = vunpack.c.h.b16 %v9342
    %v9392 = vunpack.c.l.b16 %v9343
    %v9393 = vunpack.c.h.b16 %v9343
    %v9394 = vunpack.c.l.b16 %v9344
    %v9395 = vunpack.c.h.b16 %v9344
    %v9396 = vunpack.c.l.b16 %v9345
    %v9397 = vunpack.c.h.b16 %v9345
    %v9398 = vunpack.c.l.b16 %v9346
    %v9399 = vunpack.c.h.b16 %v9346
    %v9400 = vunpack.c.l.b16 %v9347
    %v9401 = vunpack.c.h.b16 %v9347
    %v9402 = vunpack.c.l.b16 %v9348
    %v9403 = vunpack.c.h.b16 %v9348
    %v9404 = vunpack.c.l.b16 %v9349
    %v9405 = vunpack.c.h.b16 %v9349
    %v9406 = vunpack.c.l.b16 %v9350
    %v9407 = vunpack.c.h.b16 %v9350
    %v9408 = vunpack.c.l.b16 %v9351
    %v9409 = vunpack.c.h.b16 %v9351
    %v9410 = vunpack.c.l.b16 %v9352
    %v9411 = vunpack.c.h.b16 %v9352
    %v9412 = vunpack.c.l.b16 %v9353
    %v9413 = vunpack.c.h.b16 %v9353
    %v9414 = vpack.c.b16 %v9384, %v9382
    %v9415 = vpack.c.b16 %v9385, %v9383
    %v9416 = vpack.c.b16 %v9388, %v9386
    %v9417 = vpack.c.b16 %v9389, %v9387
    %v9418 = vpack.c.b16 %v9392, %v9390
    %v9419 = vpack.c.b16 %v9393, %v9391
    %v9420 = vpack.c.b16 %v9396, %v9394
    %v9421 = vpack.c.b16 %v9397, %v9395
    %v9422 = vpack.c.b16 %v9400, %v9398
    %v9423 = vpack.c.b16 %v9401, %v9399
    %v9424 = vpack.c.b16 %v9404, %v9402
    %v9425 = vpack.c.b16 %v9405, %v9403
    %v9426 = vpack.c.b16 %v9408, %v9406
    %v9427 = vpack.c.b16 %v9409, %v9407
    %v9428 = vpack.c.b16 %v9412, %v9410
    %v9429 = vpack.c.b16 %v9413, %v9411
    %9446 = vmatprep.subr.bf16.mxu0 %v9429
    %9447 = vmatpush1.bf16.msra.mxu0 %v9428
    %9448 = vmatprep.subr.bf16.mxu0 %v9427
    %9449 = vmatpush1.bf16.msra.mxu0 %v9426
    %9450 = vmatprep.subr.bf16.mxu0 %v9425
    %9451 = vmatpush1.bf16.msra.mxu0 %v9424
    %9452 = vmatprep.subr.bf16.mxu0 %v9423
    %9453 = vmatpush1.bf16.msra.mxu0 %v9422
    %9454 = vmatprep.subr.bf16.mxu0 %v9421
    %9455 = vmatpush1.bf16.msra.mxu0 %v9420
    %9456 = vmatprep.subr.bf16.mxu0 %v9419
    %9457 = vmatpush1.bf16.msra.mxu0 %v9418
    %9458 = vmatprep.subr.bf16.mxu0 %v9417
    %9459 = vmatpush1.bf16.msra.mxu0 %v9416
    %9460 = vmatprep.subr.bf16.mxu0 %v9415
    %9461 = vmatpush1.bf16.msra.mxu0 %v9414
    %9462 = vmatprep.subr.bf16.mxu0 0
    %9463 = vmatpush2.bf16.msra.mxu0 0
    %9464 = vmatprep.subr.bf16.mxu0 0
    %9465 = vmatpush2.bf16.msra.mxu0 0
    %9466 = vmatprep.subr.bf16.mxu0 0
    %9467 = vmatpush2.bf16.msra.mxu0 0
    %9468 = vmatprep.subr.bf16.mxu0 0
    %9469 = vmatpush2.bf16.msra.mxu0 0
    %9470 = vmatprep.subr.bf16.mxu0 0
    %9471 = vmatpush2.bf16.msra.mxu0 0
    %9472 = vmatprep.subr.bf16.mxu0 0
    %9473 = vmatpush2.bf16.msra.mxu0 0
    %9474 = vmatprep.subr.bf16.mxu0 0
    %9475 = vmatpush2.bf16.msra.mxu0 0
    %9476 = vmatprep.subr.bf16.mxu0 0
    %9477 = vmatpush2.bf16.msra.mxu0 0
    %9478 = vmatprep.mubr.bf16.mxu0 0
    %9479 = vmatmul.mubr.bf16.gmra.mxu0 %v9337
    %v9480 = vpop.f32.mrf.mxu0
    %v9481 = vadd.f32 %v9359, %v9480
    %v9482 = vpop.f32.mrf.mxu0
    %v9483 = vadd.f32 %v9363, %v9482
    %v9484 = vpop.f32.mrf.mxu0
    %v9485 = vpop.f32.mrf.mxu0
    %9486 = vdwg.mxu0
    %v9487 = vmax.f32 %v9481, 0.0
    %v9488 = vmax.f32 %v9483, 0.0
    %v9489 = vpack.c.bf16 %v9487, %v9487
    %v9490 = vpack.c.bf16 %v9488, %v9488
    %v9491 = vld [vmem:[#allocation13] sm:$0xf]
    %v9492 = vld [vmem:[#allocation13 + $0x4] sm:$0xf]
    %v9493 = vld [vmem:[#allocation13 + $0x8] sm:$0xf]
    %v9494 = vld [vmem:[#allocation13 + $0xc] sm:$0xf]
    %v9495 = vld [vmem:[#allocation13 + $0x10] sm:$0xf]
    %v9496 = vld [vmem:[#allocation13 + $0x14] sm:$0xf]
    %v9497 = vld [vmem:[#allocation13 + $0x18] sm:$0xf]
    %v9498 = vld [vmem:[#allocation13 + $0x1c] sm:$0xf]
    %v9499 = vld [vmem:[#allocation13 + $0x20] sm:$0xf]
    %v9500 = vld [vmem:[#allocation13 + $0x24] sm:$0xf]
    %v9501 = vld [vmem:[#allocation13 + $0x28] sm:$0xf]
    %v9502 = vld [vmem:[#allocation13 + $0x2c] sm:$0xf]
    %v9503 = vld [vmem:[#allocation13 + $0x30] sm:$0xf]
    %v9504 = vld [vmem:[#allocation13 + $0x34] sm:$0xf]
    %v9505 = vld [vmem:[#allocation13 + $0x38] sm:$0xf]
    %v9506 = vld [vmem:[#allocation13 + $0x3c] sm:$0xf]
    %v9507 = vld [vmem:[#allocation13 + $0x40] sm:$0xf]
    %v9508 = vld [vmem:[#allocation13 + $0x44] sm:$0xf]
    %v9509 = vld [vmem:[#allocation13 + $0x48] sm:$0xf]
    %v9510 = vld [vmem:[#allocation13 + $0x4c] sm:$0xf]
    %v9511 = vld [vmem:[#allocation14] sm:$0x1]
    %v9513 = vlaneseq
    %v9514 = vshrl.u32 %v9513, 7
    %v9515 = vsub.s32 0, %v9514
    %v9516 = vrot.slane %v9511, %v9515
    %v9538 = vunpack.c.l.b16 %v9491
    %v9539 = vunpack.c.l.b16 %v9492
    %v9540 = vunpack.c.l.b16 %v9493
    %v9541 = vunpack.c.l.b16 %v9494
    %v9542 = vunpack.c.l.b16 %v9495
    %v9543 = vunpack.c.l.b16 %v9496
    %v9544 = vunpack.c.l.b16 %v9497
    %v9545 = vunpack.c.l.b16 %v9498
    %v9546 = vunpack.c.l.b16 %v9499
    %v9547 = vunpack.c.l.b16 %v9500
    %v9548 = vunpack.c.l.b16 %v9501
    %v9549 = vunpack.c.l.b16 %v9502
    %v9550 = vunpack.c.l.b16 %v9503
    %v9551 = vunpack.c.l.b16 %v9504
    %v9552 = vunpack.c.l.b16 %v9505
    %v9553 = vunpack.c.l.b16 %v9506
    %v9554 = vunpack.c.l.b16 %v9507
    %v9555 = vunpack.c.l.b16 %v9508
    %v9556 = vunpack.c.l.b16 %v9509
    %v9557 = vunpack.c.l.b16 %v9510
    %v9558 = vpack.c.b16 %v9539, %v9538
    %v9559 = vpack.c.b16 %v9541, %v9540
    %v9560 = vpack.c.b16 %v9543, %v9542
    %v9561 = vpack.c.b16 %v9545, %v9544
    %v9562 = vpack.c.b16 %v9547, %v9546
    %v9563 = vpack.c.b16 %v9549, %v9548
    %v9564 = vpack.c.b16 %v9551, %v9550
    %v9565 = vpack.c.b16 %v9553, %v9552
    %v9566 = vpack.c.b16 %v9555, %v9554
    %v9567 = vpack.c.b16 %v9557, %v9556
    %vm9578 = vcmask 261120
    %v9580 = vsel %vm9578, %v9490, 0
    %9582 = vmatprep.subr.bf16.mxu0 0
    %9583 = vmatpush1.bf16.msra.mxu0 %v9565
    %9584 = vmatprep.subr.bf16.mxu0 0
    %9585 = vmatpush1.bf16.msra.mxu0 %v9564
    %9586 = vmatprep.subr.bf16.mxu0 0
    %9587 = vmatpush1.bf16.msra.mxu0 %v9563
    %9588 = vmatprep.subr.bf16.mxu0 0
    %9589 = vmatpush1.bf16.msra.mxu0 %v9562
    %9590 = vmatprep.subr.bf16.mxu0 0
    %9591 = vmatpush1.bf16.msra.mxu0 %v9561
    %9592 = vmatprep.subr.bf16.mxu0 0
    %9593 = vmatpush1.bf16.msra.mxu0 %v9560
    %9594 = vmatprep.subr.bf16.mxu0 0
    %9595 = vmatpush1.bf16.msra.mxu0 %v9559
    %9596 = vmatprep.subr.bf16.mxu0 0
    %9597 = vmatpush1.bf16.msra.mxu0 %v9558
    %9598 = vmatprep.subr.bf16.mxu0 0
    %9599 = vmatpush2.bf16.msra.mxu0 0
    %9600 = vmatprep.subr.bf16.mxu0 0
    %9601 = vmatpush2.bf16.msra.mxu0 0
    %9602 = vmatprep.subr.bf16.mxu0 0
    %9603 = vmatpush2.bf16.msra.mxu0 0
    %9604 = vmatprep.subr.bf16.mxu0 0
    %9605 = vmatpush2.bf16.msra.mxu0 0
    %9606 = vmatprep.subr.bf16.mxu0 0
    %9607 = vmatpush2.bf16.msra.mxu0 0
    %9608 = vmatprep.subr.bf16.mxu0 0
    %9609 = vmatpush2.bf16.msra.mxu0 0
    %9610 = vmatprep.subr.bf16.mxu0 0
    %9611 = vmatpush2.bf16.msra.mxu0 %v9567
    %9612 = vmatprep.subr.bf16.mxu0 0
    %9613 = vmatpush2.bf16.msra.mxu0 %v9566
    %9614 = vmatprep.mubr.bf16.mxu0 %v9580
    %9615 = vmatmul.mubr.bf16.gmra.mxu0 %v9489
    %v9616 = vpop.f32.mrf.mxu0
    %v9617 = vadd.f32 %v9516, %v9616
    %v9618 = vpop.f32.mrf.mxu0
    %v9619 = vpop.f32.mrf.mxu0
    %v9620 = vpop.f32.mrf.mxu0
    %9621 = vdwg.mxu0
    %v9622 = vsub.f32 0.0, %v9617
    %v9623 = vmul.f32 %v9622, 1.442695
    %v9624 = vpow.pop %v9623
    %v9625 = vadd.f32 %v9624, 1.0
    %v9626 = vrcp.pop %v9625
    %v9627 = vmul.f32 1.0, %v9626
    %v9628 = vlog2.pop %v9627
    %v9629 = vmul.f32 %v9628, 0.6931472
    %v9630 = vmax.f32 %v9629, -100.0
    %v9631 = vsub.f32 1.0, %v9627
    %v9632 = vlog2.pop %v9631
    %v9633 = vmul.f32 %v9632, 0.6931472
    %v9634 = vmax.f32 %v9633, -100.0
    %s9635 = sld [smem:[#allocation3 + $0x1]]
    %p9636 = scmp.eq.s32.totalorder %s9635, 1
    %v9637 = vsub.f32 0.0, %v9630
    %v9638 = vsub.f32 0.0, %v9634
    %s9639 = scalar_select %p9636, 1, 0
    %v9640 = vstv %s9639
    %vm9641 = vcmp.eq.s32.totalorder %v9640, 1
    %v9642 = vsel %vm9641, %v9637, %v9638
    %s9643 = sld [smem:[#allocation3]]
    %v9644 = vlaneseq
    %v9645 = vshrl.u32 %v9644, 7
    %v9646 = vstv %s9643
    %vm9647 = vcmp.lt.s32.totalorder %v9645, %v9646
    %v9648 = vsel %vm9647, 1, 0
    %v9649 = vcvt.s32.f32 %v9648
    %v9650 = vmul.f32 %v9642, %v9649
    %9652 = vrot.lane.b32.xlu0 %v9650, 127
    %v9653 = vpop.permute.xlu0 %9652
    %vm9655 = vcmask 7168
    %v9656 = vsel %vm9655, %v9653, 0.0
    %9657 = vadd.xlane.f32.xlu0 %v9656
    %v9658 = vpop.xlane.xlu0 %9657
    %v9659 = vrot.slane %v9658, 4
    %v9660 = vadd.f32 %v9658, %v9659
    %v9661 = vrot.slane %v9660, 2
    %v9662 = vadd.f32 %v9660, %v9661
    %v9663 = vrot.slane %v9662, 1
    %v9664 = vadd.f32 %v9662, %v9663
    %s9665 = vtos %v9664
    %s9666 = scvt.s32.f32 %s9643
    %v9667 = vstv %s9666
    %v9668 = vrcp.pop %v9667
    %s9669 = vtos %v9668
    %s9670 = smul.f32 %s9665, %s9669
    %v9671 = vlaneseq
    %v9672 = vand.u32 %v9671, 127
    %vm9673 = vcmp.eq.s32.totalorder %v9672, 0
    %vm9674 = vcmp.eq.s32.totalorder %v9672, 1
    %v9675 = vstv %s9670
    %v9676 = vsel %vm9674, %v9675, 0.0
    %9678 = vset.pattern.permute.xlu0 0
    %9679 = vperm.xlu0 %9678, %v9627
    %v9680 = vpop.permute.xlu0 %9679
    %v9682 = vsel %vm9673, %v9680, %v9676
    %9683 = vst [vmem:[#allocation16] sm:$0xff] %v9682
    // Predicated region
    $region70: #{tpu_custom_call.1} parent=1 // pred_check
      _
    $region71: #{tpu_custom_call.1} parent=1 // pred_check_branch
      %9685 = sbr.rel (0) target = $region73
    $region72: #{tpu_custom_call.1} parent=1 // pred_region
      %s9687 = ssub.s32 128, 128
      %9688 = vsyncadd [#allocation5], %s9687
      %s9690 = sshll.u32 [#allocation16], 4
      %s9691 = int_to_ptr.vmem [resolvable:$true] %s9690
      %9693 = dma.vmem_to_hbm [thread:$0]  %s9691, 128, %s10, [#allocation5]
    $region73: #{tpu_custom_call.1} parent=1 // pred_fallthru
      _
    // Predicated region
    $region74: #{tpu_custom_call.1} parent=1 // pred_check
      _
    $region75: #{tpu_custom_call.1} parent=1 // pred_check_branch
      %9695 = sbr.rel (0) target = $region77
    $region76: #{tpu_custom_call.1} parent=1 // pred_region
      %9696 = dma.done [#allocation5], 128
    $region77: #{tpu_custom_call.1} parent=1 // pred_fallthru
      _
    %9697 = vsyncpa [#allocation4], 1
    %9698 = vsyncpa [#allocation9], 1
    %9699 = vsyncpa [#allocation12], 1
    %9700 = vsyncpa [#allocation15], 1
    %9701 = vsyncpa [#allocation5], 1
    %9702 = vsyncpa [#allocation6], 1

</llo_original>
